<compile_context>
chip_gen: v5e
topology: v5e:2x2
jax: 0.10.0
libtpu: 0.0.40
codegen_flags: <defaults>
</compile_context>

<pallas_src>
import math

import numpy as np
import jax
import jax.numpy as jnp
from jax.experimental import pallas as pl
from jax.experimental.pallas import tpu as pltpu

# ----------------------------- configuration --------------------------------
B_SZ = 2
IN_CHS = 8          # in_chs
DIM = 4             # dim
HIDDEN = 16         # hidden_ch
OUT_CH = 4          # out_ch
D_STATE = 4
D_CONV = 4
EXPAND = 2
LAST_FEAT = 8       # last_feat_size  (input spatial size H = W = LAST_FEAT)
H = W = LAST_FEAT

POOL_SCALES = list(range(1, LAST_FEAT, LAST_FEAT // 8))    # [1,2,...,7]
POOL_LEN = len(POOL_SCALES)                                # 7
D_MODEL = DIM * POOL_LEN + IN_CHS                          # 36
D_INNER = EXPAND * D_MODEL                                 # 72
DT_RANK = math.ceil(D_MODEL / 16)                          # 3
L_SEQ = H * W                                              # 64
BN_EPS = 1e-5
SCAN_CHUNK = 8                                             # steps per store slab
DP = D_STATE * D_INNER                                     # 288 (packed state width)
N_POOL_CH = DIM * (POOL_LEN - 1)                           # 24
assert L_SEQ % SCAN_CHUNK == 0


# ===================== constant structure matrices (numpy) ===================

def _pool_matrix(in_size, out_size):
    """AdaptiveAvgPool1d averaging matrix (out, in), PyTorch semantics."""
    M = np.zeros((out_size, in_size), np.float32)
    for i in range(out_size):
        s = (i * in_size) // out_size
        e = -(-((i + 1) * in_size) // out_size)
        M[i, s:e] = 1.0 / (e - s)
    return M


def _bilinear_matrix(in_size, out_size):
    """Bilinear resize matrix (out, in), align_corners=False (PyTorch)."""
    M = np.zeros((out_size, in_size), np.float32)
    scale = in_size / out_size
    for i in range(out_size):
        src = max((i + 0.5) * scale - 0.5, 0.0)
        i0 = min(int(np.floor(src)), in_size - 1)
        i1 = min(i0 + 1, in_size - 1)
        lam = src - i0
        M[i, i0] += 1.0 - lam
        M[i, i1] += lam
    return M


def _shift2d_matrix(dh, dw, n):
    """(n*n, n*n) matrix: out[hw] = in[(h+dh)(w+dw)] with zero padding."""
    M = np.zeros((n * n, n * n), np.float32)
    for hh in range(n):
        for ww in range(n):
            h2, w2 = hh + dh, ww + dw
            if 0 <= h2 < n and 0 <= w2 < n:
                M[hh * n + ww, h2 * n + w2] = 1.0
    return M


# ============================ the fused kernel ===============================

def _block_kernel(x_ref,
                  w_ppm, pool_m, pmask, up_m,
                  w_inx, w_inz, w_xproj, w72, s288, red_m, vbias,
                  wout, shift3, wffn, wfc1, wfc2,
                  o_ref,
                  dA_sc, dBu_sc, cb_sc, y_sc):
    f32 = jnp.float32
    bf16 = jnp.bfloat16
    L = L_SEQ
    xf = x_ref[0]                                                   # (64, 8)

    # ---------------- PPM (pyramid pooling) ----------------
    # one fused conv1x1(+BN folded) for all 7 branches
    ppm = jnp.dot(xf, w_ppm[...], preferred_element_type=f32)       # (64, 28)
    # branch 0: ConvBNReLU6 at full res -> AdaptiveAvgPool(1) -> broadcast
    y0 = jnp.clip(ppm[:, 0:DIM] + vbias[0:1, 0:DIM], 0.0, 6.0)      # (64, 4)
    mean_row = jnp.full((1, L), 1.0 / L, f32)
    g0 = jnp.dot(mean_row, y0, preferred_element_type=f32)          # (1, 4)
    # branches 2..7: (pool then ConvBN) == (ConvBN then pool); ReLU6 at pooled
    # resolution; bilinear upsample (align_corners=False) back to HxW.
    convp = ppm[:, DIM:DIM + N_POOL_CH] + vbias[0:1, DIM:DIM + N_POOL_CH]
    pooled = jnp.dot(pool_m[...], convp, preferred_element_type=f32)     # (139, 24)
    pooled = jnp.clip(pooled, 0.0, 6.0) * pmask[...]                      # block-diag mask
    outp = jnp.dot(up_m[...], pooled, preferred_element_type=f32)         # (64, 24)

    # ---------------- Mamba: in_proj (concat-free, split weights) ----------
    xf_b = xf.astype(bf16)
    outp_b = outp.astype(bf16)
    g0_b = g0.astype(bf16)
    x_in = (jnp.dot(xf_b, w_inx[0:IN_CHS, :], preferred_element_type=f32)
            + jnp.dot(outp_b, w_inx[IN_CHS:IN_CHS + N_POOL_CH, :],
                      preferred_element_type=f32)
            + jnp.dot(g0_b, w_inx[IN_CHS + N_POOL_CH:IN_CHS + N_POOL_CH + DIM, :],
                      preferred_element_type=f32))                   # (64, 72)
    z_br = (jnp.dot(xf_b, w_inz[0:IN_CHS, :], preferred_element_type=f32)
            + jnp.dot(outp_b, w_inz[IN_CHS:IN_CHS + N_POOL_CH, :],
                      preferred_element_type=f32)
            + jnp.dot(g0_b, w_inz[IN_CHS + N_POOL_CH:IN_CHS + N_POOL_CH + DIM, :],
                      preferred_element_type=f32))                   # (64, 72)

    # ---------------- causal depthwise conv1d (k=4) via rolls + masks ------
    ridx = jax.lax.broadcasted_iota(jnp.int32, (L, D_INNER), 0)
    u = vbias[1:2, 0:D_INNER] + w72[3 + D_CONV - 1:3 + D_CONV, :] * x_in   # tap k=3 (m=0)
    for m in range(1, D_CONV):
        k = D_CONV - 1 - m
        rolled = pltpu.roll(x_in, shift=m, axis=0)                   # x[t - m] (wrapped)
        rolled = jnp.where(ridx >= m, rolled, 0.0)                   # zero the wrap
        u = u + w72[3 + k:4 + k, :] * rolled
    u = u * jax.nn.sigmoid(u)                                        # SiLU, (64, 72)

    # ---------------- x_proj / dt_proj (softplus hoisted) -------------------
    xdbl = jnp.dot(u, w_xproj[...], preferred_element_type=f32)      # (64, 11)
    dtv = xdbl[:, 0:DT_RANK]
    b_c = xdbl[:, DT_RANK:DT_RANK + D_STATE]
    c_c = xdbl[:, DT_RANK + D_STATE:DT_RANK + 2 * D_STATE]
    delta = jax.nn.softplus(
        jnp.dot(dtv, w72[0:DT_RANK, :], preferred_element_type=f32)
        + vbias[2:3, 0:D_INNER])                                     # (64, 72)
    du = delta * u

    # -------- packed scan precompute: state axis in lanes (width 288) -------
    sel = s288[0:D_STATE, :]                                         # (4, 288) 0/1
    a_flat = s288[D_STATE:D_STATE + 1, :]                            # (1, 288)
    delta4 = jnp.concatenate([delta] * D_STATE, axis=1)              # (64, 288)
    du4 = jnp.concatenate([du] * D_STATE, axis=1)                    # (64, 288)
    dA_sc[...] = jnp.exp(delta4 * a_flat)                            # exp hoisted
    dBu_sc[...] = du4 * jnp.dot(b_c, sel, preferred_element_type=f32)
    cb_sc[...] = jnp.dot(c_c, sel, preferred_element_type=f32)       # C broadcast

    # -------- selective scan: h packed (1,288), fully unrolled chunks -------
    CH = SCAN_CHUNK
    h = jnp.zeros((1, DP), f32)
    for ci in range(L // CH):
        r0 = ci * CH
        dA_c = dA_sc[r0:r0 + CH, :]                                  # (8, 288)
        dB_c = dBu_sc[r0:r0 + CH, :]
        cb_c = cb_sc[r0:r0 + CH, :]
        hs = []
        for j in range(CH):
            h = dA_c[j:j + 1, :] * h + dB_c[j:j + 1, :]              # one packed FMA
            hs.append(h)
        hc = jnp.concatenate(hs, axis=0) * cb_c                      # (8, 288)
        # deferred state-sum on the MXU (idle during the scan)
        y_sc[r0:r0 + CH, :] = jnp.dot(hc, red_m[...],
                                      preferred_element_type=f32)    # (8, 72)

    y = y_sc[...] + w72[3 + D_CONV:4 + D_CONV, :] * u                # D skip
    y = y * (z_br * jax.nn.sigmoid(z_br))                            # SiLU(z) gate
    xm = jnp.dot(y.astype(bf16), wout[...], preferred_element_type=f32)   # (64, 36)

    # ---------------- ConvFFN ----------------
    # 3x3 conv = 9 spatially-shifted matmuls (shift matrix precomputed), BN folded
    sh3 = jnp.dot(shift3[...], xm.astype(bf16), preferred_element_type=f32)   # (576, 36)
    sh3b = sh3.astype(bf16)
    acc = jnp.dot(sh3b[0:L, :], wffn[0], preferred_element_type=f32)
    for k in range(1, 9):
        acc = acc + jnp.dot(sh3b[k * L:(k + 1) * L, :], wffn[k],
                            preferred_element_type=f32)              # (64, 36)
    h1 = jnp.clip(acc + vbias[3:4, 0:D_MODEL], 0.0, 6.0)             # ReLU6
    h2 = jnp.dot(h1.astype(bf16), wfc1[...], preferred_element_type=f32)   # (64, 16)
    h2 = 0.5 * h2 * (1.0 + jax.lax.erf(h2 * f32(0.7071067811865476)))      # exact GELU
    h3 = jnp.dot(h2.astype(bf16), wfc2[...], preferred_element_type=f32)   # (64, 4)
    # Dropout(p=0.1): identity in inference mode.
    o_ref[0] = h3


# ============================= wrapper ======================================

def block_forward(x_nchw, ops):
    """x_nchw: (B, IN_CHS, H, W) float32  ->  (B, OUT_CH, H, W)."""
    B = x_nchw.shape[0]
    xt = jnp.transpose(x_nchw, (0, 2, 3, 1)).reshape(B, L_SEQ, IN_CHS)

    in_specs = [pl.BlockSpec((1, L_SEQ, IN_CHS), lambda b: (b, 0, 0))]
    for a in ops:
        in_specs.append(pl.BlockSpec(a.shape, lambda b, _n=a.ndim: (0,) * _n))

    out = pl.pallas_call(
        _block_kernel,
        out_shape=jax.ShapeDtypeStruct((B, L_SEQ, OUT_CH), jnp.float32),
        grid=(B,),
        in_specs=in_specs,
        out_specs=pl.BlockSpec((1, L_SEQ, OUT_CH), lambda b: (b, 0, 0)),
        scratch_shapes=[
            pltpu.VMEM((L_SEQ, DP), jnp.float32),      # dA  (state packed in lanes)
            pltpu.VMEM((L_SEQ, DP), jnp.float32),      # dB*u (packed)
            pltpu.VMEM((L_SEQ, DP), jnp.float32),      # C broadcast (packed)
            pltpu.VMEM((L_SEQ, D_INNER), jnp.float32), # scan output y
        ],
        compiler_params=pltpu.CompilerParams(
            dimension_semantics=("parallel",)),        # batch across v7x cores
    )(xt, *ops)

    return jnp.transpose(out.reshape(B, H, W, OUT_CH), (0, 3, 1, 2))


# ============================ parameter init =================================

def _init_bn(key, c):
    k1, k2, k3, k4 = jax.random.split(key, 4)
    gamma = 1.0 + 0.1 * jax.random.normal(k1, (c,), jnp.float32)
    beta = 0.1 * jax.random.normal(k2, (c,), jnp.float32)
    mean = 0.1 * jax.random.normal(k3, (c,), jnp.float32)
    var = 1.0 + 0.1 * jnp.abs(jax.random.normal(k4, (c,), jnp.float32))
    return (gamma, beta, mean, var)


def init_params(key):
    keys = list(jax.random.split(key, 48))
    it = iter(keys)

    def nrm(shape, s=0.2):
        return s * jax.random.normal(next(it), shape, jnp.float32)

    P = {}
    P['pool0_w'] = nrm((DIM, IN_CHS, 1, 1))
    P['pool0_bn'] = _init_bn(next(it), DIM)
    P['pool_w'] = [nrm((DIM, IN_CHS, 1, 1)) for _ in POOL_SCALES[1:]]
    P['pool_bn'] = [_init_bn(next(it), DIM) for _ in POOL_SCALES[1:]]

    m = {}
    m['in_proj_w'] = nrm((2 * D_INNER, D_MODEL))
    m['conv_w'] = nrm((D_INNER, 1, D_CONV))
    m['conv_b'] = nrm((D_INNER,), 0.1)
    m['x_proj_w'] = nrm((DT_RANK + 2 * D_STATE, D_INNER))
    m['dt_proj_w'] = nrm((D_INNER, DT_RANK))
    m['dt_proj_b'] = (jnp.log(jnp.expm1(jnp.float32(0.01)))
                      + 0.1 * jax.random.normal(next(it), (D_INNER,), jnp.float32))
    # A = -exp(A_log), A_log = log(arange(1, d_state+1)) (standard Mamba init)
    A = -(jnp.arange(1, D_STATE + 1, dtype=jnp.float32)[None, :]
          * jnp.ones((D_INNER, 1), jnp.float32))            # (D_INNER, N)
    m['A_T'] = A.T                                           # (N, D_INNER)
    m['D'] = jnp.ones((D_INNER,), jnp.float32)
    m['out_proj_w'] = nrm((D_MODEL, D_INNER))
    P['mamba'] = m

    P['ffn_conv_w'] = nrm((D_MODEL, D_MODEL, 3, 3), 0.1)
    P['ffn_conv_bn'] = _init_bn(next(it), D_MODEL)
    P['fc1_w'] = nrm((HIDDEN, D_MODEL, 1, 1))
    P['fc2_w'] = nrm((OUT_CH, HIDDEN, 1, 1))
    return P


# ====================== operand preparation (one-time) =======================

def _fold_bn_1x1(w4, bn):
    """Conv2d(k=1, bias=False) + BN(eval) folded -> (Cin, Cout) weight, (Cout,) bias."""
    gamma, beta, mean, var = bn
    scale = gamma / jnp.sqrt(var + BN_EPS)
    w = (w4[:, :, 0, 0] * scale[:, None]).T
    b = beta - mean * scale
    return w.astype(jnp.float32), b.astype(jnp.float32)


def prepare_operands(P):
    # ---- constant structure matrices ----
    n_rows = sum(p * p for p in POOL_SCALES[1:])             # 139
    pool_blocks, up_blocks = [], []
    pmask = np.zeros((n_rows, N_POOL_CH), np.float32)
    r = 0
    for i, p in enumerate(POOL_SCALES[1:]):
        A = _pool_matrix(H, p)                                # (p, 8)
        pool_blocks.append(np.kron(A, A))                     # (p*p, 64)
        U = _bilinear_matrix(p, H)                            # (8, p)
        up_blocks.append(np.kron(U, U))                       # (64, p*p)
        pmask[r:r + p * p, DIM * i:DIM * (i + 1)] = 1.0
        r += p * p
    pool_all = np.concatenate(pool_blocks, axis=0)            # (139, 64)
    up_cat = np.concatenate(up_blocks, axis=1)                # (64, 139)
    # 3x3 conv spatial shifts, k = kh*3 + kw
    shift3 = np.concatenate(
        [_shift2d_matrix(kh - 1, kw - 1, H) for kh in range(3) for kw in range(3)],
        axis=0)                                               # (576, 64)

    # ---- PPM conv + BN folded (all branches packed) ----
    wp0, bp0 = _fold_bn_1x1(P['pool0_w'], P['pool0_bn'])      # (8,4), (4,)
    wps, bps = [], []
    for wi, bni in zip(P['pool_w'], P['pool_bn']):
        wf, bf = _fold_bn_1x1(wi, bni)
        wps.append(wf)
        bps.append(bf)
    wpp = jnp.concatenate(wps, axis=1)                        # (8, 24)
    bpp = jnp.concatenate(bps)                                # (24,)
    w_ppm = jnp.concatenate([wp0, wpp], axis=1)               # (8, 28)

    # ---- Mamba weights (pre-transposed / pre-split / packed) ----
    m = P['mamba']
    winx_full = m['in_proj_w'][:D_INNER, :].T                 # (36, 72) rows = d_model ch
    winz_full = m['in_proj_w'][D_INNER:, :].T

    def reorder(w):
        # d_model channel order is [xf(8), branch0(4), branches2..7(24)];
        # repack as [xf(8), branches2..7(24), branch0(4)] (branch0 is folded
        # into a global-mean bias inside the kernel).
        return jnp.concatenate([w[:IN_CHS], w[IN_CHS + DIM:],
                                w[IN_CHS:IN_CHS + DIM]], axis=0)

    w_inx = reorder(winx_full).astype(jnp.bfloat16)           # (36, 72)
    w_inz = reorder(winz_full).astype(jnp.bfloat16)           # (36, 72)

    w_xproj = m['x_proj_w'].T                                 # (72, 11)
    # packed (8,72) slab: rows 0-2 dt_proj.T, 3-6 depthwise-conv taps, 7 D vector
    w72 = jnp.concatenate([m['dt_proj_w'].T,                  # (3, 72)
                           m['conv_w'][:, 0, :].T,            # (4, 72)
                           m['D'].reshape(1, D_INNER)], axis=0)   # (8, 72)

    at = m['A_T']                                             # (4, 72)
    sel = np.zeros((D_STATE, DP), np.float32)                 # 0/1 lane selector
    for n in range(D_STATE):
        sel[n, n * D_INNER:(n + 1) * D_INNER] = 1.0
    s288 = jnp.concatenate([jnp.asarray(sel), at.reshape(1, DP)], axis=0)   # (5, 288)
    red = np.tile(np.eye(D_INNER, dtype=np.float32), (D_STATE, 1))          # (288, 72)

    wout = m['out_proj_w'].T.astype(jnp.bfloat16)             # (72, 36)

    # ---- ConvFFN 3x3 conv + BN folded, fc1/fc2 ----
    gamma, beta, mean, var = P['ffn_conv_bn']
    scale = gamma / jnp.sqrt(var + BN_EPS)
    wffn = jnp.transpose(P['ffn_conv_w'] * scale[:, None, None, None],
                         (2, 3, 1, 0)).reshape(9, D_MODEL, D_MODEL)
    wffn = wffn.astype(jnp.bfloat16)                          # [k, Cin, Cout]
    bffn = beta - mean * scale                                # (36,)
    wfc1 = P['fc1_w'][:, :, 0, 0].T.astype(jnp.bfloat16)      # (36, 16)
    wfc2 = P['fc2_w'][:, :, 0, 0].T.astype(jnp.bfloat16)      # (16, 4)

    # ---- all small bias/vector operands packed into one lane-dense slab ----
    vbias = np.zeros((4, 128), np.float32)
    vbias[0, :DIM] = np.asarray(bp0)
    vbias[0, DIM:DIM + N_POOL_CH] = np.asarray(bpp)
    vbias[1, :D_INNER] = np.asarray(m['conv_b'])
    vbias[2, :D_INNER] = np.asarray(m['dt_proj_b'])
    vbias[3, :D_MODEL] = np.asarray(bffn)

    ops = [
        jnp.asarray(w_ppm, jnp.float32),
        jnp.asarray(pool_all, jnp.float32),
        jnp.asarray(pmask, jnp.float32),
        jnp.asarray(up_cat, jnp.float32),
        w_inx, w_inz,
        jnp.asarray(w_xproj, jnp.float32),
        jnp.asarray(w72, jnp.float32),
        jnp.asarray(s288, jnp.float32),
        jnp.asarray(red, jnp.float32),
        jnp.asarray(vbias, jnp.float32),
        wout,
        jnp.asarray(shift3, jnp.bfloat16),
        wffn, wfc1, wfc2,
    ]
    return ops


# ================================= main ======================================

if __name__ == "__main__":
    root = jax.random.PRNGKey(0)
    k_x, k_p = jax.random.split(root)
    x = jax.random.normal(k_x, (B_SZ, IN_CHS, H, W), jnp.float32)   # NCHW input
    params = init_params(k_p)
    ops = prepare_operands(params)

    fwd = jax.jit(lambda xx: block_forward(xx, ops))
    out = jax.block_until_ready(fwd(x))

    assert out.shape == (B_SZ, OUT_CH, H, W), out.shape
    assert bool(jnp.all(jnp.isfinite(out)))
    print("KERNEL_OK")
</pallas_src>

<mosaic_0001>
module attributes {stable_mosaic.version = 11 : i64} {
  func.func @_block_kernel(%arg0: i32, %arg1: memref<1x64x8xf32, #tpu.memory_space<vmem>>, %arg2: memref<8x28xf32, #tpu.memory_space<vmem>>, %arg3: memref<139x64xf32, #tpu.memory_space<vmem>>, %arg4: memref<139x24xf32, #tpu.memory_space<vmem>>, %arg5: memref<64x139xf32, #tpu.memory_space<vmem>>, %arg6: memref<36x72xbf16, #tpu.memory_space<vmem>>, %arg7: memref<36x72xbf16, #tpu.memory_space<vmem>>, %arg8: memref<72x11xf32, #tpu.memory_space<vmem>>, %arg9: memref<8x72xf32, #tpu.memory_space<vmem>>, %arg10: memref<5x288xf32, #tpu.memory_space<vmem>>, %arg11: memref<288x72xf32, #tpu.memory_space<vmem>>, %arg12: memref<4x128xf32, #tpu.memory_space<vmem>>, %arg13: memref<72x36xbf16, #tpu.memory_space<vmem>>, %arg14: memref<576x64xbf16, #tpu.memory_space<vmem>>, %arg15: memref<9x36x36xbf16, #tpu.memory_space<vmem>>, %arg16: memref<36x16xbf16, #tpu.memory_space<vmem>>, %arg17: memref<16x4xbf16, #tpu.memory_space<vmem>>, %arg18: memref<1x64x4xf32, #tpu.memory_space<vmem>>, %arg19: memref<64x288xf32, #tpu.memory_space<vmem>>, %arg20: memref<64x288xf32, #tpu.memory_space<vmem>>, %arg21: memref<64x288xf32, #tpu.memory_space<vmem>>, %arg22: memref<64x72xf32, #tpu.memory_space<vmem>>) attributes {dimension_semantics = [#tpu.dimension_semantics<parallel>], iteration_bounds = array<i64: 2>, scalar_prefetch = 0 : i64, scratch_operands = 4 : i64, tpu.core_type = #tpu.core_type<tc>, window_params = [{transform_indices = @transform_0, window_bounds = array<i64: 1, 64, 8>}, {pipeline_mode = #tpu.pipeline_mode<synchronous>, transform_indices = @transform_1, window_bounds = array<i64: 8, 28>}, {pipeline_mode = #tpu.pipeline_mode<synchronous>, transform_indices = @transform_2, window_bounds = array<i64: 139, 64>}, {pipeline_mode = #tpu.pipeline_mode<synchronous>, transform_indices = @transform_3, window_bounds = array<i64: 139, 24>}, {pipeline_mode = #tpu.pipeline_mode<synchronous>, transform_indices = @transform_4, window_bounds = array<i64: 64, 139>}, {pipeline_mode = #tpu.pipeline_mode<synchronous>, transform_indices = @transform_5, window_bounds = array<i64: 36, 72>}, {pipeline_mode = #tpu.pipeline_mode<synchronous>, transform_indices = @transform_6, window_bounds = array<i64: 36, 72>}, {pipeline_mode = #tpu.pipeline_mode<synchronous>, transform_indices = @transform_7, window_bounds = array<i64: 72, 11>}, {pipeline_mode = #tpu.pipeline_mode<synchronous>, transform_indices = @transform_8, window_bounds = array<i64: 8, 72>}, {pipeline_mode = #tpu.pipeline_mode<synchronous>, transform_indices = @transform_9, window_bounds = array<i64: 5, 288>}, {pipeline_mode = #tpu.pipeline_mode<synchronous>, transform_indices = @transform_10, window_bounds = array<i64: 288, 72>}, {pipeline_mode = #tpu.pipeline_mode<synchronous>, transform_indices = @transform_11, window_bounds = array<i64: 4, 128>}, {pipeline_mode = #tpu.pipeline_mode<synchronous>, transform_indices = @transform_12, window_bounds = array<i64: 72, 36>}, {pipeline_mode = #tpu.pipeline_mode<synchronous>, transform_indices = @transform_13, window_bounds = array<i64: 576, 64>}, {pipeline_mode = #tpu.pipeline_mode<synchronous>, transform_indices = @transform_14, window_bounds = array<i64: 9, 36, 36>}, {pipeline_mode = #tpu.pipeline_mode<synchronous>, transform_indices = @transform_15, window_bounds = array<i64: 36, 16>}, {pipeline_mode = #tpu.pipeline_mode<synchronous>, transform_indices = @transform_16, window_bounds = array<i64: 16, 4>}, {transform_indices = @transform_17, window_bounds = array<i64: 1, 64, 4>}]} {
    %c0 = arith.constant 0 : index
    %c0_0 = arith.constant 0 : index
    %c0_1 = arith.constant 0 : index
    %0 = vector.load %arg1[%c0, %c0_0, %c0_1] : memref<1x64x8xf32, #tpu.memory_space<vmem>>, vector<1x64x8xf32>
    %1 = vector.shape_cast %0 : vector<1x64x8xf32> to vector<64x8xf32>
    %c0_2 = arith.constant 0 : index
    %c0_3 = arith.constant 0 : index
    %2 = vector.load %arg2[%c0_2, %c0_3] : memref<8x28xf32, #tpu.memory_space<vmem>>, vector<8x28xf32>
    %cst = arith.constant dense<0.000000e+00> : vector<64x28xf32>
    %3 = tpu.matmul %1, %2, %cst {dimension_numbers = #tpu.dot_dimension_numbers<[1], [0], [0], [1], [0, 0, 1, 1], [], []>} : vector<64x8xf32>, vector<8x28xf32>, vector<64x28xf32> -> vector<64x28xf32>
    %4 = vector.extract_strided_slice %3 {offsets = [0, 0], sizes = [64, 4], strides = [1, 1]} : vector<64x28xf32> to vector<64x4xf32>
    %c0_4 = arith.constant 0 : index
    %c0_5 = arith.constant 0 : index
    %5 = vector.load %arg12[%c0_4, %c0_5] : memref<4x128xf32, #tpu.memory_space<vmem>>, vector<1x4xf32>
    %6 = vector.broadcast %5 : vector<1x4xf32> to vector<64x4xf32>
    %7 = arith.addf %4, %6 : vector<64x4xf32>
    %cst_6 = arith.constant 0.000000e+00 : f32
    %cst_7 = arith.constant 6.000000e+00 : f32
    %8 = vector.broadcast %cst_6 : f32 to vector<64x4xf32>
    %9 = arith.maximumf %8, %7 : vector<64x4xf32>
    %10 = vector.broadcast %cst_7 : f32 to vector<64x4xf32>
    %11 = arith.minimumf %10, %9 : vector<64x4xf32>
    %cst_8 = arith.constant 1.562500e-02 : f32
    %12 = vector.broadcast %cst_8 : f32 to vector<1x64xf32>
    %cst_9 = arith.constant dense<0.000000e+00> : vector<1x4xf32>
    %13 = tpu.matmul %12, %11, %cst_9 {dimension_numbers = #tpu.dot_dimension_numbers<[1], [0], [0], [1], [0, 0, 1, 1], [], []>} : vector<1x64xf32>, vector<64x4xf32>, vector<1x4xf32> -> vector<1x4xf32>
    %14 = vector.extract_strided_slice %3 {offsets = [0, 4], sizes = [64, 24], strides = [1, 1]} : vector<64x28xf32> to vector<64x24xf32>
    %c0_10 = arith.constant 0 : index
    %c4 = arith.constant 4 : index
    %15 = vector.load %arg12[%c0_10, %c4] : memref<4x128xf32, #tpu.memory_space<vmem>>, vector<1x24xf32>
    %16 = vector.broadcast %15 : vector<1x24xf32> to vector<64x24xf32>
    %17 = arith.addf %14, %16 : vector<64x24xf32>
    %c0_11 = arith.constant 0 : index
    %c0_12 = arith.constant 0 : index
    %18 = vector.load %arg3[%c0_11, %c0_12] : memref<139x64xf32, #tpu.memory_space<vmem>>, vector<139x64xf32>
    %cst_13 = arith.constant dense<0.000000e+00> : vector<139x24xf32>
    %19 = tpu.matmul %18, %17, %cst_13 {dimension_numbers = #tpu.dot_dimension_numbers<[1], [0], [0], [1], [0, 0, 1, 1], [], []>} : vector<139x64xf32>, vector<64x24xf32>, vector<139x24xf32> -> vector<139x24xf32>
    %cst_14 = arith.constant 0.000000e+00 : f32
    %cst_15 = arith.constant 6.000000e+00 : f32
    %20 = vector.broadcast %cst_14 : f32 to vector<139x24xf32>
    %21 = arith.maximumf %20, %19 : vector<139x24xf32>
    %22 = vector.broadcast %cst_15 : f32 to vector<139x24xf32>
    %23 = arith.minimumf %22, %21 : vector<139x24xf32>
    %c0_16 = arith.constant 0 : index
    %c0_17 = arith.constant 0 : index
    %24 = vector.load %arg4[%c0_16, %c0_17] : memref<139x24xf32, #tpu.memory_space<vmem>>, vector<139x24xf32>
    %25 = arith.mulf %23, %24 : vector<139x24xf32>
    %c0_18 = arith.constant 0 : index
    %c0_19 = arith.constant 0 : index
    %26 = vector.load %arg5[%c0_18, %c0_19] : memref<64x139xf32, #tpu.memory_space<vmem>>, vector<64x139xf32>
    %cst_20 = arith.constant dense<0.000000e+00> : vector<64x24xf32>
    %27 = tpu.matmul %26, %25, %cst_20 {dimension_numbers = #tpu.dot_dimension_numbers<[1], [0], [0], [1], [0, 0, 1, 1], [], []>} : vector<64x139xf32>, vector<139x24xf32>, vector<64x24xf32> -> vector<64x24xf32>
    %28 = arith.truncf %1 : vector<64x8xf32> to vector<64x8xbf16>
    %29 = arith.truncf %27 : vector<64x24xf32> to vector<64x24xbf16>
    %30 = arith.truncf %13 : vector<1x4xf32> to vector<1x4xbf16>
    %c0_21 = arith.constant 0 : index
    %c0_22 = arith.constant 0 : index
    %31 = vector.load %arg6[%c0_21, %c0_22] : memref<36x72xbf16, #tpu.memory_space<vmem>>, vector<8x72xbf16>
    %cst_23 = arith.constant dense<0.000000e+00> : vector<64x72xf32>
    %32 = tpu.matmul %28, %31, %cst_23 {dimension_numbers = #tpu.dot_dimension_numbers<[1], [0], [0], [1], [0, 0, 1, 1], [], []>} : vector<64x8xbf16>, vector<8x72xbf16>, vector<64x72xf32> -> vector<64x72xf32>
    %c8 = arith.constant 8 : index
    %c0_24 = arith.constant 0 : index
    %33 = vector.load %arg6[%c8, %c0_24] : memref<36x72xbf16, #tpu.memory_space<vmem>>, vector<24x72xbf16>
    %cst_25 = arith.constant dense<0.000000e+00> : vector<64x72xf32>
    %34 = tpu.matmul %29, %33, %cst_25 {dimension_numbers = #tpu.dot_dimension_numbers<[1], [0], [0], [1], [0, 0, 1, 1], [], []>} : vector<64x24xbf16>, vector<24x72xbf16>, vector<64x72xf32> -> vector<64x72xf32>
    %35 = arith.addf %32, %34 : vector<64x72xf32>
    %c32 = arith.constant 32 : index
    %c0_26 = arith.constant 0 : index
    %36 = vector.load %arg6[%c32, %c0_26] : memref<36x72xbf16, #tpu.memory_space<vmem>>, vector<4x72xbf16>
    %cst_27 = arith.constant dense<0.000000e+00> : vector<1x72xf32>
    %37 = tpu.matmul %30, %36, %cst_27 {dimension_numbers = #tpu.dot_dimension_numbers<[1], [0], [0], [1], [0, 0, 1, 1], [], []>} : vector<1x4xbf16>, vector<4x72xbf16>, vector<1x72xf32> -> vector<1x72xf32>
    %38 = vector.broadcast %37 : vector<1x72xf32> to vector<64x72xf32>
    %39 = arith.addf %35, %38 : vector<64x72xf32>
    %c0_28 = arith.constant 0 : index
    %c0_29 = arith.constant 0 : index
    %40 = vector.load %arg7[%c0_28, %c0_29] : memref<36x72xbf16, #tpu.memory_space<vmem>>, vector<8x72xbf16>
    %cst_30 = arith.constant dense<0.000000e+00> : vector<64x72xf32>
    %41 = tpu.matmul %28, %40, %cst_30 {dimension_numbers = #tpu.dot_dimension_numbers<[1], [0], [0], [1], [0, 0, 1, 1], [], []>} : vector<64x8xbf16>, vector<8x72xbf16>, vector<64x72xf32> -> vector<64x72xf32>
    %c8_31 = arith.constant 8 : index
    %c0_32 = arith.constant 0 : index
    %42 = vector.load %arg7[%c8_31, %c0_32] : memref<36x72xbf16, #tpu.memory_space<vmem>>, vector<24x72xbf16>
    %cst_33 = arith.constant dense<0.000000e+00> : vector<64x72xf32>
    %43 = tpu.matmul %29, %42, %cst_33 {dimension_numbers = #tpu.dot_dimension_numbers<[1], [0], [0], [1], [0, 0, 1, 1], [], []>} : vector<64x24xbf16>, vector<24x72xbf16>, vector<64x72xf32> -> vector<64x72xf32>
    %44 = arith.addf %41, %43 : vector<64x72xf32>
    %c32_34 = arith.constant 32 : index
    %c0_35 = arith.constant 0 : index
    %45 = vector.load %arg7[%c32_34, %c0_35] : memref<36x72xbf16, #tpu.memory_space<vmem>>, vector<4x72xbf16>
    %cst_36 = arith.constant dense<0.000000e+00> : vector<1x72xf32>
    %46 = tpu.matmul %30, %45, %cst_36 {dimension_numbers = #tpu.dot_dimension_numbers<[1], [0], [0], [1], [0, 0, 1, 1], [], []>} : vector<1x4xbf16>, vector<4x72xbf16>, vector<1x72xf32> -> vector<1x72xf32>
    %47 = vector.broadcast %46 : vector<1x72xf32> to vector<64x72xf32>
    %48 = arith.addf %44, %47 : vector<64x72xf32>
    %49 = tpu.iota {dimensions = array<i32: 0>} : vector<64x72xi32>
    %c1 = arith.constant 1 : index
    %c0_37 = arith.constant 0 : index
    %50 = vector.load %arg12[%c1, %c0_37] : memref<4x128xf32, #tpu.memory_space<vmem>>, vector<1x72xf32>
    %c6 = arith.constant 6 : index
    %c0_38 = arith.constant 0 : index
    %51 = vector.load %arg9[%c6, %c0_38] : memref<8x72xf32, #tpu.memory_space<vmem>>, vector<1x72xf32>
    %52 = vector.broadcast %51 : vector<1x72xf32> to vector<64x72xf32>
    %53 = arith.mulf %52, %39 : vector<64x72xf32>
    %54 = vector.broadcast %50 : vector<1x72xf32> to vector<64x72xf32>
    %55 = arith.addf %54, %53 : vector<64x72xf32>
    %c1_i32 = arith.constant 1 : i32
    %56 = tpu.dynamic_rotate %39 by %c1_i32 dim 0 : vector<64x72xf32>, i32 -> vector<64x72xf32>
    %c1_i32_39 = arith.constant 1 : i32
    %57 = vector.broadcast %c1_i32_39 : i32 to vector<64x72xi32>
    %58 = arith.cmpi sge, %49, %57 : vector<64x72xi32>
    %cst_40 = arith.constant 0.000000e+00 : f32
    %59 = vector.broadcast %cst_40 : f32 to vector<64x72xf32>
    %60 = arith.select %58, %56, %59 : vector<64x72xi1>, vector<64x72xf32>
    %c5 = arith.constant 5 : index
    %c0_41 = arith.constant 0 : index
    %61 = vector.load %arg9[%c5, %c0_41] : memref<8x72xf32, #tpu.memory_space<vmem>>, vector<1x72xf32>
    %62 = vector.broadcast %61 : vector<1x72xf32> to vector<64x72xf32>
    %63 = arith.mulf %62, %60 : vector<64x72xf32>
    %64 = arith.addf %55, %63 : vector<64x72xf32>
    %c2_i32 = arith.constant 2 : i32
    %65 = tpu.dynamic_rotate %39 by %c2_i32 dim 0 : vector<64x72xf32>, i32 -> vector<64x72xf32>
    %c2_i32_42 = arith.constant 2 : i32
    %66 = vector.broadcast %c2_i32_42 : i32 to vector<64x72xi32>
    %67 = arith.cmpi sge, %49, %66 : vector<64x72xi32>
    %cst_43 = arith.constant 0.000000e+00 : f32
    %68 = vector.broadcast %cst_43 : f32 to vector<64x72xf32>
    %69 = arith.select %67, %65, %68 : vector<64x72xi1>, vector<64x72xf32>
    %c4_44 = arith.constant 4 : index
    %c0_45 = arith.constant 0 : index
    %70 = vector.load %arg9[%c4_44, %c0_45] : memref<8x72xf32, #tpu.memory_space<vmem>>, vector<1x72xf32>
    %71 = vector.broadcast %70 : vector<1x72xf32> to vector<64x72xf32>
    %72 = arith.mulf %71, %69 : vector<64x72xf32>
    %73 = arith.addf %64, %72 : vector<64x72xf32>
    %c3_i32 = arith.constant 3 : i32
    %74 = tpu.dynamic_rotate %39 by %c3_i32 dim 0 : vector<64x72xf32>, i32 -> vector<64x72xf32>
    %c3_i32_46 = arith.constant 3 : i32
    %75 = vector.broadcast %c3_i32_46 : i32 to vector<64x72xi32>
    %76 = arith.cmpi sge, %49, %75 : vector<64x72xi32>
    %cst_47 = arith.constant 0.000000e+00 : f32
    %77 = vector.broadcast %cst_47 : f32 to vector<64x72xf32>
    %78 = arith.select %76, %74, %77 : vector<64x72xi1>, vector<64x72xf32>
    %c3 = arith.constant 3 : index
    %c0_48 = arith.constant 0 : index
    %79 = vector.load %arg9[%c3, %c0_48] : memref<8x72xf32, #tpu.memory_space<vmem>>, vector<1x72xf32>
    %80 = vector.broadcast %79 : vector<1x72xf32> to vector<64x72xf32>
    %81 = arith.mulf %80, %78 : vector<64x72xf32>
    %82 = arith.addf %73, %81 : vector<64x72xf32>
    %83 = arith.negf %82 : vector<64x72xf32>
    %84 = math.exp %83 : vector<64x72xf32>
    %cst_49 = arith.constant 1.000000e+00 : f32
    %85 = vector.broadcast %cst_49 : f32 to vector<64x72xf32>
    %86 = arith.addf %85, %84 : vector<64x72xf32>
    %87 = arith.divf %85, %86 : vector<64x72xf32>
    %88 = arith.mulf %82, %87 : vector<64x72xf32>
    %c0_50 = arith.constant 0 : index
    %c0_51 = arith.constant 0 : index
    %89 = vector.load %arg8[%c0_50, %c0_51] : memref<72x11xf32, #tpu.memory_space<vmem>>, vector<72x11xf32>
    %cst_52 = arith.constant dense<0.000000e+00> : vector<64x11xf32>
    %90 = tpu.matmul %88, %89, %cst_52 {dimension_numbers = #tpu.dot_dimension_numbers<[1], [0], [0], [1], [0, 0, 1, 1], [], []>} : vector<64x72xf32>, vector<72x11xf32>, vector<64x11xf32> -> vector<64x11xf32>
    %91 = vector.extract_strided_slice %90 {offsets = [0, 0], sizes = [64, 3], strides = [1, 1]} : vector<64x11xf32> to vector<64x3xf32>
    %92 = vector.extract_strided_slice %90 {offsets = [0, 3], sizes = [64, 4], strides = [1, 1]} : vector<64x11xf32> to vector<64x4xf32>
    %93 = vector.extract_strided_slice %90 {offsets = [0, 7], sizes = [64, 4], strides = [1, 1]} : vector<64x11xf32> to vector<64x4xf32>
    %c0_53 = arith.constant 0 : index
    %c0_54 = arith.constant 0 : index
    %94 = vector.load %arg9[%c0_53, %c0_54] : memref<8x72xf32, #tpu.memory_space<vmem>>, vector<3x72xf32>
    %cst_55 = arith.constant dense<0.000000e+00> : vector<64x72xf32>
    %95 = tpu.matmul %91, %94, %cst_55 {dimension_numbers = #tpu.dot_dimension_numbers<[1], [0], [0], [1], [0, 0, 1, 1], [], []>} : vector<64x3xf32>, vector<3x72xf32>, vector<64x72xf32> -> vector<64x72xf32>
    %c2 = arith.constant 2 : index
    %c0_56 = arith.constant 0 : index
    %96 = vector.load %arg12[%c2, %c0_56] : memref<4x128xf32, #tpu.memory_space<vmem>>, vector<1x72xf32>
    %97 = vector.broadcast %96 : vector<1x72xf32> to vector<64x72xf32>
    %98 = arith.addf %95, %97 : vector<64x72xf32>
    %cst_57 = arith.constant 0.000000e+00 : f32
    %99 = vector.broadcast %cst_57 : f32 to vector<64x72xf32>
    %100 = arith.maximumf %98, %99 : vector<64x72xf32>
    %101 = vector.broadcast %cst_57 : f32 to vector<64x72xf32>
    %102 = arith.subf %98, %101 : vector<64x72xf32>
    %103 = arith.cmpf one, %102, %102 : vector<64x72xf32>
    %104 = vector.broadcast %cst_57 : f32 to vector<64x72xf32>
    %105 = arith.addf %98, %104 : vector<64x72xf32>
    %106 = math.absf %102 : vector<64x72xf32>
    %cst_58 = arith.constant 0.000000e+00 : f32
    %107 = vector.broadcast %cst_58 : f32 to vector<64x72xf32>
    %108 = arith.subf %107, %106 : vector<64x72xf32>
    %109 = math.exp %108 : vector<64x72xf32>
    %110 = math.log1p %109 : vector<64x72xf32>
    %111 = arith.addf %100, %110 : vector<64x72xf32>
    %112 = arith.select %103, %105, %111 : vector<64x72xi1>, vector<64x72xf32>
    %113 = arith.mulf %112, %88 : vector<64x72xf32>
    %c0_59 = arith.constant 0 : index
    %c0_60 = arith.constant 0 : index
    %114 = vector.load %arg10[%c0_59, %c0_60] : memref<5x288xf32, #tpu.memory_space<vmem>>, vector<4x288xf32>
    %c4_61 = arith.constant 4 : index
    %c0_62 = arith.constant 0 : index
    %115 = vector.load %arg10[%c4_61, %c0_62] : memref<5x288xf32, #tpu.memory_space<vmem>>, vector<1x288xf32>
    %116 = tpu.concatenate %112, %112, %112, %112 in 1 : vector<64x72xf32>, vector<64x72xf32>, vector<64x72xf32>, vector<64x72xf32> -> vector<64x288xf32>
    %117 = tpu.concatenate %113, %113, %113, %113 in 1 : vector<64x72xf32>, vector<64x72xf32>, vector<64x72xf32>, vector<64x72xf32> -> vector<64x288xf32>
    %118 = vector.broadcast %115 : vector<1x288xf32> to vector<64x288xf32>
    %119 = arith.mulf %116, %118 : vector<64x288xf32>
    %120 = math.exp %119 : vector<64x288xf32>
    %c0_63 = arith.constant 0 : index
    %c0_64 = arith.constant 0 : index
    %121 = vector.load %arg19[%c0_63, %c0_64] : memref<64x288xf32, #tpu.memory_space<vmem>>, vector<64x288xf32>
    tpu.vector_store %arg19[%c0_63, %c0_64], %120 {strides = array<i32>} : memref<64x288xf32, #tpu.memory_space<vmem>>, vector<64x288xf32>,
    %cst_65 = arith.constant dense<0.000000e+00> : vector<64x288xf32>
    %122 = tpu.matmul %92, %114, %cst_65 {dimension_numbers = #tpu.dot_dimension_numbers<[1], [0], [0], [1], [0, 0, 1, 1], [], []>} : vector<64x4xf32>, vector<4x288xf32>, vector<64x288xf32> -> vector<64x288xf32>
    %123 = arith.mulf %117, %122 : vector<64x288xf32>
    %c0_66 = arith.constant 0 : index
    %c0_67 = arith.constant 0 : index
    %124 = vector.load %arg20[%c0_66, %c0_67] : memref<64x288xf32, #tpu.memory_space<vmem>>, vector<64x288xf32>
    tpu.vector_store %arg20[%c0_66, %c0_67], %123 {strides = array<i32>} : memref<64x288xf32, #tpu.memory_space<vmem>>, vector<64x288xf32>,
    %cst_68 = arith.constant dense<0.000000e+00> : vector<64x288xf32>
    %125 = tpu.matmul %93, %114, %cst_68 {dimension_numbers = #tpu.dot_dimension_numbers<[1], [0], [0], [1], [0, 0, 1, 1], [], []>} : vector<64x4xf32>, vector<4x288xf32>, vector<64x288xf32> -> vector<64x288xf32>
    %c0_69 = arith.constant 0 : index
    %c0_70 = arith.constant 0 : index
    %126 = vector.load %arg21[%c0_69, %c0_70] : memref<64x288xf32, #tpu.memory_space<vmem>>, vector<64x288xf32>
    tpu.vector_store %arg21[%c0_69, %c0_70], %125 {strides = array<i32>} : memref<64x288xf32, #tpu.memory_space<vmem>>, vector<64x288xf32>,
    %cst_71 = arith.constant 0.000000e+00 : f32
    %127 = vector.broadcast %cst_71 : f32 to vector<1x288xf32>
    %c0_72 = arith.constant 0 : index
    %c0_73 = arith.constant 0 : index
    %128 = vector.load %arg19[%c0_72, %c0_73] : memref<64x288xf32, #tpu.memory_space<vmem>>, vector<8x288xf32>
    %c0_74 = arith.constant 0 : index
    %c0_75 = arith.constant 0 : index
    %129 = vector.load %arg20[%c0_74, %c0_75] : memref<64x288xf32, #tpu.memory_space<vmem>>, vector<8x288xf32>
    %c0_76 = arith.constant 0 : index
    %c0_77 = arith.constant 0 : index
    %130 = vector.load %arg21[%c0_76, %c0_77] : memref<64x288xf32, #tpu.memory_space<vmem>>, vector<8x288xf32>
    %131 = vector.extract_strided_slice %128 {offsets = [0, 0], sizes = [1, 288], strides = [1, 1]} : vector<8x288xf32> to vector<1x288xf32>
    %132 = arith.mulf %131, %127 : vector<1x288xf32>
    %133 = vector.extract_strided_slice %129 {offsets = [0, 0], sizes = [1, 288], strides = [1, 1]} : vector<8x288xf32> to vector<1x288xf32>
    %134 = arith.addf %132, %133 : vector<1x288xf32>
    %135 = vector.extract_strided_slice %128 {offsets = [1, 0], sizes = [1, 288], strides = [1, 1]} : vector<8x288xf32> to vector<1x288xf32>
    %136 = arith.mulf %135, %134 : vector<1x288xf32>
    %137 = vector.extract_strided_slice %129 {offsets = [1, 0], sizes = [1, 288], strides = [1, 1]} : vector<8x288xf32> to vector<1x288xf32>
    %138 = arith.addf %136, %137 : vector<1x288xf32>
    %139 = vector.extract_strided_slice %128 {offsets = [2, 0], sizes = [1, 288], strides = [1, 1]} : vector<8x288xf32> to vector<1x288xf32>
    %140 = arith.mulf %139, %138 : vector<1x288xf32>
    %141 = vector.extract_strided_slice %129 {offsets = [2, 0], sizes = [1, 288], strides = [1, 1]} : vector<8x288xf32> to vector<1x288xf32>
    %142 = arith.addf %140, %141 : vector<1x288xf32>
    %143 = vector.extract_strided_slice %128 {offsets = [3, 0], sizes = [1, 288], strides = [1, 1]} : vector<8x288xf32> to vector<1x288xf32>
    %144 = arith.mulf %143, %142 : vector<1x288xf32>
    %145 = vector.extract_strided_slice %129 {offsets = [3, 0], sizes = [1, 288], strides = [1, 1]} : vector<8x288xf32> to vector<1x288xf32>
    %146 = arith.addf %144, %145 : vector<1x288xf32>
    %147 = vector.extract_strided_slice %128 {offsets = [4, 0], sizes = [1, 288], strides = [1, 1]} : vector<8x288xf32> to vector<1x288xf32>
    %148 = arith.mulf %147, %146 : vector<1x288xf32>
    %149 = vector.extract_strided_slice %129 {offsets = [4, 0], sizes = [1, 288], strides = [1, 1]} : vector<8x288xf32> to vector<1x288xf32>
    %150 = arith.addf %148, %149 : vector<1x288xf32>
    %151 = vector.extract_strided_slice %128 {offsets = [5, 0], sizes = [1, 288], strides = [1, 1]} : vector<8x288xf32> to vector<1x288xf32>
    %152 = arith.mulf %151, %150 : vector<1x288xf32>
    %153 = vector.extract_strided_slice %129 {offsets = [5, 0], sizes = [1, 288], strides = [1, 1]} : vector<8x288xf32> to vector<1x288xf32>
    %154 = arith.addf %152, %153 : vector<1x288xf32>
    %155 = vector.extract_strided_slice %128 {offsets = [6, 0], sizes = [1, 288], strides = [1, 1]} : vector<8x288xf32> to vector<1x288xf32>
    %156 = arith.mulf %155, %154 : vector<1x288xf32>
    %157 = vector.extract_strided_slice %129 {offsets = [6, 0], sizes = [1, 288], strides = [1, 1]} : vector<8x288xf32> to vector<1x288xf32>
    %158 = arith.addf %156, %157 : vector<1x288xf32>
    %159 = vector.extract_strided_slice %128 {offsets = [7, 0], sizes = [1, 288], strides = [1, 1]} : vector<8x288xf32> to vector<1x288xf32>
    %160 = arith.mulf %159, %158 : vector<1x288xf32>
    %161 = vector.extract_strided_slice %129 {offsets = [7, 0], sizes = [1, 288], strides = [1, 1]} : vector<8x288xf32> to vector<1x288xf32>
    %162 = arith.addf %160, %161 : vector<1x288xf32>
    %163 = tpu.concatenate %134, %138, %142, %146, %150, %154, %158, %162 in 0 : vector<1x288xf32>, vector<1x288xf32>, vector<1x288xf32>, vector<1x288xf32>, vector<1x288xf32>, vector<1x288xf32>, vector<1x288xf32>, vector<1x288xf32> -> vector<8x288xf32>
    %164 = arith.mulf %163, %130 : vector<8x288xf32>
    %c0_78 = arith.constant 0 : index
    %c0_79 = arith.constant 0 : index
    %165 = vector.load %arg11[%c0_78, %c0_79] : memref<288x72xf32, #tpu.memory_space<vmem>>, vector<288x72xf32>
    %cst_80 = arith.constant dense<0.000000e+00> : vector<8x72xf32>
    %166 = tpu.matmul %164, %165, %cst_80 {dimension_numbers = #tpu.dot_dimension_numbers<[1], [0], [0], [1], [0, 0, 1, 1], [], []>} : vector<8x288xf32>, vector<288x72xf32>, vector<8x72xf32> -> vector<8x72xf32>
    %c0_81 = arith.constant 0 : index
    %c0_82 = arith.constant 0 : index
    %167 = vector.load %arg22[%c0_81, %c0_82] : memref<64x72xf32, #tpu.memory_space<vmem>>, vector<8x72xf32>
    tpu.vector_store %arg22[%c0_81, %c0_82], %166 {strides = array<i32>} : memref<64x72xf32, #tpu.memory_space<vmem>>, vector<8x72xf32>,
    %c8_83 = arith.constant 8 : index
    %c0_84 = arith.constant 0 : index
    %168 = vector.load %arg19[%c8_83, %c0_84] : memref<64x288xf32, #tpu.memory_space<vmem>>, vector<8x288xf32>
    %c8_85 = arith.constant 8 : index
    %c0_86 = arith.constant 0 : index
    %169 = vector.load %arg20[%c8_85, %c0_86] : memref<64x288xf32, #tpu.memory_space<vmem>>, vector<8x288xf32>
    %c8_87 = arith.constant 8 : index
    %c0_88 = arith.constant 0 : index
    %170 = vector.load %arg21[%c8_87, %c0_88] : memref<64x288xf32, #tpu.memory_space<vmem>>, vector<8x288xf32>
    %171 = vector.extract_strided_slice %168 {offsets = [0, 0], sizes = [1, 288], strides = [1, 1]} : vector<8x288xf32> to vector<1x288xf32>
    %172 = arith.mulf %171, %162 : vector<1x288xf32>
    %173 = vector.extract_strided_slice %169 {offsets = [0, 0], sizes = [1, 288], strides = [1, 1]} : vector<8x288xf32> to vector<1x288xf32>
    %174 = arith.addf %172, %173 : vector<1x288xf32>
    %175 = vector.extract_strided_slice %168 {offsets = [1, 0], sizes = [1, 288], strides = [1, 1]} : vector<8x288xf32> to vector<1x288xf32>
    %176 = arith.mulf %175, %174 : vector<1x288xf32>
    %177 = vector.extract_strided_slice %169 {offsets = [1, 0], sizes = [1, 288], strides = [1, 1]} : vector<8x288xf32> to vector<1x288xf32>
    %178 = arith.addf %176, %177 : vector<1x288xf32>
    %179 = vector.extract_strided_slice %168 {offsets = [2, 0], sizes = [1, 288], strides = [1, 1]} : vector<8x288xf32> to vector<1x288xf32>
    %180 = arith.mulf %179, %178 : vector<1x288xf32>
    %181 = vector.extract_strided_slice %169 {offsets = [2, 0], sizes = [1, 288], strides = [1, 1]} : vector<8x288xf32> to vector<1x288xf32>
    %182 = arith.addf %180, %181 : vector<1x288xf32>
    %183 = vector.extract_strided_slice %168 {offsets = [3, 0], sizes = [1, 288], strides = [1, 1]} : vector<8x288xf32> to vector<1x288xf32>
    %184 = arith.mulf %183, %182 : vector<1x288xf32>
    %185 = vector.extract_strided_slice %169 {offsets = [3, 0], sizes = [1, 288], strides = [1, 1]} : vector<8x288xf32> to vector<1x288xf32>
    %186 = arith.addf %184, %185 : vector<1x288xf32>
    %187 = vector.extract_strided_slice %168 {offsets = [4, 0], sizes = [1, 288], strides = [1, 1]} : vector<8x288xf32> to vector<1x288xf32>
    %188 = arith.mulf %187, %186 : vector<1x288xf32>
    %189 = vector.extract_strided_slice %169 {offsets = [4, 0], sizes = [1, 288], strides = [1, 1]} : vector<8x288xf32> to vector<1x288xf32>
    %190 = arith.addf %188, %189 : vector<1x288xf32>
    %191 = vector.extract_strided_slice %168 {offsets = [5, 0], sizes = [1, 288], strides = [1, 1]} : vector<8x288xf32> to vector<1x288xf32>
    %192 = arith.mulf %191, %190 : vector<1x288xf32>
    %193 = vector.extract_strided_slice %169 {offsets = [5, 0], sizes = [1, 288], strides = [1, 1]} : vector<8x288xf32> to vector<1x288xf32>
    %194 = arith.addf %192, %193 : vector<1x288xf32>
    %195 = vector.extract_strided_slice %168 {offsets = [6, 0], sizes = [1, 288], strides = [1, 1]} : vector<8x288xf32> to vector<1x288xf32>
    %196 = arith.mulf %195, %194 : vector<1x288xf32>
    %197 = vector.extract_strided_slice %169 {offsets = [6, 0], sizes = [1, 288], strides = [1, 1]} : vector<8x288xf32> to vector<1x288xf32>
    %198 = arith.addf %196, %197 : vector<1x288xf32>
    %199 = vector.extract_strided_slice %168 {offsets = [7, 0], sizes = [1, 288], strides = [1, 1]} : vector<8x288xf32> to vector<1x288xf32>
    %200 = arith.mulf %199, %198 : vector<1x288xf32>
    %201 = vector.extract_strided_slice %169 {offsets = [7, 0], sizes = [1, 288], strides = [1, 1]} : vector<8x288xf32> to vector<1x288xf32>
    %202 = arith.addf %200, %201 : vector<1x288xf32>
    %203 = tpu.concatenate %174, %178, %182, %186, %190, %194, %198, %202 in 0 : vector<1x288xf32>, vector<1x288xf32>, vector<1x288xf32>, vector<1x288xf32>, vector<1x288xf32>, vector<1x288xf32>, vector<1x288xf32>, vector<1x288xf32> -> vector<8x288xf32>
    %204 = arith.mulf %203, %170 : vector<8x288xf32>
    %c0_89 = arith.constant 0 : index
    %c0_90 = arith.constant 0 : index
    %205 = vector.load %arg11[%c0_89, %c0_90] : memref<288x72xf32, #tpu.memory_space<vmem>>, vector<288x72xf32>
    %cst_91 = arith.constant dense<0.000000e+00> : vector<8x72xf32>
    %206 = tpu.matmul %204, %205, %cst_91 {dimension_numbers = #tpu.dot_dimension_numbers<[1], [0], [0], [1], [0, 0, 1, 1], [], []>} : vector<8x288xf32>, vector<288x72xf32>, vector<8x72xf32> -> vector<8x72xf32>
    %c8_92 = arith.constant 8 : index
    %c0_93 = arith.constant 0 : index
    %207 = vector.load %arg22[%c8_92, %c0_93] : memref<64x72xf32, #tpu.memory_space<vmem>>, vector<8x72xf32>
    tpu.vector_store %arg22[%c8_92, %c0_93], %206 {strides = array<i32>} : memref<64x72xf32, #tpu.memory_space<vmem>>, vector<8x72xf32>,
    %c16 = arith.constant 16 : index
    %c0_94 = arith.constant 0 : index
    %208 = vector.load %arg19[%c16, %c0_94] : memref<64x288xf32, #tpu.memory_space<vmem>>, vector<8x288xf32>
    %c16_95 = arith.constant 16 : index
    %c0_96 = arith.constant 0 : index
    %209 = vector.load %arg20[%c16_95, %c0_96] : memref<64x288xf32, #tpu.memory_space<vmem>>, vector<8x288xf32>
    %c16_97 = arith.constant 16 : index
    %c0_98 = arith.constant 0 : index
    %210 = vector.load %arg21[%c16_97, %c0_98] : memref<64x288xf32, #tpu.memory_space<vmem>>, vector<8x288xf32>
    %211 = vector.extract_strided_slice %208 {offsets = [0, 0], sizes = [1, 288], strides = [1, 1]} : vector<8x288xf32> to vector<1x288xf32>
    %212 = arith.mulf %211, %202 : vector<1x288xf32>
    %213 = vector.extract_strided_slice %209 {offsets = [0, 0], sizes = [1, 288], strides = [1, 1]} : vector<8x288xf32> to vector<1x288xf32>
    %214 = arith.addf %212, %213 : vector<1x288xf32>
    %215 = vector.extract_strided_slice %208 {offsets = [1, 0], sizes = [1, 288], strides = [1, 1]} : vector<8x288xf32> to vector<1x288xf32>
    %216 = arith.mulf %215, %214 : vector<1x288xf32>
    %217 = vector.extract_strided_slice %209 {offsets = [1, 0], sizes = [1, 288], strides = [1, 1]} : vector<8x288xf32> to vector<1x288xf32>
    %218 = arith.addf %216, %217 : vector<1x288xf32>
    %219 = vector.extract_strided_slice %208 {offsets = [2, 0], sizes = [1, 288], strides = [1, 1]} : vector<8x288xf32> to vector<1x288xf32>
    %220 = arith.mulf %219, %218 : vector<1x288xf32>
    %221 = vector.extract_strided_slice %209 {offsets = [2, 0], sizes = [1, 288], strides = [1, 1]} : vector<8x288xf32> to vector<1x288xf32>
    %222 = arith.addf %220, %221 : vector<1x288xf32>
    %223 = vector.extract_strided_slice %208 {offsets = [3, 0], sizes = [1, 288], strides = [1, 1]} : vector<8x288xf32> to vector<1x288xf32>
    %224 = arith.mulf %223, %222 : vector<1x288xf32>
    %225 = vector.extract_strided_slice %209 {offsets = [3, 0], sizes = [1, 288], strides = [1, 1]} : vector<8x288xf32> to vector<1x288xf32>
    %226 = arith.addf %224, %225 : vector<1x288xf32>
    %227 = vector.extract_strided_slice %208 {offsets = [4, 0], sizes = [1, 288], strides = [1, 1]} : vector<8x288xf32> to vector<1x288xf32>
    %228 = arith.mulf %227, %226 : vector<1x288xf32>
    %229 = vector.extract_strided_slice %209 {offsets = [4, 0], sizes = [1, 288], strides = [1, 1]} : vector<8x288xf32> to vector<1x288xf32>
    %230 = arith.addf %228, %229 : vector<1x288xf32>
    %231 = vector.extract_strided_slice %208 {offsets = [5, 0], sizes = [1, 288], strides = [1, 1]} : vector<8x288xf32> to vector<1x288xf32>
    %232 = arith.mulf %231, %230 : vector<1x288xf32>
    %233 = vector.extract_strided_slice %209 {offsets = [5, 0], sizes = [1, 288], strides = [1, 1]} : vector<8x288xf32> to vector<1x288xf32>
    %234 = arith.addf %232, %233 : vector<1x288xf32>
    %235 = vector.extract_strided_slice %208 {offsets = [6, 0], sizes = [1, 288], strides = [1, 1]} : vector<8x288xf32> to vector<1x288xf32>
    %236 = arith.mulf %235, %234 : vector<1x288xf32>
    %237 = vector.extract_strided_slice %209 {offsets = [6, 0], sizes = [1, 288], strides = [1, 1]} : vector<8x288xf32> to vector<1x288xf32>
    %238 = arith.addf %236, %237 : vector<1x288xf32>
    %239 = vector.extract_strided_slice %208 {offsets = [7, 0], sizes = [1, 288], strides = [1, 1]} : vector<8x288xf32> to vector<1x288xf32>
    %240 = arith.mulf %239, %238 : vector<1x288xf32>
    %241 = vector.extract_strided_slice %209 {offsets = [7, 0], sizes = [1, 288], strides = [1, 1]} : vector<8x288xf32> to vector<1x288xf32>
    %242 = arith.addf %240, %241 : vector<1x288xf32>
    %243 = tpu.concatenate %214, %218, %222, %226, %230, %234, %238, %242 in 0 : vector<1x288xf32>, vector<1x288xf32>, vector<1x288xf32>, vector<1x288xf32>, vector<1x288xf32>, vector<1x288xf32>, vector<1x288xf32>, vector<1x288xf32> -> vector<8x288xf32>
    %244 = arith.mulf %243, %210 : vector<8x288xf32>
    %c0_99 = arith.constant 0 : index
    %c0_100 = arith.constant 0 : index
    %245 = vector.load %arg11[%c0_99, %c0_100] : memref<288x72xf32, #tpu.memory_space<vmem>>, vector<288x72xf32>
    %cst_101 = arith.constant dense<0.000000e+00> : vector<8x72xf32>
    %246 = tpu.matmul %244, %245, %cst_101 {dimension_numbers = #tpu.dot_dimension_numbers<[1], [0], [0], [1], [0, 0, 1, 1], [], []>} : vector<8x288xf32>, vector<288x72xf32>, vector<8x72xf32> -> vector<8x72xf32>
    %c16_102 = arith.constant 16 : index
    %c0_103 = arith.constant 0 : index
    %247 = vector.load %arg22[%c16_102, %c0_103] : memref<64x72xf32, #tpu.memory_space<vmem>>, vector<8x72xf32>
    tpu.vector_store %arg22[%c16_102, %c0_103], %246 {strides = array<i32>} : memref<64x72xf32, #tpu.memory_space<vmem>>, vector<8x72xf32>,
    %c24 = arith.constant 24 : index
    %c0_104 = arith.constant 0 : index
    %248 = vector.load %arg19[%c24, %c0_104] : memref<64x288xf32, #tpu.memory_space<vmem>>, vector<8x288xf32>
    %c24_105 = arith.constant 24 : index
    %c0_106 = arith.constant 0 : index
    %249 = vector.load %arg20[%c24_105, %c0_106] : memref<64x288xf32, #tpu.memory_space<vmem>>, vector<8x288xf32>
    %c24_107 = arith.constant 24 : index
    %c0_108 = arith.constant 0 : index
    %250 = vector.load %arg21[%c24_107, %c0_108] : memref<64x288xf32, #tpu.memory_space<vmem>>, vector<8x288xf32>
    %251 = vector.extract_strided_slice %248 {offsets = [0, 0], sizes = [1, 288], strides = [1, 1]} : vector<8x288xf32> to vector<1x288xf32>
    %252 = arith.mulf %251, %242 : vector<1x288xf32>
    %253 = vector.extract_strided_slice %249 {offsets = [0, 0], sizes = [1, 288], strides = [1, 1]} : vector<8x288xf32> to vector<1x288xf32>
    %254 = arith.addf %252, %253 : vector<1x288xf32>
    %255 = vector.extract_strided_slice %248 {offsets = [1, 0], sizes = [1, 288], strides = [1, 1]} : vector<8x288xf32> to vector<1x288xf32>
    %256 = arith.mulf %255, %254 : vector<1x288xf32>
    %257 = vector.extract_strided_slice %249 {offsets = [1, 0], sizes = [1, 288], strides = [1, 1]} : vector<8x288xf32> to vector<1x288xf32>
    %258 = arith.addf %256, %257 : vector<1x288xf32>
    %259 = vector.extract_strided_slice %248 {offsets = [2, 0], sizes = [1, 288], strides = [1, 1]} : vector<8x288xf32> to vector<1x288xf32>
    %260 = arith.mulf %259, %258 : vector<1x288xf32>
    %261 = vector.extract_strided_slice %249 {offsets = [2, 0], sizes = [1, 288], strides = [1, 1]} : vector<8x288xf32> to vector<1x288xf32>
    %262 = arith.addf %260, %261 : vector<1x288xf32>
    %263 = vector.extract_strided_slice %248 {offsets = [3, 0], sizes = [1, 288], strides = [1, 1]} : vector<8x288xf32> to vector<1x288xf32>
    %264 = arith.mulf %263, %262 : vector<1x288xf32>
    %265 = vector.extract_strided_slice %249 {offsets = [3, 0], sizes = [1, 288], strides = [1, 1]} : vector<8x288xf32> to vector<1x288xf32>
    %266 = arith.addf %264, %265 : vector<1x288xf32>
    %267 = vector.extract_strided_slice %248 {offsets = [4, 0], sizes = [1, 288], strides = [1, 1]} : vector<8x288xf32> to vector<1x288xf32>
    %268 = arith.mulf %267, %266 : vector<1x288xf32>
    %269 = vector.extract_strided_slice %249 {offsets = [4, 0], sizes = [1, 288], strides = [1, 1]} : vector<8x288xf32> to vector<1x288xf32>
    %270 = arith.addf %268, %269 : vector<1x288xf32>
    %271 = vector.extract_strided_slice %248 {offsets = [5, 0], sizes = [1, 288], strides = [1, 1]} : vector<8x288xf32> to vector<1x288xf32>
    %272 = arith.mulf %271, %270 : vector<1x288xf32>
    %273 = vector.extract_strided_slice %249 {offsets = [5, 0], sizes = [1, 288], strides = [1, 1]} : vector<8x288xf32> to vector<1x288xf32>
    %274 = arith.addf %272, %273 : vector<1x288xf32>
    %275 = vector.extract_strided_slice %248 {offsets = [6, 0], sizes = [1, 288], strides = [1, 1]} : vector<8x288xf32> to vector<1x288xf32>
    %276 = arith.mulf %275, %274 : vector<1x288xf32>
    %277 = vector.extract_strided_slice %249 {offsets = [6, 0], sizes = [1, 288], strides = [1, 1]} : vector<8x288xf32> to vector<1x288xf32>
    %278 = arith.addf %276, %277 : vector<1x288xf32>
    %279 = vector.extract_strided_slice %248 {offsets = [7, 0], sizes = [1, 288], strides = [1, 1]} : vector<8x288xf32> to vector<1x288xf32>
    %280 = arith.mulf %279, %278 : vector<1x288xf32>
    %281 = vector.extract_strided_slice %249 {offsets = [7, 0], sizes = [1, 288], strides = [1, 1]} : vector<8x288xf32> to vector<1x288xf32>
    %282 = arith.addf %280, %281 : vector<1x288xf32>
    %283 = tpu.concatenate %254, %258, %262, %266, %270, %274, %278, %282 in 0 : vector<1x288xf32>, vector<1x288xf32>, vector<1x288xf32>, vector<1x288xf32>, vector<1x288xf32>, vector<1x288xf32>, vector<1x288xf32>, vector<1x288xf32> -> vector<8x288xf32>
    %284 = arith.mulf %283, %250 : vector<8x288xf32>
    %c0_109 = arith.constant 0 : index
    %c0_110 = arith.constant 0 : index
    %285 = vector.load %arg11[%c0_109, %c0_110] : memref<288x72xf32, #tpu.memory_space<vmem>>, vector<288x72xf32>
    %cst_111 = arith.constant dense<0.000000e+00> : vector<8x72xf32>
    %286 = tpu.matmul %284, %285, %cst_111 {dimension_numbers = #tpu.dot_dimension_numbers<[1], [0], [0], [1], [0, 0, 1, 1], [], []>} : vector<8x288xf32>, vector<288x72xf32>, vector<8x72xf32> -> vector<8x72xf32>
    %c24_112 = arith.constant 24 : index
    %c0_113 = arith.constant 0 : index
    %287 = vector.load %arg22[%c24_112, %c0_113] : memref<64x72xf32, #tpu.memory_space<vmem>>, vector<8x72xf32>
    tpu.vector_store %arg22[%c24_112, %c0_113], %286 {strides = array<i32>} : memref<64x72xf32, #tpu.memory_space<vmem>>, vector<8x72xf32>,
    %c32_114 = arith.constant 32 : index
    %c0_115 = arith.constant 0 : index
    %288 = vector.load %arg19[%c32_114, %c0_115] : memref<64x288xf32, #tpu.memory_space<vmem>>, vector<8x288xf32>
    %c32_116 = arith.constant 32 : index
    %c0_117 = arith.constant 0 : index
    %289 = vector.load %arg20[%c32_116, %c0_117] : memref<64x288xf32, #tpu.memory_space<vmem>>, vector<8x288xf32>
    %c32_118 = arith.constant 32 : index
    %c0_119 = arith.constant 0 : index
    %290 = vector.load %arg21[%c32_118, %c0_119] : memref<64x288xf32, #tpu.memory_space<vmem>>, vector<8x288xf32>
    %291 = vector.extract_strided_slice %288 {offsets = [0, 0], sizes = [1, 288], strides = [1, 1]} : vector<8x288xf32> to vector<1x288xf32>
    %292 = arith.mulf %291, %282 : vector<1x288xf32>
    %293 = vector.extract_strided_slice %289 {offsets = [0, 0], sizes = [1, 288], strides = [1, 1]} : vector<8x288xf32> to vector<1x288xf32>
    %294 = arith.addf %292, %293 : vector<1x288xf32>
    %295 = vector.extract_strided_slice %288 {offsets = [1, 0], sizes = [1, 288], strides = [1, 1]} : vector<8x288xf32> to vector<1x288xf32>
    %296 = arith.mulf %295, %294 : vector<1x288xf32>
    %297 = vector.extract_strided_slice %289 {offsets = [1, 0], sizes = [1, 288], strides = [1, 1]} : vector<8x288xf32> to vector<1x288xf32>
    %298 = arith.addf %296, %297 : vector<1x288xf32>
    %299 = vector.extract_strided_slice %288 {offsets = [2, 0], sizes = [1, 288], strides = [1, 1]} : vector<8x288xf32> to vector<1x288xf32>
    %300 = arith.mulf %299, %298 : vector<1x288xf32>
    %301 = vector.extract_strided_slice %289 {offsets = [2, 0], sizes = [1, 288], strides = [1, 1]} : vector<8x288xf32> to vector<1x288xf32>
    %302 = arith.addf %300, %301 : vector<1x288xf32>
    %303 = vector.extract_strided_slice %288 {offsets = [3, 0], sizes = [1, 288], strides = [1, 1]} : vector<8x288xf32> to vector<1x288xf32>
    %304 = arith.mulf %303, %302 : vector<1x288xf32>
    %305 = vector.extract_strided_slice %289 {offsets = [3, 0], sizes = [1, 288], strides = [1, 1]} : vector<8x288xf32> to vector<1x288xf32>
    %306 = arith.addf %304, %305 : vector<1x288xf32>
    %307 = vector.extract_strided_slice %288 {offsets = [4, 0], sizes = [1, 288], strides = [1, 1]} : vector<8x288xf32> to vector<1x288xf32>
    %308 = arith.mulf %307, %306 : vector<1x288xf32>
    %309 = vector.extract_strided_slice %289 {offsets = [4, 0], sizes = [1, 288], strides = [1, 1]} : vector<8x288xf32> to vector<1x288xf32>
    %310 = arith.addf %308, %309 : vector<1x288xf32>
    %311 = vector.extract_strided_slice %288 {offsets = [5, 0], sizes = [1, 288], strides = [1, 1]} : vector<8x288xf32> to vector<1x288xf32>
    %312 = arith.mulf %311, %310 : vector<1x288xf32>
    %313 = vector.extract_strided_slice %289 {offsets = [5, 0], sizes = [1, 288], strides = [1, 1]} : vector<8x288xf32> to vector<1x288xf32>
    %314 = arith.addf %312, %313 : vector<1x288xf32>
    %315 = vector.extract_strided_slice %288 {offsets = [6, 0], sizes = [1, 288], strides = [1, 1]} : vector<8x288xf32> to vector<1x288xf32>
    %316 = arith.mulf %315, %314 : vector<1x288xf32>
    %317 = vector.extract_strided_slice %289 {offsets = [6, 0], sizes = [1, 288], strides = [1, 1]} : vector<8x288xf32> to vector<1x288xf32>
    %318 = arith.addf %316, %317 : vector<1x288xf32>
    %319 = vector.extract_strided_slice %288 {offsets = [7, 0], sizes = [1, 288], strides = [1, 1]} : vector<8x288xf32> to vector<1x288xf32>
    %320 = arith.mulf %319, %318 : vector<1x288xf32>
    %321 = vector.extract_strided_slice %289 {offsets = [7, 0], sizes = [1, 288], strides = [1, 1]} : vector<8x288xf32> to vector<1x288xf32>
    %322 = arith.addf %320, %321 : vector<1x288xf32>
    %323 = tpu.concatenate %294, %298, %302, %306, %310, %314, %318, %322 in 0 : vector<1x288xf32>, vector<1x288xf32>, vector<1x288xf32>, vector<1x288xf32>, vector<1x288xf32>, vector<1x288xf32>, vector<1x288xf32>, vector<1x288xf32> -> vector<8x288xf32>
    %324 = arith.mulf %323, %290 : vector<8x288xf32>
    %c0_120 = arith.constant 0 : index
    %c0_121 = arith.constant 0 : index
    %325 = vector.load %arg11[%c0_120, %c0_121] : memref<288x72xf32, #tpu.memory_space<vmem>>, vector<288x72xf32>
    %cst_122 = arith.constant dense<0.000000e+00> : vector<8x72xf32>
    %326 = tpu.matmul %324, %325, %cst_122 {dimension_numbers = #tpu.dot_dimension_numbers<[1], [0], [0], [1], [0, 0, 1, 1], [], []>} : vector<8x288xf32>, vector<288x72xf32>, vector<8x72xf32> -> vector<8x72xf32>
    %c32_123 = arith.constant 32 : index
    %c0_124 = arith.constant 0 : index
    %327 = vector.load %arg22[%c32_123, %c0_124] : memref<64x72xf32, #tpu.memory_space<vmem>>, vector<8x72xf32>
    tpu.vector_store %arg22[%c32_123, %c0_124], %326 {strides = array<i32>} : memref<64x72xf32, #tpu.memory_space<vmem>>, vector<8x72xf32>,
    %c40 = arith.constant 40 : index
    %c0_125 = arith.constant 0 : index
    %328 = vector.load %arg19[%c40, %c0_125] : memref<64x288xf32, #tpu.memory_space<vmem>>, vector<8x288xf32>
    %c40_126 = arith.constant 40 : index
    %c0_127 = arith.constant 0 : index
    %329 = vector.load %arg20[%c40_126, %c0_127] : memref<64x288xf32, #tpu.memory_space<vmem>>, vector<8x288xf32>
    %c40_128 = arith.constant 40 : index
    %c0_129 = arith.constant 0 : index
    %330 = vector.load %arg21[%c40_128, %c0_129] : memref<64x288xf32, #tpu.memory_space<vmem>>, vector<8x288xf32>
    %331 = vector.extract_strided_slice %328 {offsets = [0, 0], sizes = [1, 288], strides = [1, 1]} : vector<8x288xf32> to vector<1x288xf32>
    %332 = arith.mulf %331, %322 : vector<1x288xf32>
    %333 = vector.extract_strided_slice %329 {offsets = [0, 0], sizes = [1, 288], strides = [1, 1]} : vector<8x288xf32> to vector<1x288xf32>
    %334 = arith.addf %332, %333 : vector<1x288xf32>
    %335 = vector.extract_strided_slice %328 {offsets = [1, 0], sizes = [1, 288], strides = [1, 1]} : vector<8x288xf32> to vector<1x288xf32>
    %336 = arith.mulf %335, %334 : vector<1x288xf32>
    %337 = vector.extract_strided_slice %329 {offsets = [1, 0], sizes = [1, 288], strides = [1, 1]} : vector<8x288xf32> to vector<1x288xf32>
    %338 = arith.addf %336, %337 : vector<1x288xf32>
    %339 = vector.extract_strided_slice %328 {offsets = [2, 0], sizes = [1, 288], strides = [1, 1]} : vector<8x288xf32> to vector<1x288xf32>
    %340 = arith.mulf %339, %338 : vector<1x288xf32>
    %341 = vector.extract_strided_slice %329 {offsets = [2, 0], sizes = [1, 288], strides = [1, 1]} : vector<8x288xf32> to vector<1x288xf32>
    %342 = arith.addf %340, %341 : vector<1x288xf32>
    %343 = vector.extract_strided_slice %328 {offsets = [3, 0], sizes = [1, 288], strides = [1, 1]} : vector<8x288xf32> to vector<1x288xf32>
    %344 = arith.mulf %343, %342 : vector<1x288xf32>
    %345 = vector.extract_strided_slice %329 {offsets = [3, 0], sizes = [1, 288], strides = [1, 1]} : vector<8x288xf32> to vector<1x288xf32>
    %346 = arith.addf %344, %345 : vector<1x288xf32>
    %347 = vector.extract_strided_slice %328 {offsets = [4, 0], sizes = [1, 288], strides = [1, 1]} : vector<8x288xf32> to vector<1x288xf32>
    %348 = arith.mulf %347, %346 : vector<1x288xf32>
    %349 = vector.extract_strided_slice %329 {offsets = [4, 0], sizes = [1, 288], strides = [1, 1]} : vector<8x288xf32> to vector<1x288xf32>
    %350 = arith.addf %348, %349 : vector<1x288xf32>
    %351 = vector.extract_strided_slice %328 {offsets = [5, 0], sizes = [1, 288], strides = [1, 1]} : vector<8x288xf32> to vector<1x288xf32>
    %352 = arith.mulf %351, %350 : vector<1x288xf32>
    %353 = vector.extract_strided_slice %329 {offsets = [5, 0], sizes = [1, 288], strides = [1, 1]} : vector<8x288xf32> to vector<1x288xf32>
    %354 = arith.addf %352, %353 : vector<1x288xf32>
    %355 = vector.extract_strided_slice %328 {offsets = [6, 0], sizes = [1, 288], strides = [1, 1]} : vector<8x288xf32> to vector<1x288xf32>
    %356 = arith.mulf %355, %354 : vector<1x288xf32>
    %357 = vector.extract_strided_slice %329 {offsets = [6, 0], sizes = [1, 288], strides = [1, 1]} : vector<8x288xf32> to vector<1x288xf32>
    %358 = arith.addf %356, %357 : vector<1x288xf32>
    %359 = vector.extract_strided_slice %328 {offsets = [7, 0], sizes = [1, 288], strides = [1, 1]} : vector<8x288xf32> to vector<1x288xf32>
    %360 = arith.mulf %359, %358 : vector<1x288xf32>
    %361 = vector.extract_strided_slice %329 {offsets = [7, 0], sizes = [1, 288], strides = [1, 1]} : vector<8x288xf32> to vector<1x288xf32>
    %362 = arith.addf %360, %361 : vector<1x288xf32>
    %363 = tpu.concatenate %334, %338, %342, %346, %350, %354, %358, %362 in 0 : vector<1x288xf32>, vector<1x288xf32>, vector<1x288xf32>, vector<1x288xf32>, vector<1x288xf32>, vector<1x288xf32>, vector<1x288xf32>, vector<1x288xf32> -> vector<8x288xf32>
    %364 = arith.mulf %363, %330 : vector<8x288xf32>
    %c0_130 = arith.constant 0 : index
    %c0_131 = arith.constant 0 : index
    %365 = vector.load %arg11[%c0_130, %c0_131] : memref<288x72xf32, #tpu.memory_space<vmem>>, vector<288x72xf32>
    %cst_132 = arith.constant dense<0.000000e+00> : vector<8x72xf32>
    %366 = tpu.matmul %364, %365, %cst_132 {dimension_numbers = #tpu.dot_dimension_numbers<[1], [0], [0], [1], [0, 0, 1, 1], [], []>} : vector<8x288xf32>, vector<288x72xf32>, vector<8x72xf32> -> vector<8x72xf32>
    %c40_133 = arith.constant 40 : index
    %c0_134 = arith.constant 0 : index
    %367 = vector.load %arg22[%c40_133, %c0_134] : memref<64x72xf32, #tpu.memory_space<vmem>>, vector<8x72xf32>
    tpu.vector_store %arg22[%c40_133, %c0_134], %366 {strides = array<i32>} : memref<64x72xf32, #tpu.memory_space<vmem>>, vector<8x72xf32>,
    %c48 = arith.constant 48 : index
    %c0_135 = arith.constant 0 : index
    %368 = vector.load %arg19[%c48, %c0_135] : memref<64x288xf32, #tpu.memory_space<vmem>>, vector<8x288xf32>
    %c48_136 = arith.constant 48 : index
    %c0_137 = arith.constant 0 : index
    %369 = vector.load %arg20[%c48_136, %c0_137] : memref<64x288xf32, #tpu.memory_space<vmem>>, vector<8x288xf32>
    %c48_138 = arith.constant 48 : index
    %c0_139 = arith.constant 0 : index
    %370 = vector.load %arg21[%c48_138, %c0_139] : memref<64x288xf32, #tpu.memory_space<vmem>>, vector<8x288xf32>
    %371 = vector.extract_strided_slice %368 {offsets = [0, 0], sizes = [1, 288], strides = [1, 1]} : vector<8x288xf32> to vector<1x288xf32>
    %372 = arith.mulf %371, %362 : vector<1x288xf32>
    %373 = vector.extract_strided_slice %369 {offsets = [0, 0], sizes = [1, 288], strides = [1, 1]} : vector<8x288xf32> to vector<1x288xf32>
    %374 = arith.addf %372, %373 : vector<1x288xf32>
    %375 = vector.extract_strided_slice %368 {offsets = [1, 0], sizes = [1, 288], strides = [1, 1]} : vector<8x288xf32> to vector<1x288xf32>
    %376 = arith.mulf %375, %374 : vector<1x288xf32>
    %377 = vector.extract_strided_slice %369 {offsets = [1, 0], sizes = [1, 288], strides = [1, 1]} : vector<8x288xf32> to vector<1x288xf32>
    %378 = arith.addf %376, %377 : vector<1x288xf32>
    %379 = vector.extract_strided_slice %368 {offsets = [2, 0], sizes = [1, 288], strides = [1, 1]} : vector<8x288xf32> to vector<1x288xf32>
    %380 = arith.mulf %379, %378 : vector<1x288xf32>
    %381 = vector.extract_strided_slice %369 {offsets = [2, 0], sizes = [1, 288], strides = [1, 1]} : vector<8x288xf32> to vector<1x288xf32>
    %382 = arith.addf %380, %381 : vector<1x288xf32>
    %383 = vector.extract_strided_slice %368 {offsets = [3, 0], sizes = [1, 288], strides = [1, 1]} : vector<8x288xf32> to vector<1x288xf32>
    %384 = arith.mulf %383, %382 : vector<1x288xf32>
    %385 = vector.extract_strided_slice %369 {offsets = [3, 0], sizes = [1, 288], strides = [1, 1]} : vector<8x288xf32> to vector<1x288xf32>
    %386 = arith.addf %384, %385 : vector<1x288xf32>
    %387 = vector.extract_strided_slice %368 {offsets = [4, 0], sizes = [1, 288], strides = [1, 1]} : vector<8x288xf32> to vector<1x288xf32>
    %388 = arith.mulf %387, %386 : vector<1x288xf32>
    %389 = vector.extract_strided_slice %369 {offsets = [4, 0], sizes = [1, 288], strides = [1, 1]} : vector<8x288xf32> to vector<1x288xf32>
    %390 = arith.addf %388, %389 : vector<1x288xf32>
    %391 = vector.extract_strided_slice %368 {offsets = [5, 0], sizes = [1, 288], strides = [1, 1]} : vector<8x288xf32> to vector<1x288xf32>
    %392 = arith.mulf %391, %390 : vector<1x288xf32>
    %393 = vector.extract_strided_slice %369 {offsets = [5, 0], sizes = [1, 288], strides = [1, 1]} : vector<8x288xf32> to vector<1x288xf32>
    %394 = arith.addf %392, %393 : vector<1x288xf32>
    %395 = vector.extract_strided_slice %368 {offsets = [6, 0], sizes = [1, 288], strides = [1, 1]} : vector<8x288xf32> to vector<1x288xf32>
    %396 = arith.mulf %395, %394 : vector<1x288xf32>
    %397 = vector.extract_strided_slice %369 {offsets = [6, 0], sizes = [1, 288], strides = [1, 1]} : vector<8x288xf32> to vector<1x288xf32>
    %398 = arith.addf %396, %397 : vector<1x288xf32>
    %399 = vector.extract_strided_slice %368 {offsets = [7, 0], sizes = [1, 288], strides = [1, 1]} : vector<8x288xf32> to vector<1x288xf32>
    %400 = arith.mulf %399, %398 : vector<1x288xf32>
    %401 = vector.extract_strided_slice %369 {offsets = [7, 0], sizes = [1, 288], strides = [1, 1]} : vector<8x288xf32> to vector<1x288xf32>
    %402 = arith.addf %400, %401 : vector<1x288xf32>
    %403 = tpu.concatenate %374, %378, %382, %386, %390, %394, %398, %402 in 0 : vector<1x288xf32>, vector<1x288xf32>, vector<1x288xf32>, vector<1x288xf32>, vector<1x288xf32>, vector<1x288xf32>, vector<1x288xf32>, vector<1x288xf32> -> vector<8x288xf32>
    %404 = arith.mulf %403, %370 : vector<8x288xf32>
    %c0_140 = arith.constant 0 : index
    %c0_141 = arith.constant 0 : index
    %405 = vector.load %arg11[%c0_140, %c0_141] : memref<288x72xf32, #tpu.memory_space<vmem>>, vector<288x72xf32>
    %cst_142 = arith.constant dense<0.000000e+00> : vector<8x72xf32>
    %406 = tpu.matmul %404, %405, %cst_142 {dimension_numbers = #tpu.dot_dimension_numbers<[1], [0], [0], [1], [0, 0, 1, 1], [], []>} : vector<8x288xf32>, vector<288x72xf32>, vector<8x72xf32> -> vector<8x72xf32>
    %c48_143 = arith.constant 48 : index
    %c0_144 = arith.constant 0 : index
    %407 = vector.load %arg22[%c48_143, %c0_144] : memref<64x72xf32, #tpu.memory_space<vmem>>, vector<8x72xf32>
    tpu.vector_store %arg22[%c48_143, %c0_144], %406 {strides = array<i32>} : memref<64x72xf32, #tpu.memory_space<vmem>>, vector<8x72xf32>,
    %c56 = arith.constant 56 : index
    %c0_145 = arith.constant 0 : index
    %408 = vector.load %arg19[%c56, %c0_145] : memref<64x288xf32, #tpu.memory_space<vmem>>, vector<8x288xf32>
    %c56_146 = arith.constant 56 : index
    %c0_147 = arith.constant 0 : index
    %409 = vector.load %arg20[%c56_146, %c0_147] : memref<64x288xf32, #tpu.memory_space<vmem>>, vector<8x288xf32>
    %c56_148 = arith.constant 56 : index
    %c0_149 = arith.constant 0 : index
    %410 = vector.load %arg21[%c56_148, %c0_149] : memref<64x288xf32, #tpu.memory_space<vmem>>, vector<8x288xf32>
    %411 = vector.extract_strided_slice %408 {offsets = [0, 0], sizes = [1, 288], strides = [1, 1]} : vector<8x288xf32> to vector<1x288xf32>
    %412 = arith.mulf %411, %402 : vector<1x288xf32>
    %413 = vector.extract_strided_slice %409 {offsets = [0, 0], sizes = [1, 288], strides = [1, 1]} : vector<8x288xf32> to vector<1x288xf32>
    %414 = arith.addf %412, %413 : vector<1x288xf32>
    %415 = vector.extract_strided_slice %408 {offsets = [1, 0], sizes = [1, 288], strides = [1, 1]} : vector<8x288xf32> to vector<1x288xf32>
    %416 = arith.mulf %415, %414 : vector<1x288xf32>
    %417 = vector.extract_strided_slice %409 {offsets = [1, 0], sizes = [1, 288], strides = [1, 1]} : vector<8x288xf32> to vector<1x288xf32>
    %418 = arith.addf %416, %417 : vector<1x288xf32>
    %419 = vector.extract_strided_slice %408 {offsets = [2, 0], sizes = [1, 288], strides = [1, 1]} : vector<8x288xf32> to vector<1x288xf32>
    %420 = arith.mulf %419, %418 : vector<1x288xf32>
    %421 = vector.extract_strided_slice %409 {offsets = [2, 0], sizes = [1, 288], strides = [1, 1]} : vector<8x288xf32> to vector<1x288xf32>
    %422 = arith.addf %420, %421 : vector<1x288xf32>
    %423 = vector.extract_strided_slice %408 {offsets = [3, 0], sizes = [1, 288], strides = [1, 1]} : vector<8x288xf32> to vector<1x288xf32>
    %424 = arith.mulf %423, %422 : vector<1x288xf32>
    %425 = vector.extract_strided_slice %409 {offsets = [3, 0], sizes = [1, 288], strides = [1, 1]} : vector<8x288xf32> to vector<1x288xf32>
    %426 = arith.addf %424, %425 : vector<1x288xf32>
    %427 = vector.extract_strided_slice %408 {offsets = [4, 0], sizes = [1, 288], strides = [1, 1]} : vector<8x288xf32> to vector<1x288xf32>
    %428 = arith.mulf %427, %426 : vector<1x288xf32>
    %429 = vector.extract_strided_slice %409 {offsets = [4, 0], sizes = [1, 288], strides = [1, 1]} : vector<8x288xf32> to vector<1x288xf32>
    %430 = arith.addf %428, %429 : vector<1x288xf32>
    %431 = vector.extract_strided_slice %408 {offsets = [5, 0], sizes = [1, 288], strides = [1, 1]} : vector<8x288xf32> to vector<1x288xf32>
    %432 = arith.mulf %431, %430 : vector<1x288xf32>
    %433 = vector.extract_strided_slice %409 {offsets = [5, 0], sizes = [1, 288], strides = [1, 1]} : vector<8x288xf32> to vector<1x288xf32>
    %434 = arith.addf %432, %433 : vector<1x288xf32>
    %435 = vector.extract_strided_slice %408 {offsets = [6, 0], sizes = [1, 288], strides = [1, 1]} : vector<8x288xf32> to vector<1x288xf32>
    %436 = arith.mulf %435, %434 : vector<1x288xf32>
    %437 = vector.extract_strided_slice %409 {offsets = [6, 0], sizes = [1, 288], strides = [1, 1]} : vector<8x288xf32> to vector<1x288xf32>
    %438 = arith.addf %436, %437 : vector<1x288xf32>
    %439 = vector.extract_strided_slice %408 {offsets = [7, 0], sizes = [1, 288], strides = [1, 1]} : vector<8x288xf32> to vector<1x288xf32>
    %440 = arith.mulf %439, %438 : vector<1x288xf32>
    %441 = vector.extract_strided_slice %409 {offsets = [7, 0], sizes = [1, 288], strides = [1, 1]} : vector<8x288xf32> to vector<1x288xf32>
    %442 = arith.addf %440, %441 : vector<1x288xf32>
    %443 = tpu.concatenate %414, %418, %422, %426, %430, %434, %438, %442 in 0 : vector<1x288xf32>, vector<1x288xf32>, vector<1x288xf32>, vector<1x288xf32>, vector<1x288xf32>, vector<1x288xf32>, vector<1x288xf32>, vector<1x288xf32> -> vector<8x288xf32>
    %444 = arith.mulf %443, %410 : vector<8x288xf32>
    %c0_150 = arith.constant 0 : index
    %c0_151 = arith.constant 0 : index
    %445 = vector.load %arg11[%c0_150, %c0_151] : memref<288x72xf32, #tpu.memory_space<vmem>>, vector<288x72xf32>
    %cst_152 = arith.constant dense<0.000000e+00> : vector<8x72xf32>
    %446 = tpu.matmul %444, %445, %cst_152 {dimension_numbers = #tpu.dot_dimension_numbers<[1], [0], [0], [1], [0, 0, 1, 1], [], []>} : vector<8x288xf32>, vector<288x72xf32>, vector<8x72xf32> -> vector<8x72xf32>
    %c56_153 = arith.constant 56 : index
    %c0_154 = arith.constant 0 : index
    %447 = vector.load %arg22[%c56_153, %c0_154] : memref<64x72xf32, #tpu.memory_space<vmem>>, vector<8x72xf32>
    tpu.vector_store %arg22[%c56_153, %c0_154], %446 {strides = array<i32>} : memref<64x72xf32, #tpu.memory_space<vmem>>, vector<8x72xf32>,
    %c0_155 = arith.constant 0 : index
    %c0_156 = arith.constant 0 : index
    %448 = vector.load %arg22[%c0_155, %c0_156] : memref<64x72xf32, #tpu.memory_space<vmem>>, vector<64x72xf32>
    %c7 = arith.constant 7 : index
    %c0_157 = arith.constant 0 : index
    %449 = vector.load %arg9[%c7, %c0_157] : memref<8x72xf32, #tpu.memory_space<vmem>>, vector<1x72xf32>
    %450 = vector.broadcast %449 : vector<1x72xf32> to vector<64x72xf32>
    %451 = arith.mulf %450, %88 : vector<64x72xf32>
    %452 = arith.addf %448, %451 : vector<64x72xf32>
    %453 = arith.negf %48 : vector<64x72xf32>
    %454 = math.exp %453 : vector<64x72xf32>
    %cst_158 = arith.constant 1.000000e+00 : f32
    %455 = vector.broadcast %cst_158 : f32 to vector<64x72xf32>
    %456 = arith.addf %455, %454 : vector<64x72xf32>
    %457 = arith.divf %455, %456 : vector<64x72xf32>
    %458 = arith.mulf %48, %457 : vector<64x72xf32>
    %459 = arith.mulf %452, %458 : vector<64x72xf32>
    %460 = arith.truncf %459 : vector<64x72xf32> to vector<64x72xbf16>
    %c0_159 = arith.constant 0 : index
    %c0_160 = arith.constant 0 : index
    %461 = vector.load %arg13[%c0_159, %c0_160] : memref<72x36xbf16, #tpu.memory_space<vmem>>, vector<72x36xbf16>
    %cst_161 = arith.constant dense<0.000000e+00> : vector<64x36xf32>
    %462 = tpu.matmul %460, %461, %cst_161 {dimension_numbers = #tpu.dot_dimension_numbers<[1], [0], [0], [1], [0, 0, 1, 1], [], []>} : vector<64x72xbf16>, vector<72x36xbf16>, vector<64x36xf32> -> vector<64x36xf32>
    %c0_162 = arith.constant 0 : index
    %c0_163 = arith.constant 0 : index
    %463 = vector.load %arg14[%c0_162, %c0_163] : memref<576x64xbf16, #tpu.memory_space<vmem>>, vector<576x64xbf16>
    %464 = arith.truncf %462 : vector<64x36xf32> to vector<64x36xbf16>
    %cst_164 = arith.constant dense<0.000000e+00> : vector<576x36xf32>
    %465 = tpu.matmul %463, %464, %cst_164 {dimension_numbers = #tpu.dot_dimension_numbers<[1], [0], [0], [1], [0, 0, 1, 1], [], []>} : vector<576x64xbf16>, vector<64x36xbf16>, vector<576x36xf32> -> vector<576x36xf32>
    %466 = arith.truncf %465 : vector<576x36xf32> to vector<576x36xbf16>
    %467 = vector.extract_strided_slice %466 {offsets = [0, 0], sizes = [64, 36], strides = [1, 1]} : vector<576x36xbf16> to vector<64x36xbf16>
    %c0_165 = arith.constant 0 : index
    %c0_166 = arith.constant 0 : index
    %c0_167 = arith.constant 0 : index
    %468 = vector.load %arg15[%c0_165, %c0_166, %c0_167] : memref<9x36x36xbf16, #tpu.memory_space<vmem>>, vector<1x36x36xbf16>
    %469 = vector.shape_cast %468 : vector<1x36x36xbf16> to vector<36x36xbf16>
    %cst_168 = arith.constant dense<0.000000e+00> : vector<64x36xf32>
    %470 = tpu.matmul %467, %469, %cst_168 {dimension_numbers = #tpu.dot_dimension_numbers<[1], [0], [0], [1], [0, 0, 1, 1], [], []>} : vector<64x36xbf16>, vector<36x36xbf16>, vector<64x36xf32> -> vector<64x36xf32>
    %471 = vector.extract_strided_slice %466 {offsets = [64, 0], sizes = [64, 36], strides = [1, 1]} : vector<576x36xbf16> to vector<64x36xbf16>
    %c1_169 = arith.constant 1 : index
    %c0_170 = arith.constant 0 : index
    %c0_171 = arith.constant 0 : index
    %472 = vector.load %arg15[%c1_169, %c0_170, %c0_171] : memref<9x36x36xbf16, #tpu.memory_space<vmem>>, vector<1x36x36xbf16>
    %473 = vector.shape_cast %472 : vector<1x36x36xbf16> to vector<36x36xbf16>
    %cst_172 = arith.constant dense<0.000000e+00> : vector<64x36xf32>
    %474 = tpu.matmul %471, %473, %cst_172 {dimension_numbers = #tpu.dot_dimension_numbers<[1], [0], [0], [1], [0, 0, 1, 1], [], []>} : vector<64x36xbf16>, vector<36x36xbf16>, vector<64x36xf32> -> vector<64x36xf32>
    %475 = arith.addf %470, %474 : vector<64x36xf32>
    %476 = vector.extract_strided_slice %466 {offsets = [128, 0], sizes = [64, 36], strides = [1, 1]} : vector<576x36xbf16> to vector<64x36xbf16>
    %c2_173 = arith.constant 2 : index
    %c0_174 = arith.constant 0 : index
    %c0_175 = arith.constant 0 : index
    %477 = vector.load %arg15[%c2_173, %c0_174, %c0_175] : memref<9x36x36xbf16, #tpu.memory_space<vmem>>, vector<1x36x36xbf16>
    %478 = vector.shape_cast %477 : vector<1x36x36xbf16> to vector<36x36xbf16>
    %cst_176 = arith.constant dense<0.000000e+00> : vector<64x36xf32>
    %479 = tpu.matmul %476, %478, %cst_176 {dimension_numbers = #tpu.dot_dimension_numbers<[1], [0], [0], [1], [0, 0, 1, 1], [], []>} : vector<64x36xbf16>, vector<36x36xbf16>, vector<64x36xf32> -> vector<64x36xf32>
    %480 = arith.addf %475, %479 : vector<64x36xf32>
    %481 = vector.extract_strided_slice %466 {offsets = [192, 0], sizes = [64, 36], strides = [1, 1]} : vector<576x36xbf16> to vector<64x36xbf16>
    %c3_177 = arith.constant 3 : index
    %c0_178 = arith.constant 0 : index
    %c0_179 = arith.constant 0 : index
    %482 = vector.load %arg15[%c3_177, %c0_178, %c0_179] : memref<9x36x36xbf16, #tpu.memory_space<vmem>>, vector<1x36x36xbf16>
    %483 = vector.shape_cast %482 : vector<1x36x36xbf16> to vector<36x36xbf16>
    %cst_180 = arith.constant dense<0.000000e+00> : vector<64x36xf32>
    %484 = tpu.matmul %481, %483, %cst_180 {dimension_numbers = #tpu.dot_dimension_numbers<[1], [0], [0], [1], [0, 0, 1, 1], [], []>} : vector<64x36xbf16>, vector<36x36xbf16>, vector<64x36xf32> -> vector<64x36xf32>
    %485 = arith.addf %480, %484 : vector<64x36xf32>
    %486 = vector.extract_strided_slice %466 {offsets = [256, 0], sizes = [64, 36], strides = [1, 1]} : vector<576x36xbf16> to vector<64x36xbf16>
    %c4_181 = arith.constant 4 : index
    %c0_182 = arith.constant 0 : index
    %c0_183 = arith.constant 0 : index
    %487 = vector.load %arg15[%c4_181, %c0_182, %c0_183] : memref<9x36x36xbf16, #tpu.memory_space<vmem>>, vector<1x36x36xbf16>
    %488 = vector.shape_cast %487 : vector<1x36x36xbf16> to vector<36x36xbf16>
    %cst_184 = arith.constant dense<0.000000e+00> : vector<64x36xf32>
    %489 = tpu.matmul %486, %488, %cst_184 {dimension_numbers = #tpu.dot_dimension_numbers<[1], [0], [0], [1], [0, 0, 1, 1], [], []>} : vector<64x36xbf16>, vector<36x36xbf16>, vector<64x36xf32> -> vector<64x36xf32>
    %490 = arith.addf %485, %489 : vector<64x36xf32>
    %491 = vector.extract_strided_slice %466 {offsets = [320, 0], sizes = [64, 36], strides = [1, 1]} : vector<576x36xbf16> to vector<64x36xbf16>
    %c5_185 = arith.constant 5 : index
    %c0_186 = arith.constant 0 : index
    %c0_187 = arith.constant 0 : index
    %492 = vector.load %arg15[%c5_185, %c0_186, %c0_187] : memref<9x36x36xbf16, #tpu.memory_space<vmem>>, vector<1x36x36xbf16>
    %493 = vector.shape_cast %492 : vector<1x36x36xbf16> to vector<36x36xbf16>
    %cst_188 = arith.constant dense<0.000000e+00> : vector<64x36xf32>
    %494 = tpu.matmul %491, %493, %cst_188 {dimension_numbers = #tpu.dot_dimension_numbers<[1], [0], [0], [1], [0, 0, 1, 1], [], []>} : vector<64x36xbf16>, vector<36x36xbf16>, vector<64x36xf32> -> vector<64x36xf32>
    %495 = arith.addf %490, %494 : vector<64x36xf32>
    %496 = vector.extract_strided_slice %466 {offsets = [384, 0], sizes = [64, 36], strides = [1, 1]} : vector<576x36xbf16> to vector<64x36xbf16>
    %c6_189 = arith.constant 6 : index
    %c0_190 = arith.constant 0 : index
    %c0_191 = arith.constant 0 : index
    %497 = vector.load %arg15[%c6_189, %c0_190, %c0_191] : memref<9x36x36xbf16, #tpu.memory_space<vmem>>, vector<1x36x36xbf16>
    %498 = vector.shape_cast %497 : vector<1x36x36xbf16> to vector<36x36xbf16>
    %cst_192 = arith.constant dense<0.000000e+00> : vector<64x36xf32>
    %499 = tpu.matmul %496, %498, %cst_192 {dimension_numbers = #tpu.dot_dimension_numbers<[1], [0], [0], [1], [0, 0, 1, 1], [], []>} : vector<64x36xbf16>, vector<36x36xbf16>, vector<64x36xf32> -> vector<64x36xf32>
    %500 = arith.addf %495, %499 : vector<64x36xf32>
    %501 = vector.extract_strided_slice %466 {offsets = [448, 0], sizes = [64, 36], strides = [1, 1]} : vector<576x36xbf16> to vector<64x36xbf16>
    %c7_193 = arith.constant 7 : index
    %c0_194 = arith.constant 0 : index
    %c0_195 = arith.constant 0 : index
    %502 = vector.load %arg15[%c7_193, %c0_194, %c0_195] : memref<9x36x36xbf16, #tpu.memory_space<vmem>>, vector<1x36x36xbf16>
    %503 = vector.shape_cast %502 : vector<1x36x36xbf16> to vector<36x36xbf16>
    %cst_196 = arith.constant dense<0.000000e+00> : vector<64x36xf32>
    %504 = tpu.matmul %501, %503, %cst_196 {dimension_numbers = #tpu.dot_dimension_numbers<[1], [0], [0], [1], [0, 0, 1, 1], [], []>} : vector<64x36xbf16>, vector<36x36xbf16>, vector<64x36xf32> -> vector<64x36xf32>
    %505 = arith.addf %500, %504 : vector<64x36xf32>
    %506 = vector.extract_strided_slice %466 {offsets = [512, 0], sizes = [64, 36], strides = [1, 1]} : vector<576x36xbf16> to vector<64x36xbf16>
    %c8_197 = arith.constant 8 : index
    %c0_198 = arith.constant 0 : index
    %c0_199 = arith.constant 0 : index
    %507 = vector.load %arg15[%c8_197, %c0_198, %c0_199] : memref<9x36x36xbf16, #tpu.memory_space<vmem>>, vector<1x36x36xbf16>
    %508 = vector.shape_cast %507 : vector<1x36x36xbf16> to vector<36x36xbf16>
    %cst_200 = arith.constant dense<0.000000e+00> : vector<64x36xf32>
    %509 = tpu.matmul %506, %508, %cst_200 {dimension_numbers = #tpu.dot_dimension_numbers<[1], [0], [0], [1], [0, 0, 1, 1], [], []>} : vector<64x36xbf16>, vector<36x36xbf16>, vector<64x36xf32> -> vector<64x36xf32>
    %510 = arith.addf %505, %509 : vector<64x36xf32>
    %c3_201 = arith.constant 3 : index
    %c0_202 = arith.constant 0 : index
    %511 = vector.load %arg12[%c3_201, %c0_202] : memref<4x128xf32, #tpu.memory_space<vmem>>, vector<1x36xf32>
    %512 = vector.broadcast %511 : vector<1x36xf32> to vector<64x36xf32>
    %513 = arith.addf %510, %512 : vector<64x36xf32>
    %cst_203 = arith.constant 0.000000e+00 : f32
    %cst_204 = arith.constant 6.000000e+00 : f32
    %514 = vector.broadcast %cst_203 : f32 to vector<64x36xf32>
    %515 = arith.maximumf %514, %513 : vector<64x36xf32>
    %516 = vector.broadcast %cst_204 : f32 to vector<64x36xf32>
    %517 = arith.minimumf %516, %515 : vector<64x36xf32>
    %518 = arith.truncf %517 : vector<64x36xf32> to vector<64x36xbf16>
    %c0_205 = arith.constant 0 : index
    %c0_206 = arith.constant 0 : index
    %519 = vector.load %arg16[%c0_205, %c0_206] : memref<36x16xbf16, #tpu.memory_space<vmem>>, vector<36x16xbf16>
    %cst_207 = arith.constant dense<0.000000e+00> : vector<64x16xf32>
    %520 = tpu.matmul %518, %519, %cst_207 {dimension_numbers = #tpu.dot_dimension_numbers<[1], [0], [0], [1], [0, 0, 1, 1], [], []>} : vector<64x36xbf16>, vector<36x16xbf16>, vector<64x16xf32> -> vector<64x16xf32>
    %cst_208 = arith.constant 5.000000e-01 : f32
    %521 = vector.broadcast %cst_208 : f32 to vector<64x16xf32>
    %522 = arith.mulf %521, %520 : vector<64x16xf32>
    %cst_209 = arith.constant 0.707106769 : f32
    %523 = vector.broadcast %cst_209 : f32 to vector<64x16xf32>
    %524 = arith.mulf %520, %523 : vector<64x16xf32>
    %525 = math.erf %524 : vector<64x16xf32>
    %cst_210 = arith.constant 1.000000e+00 : f32
    %526 = vector.broadcast %cst_210 : f32 to vector<64x16xf32>
    %527 = arith.addf %526, %525 : vector<64x16xf32>
    %528 = arith.mulf %522, %527 : vector<64x16xf32>
    %529 = arith.truncf %528 : vector<64x16xf32> to vector<64x16xbf16>
    %c0_211 = arith.constant 0 : index
    %c0_212 = arith.constant 0 : index
    %530 = vector.load %arg17[%c0_211, %c0_212] : memref<16x4xbf16, #tpu.memory_space<vmem>>, vector<16x4xbf16>
    %cst_213 = arith.constant dense<0.000000e+00> : vector<64x4xf32>
    %531 = tpu.matmul %529, %530, %cst_213 {dimension_numbers = #tpu.dot_dimension_numbers<[1], [0], [0], [1], [0, 0, 1, 1], [], []>} : vector<64x16xbf16>, vector<16x4xbf16>, vector<64x4xf32> -> vector<64x4xf32>
    %c0_214 = arith.constant 0 : index
    %c0_215 = arith.constant 0 : index
    %c0_216 = arith.constant 0 : index
    %532 = vector.load %arg18[%c0_214, %c0_215, %c0_216] : memref<1x64x4xf32, #tpu.memory_space<vmem>>, vector<1x64x4xf32>
    %533 = vector.shape_cast %532 : vector<1x64x4xf32> to vector<64x4xf32>
    %534 = vector.shape_cast %531 : vector<64x4xf32> to vector<1x64x4xf32>
    tpu.vector_store %arg18[%c0_214, %c0_215, %c0_216], %534 {strides = array<i32>} : memref<1x64x4xf32, #tpu.memory_space<vmem>>, vector<1x64x4xf32>,
    return
  }
  func.func @transform_0(%arg0: i32) -> (i32, i32, i32) {
    %c0_i32 = arith.constant 0 : i32
    %c0_i32_0 = arith.constant 0 : i32
    %c0_i32_1 = arith.constant 0 : i32
    return %arg0, %c0_i32, %c0_i32_0 : i32, i32, i32
  }
  func.func @transform_1(%arg0: i32) -> (i32, i32) {
    %c0_i32 = arith.constant 0 : i32
    %c0_i32_0 = arith.constant 0 : i32
    %c0_i32_1 = arith.constant 0 : i32
    return %c0_i32, %c0_i32_0 : i32, i32
  }
  func.func @transform_2(%arg0: i32) -> (i32, i32) {
    %c0_i32 = arith.constant 0 : i32
    %c0_i32_0 = arith.constant 0 : i32
    %c0_i32_1 = arith.constant 0 : i32
    return %c0_i32, %c0_i32_0 : i32, i32
  }
  func.func @transform_3(%arg0: i32) -> (i32, i32) {
    %c0_i32 = arith.constant 0 : i32
    %c0_i32_0 = arith.constant 0 : i32
    %c0_i32_1 = arith.constant 0 : i32
    return %c0_i32, %c0_i32_0 : i32, i32
  }
  func.func @transform_4(%arg0: i32) -> (i32, i32) {
    %c0_i32 = arith.constant 0 : i32
    %c0_i32_0 = arith.constant 0 : i32
    %c0_i32_1 = arith.constant 0 : i32
    return %c0_i32, %c0_i32_0 : i32, i32
  }
  func.func @transform_5(%arg0: i32) -> (i32, i32) {
    %c0_i32 = arith.constant 0 : i32
    %c0_i32_0 = arith.constant 0 : i32
    %c0_i32_1 = arith.constant 0 : i32
    return %c0_i32, %c0_i32_0 : i32, i32
  }
  func.func @transform_6(%arg0: i32) -> (i32, i32) {
    %c0_i32 = arith.constant 0 : i32
    %c0_i32_0 = arith.constant 0 : i32
    %c0_i32_1 = arith.constant 0 : i32
    return %c0_i32, %c0_i32_0 : i32, i32
  }
  func.func @transform_7(%arg0: i32) -> (i32, i32) {
    %c0_i32 = arith.constant 0 : i32
    %c0_i32_0 = arith.constant 0 : i32
    %c0_i32_1 = arith.constant 0 : i32
    return %c0_i32, %c0_i32_0 : i32, i32
  }
  func.func @transform_8(%arg0: i32) -> (i32, i32) {
    %c0_i32 = arith.constant 0 : i32
    %c0_i32_0 = arith.constant 0 : i32
    %c0_i32_1 = arith.constant 0 : i32
    return %c0_i32, %c0_i32_0 : i32, i32
  }
  func.func @transform_9(%arg0: i32) -> (i32, i32) {
    %c0_i32 = arith.constant 0 : i32
    %c0_i32_0 = arith.constant 0 : i32
    %c0_i32_1 = arith.constant 0 : i32
    return %c0_i32, %c0_i32_0 : i32, i32
  }
  func.func @transform_10(%arg0: i32) -> (i32, i32) {
    %c0_i32 = arith.constant 0 : i32
    %c0_i32_0 = arith.constant 0 : i32
    %c0_i32_1 = arith.constant 0 : i32
    return %c0_i32, %c0_i32_0 : i32, i32
  }
  func.func @transform_11(%arg0: i32) -> (i32, i32) {
    %c0_i32 = arith.constant 0 : i32
    %c0_i32_0 = arith.constant 0 : i32
    %c0_i32_1 = arith.constant 0 : i32
    return %c0_i32, %c0_i32_0 : i32, i32
  }
  func.func @transform_12(%arg0: i32) -> (i32, i32) {
    %c0_i32 = arith.constant 0 : i32
    %c0_i32_0 = arith.constant 0 : i32
    %c0_i32_1 = arith.constant 0 : i32
    return %c0_i32, %c0_i32_0 : i32, i32
  }
  func.func @transform_13(%arg0: i32) -> (i32, i32) {
    %c0_i32 = arith.constant 0 : i32
    %c0_i32_0 = arith.constant 0 : i32
    %c0_i32_1 = arith.constant 0 : i32
    return %c0_i32, %c0_i32_0 : i32, i32
  }
  func.func @transform_14(%arg0: i32) -> (i32, i32, i32) {
    %c0_i32 = arith.constant 0 : i32
    %c0_i32_0 = arith.constant 0 : i32
    %c0_i32_1 = arith.constant 0 : i32
    %c0_i32_2 = arith.constant 0 : i32
    return %c0_i32, %c0_i32_0, %c0_i32_1 : i32, i32, i32
  }
  func.func @transform_15(%arg0: i32) -> (i32, i32) {
    %c0_i32 = arith.constant 0 : i32
    %c0_i32_0 = arith.constant 0 : i32
    %c0_i32_1 = arith.constant 0 : i32
    return %c0_i32, %c0_i32_0 : i32, i32
  }
  func.func @transform_16(%arg0: i32) -> (i32, i32) {
    %c0_i32 = arith.constant 0 : i32
    %c0_i32_0 = arith.constant 0 : i32
    %c0_i32_1 = arith.constant 0 : i32
    return %c0_i32, %c0_i32_0 : i32, i32
  }
  func.func @transform_17(%arg0: i32) -> (i32, i32, i32) {
    %c0_i32 = arith.constant 0 : i32
    %c0_i32_0 = arith.constant 0 : i32
    %c0_i32_1 = arith.constant 0 : i32
    return %arg0, %c0_i32, %c0_i32_0 : i32, i32, i32
  }
}

</mosaic_0001>

<llo_original>
// kernel: _lambda_.1
$region0: #{_lambda_.1}
  #allocation0 [shape = 'u32[]', space=smem, size = 0x4, offset = 0x4, fixed_abs, tag = 'smem constant byte address 0x4 - core index']
  #allocation1 [shape = 'u32[72,128]{1,0:T(1,128)}', space=vmem, size = 0x9000, scoped, tag = 'internal scratch']
  #allocation2 [shape = 'f32[64,288]{1,0:T(8,128)}', space=vmem, size = 0x18000, scoped, tag = 'scratch operand']
  #allocation3 [shape = 'f32[64,288]{1,0:T(8,128)}', space=vmem, size = 0x18000, scoped, tag = 'scratch operand']
  #allocation4 [shape = 'f32[64,288]{1,0:T(8,128)}', space=vmem, size = 0x18000, scoped, tag = 'scratch operand']
  #allocation5 [shape = 'f32[64,72]{1,0:T(8,128)}', space=vmem, size = 0x8000, scoped, tag = 'scratch operand']
  %s0 = inlined_call_operand.vmem [shape: f32[2,64,8], index: 0, kind: input, shape index: {}]
  %s1 = inlined_call_operand.hbm [shape: f32[8,28], index: 1, kind: input, shape index: {}]
  %s2 = inlined_call_operand.hbm [shape: f32[139,64], index: 2, kind: input, shape index: {}]
  %s3 = inlined_call_operand.hbm [shape: f32[139,24], index: 3, kind: input, shape index: {}]
  %s4 = inlined_call_operand.hbm [shape: f32[64,139], index: 4, kind: input, shape index: {}]
  %s5 = inlined_call_operand.hbm [shape: bf16[36,72], index: 5, kind: input, shape index: {}]
  %s6 = inlined_call_operand.hbm [shape: bf16[36,72], index: 6, kind: input, shape index: {}]
  %s7 = inlined_call_operand.vmem [shape: f32[72,11], index: 7, kind: input, shape index: {}]
  %s8 = inlined_call_operand.vmem [shape: f32[8,72], index: 8, kind: input, shape index: {}]
  %s9 = inlined_call_operand.hbm [shape: f32[5,288], index: 9, kind: input, shape index: {}]
  %s10 = inlined_call_operand.hbm [shape: f32[288,72], index: 10, kind: input, shape index: {}]
  %s11 = inlined_call_operand.hbm [shape: f32[4,128], index: 11, kind: input, shape index: {}]
  %s12 = inlined_call_operand.hbm [shape: bf16[72,36], index: 12, kind: input, shape index: {}]
  %s13 = inlined_call_operand.hbm [shape: bf16[576,64], index: 13, kind: input, shape index: {}]
  %s14 = inlined_call_operand.vmem [shape: bf16[9,36,36], index: 14, kind: input, shape index: {}]
  %s15 = inlined_call_operand.hbm [shape: bf16[36,16], index: 15, kind: input, shape index: {}]
  %s16 = inlined_call_operand.vmem [shape: bf16[16,4], index: 16, kind: input, shape index: {}]
  %s17 = inlined_call_operand.vmem [shape: f32[2,64,4], index: 17, kind: output, shape index: {}]
  %s18 = sld [smem:[#allocation0]]
  $region149: #{_lambda_.1} parent=0
    _
  %s20 = ssub.s32 1, %s18
  %s21 = scalar_select 0, %s20, %s18
  $region1: #{_lambda_.1} parent=0
    #allocation6 [shape = 'u8[4096]{0}', space=vmem, size = 0x1000, scoped, tag = 'input window, operand 1, single buffered']
    #allocation7 [shape = 's32[2]{0}', space=sflag, size = 0x8, scoped, tag = 'scoped memory for _lambda_.1']
    #allocation8 [shape = 'u8[73728]{0}', space=vmem, size = 0x12000, scoped, tag = 'input window, operand 2, single buffered']
    #allocation9 [shape = 's32[1]{0}', space=sflag, size = 0x4, scoped, tag = 'scoped memory for _lambda_.1']
    #allocation10 [shape = 'u8[73728]{0}', space=vmem, size = 0x12000, scoped, tag = 'input window, operand 3, single buffered']
    #allocation11 [shape = 'u8[65536]{0}', space=vmem, size = 0x10000, scoped, tag = 'input window, operand 4, single buffered']
    #allocation12 [shape = 's32[1]{0}', space=sflag, size = 0x4, scoped, tag = 'scoped memory for _lambda_.1']
    #allocation13 [shape = 'u8[10240]{0}', space=vmem, size = 0x2800, scoped, tag = 'input window, operand 5, single buffered']
    #allocation14 [shape = 'u8[10240]{0}', space=vmem, size = 0x2800, scoped, tag = 'input window, operand 6, single buffered']
    #allocation15 [shape = 's32[1]{0}', space=sflag, size = 0x4, scoped, tag = 'scoped memory for _lambda_.1']
    #allocation16 [shape = 'u8[12288]{0}', space=vmem, size = 0x3000, scoped, tag = 'input window, operand 9, single buffered']
    #allocation17 [shape = 'u8[147456]{0}', space=vmem, size = 0x24000, scoped, tag = 'input window, operand 10, single buffered']
    #allocation18 [shape = 's32[1]{0}', space=sflag, size = 0x4, scoped, tag = 'scoped memory for _lambda_.1']
    #allocation19 [shape = 'u8[2048]{0}', space=vmem, size = 0x800, scoped, tag = 'input window, operand 11, single buffered']
    #allocation20 [shape = 'u8[18432]{0}', space=vmem, size = 0x4800, scoped, tag = 'input window, operand 12, single buffered']
    #allocation21 [shape = 's32[1]{0}', space=sflag, size = 0x4, scoped, tag = 'scoped memory for _lambda_.1']
    #allocation22 [shape = 'u8[147456]{0}', space=vmem, size = 0x24000, scoped, tag = 'input window, operand 13, single buffered']
    #allocation23 [shape = 'u8[10240]{0}', space=vmem, size = 0x2800, scoped, tag = 'input window, operand 15, single buffered']
    #allocation24 [shape = 's32[1]{0}', space=sflag, size = 0x4, scoped, tag = 'scoped memory for _lambda_.1']
    %22 = vsyncpa [#allocation7], 0
    %23 = vsyncpa [#allocation9], 0
    %24 = vsyncpa [#allocation12], 0
    %25 = vsyncpa [#allocation15], 0
    %26 = vsyncpa [#allocation18], 0
    %27 = vsyncpa [#allocation21], 0
    %28 = vsyncpa [#allocation24], 0
    loop: start=0, step=1, limit=4
    $region2: #{_lambda_.1} parent=1 // loop_pre_header
      _
    $region3: #{_lambda_.1} parent=1 // loop_header
      %s30 = sphi 0, %s34
      %p31 = scmp.ge.s32.totalorder %s30, 4
      %s40 = sphi 0, %s42
      %s43 = sphi 0, %s40
      %s44 = sphi 0, %s43
      %s60 = sphi 0, %s44
      %s64 = sphi 0, %s64
      %s66 = sphi 0, %s64
      %s67 = sphi 0, %s66
      %s81 = sphi 0, %s67
      %s85 = sphi 0, %s85
      %s87 = sphi 0, %s85
      %s88 = sphi 0, %s87
      %s102 = sphi 0, %s88
      %s106 = sphi 0, %s106
      %s108 = sphi 0, %s106
      %s109 = sphi 0, %s108
      %s123 = sphi 0, %s109
      %s127 = sphi 0, %s127
      %s129 = sphi 0, %s127
      %s130 = sphi 0, %s129
      %s144 = sphi 0, %s130
      %s148 = sphi 0, %s148
      %s150 = sphi 0, %s148
      %s151 = sphi 0, %s150
      %s165 = sphi 0, %s151
      %s169 = sphi 0, %s169
      %s171 = sphi 0, %s169
      %s172 = sphi 0, %s171
      %s186 = sphi 0, %s172
      %s190 = sphi 0, %s190
      %s192 = sphi 0, %s190
      %s193 = sphi 0, %s192
      %s207 = sphi 0, %s193
      %s211 = sphi 0, %s211
      %s213 = sphi 0, %s211
      %s214 = sphi 0, %s213
      %s228 = sphi 0, %s214
      %s232 = sphi 0, %s232
      %s234 = sphi 0, %s232
      %s235 = sphi 0, %s234
      %s249 = sphi 0, %s235
      %s253 = sphi 0, %s253
      %s255 = sphi 0, %s253
      %s256 = sphi 0, %s255
      %s270 = sphi 0, %s256
      %s274 = sphi 0, %s274
      %s276 = sphi 0, %s274
      %s277 = sphi 0, %s276
      %s291 = sphi 0, %s277
      %s295 = sphi 0, %s295
      %s297 = sphi 0, %s295
      %s298 = sphi 0, %s297
      %s312 = sphi 0, %s298
      %s316 = sphi 0, %s316
      %s318 = sphi 0, %s316
      %s319 = sphi 0, %s318
      %s333 = sphi 0, %s319
      %s337 = sphi 0, %s337
      %s339 = sphi 0, %s337
      %s340 = sphi 0, %s339
      %s354 = sphi 0, %s340
      %s358 = sphi 0, %s358
      %s360 = sphi 0, %s358
      %s361 = sphi 0, %s360
      %s375 = sphi 0, %s361
      %s379 = sphi 0, %s379
      %s381 = sphi 0, %s379
      %s382 = sphi 0, %s381
      %s396 = sphi 0, %s382
      %s402 = sphi 0, %s404
      %s405 = sphi 0, %s402
      %s406 = sphi 0, %s405
      %s422 = sphi 0, %s406
    $region4: #{_lambda_.1} parent=1 // loop_header_branch
      %33 = sbr.rel (%p31) target = $region8
    $region5: #{_lambda_.1} parent=1 // loop_body
      %s35 = ssub.s32 %s30, 1
      %s36 = ssub.s32 %s30, 2
      %s37 = sadd.s32 %s30, 1
      %s38 = ssub.s32 %s30, %s37
      %p39 = scmp.eq.s32.totalorder %s38, 0
      %s41 = sadd.s32 %s40, 1
      %s42 = scalar_select %p39, %s40, %s41
      %p45 = pneg %p39
      %p46 = scmp.eq.s32.totalorder %s30, 1
      %p47 = por %p45, %p46
      %p48 = scmp.ne.s32.totalorder %s40, %s43
      %p49 = scmp.eq.s32.totalorder %s30, 0
      %p50 = por %p48, %p49
      %p51 = scmp.ne.s32.totalorder %s40, %s43
      %p52 = scmp.eq.s32.totalorder %s35, 1
      %p53 = por %p51, %p52
      %p54 = scmp.ne.s32.totalorder %s43, %s44
      %p55 = scmp.eq.s32.totalorder %s35, 0
      %p56 = por %p54, %p55
      %p57 = scmp.ne.s32.totalorder %s43, %s44
      %p58 = scmp.eq.s32.totalorder %s36, 1
      %p59 = por %p57, %p58
      %p61 = scmp.ne.s32.totalorder %s44, %s60
      %p62 = scmp.eq.s32.totalorder %s36, 0
      %p63 = por %p61, %p62
      %s65 = sadd.s32 %s64, 1
      %p68 = scmp.eq.s32.totalorder %s30, 1
      %p69 = scmp.ne.s32.totalorder %s64, %s66
      %p70 = scmp.eq.s32.totalorder %s30, 0
      %p71 = por %p69, %p70
      %p72 = scmp.ne.s32.totalorder %s64, %s66
      %p73 = scmp.eq.s32.totalorder %s35, 1
      %p74 = por %p72, %p73
      %p75 = scmp.ne.s32.totalorder %s66, %s67
      %p76 = scmp.eq.s32.totalorder %s35, 0
      %p77 = por %p75, %p76
      %p78 = scmp.ne.s32.totalorder %s66, %s67
      %p79 = scmp.eq.s32.totalorder %s36, 1
      %p80 = por %p78, %p79
      %p82 = scmp.ne.s32.totalorder %s67, %s81
      %p83 = scmp.eq.s32.totalorder %s36, 0
      %p84 = por %p82, %p83
      %s86 = sadd.s32 %s85, 1
      %p89 = scmp.eq.s32.totalorder %s30, 1
      %p90 = scmp.ne.s32.totalorder %s85, %s87
      %p91 = scmp.eq.s32.totalorder %s30, 0
      %p92 = por %p90, %p91
      %p93 = scmp.ne.s32.totalorder %s85, %s87
      %p94 = scmp.eq.s32.totalorder %s35, 1
      %p95 = por %p93, %p94
      %p96 = scmp.ne.s32.totalorder %s87, %s88
      %p97 = scmp.eq.s32.totalorder %s35, 0
      %p98 = por %p96, %p97
      %p99 = scmp.ne.s32.totalorder %s87, %s88
      %p100 = scmp.eq.s32.totalorder %s36, 1
      %p101 = por %p99, %p100
      %p103 = scmp.ne.s32.totalorder %s88, %s102
      %p104 = scmp.eq.s32.totalorder %s36, 0
      %p105 = por %p103, %p104
      %s107 = sadd.s32 %s106, 1
      %p110 = scmp.eq.s32.totalorder %s30, 1
      %p111 = scmp.ne.s32.totalorder %s106, %s108
      %p112 = scmp.eq.s32.totalorder %s30, 0
      %p113 = por %p111, %p112
      %p114 = scmp.ne.s32.totalorder %s106, %s108
      %p115 = scmp.eq.s32.totalorder %s35, 1
      %p116 = por %p114, %p115
      %p117 = scmp.ne.s32.totalorder %s108, %s109
      %p118 = scmp.eq.s32.totalorder %s35, 0
      %p119 = por %p117, %p118
      %p120 = scmp.ne.s32.totalorder %s108, %s109
      %p121 = scmp.eq.s32.totalorder %s36, 1
      %p122 = por %p120, %p121
      %p124 = scmp.ne.s32.totalorder %s109, %s123
      %p125 = scmp.eq.s32.totalorder %s36, 0
      %p126 = por %p124, %p125
      %s128 = sadd.s32 %s127, 1
      %p131 = scmp.eq.s32.totalorder %s30, 1
      %p132 = scmp.ne.s32.totalorder %s127, %s129
      %p133 = scmp.eq.s32.totalorder %s30, 0
      %p134 = por %p132, %p133
      %p135 = scmp.ne.s32.totalorder %s127, %s129
      %p136 = scmp.eq.s32.totalorder %s35, 1
      %p137 = por %p135, %p136
      %p138 = scmp.ne.s32.totalorder %s129, %s130
      %p139 = scmp.eq.s32.totalorder %s35, 0
      %p140 = por %p138, %p139
      %p141 = scmp.ne.s32.totalorder %s129, %s130
      %p142 = scmp.eq.s32.totalorder %s36, 1
      %p143 = por %p141, %p142
      %p145 = scmp.ne.s32.totalorder %s130, %s144
      %p146 = scmp.eq.s32.totalorder %s36, 0
      %p147 = por %p145, %p146
      %s149 = sadd.s32 %s148, 1
      %p152 = scmp.eq.s32.totalorder %s30, 1
      %p153 = scmp.ne.s32.totalorder %s148, %s150
      %p154 = scmp.eq.s32.totalorder %s30, 0
      %p155 = por %p153, %p154
      %p156 = scmp.ne.s32.totalorder %s148, %s150
      %p157 = scmp.eq.s32.totalorder %s35, 1
      %p158 = por %p156, %p157
      %p159 = scmp.ne.s32.totalorder %s150, %s151
      %p160 = scmp.eq.s32.totalorder %s35, 0
      %p161 = por %p159, %p160
      %p162 = scmp.ne.s32.totalorder %s150, %s151
      %p163 = scmp.eq.s32.totalorder %s36, 1
      %p164 = por %p162, %p163
      %p166 = scmp.ne.s32.totalorder %s151, %s165
      %p167 = scmp.eq.s32.totalorder %s36, 0
      %p168 = por %p166, %p167
      %s170 = sadd.s32 %s169, 1
      %p173 = scmp.eq.s32.totalorder %s30, 1
      %p174 = scmp.ne.s32.totalorder %s169, %s171
      %p175 = scmp.eq.s32.totalorder %s30, 0
      %p176 = por %p174, %p175
      %p177 = scmp.ne.s32.totalorder %s169, %s171
      %p178 = scmp.eq.s32.totalorder %s35, 1
      %p179 = por %p177, %p178
      %p180 = scmp.ne.s32.totalorder %s171, %s172
      %p181 = scmp.eq.s32.totalorder %s35, 0
      %p182 = por %p180, %p181
      %p183 = scmp.ne.s32.totalorder %s171, %s172
      %p184 = scmp.eq.s32.totalorder %s36, 1
      %p185 = por %p183, %p184
      %p187 = scmp.ne.s32.totalorder %s172, %s186
      %p188 = scmp.eq.s32.totalorder %s36, 0
      %p189 = por %p187, %p188
      %s191 = sadd.s32 %s190, 1
      %p194 = scmp.eq.s32.totalorder %s30, 1
      %p195 = scmp.ne.s32.totalorder %s190, %s192
      %p196 = scmp.eq.s32.totalorder %s30, 0
      %p197 = por %p195, %p196
      %p198 = scmp.ne.s32.totalorder %s190, %s192
      %p199 = scmp.eq.s32.totalorder %s35, 1
      %p200 = por %p198, %p199
      %p201 = scmp.ne.s32.totalorder %s192, %s193
      %p202 = scmp.eq.s32.totalorder %s35, 0
      %p203 = por %p201, %p202
      %p204 = scmp.ne.s32.totalorder %s192, %s193
      %p205 = scmp.eq.s32.totalorder %s36, 1
      %p206 = por %p204, %p205
      %p208 = scmp.ne.s32.totalorder %s193, %s207
      %p209 = scmp.eq.s32.totalorder %s36, 0
      %p210 = por %p208, %p209
      %s212 = sadd.s32 %s211, 1
      %p215 = scmp.eq.s32.totalorder %s30, 1
      %p216 = scmp.ne.s32.totalorder %s211, %s213
      %p217 = scmp.eq.s32.totalorder %s30, 0
      %p218 = por %p216, %p217
      %p219 = scmp.ne.s32.totalorder %s211, %s213
      %p220 = scmp.eq.s32.totalorder %s35, 1
      %p221 = por %p219, %p220
      %p222 = scmp.ne.s32.totalorder %s213, %s214
      %p223 = scmp.eq.s32.totalorder %s35, 0
      %p224 = por %p222, %p223
      %p225 = scmp.ne.s32.totalorder %s213, %s214
      %p226 = scmp.eq.s32.totalorder %s36, 1
      %p227 = por %p225, %p226
      %p229 = scmp.ne.s32.totalorder %s214, %s228
      %p230 = scmp.eq.s32.totalorder %s36, 0
      %p231 = por %p229, %p230
      %s233 = sadd.s32 %s232, 1
      %p236 = scmp.eq.s32.totalorder %s30, 1
      %p237 = scmp.ne.s32.totalorder %s232, %s234
      %p238 = scmp.eq.s32.totalorder %s30, 0
      %p239 = por %p237, %p238
      %p240 = scmp.ne.s32.totalorder %s232, %s234
      %p241 = scmp.eq.s32.totalorder %s35, 1
      %p242 = por %p240, %p241
      %p243 = scmp.ne.s32.totalorder %s234, %s235
      %p244 = scmp.eq.s32.totalorder %s35, 0
      %p245 = por %p243, %p244
      %p246 = scmp.ne.s32.totalorder %s234, %s235
      %p247 = scmp.eq.s32.totalorder %s36, 1
      %p248 = por %p246, %p247
      %p250 = scmp.ne.s32.totalorder %s235, %s249
      %p251 = scmp.eq.s32.totalorder %s36, 0
      %p252 = por %p250, %p251
      %s254 = sadd.s32 %s253, 1
      %p257 = scmp.eq.s32.totalorder %s30, 1
      %p258 = scmp.ne.s32.totalorder %s253, %s255
      %p259 = scmp.eq.s32.totalorder %s30, 0
      %p260 = por %p258, %p259
      %p261 = scmp.ne.s32.totalorder %s253, %s255
      %p262 = scmp.eq.s32.totalorder %s35, 1
      %p263 = por %p261, %p262
      %p264 = scmp.ne.s32.totalorder %s255, %s256
      %p265 = scmp.eq.s32.totalorder %s35, 0
      %p266 = por %p264, %p265
      %p267 = scmp.ne.s32.totalorder %s255, %s256
      %p268 = scmp.eq.s32.totalorder %s36, 1
      %p269 = por %p267, %p268
      %p271 = scmp.ne.s32.totalorder %s256, %s270
      %p272 = scmp.eq.s32.totalorder %s36, 0
      %p273 = por %p271, %p272
      %s275 = sadd.s32 %s274, 1
      %p278 = scmp.eq.s32.totalorder %s30, 1
      %p279 = scmp.ne.s32.totalorder %s274, %s276
      %p280 = scmp.eq.s32.totalorder %s30, 0
      %p281 = por %p279, %p280
      %p282 = scmp.ne.s32.totalorder %s274, %s276
      %p283 = scmp.eq.s32.totalorder %s35, 1
      %p284 = por %p282, %p283
      %p285 = scmp.ne.s32.totalorder %s276, %s277
      %p286 = scmp.eq.s32.totalorder %s35, 0
      %p287 = por %p285, %p286
      %p288 = scmp.ne.s32.totalorder %s276, %s277
      %p289 = scmp.eq.s32.totalorder %s36, 1
      %p290 = por %p288, %p289
      %p292 = scmp.ne.s32.totalorder %s277, %s291
      %p293 = scmp.eq.s32.totalorder %s36, 0
      %p294 = por %p292, %p293
      %s296 = sadd.s32 %s295, 1
      %p299 = scmp.eq.s32.totalorder %s30, 1
      %p300 = scmp.ne.s32.totalorder %s295, %s297
      %p301 = scmp.eq.s32.totalorder %s30, 0
      %p302 = por %p300, %p301
      %p303 = scmp.ne.s32.totalorder %s295, %s297
      %p304 = scmp.eq.s32.totalorder %s35, 1
      %p305 = por %p303, %p304
      %p306 = scmp.ne.s32.totalorder %s297, %s298
      %p307 = scmp.eq.s32.totalorder %s35, 0
      %p308 = por %p306, %p307
      %p309 = scmp.ne.s32.totalorder %s297, %s298
      %p310 = scmp.eq.s32.totalorder %s36, 1
      %p311 = por %p309, %p310
      %p313 = scmp.ne.s32.totalorder %s298, %s312
      %p314 = scmp.eq.s32.totalorder %s36, 0
      %p315 = por %p313, %p314
      %s317 = sadd.s32 %s316, 1
      %p320 = scmp.eq.s32.totalorder %s30, 1
      %p321 = scmp.ne.s32.totalorder %s316, %s318
      %p322 = scmp.eq.s32.totalorder %s30, 0
      %p323 = por %p321, %p322
      %p324 = scmp.ne.s32.totalorder %s316, %s318
      %p325 = scmp.eq.s32.totalorder %s35, 1
      %p326 = por %p324, %p325
      %p327 = scmp.ne.s32.totalorder %s318, %s319
      %p328 = scmp.eq.s32.totalorder %s35, 0
      %p329 = por %p327, %p328
      %p330 = scmp.ne.s32.totalorder %s318, %s319
      %p331 = scmp.eq.s32.totalorder %s36, 1
      %p332 = por %p330, %p331
      %p334 = scmp.ne.s32.totalorder %s319, %s333
      %p335 = scmp.eq.s32.totalorder %s36, 0
      %p336 = por %p334, %p335
      %s338 = sadd.s32 %s337, 1
      %p341 = scmp.eq.s32.totalorder %s30, 1
      %p342 = scmp.ne.s32.totalorder %s337, %s339
      %p343 = scmp.eq.s32.totalorder %s30, 0
      %p344 = por %p342, %p343
      %p345 = scmp.ne.s32.totalorder %s337, %s339
      %p346 = scmp.eq.s32.totalorder %s35, 1
      %p347 = por %p345, %p346
      %p348 = scmp.ne.s32.totalorder %s339, %s340
      %p349 = scmp.eq.s32.totalorder %s35, 0
      %p350 = por %p348, %p349
      %p351 = scmp.ne.s32.totalorder %s339, %s340
      %p352 = scmp.eq.s32.totalorder %s36, 1
      %p353 = por %p351, %p352
      %p355 = scmp.ne.s32.totalorder %s340, %s354
      %p356 = scmp.eq.s32.totalorder %s36, 0
      %p357 = por %p355, %p356
      %s359 = sadd.s32 %s358, 1
      %p362 = scmp.eq.s32.totalorder %s30, 1
      %p363 = scmp.ne.s32.totalorder %s358, %s360
      %p364 = scmp.eq.s32.totalorder %s30, 0
      %p365 = por %p363, %p364
      %p366 = scmp.ne.s32.totalorder %s358, %s360
      %p367 = scmp.eq.s32.totalorder %s35, 1
      %p368 = por %p366, %p367
      %p369 = scmp.ne.s32.totalorder %s360, %s361
      %p370 = scmp.eq.s32.totalorder %s35, 0
      %p371 = por %p369, %p370
      %p372 = scmp.ne.s32.totalorder %s360, %s361
      %p373 = scmp.eq.s32.totalorder %s36, 1
      %p374 = por %p372, %p373
      %p376 = scmp.ne.s32.totalorder %s361, %s375
      %p377 = scmp.eq.s32.totalorder %s36, 0
      %p378 = por %p376, %p377
      %s380 = sadd.s32 %s379, 1
      %p383 = scmp.eq.s32.totalorder %s30, 1
      %p384 = scmp.ne.s32.totalorder %s379, %s381
      %p385 = scmp.eq.s32.totalorder %s30, 0
      %p386 = por %p384, %p385
      %p387 = scmp.ne.s32.totalorder %s379, %s381
      %p388 = scmp.eq.s32.totalorder %s35, 1
      %p389 = por %p387, %p388
      %p390 = scmp.ne.s32.totalorder %s381, %s382
      %p391 = scmp.eq.s32.totalorder %s35, 0
      %p392 = por %p390, %p391
      %p393 = scmp.ne.s32.totalorder %s381, %s382
      %p394 = scmp.eq.s32.totalorder %s36, 1
      %p395 = por %p393, %p394
      %p397 = scmp.ne.s32.totalorder %s382, %s396
      %p398 = scmp.eq.s32.totalorder %s36, 0
      %p399 = por %p397, %p398
      %s400 = ssub.s32 %s30, %s37
      %p401 = scmp.eq.s32.totalorder %s400, 0
      %s403 = sadd.s32 %s402, 1
      %s404 = scalar_select %p401, %s402, %s403
      %p407 = pneg %p401
      %p408 = scmp.eq.s32.totalorder %s30, 1
      %p409 = por %p407, %p408
      %p410 = scmp.ne.s32.totalorder %s402, %s405
      %p411 = scmp.eq.s32.totalorder %s30, 0
      %p412 = por %p410, %p411
      %p413 = scmp.ne.s32.totalorder %s402, %s405
      %p414 = scmp.eq.s32.totalorder %s35, 1
      %p415 = por %p413, %p414
      %p416 = scmp.ne.s32.totalorder %s405, %s406
      %p417 = scmp.eq.s32.totalorder %s35, 0
      %p418 = por %p416, %p417
      %p419 = scmp.ne.s32.totalorder %s405, %s406
      %p420 = scmp.eq.s32.totalorder %s36, 1
      %p421 = por %p419, %p420
      %p423 = scmp.ne.s32.totalorder %s406, %s422
      %p424 = scmp.eq.s32.totalorder %s36, 0
      %p425 = por %p423, %p424
      %p426 = scmp.le.s32.totalorder 1, %s30
      %p427 = scmp.lt.s32.totalorder %s30, 3
      %p428 = pnand %p426, %p427
      %p429 = pneg %p428
      // Predicated region
      $region9: #{_lambda_.1} parent=5 // pred_check
        _
      $region10: #{_lambda_.1} parent=5 // pred_check_branch
        %431 = sbr.rel (%p428) target = $region12
      $region11: #{_lambda_.1} parent=5 // pred_region
        %s432 = ssub.s32 %s30, 1
        // Predicated region
        $region13: #{_lambda_.1} parent=11 // pred_check
          %p433 = pneg %p77
        $region14: #{_lambda_.1} parent=11 // pred_check_branch
          %435 = sbr.rel (%p433) target = $region16
        $region15: #{_lambda_.1} parent=11 // pred_region
          %437 = vsyncadd [#allocation7], 0
          %s439 = sshll.u32 %s1, 4
          %s440 = int_to_ptr.hbm [resolvable:$true] %s439
          %s441 = sshll.u32 [#allocation6], 4
          %s442 = int_to_ptr.vmem [resolvable:$true] %s441
          %444 = dma.hbm_to_vmem [thread:$0]  %s440, 128, %s442, [#allocation7]
        $region16: #{_lambda_.1} parent=11 // pred_fallthru
          _
        // Predicated region
        $region17: #{_lambda_.1} parent=11 // pred_check
          %p445 = pneg %p98
        $region18: #{_lambda_.1} parent=11 // pred_check_branch
          %447 = sbr.rel (%p445) target = $region20
        $region19: #{_lambda_.1} parent=11 // pred_region
          %449 = vsyncadd [#allocation9], 0
          %s450 = sshll.u32 %s2, 4
          %s451 = int_to_ptr.hbm [resolvable:$true] %s450
          %s452 = sshll.u32 [#allocation8], 4
          %s453 = int_to_ptr.vmem [resolvable:$true] %s452
          %458 = dma.hbm_to_vmem [thread:$0]  %s451, 2304, %s453, [#allocation9], 128, 128, 8
        $region20: #{_lambda_.1} parent=11 // pred_fallthru
          _
        // Predicated region
        $region21: #{_lambda_.1} parent=11 // pred_check
          %p459 = pneg %p119
        $region22: #{_lambda_.1} parent=11 // pred_check_branch
          %461 = sbr.rel (%p459) target = $region24
        $region23: #{_lambda_.1} parent=11 // pred_region
          %463 = vsyncadd [#allocation9], 0
          %s464 = sshll.u32 %s3, 4
          %s465 = int_to_ptr.hbm [resolvable:$true] %s464
          %s466 = sshll.u32 [#allocation10], 4
          %s467 = int_to_ptr.vmem [resolvable:$true] %s466
          %472 = dma.hbm_to_vmem [thread:$0]  %s465, 2304, %s467, [#allocation9], 128, 128, 8
        $region24: #{_lambda_.1} parent=11 // pred_fallthru
          _
        // Predicated region
        $region25: #{_lambda_.1} parent=11 // pred_check
          %p473 = pneg %p140
        $region26: #{_lambda_.1} parent=11 // pred_check_branch
          %475 = sbr.rel (%p473) target = $region28
        $region27: #{_lambda_.1} parent=11 // pred_region
          %477 = vsyncadd [#allocation12], 0
          %s478 = sshll.u32 %s4, 4
          %s479 = int_to_ptr.hbm [resolvable:$true] %s478
          %s480 = sshll.u32 [#allocation11], 4
          %s481 = int_to_ptr.vmem [resolvable:$true] %s480
          %486 = dma.hbm_to_vmem [thread:$0]  %s479, 2048, %s481, [#allocation12], 256, 256, 16
        $region28: #{_lambda_.1} parent=11 // pred_fallthru
          _
        // Predicated region
        $region29: #{_lambda_.1} parent=11 // pred_check
          %p487 = pneg %p161
        $region30: #{_lambda_.1} parent=11 // pred_check_branch
          %489 = sbr.rel (%p487) target = $region32
        $region31: #{_lambda_.1} parent=11 // pred_region
          %491 = vsyncadd [#allocation12], 0
          %s492 = sshll.u32 %s5, 4
          %s493 = int_to_ptr.hbm [resolvable:$true] %s492
          %s494 = sshll.u32 [#allocation13], 4
          %s495 = int_to_ptr.vmem [resolvable:$true] %s494
          %500 = dma.hbm_to_vmem [thread:$0]  %s493, 320, %s495, [#allocation12], 64, 64, 4
        $region32: #{_lambda_.1} parent=11 // pred_fallthru
          _
        // Predicated region
        $region33: #{_lambda_.1} parent=11 // pred_check
          %p501 = pneg %p182
        $region34: #{_lambda_.1} parent=11 // pred_check_branch
          %503 = sbr.rel (%p501) target = $region36
        $region35: #{_lambda_.1} parent=11 // pred_region
          %505 = vsyncadd [#allocation15], 0
          %s506 = sshll.u32 %s6, 4
          %s507 = int_to_ptr.hbm [resolvable:$true] %s506
          %s508 = sshll.u32 [#allocation14], 4
          %s509 = int_to_ptr.vmem [resolvable:$true] %s508
          %514 = dma.hbm_to_vmem [thread:$0]  %s507, 320, %s509, [#allocation15], 64, 64, 4
        $region36: #{_lambda_.1} parent=11 // pred_fallthru
          _
        // Predicated region
        $region37: #{_lambda_.1} parent=11 // pred_check
          %p515 = pneg %p203
        $region38: #{_lambda_.1} parent=11 // pred_check_branch
          %517 = sbr.rel (%p515) target = $region40
        $region39: #{_lambda_.1} parent=11 // pred_region
          _
        $region40: #{_lambda_.1} parent=11 // pred_fallthru
          _
        // Predicated region
        $region41: #{_lambda_.1} parent=11 // pred_check
          %p518 = pneg %p224
        $region42: #{_lambda_.1} parent=11 // pred_check_branch
          %520 = sbr.rel (%p518) target = $region44
        $region43: #{_lambda_.1} parent=11 // pred_region
          _
        $region44: #{_lambda_.1} parent=11 // pred_fallthru
          _
        // Predicated region
        $region45: #{_lambda_.1} parent=11 // pred_check
          %p521 = pneg %p245
        $region46: #{_lambda_.1} parent=11 // pred_check_branch
          %523 = sbr.rel (%p521) target = $region48
        $region47: #{_lambda_.1} parent=11 // pred_region
          %525 = vsyncadd [#allocation15], 0
          %s527 = sshll.u32 %s9, 4
          %s528 = int_to_ptr.hbm [resolvable:$true] %s527
          %s529 = sshll.u32 [#allocation16], 4
          %s530 = int_to_ptr.vmem [resolvable:$true] %s529
          %532 = dma.hbm_to_vmem [thread:$0]  %s528, 384, %s530, [#allocation15]
        $region48: #{_lambda_.1} parent=11 // pred_fallthru
          _
        // Predicated region
        $region49: #{_lambda_.1} parent=11 // pred_check
          %p533 = pneg %p266
        $region50: #{_lambda_.1} parent=11 // pred_check_branch
          %535 = sbr.rel (%p533) target = $region52
        $region51: #{_lambda_.1} parent=11 // pred_region
          %537 = vsyncadd [#allocation18], 0
          %s538 = sshll.u32 %s10, 4
          %s539 = int_to_ptr.hbm [resolvable:$true] %s538
          %s540 = sshll.u32 [#allocation17], 4
          %s541 = int_to_ptr.vmem [resolvable:$true] %s540
          %546 = dma.hbm_to_vmem [thread:$0]  %s539, 4608, %s541, [#allocation18], 128, 128, 8
        $region52: #{_lambda_.1} parent=11 // pred_fallthru
          _
        // Predicated region
        $region53: #{_lambda_.1} parent=11 // pred_check
          %p547 = pneg %p287
        $region54: #{_lambda_.1} parent=11 // pred_check_branch
          %549 = sbr.rel (%p547) target = $region56
        $region55: #{_lambda_.1} parent=11 // pred_region
          %551 = vsyncadd [#allocation18], 0
          %s553 = sshll.u32 %s11, 4
          %s554 = int_to_ptr.hbm [resolvable:$true] %s553
          %s555 = sshll.u32 [#allocation19], 4
          %s556 = int_to_ptr.vmem [resolvable:$true] %s555
          %558 = dma.hbm_to_vmem [thread:$0]  %s554, 64, %s556, [#allocation18]
        $region56: #{_lambda_.1} parent=11 // pred_fallthru
          _
        // Predicated region
        $region57: #{_lambda_.1} parent=11 // pred_check
          %p559 = pneg %p308
        $region58: #{_lambda_.1} parent=11 // pred_check_branch
          %561 = sbr.rel (%p559) target = $region60
        $region59: #{_lambda_.1} parent=11 // pred_region
          %563 = vsyncadd [#allocation21], 0
          %s564 = sshll.u32 %s12, 4
          %s565 = int_to_ptr.hbm [resolvable:$true] %s564
          %s566 = sshll.u32 [#allocation20], 4
          %s567 = int_to_ptr.vmem [resolvable:$true] %s566
          %572 = dma.hbm_to_vmem [thread:$0]  %s565, 576, %s567, [#allocation21], 64, 64, 4
        $region60: #{_lambda_.1} parent=11 // pred_fallthru
          _
        // Predicated region
        $region61: #{_lambda_.1} parent=11 // pred_check
          %p573 = pneg %p329
        $region62: #{_lambda_.1} parent=11 // pred_check_branch
          %575 = sbr.rel (%p573) target = $region64
        $region63: #{_lambda_.1} parent=11 // pred_region
          %577 = vsyncadd [#allocation21], 0
          %s578 = sshll.u32 %s13, 4
          %s579 = int_to_ptr.hbm [resolvable:$true] %s578
          %s580 = sshll.u32 [#allocation22], 4
          %s581 = int_to_ptr.vmem [resolvable:$true] %s580
          %586 = dma.hbm_to_vmem [thread:$0]  %s579, 4608, %s581, [#allocation21], 64, 64, 4
        $region64: #{_lambda_.1} parent=11 // pred_fallthru
          _
        // Predicated region
        $region65: #{_lambda_.1} parent=11 // pred_check
          %p587 = pneg %p350
        $region66: #{_lambda_.1} parent=11 // pred_check_branch
          %589 = sbr.rel (%p587) target = $region68
        $region67: #{_lambda_.1} parent=11 // pred_region
          _
        $region68: #{_lambda_.1} parent=11 // pred_fallthru
          _
        // Predicated region
        $region69: #{_lambda_.1} parent=11 // pred_check
          %p590 = pneg %p371
        $region70: #{_lambda_.1} parent=11 // pred_check_branch
          %592 = sbr.rel (%p590) target = $region72
        $region71: #{_lambda_.1} parent=11 // pred_region
          %594 = vsyncadd [#allocation24], 0
          %s595 = sshll.u32 %s15, 4
          %s596 = int_to_ptr.hbm [resolvable:$true] %s595
          %s597 = sshll.u32 [#allocation23], 4
          %s598 = int_to_ptr.vmem [resolvable:$true] %s597
          %603 = dma.hbm_to_vmem [thread:$0]  %s596, 320, %s598, [#allocation24], 64, 64, 4
        $region72: #{_lambda_.1} parent=11 // pred_fallthru
          _
        // Predicated region
        $region73: #{_lambda_.1} parent=11 // pred_check
          %p604 = pneg %p392
        $region74: #{_lambda_.1} parent=11 // pred_check_branch
          %606 = sbr.rel (%p604) target = $region76
        $region75: #{_lambda_.1} parent=11 // pred_region
          _
        $region76: #{_lambda_.1} parent=11 // pred_fallthru
          _
      $region12: #{_lambda_.1} parent=5 // pred_fallthru
        _
      %p607 = scmp.lt.s32.totalorder %s30, 2
      // Predicated region
      $region77: #{_lambda_.1} parent=5 // pred_check
        %p608 = pneg %p607
      $region78: #{_lambda_.1} parent=5 // pred_check_branch
        %610 = sbr.rel (%p608) target = $region80
      $region79: #{_lambda_.1} parent=5 // pred_region
        // Predicated region
        $region81: #{_lambda_.1} parent=79 // pred_check
          %p611 = pneg %p50
        $region82: #{_lambda_.1} parent=79 // pred_check_branch
          %613 = sbr.rel (%p611) target = $region84
        $region83: #{_lambda_.1} parent=79 // pred_region
          %p614 = scmp.lt.s32.totalorder %s30, 1
          %s615 = scalar_select %p614, %s30, 1
          %s616 = smul.addr %s615, 8
          %s617 = smul.addr %s616, 8
          %s618 = scalar_lea.vmem %s0, %s617
        $region84: #{_lambda_.1} parent=79 // pred_fallthru
          _
      $region80: #{_lambda_.1} parent=5 // pred_fallthru
        _
      %p619 = scmp.le.s32.totalorder 1, %s30
      %p620 = scmp.lt.s32.totalorder %s30, 3
      %p621 = pnand %p619, %p620
      %p622 = pneg %p621
      // Predicated region
      $region85: #{_lambda_.1} parent=5 // pred_check
        _
      $region86: #{_lambda_.1} parent=5 // pred_check_branch
        %624 = sbr.rel (%p621) target = $region88
      $region87: #{_lambda_.1} parent=5 // pred_region
        %s625 = ssub.s32 %s30, 1
        // Predicated region
        $region89: #{_lambda_.1} parent=87 // pred_check
          %p626 = pneg %p77
        $region90: #{_lambda_.1} parent=87 // pred_check_branch
          %628 = sbr.rel (%p626) target = $region92
        $region91: #{_lambda_.1} parent=87 // pred_region
          %630 = dma.done [#allocation7], 128
        $region92: #{_lambda_.1} parent=87 // pred_fallthru
          _
        // Predicated region
        $region93: #{_lambda_.1} parent=87 // pred_check
          %p631 = pneg %p98
        $region94: #{_lambda_.1} parent=87 // pred_check_branch
          %633 = sbr.rel (%p631) target = $region96
        $region95: #{_lambda_.1} parent=87 // pred_region
          %635 = dma.done [#allocation9], 2304
        $region96: #{_lambda_.1} parent=87 // pred_fallthru
          _
        // Predicated region
        $region97: #{_lambda_.1} parent=87 // pred_check
          %p636 = pneg %p119
        $region98: #{_lambda_.1} parent=87 // pred_check_branch
          %638 = sbr.rel (%p636) target = $region100
        $region99: #{_lambda_.1} parent=87 // pred_region
          %640 = dma.done [#allocation9], 2304
        $region100: #{_lambda_.1} parent=87 // pred_fallthru
          _
        // Predicated region
        $region101: #{_lambda_.1} parent=87 // pred_check
          %p641 = pneg %p140
        $region102: #{_lambda_.1} parent=87 // pred_check_branch
          %643 = sbr.rel (%p641) target = $region104
        $region103: #{_lambda_.1} parent=87 // pred_region
          %645 = dma.done [#allocation12], 2048
        $region104: #{_lambda_.1} parent=87 // pred_fallthru
          _
        // Predicated region
        $region105: #{_lambda_.1} parent=87 // pred_check
          %p646 = pneg %p161
        $region106: #{_lambda_.1} parent=87 // pred_check_branch
          %648 = sbr.rel (%p646) target = $region108
        $region107: #{_lambda_.1} parent=87 // pred_region
          %650 = dma.done [#allocation12], 320
        $region108: #{_lambda_.1} parent=87 // pred_fallthru
          _
        // Predicated region
        $region109: #{_lambda_.1} parent=87 // pred_check
          %p651 = pneg %p182
        $region110: #{_lambda_.1} parent=87 // pred_check_branch
          %653 = sbr.rel (%p651) target = $region112
        $region111: #{_lambda_.1} parent=87 // pred_region
          %655 = dma.done [#allocation15], 320
        $region112: #{_lambda_.1} parent=87 // pred_fallthru
          _
        // Predicated region
        $region113: #{_lambda_.1} parent=87 // pred_check
          %p656 = pneg %p245
        $region114: #{_lambda_.1} parent=87 // pred_check_branch
          %658 = sbr.rel (%p656) target = $region116
        $region115: #{_lambda_.1} parent=87 // pred_region
          %660 = dma.done [#allocation15], 384
        $region116: #{_lambda_.1} parent=87 // pred_fallthru
          _
        // Predicated region
        $region117: #{_lambda_.1} parent=87 // pred_check
          %p661 = pneg %p266
        $region118: #{_lambda_.1} parent=87 // pred_check_branch
          %663 = sbr.rel (%p661) target = $region120
        $region119: #{_lambda_.1} parent=87 // pred_region
          %665 = dma.done [#allocation18], 4608
        $region120: #{_lambda_.1} parent=87 // pred_fallthru
          _
        // Predicated region
        $region121: #{_lambda_.1} parent=87 // pred_check
          %p666 = pneg %p287
        $region122: #{_lambda_.1} parent=87 // pred_check_branch
          %668 = sbr.rel (%p666) target = $region124
        $region123: #{_lambda_.1} parent=87 // pred_region
          %670 = dma.done [#allocation18], 64
        $region124: #{_lambda_.1} parent=87 // pred_fallthru
          _
        // Predicated region
        $region125: #{_lambda_.1} parent=87 // pred_check
          %p671 = pneg %p308
        $region126: #{_lambda_.1} parent=87 // pred_check_branch
          %673 = sbr.rel (%p671) target = $region128
        $region127: #{_lambda_.1} parent=87 // pred_region
          %675 = dma.done [#allocation21], 576
        $region128: #{_lambda_.1} parent=87 // pred_fallthru
          _
        // Predicated region
        $region129: #{_lambda_.1} parent=87 // pred_check
          %p676 = pneg %p329
        $region130: #{_lambda_.1} parent=87 // pred_check_branch
          %678 = sbr.rel (%p676) target = $region132
        $region131: #{_lambda_.1} parent=87 // pred_region
          %680 = dma.done [#allocation21], 4608
        $region132: #{_lambda_.1} parent=87 // pred_fallthru
          _
        // Predicated region
        $region133: #{_lambda_.1} parent=87 // pred_check
          %p681 = pneg %p371
        $region134: #{_lambda_.1} parent=87 // pred_check_branch
          %683 = sbr.rel (%p681) target = $region136
        $region135: #{_lambda_.1} parent=87 // pred_region
          %685 = dma.done [#allocation24], 320
        $region136: #{_lambda_.1} parent=87 // pred_fallthru
          _
        %p686 = scmp.lt.s32.totalorder %s35, 1
        %s687 = scalar_select %p686, %s35, 1
        %s688 = smul.addr %s687, 8
        %s689 = smul.addr %s688, 8
        %s690 = scalar_lea.vmem %s0, %s689
        %p691 = pneg %p56
        %p692 = pneg %p53
        %p693 = pneg %p77
        %p694 = pneg %p74
        %p695 = pneg %p98
        %p696 = pneg %p95
        %p697 = pneg %p119
        %p698 = pneg %p116
        %p699 = pneg %p140
        %p700 = pneg %p137
        %p701 = pneg %p161
        %p702 = pneg %p158
        %p703 = pneg %p182
        %p704 = pneg %p179
        %p705 = pneg %p203
        %p706 = pneg %p200
        %p707 = pneg %p224
        %p708 = pneg %p221
        %p709 = pneg %p245
        %p710 = pneg %p242
        %p711 = pneg %p266
        %p712 = pneg %p263
        %p713 = pneg %p287
        %p714 = pneg %p284
        %p715 = pneg %p308
        %p716 = pneg %p305
        %p717 = pneg %p329
        %p718 = pneg %p326
        %p719 = pneg %p350
        %p720 = pneg %p347
        %p721 = pneg %p371
        %p722 = pneg %p368
        %p723 = pneg %p392
        %p724 = pneg %p389
        %p725 = pneg %p418
        %p726 = pneg %p415
        %p727 = scmp.lt.s32.totalorder %s35, 1
        %s728 = scalar_select %p727, %s35, 1
        %s729 = smul.addr %s728, 8
        %s730 = smul.addr %s729, 8
        %s731 = scalar_lea.vmem %s17, %s730
        %p732 = scmp.lt.s32.totalorder %s35, 1
        %s733 = scalar_select %p732, %s35, 1
        %s734 = smul.addr %s733, 8
        %s735 = smul.addr %s734, 8
        %s736 = scalar_lea.vmem %s0, %s735
        %p737 = scmp.lt.s32.totalorder %s35, 1
        %s738 = scalar_select %p737, %s35, 1
        %s739 = smul.addr %s738, 8
        %s740 = smul.addr %s739, 8
        %s741 = scalar_lea.vmem %s17, %s740
        %v743 = vld [vmem:[%s736] sm:$0xff]
        %v744 = vld [vmem:[%s736 + $0x8] sm:$0xff]
        %v745 = vld [vmem:[%s736 + $0x10] sm:$0xff]
        %v746 = vld [vmem:[%s736 + $0x18] sm:$0xff]
        %v747 = vld [vmem:[%s736 + $0x20] sm:$0xff]
        %v748 = vld [vmem:[%s736 + $0x28] sm:$0xff]
        %v749 = vld [vmem:[%s736 + $0x30] sm:$0xff]
        %v750 = vld [vmem:[%s736 + $0x38] sm:$0xff]
        %v751 = vld [vmem:[#allocation6] sm:$0xff]
        %vm752 = vcmask 64512
        %v754 = vsel %vm752, %v743, 0
        %v757 = vsel %vm752, %v744, 0
        %v760 = vsel %vm752, %v745, 0
        %v763 = vsel %vm752, %v746, 0
        %v766 = vsel %vm752, %v747, 0
        %v769 = vsel %vm752, %v748, 0
        %v772 = vsel %vm752, %v749, 0
        %v775 = vsel %vm752, %v750, 0
        %777 = vmatpush.msra.mxu0 0.0
        %778 = vmatpush.msra.mxu0 0.0
        %779 = vmatpush.msra.mxu0 0.0
        %780 = vmatpush.msra.mxu0 0.0
        %781 = vmatpush.msra.mxu0 0.0
        %782 = vmatpush.msra.mxu0 0.0
        %783 = vmatpush.msra.mxu0 0.0
        %784 = vmatpush.msra.mxu0 0.0
        %785 = vmatpush.msra.mxu0 0.0
        %786 = vmatpush.msra.mxu0 0.0
        %787 = vmatpush.msra.mxu0 0.0
        %788 = vmatpush.msra.mxu0 0.0
        %789 = vmatpush.msra.mxu0 0.0
        %790 = vmatpush.msra.mxu0 0.0
        %791 = vmatpush.msra.mxu0 0.0
        %792 = vmatpush.msra.mxu0 %v751
        %793 = vmatmul.f32.gmra.mxu0 %v754
        %v794 = vpop.f32.mrf.mxu0
        %v795 = vadd.f32 0.0, %v794
        %796 = vmatmul.f32.gmra.mxu0 %v757
        %v797 = vpop.f32.mrf.mxu0
        %v798 = vadd.f32 0.0, %v797
        %799 = vmatmul.f32.gmra.mxu0 %v760
        %v800 = vpop.f32.mrf.mxu0
        %v801 = vadd.f32 0.0, %v800
        %802 = vmatmul.f32.gmra.mxu0 %v763
        %v803 = vpop.f32.mrf.mxu0
        %v804 = vadd.f32 0.0, %v803
        %805 = vmatmul.f32.gmra.mxu0 %v766
        %v806 = vpop.f32.mrf.mxu0
        %v807 = vadd.f32 0.0, %v806
        %808 = vmatmul.f32.gmra.mxu0 %v769
        %v809 = vpop.f32.mrf.mxu0
        %v810 = vadd.f32 0.0, %v809
        %811 = vmatmul.f32.gmra.mxu0 %v772
        %v812 = vpop.f32.mrf.mxu0
        %v813 = vadd.f32 0.0, %v812
        %814 = vmatmul.f32.gmra.mxu0 %v775
        %v815 = vpop.f32.mrf.mxu0
        %v816 = vadd.f32 0.0, %v815
        %817 = vdwg.mxu0
        %v818 = vld [vmem:[#allocation19] sm:$0x1]
        %v819 = vperm.slane %v818, 0
        %v820 = vadd.f32 %v795, %v819
        %v821 = vadd.f32 %v798, %v819
        %v822 = vadd.f32 %v801, %v819
        %v823 = vadd.f32 %v804, %v819
        %v824 = vadd.f32 %v807, %v819
        %v825 = vadd.f32 %v810, %v819
        %v826 = vadd.f32 %v813, %v819
        %v827 = vadd.f32 %v816, %v819
        %v828 = vmax.f32 %v820, 0.0
        %v829 = vmax.f32 %v821, 0.0
        %v830 = vmax.f32 %v822, 0.0
        %v831 = vmax.f32 %v823, 0.0
        %v832 = vmax.f32 %v824, 0.0
        %v833 = vmax.f32 %v825, 0.0
        %v834 = vmax.f32 %v826, 0.0
        %v835 = vmax.f32 %v827, 0.0
        %v836 = vmin.f32 %v828, 6.0
        %v837 = vmin.f32 %v829, 6.0
        %v838 = vmin.f32 %v830, 6.0
        %v839 = vmin.f32 %v831, 6.0
        %v840 = vmin.f32 %v832, 6.0
        %v841 = vmin.f32 %v833, 6.0
        %v842 = vmin.f32 %v834, 6.0
        %v843 = vmin.f32 %v835, 6.0
        %vm844 = vcmask 523264
        %v846 = vsel %vm844, 0.015625, 0
        %848 = vmatpush.msra.mxu0 0.0
        %849 = vmatpush.msra.mxu0 0.0
        %850 = vmatpush.msra.mxu0 0.0
        %851 = vmatpush.msra.mxu0 0.0
        %852 = vmatpush.msra.mxu0 0.0
        %853 = vmatpush.msra.mxu0 0.0
        %854 = vmatpush.msra.mxu0 0.0
        %855 = vmatpush.msra.mxu0 0.0
        %856 = vmatpush.msra.mxu0 %v843
        %857 = vmatpush.msra.mxu0 %v842
        %858 = vmatpush.msra.mxu0 %v841
        %859 = vmatpush.msra.mxu0 %v840
        %860 = vmatpush.msra.mxu0 %v839
        %861 = vmatpush.msra.mxu0 %v838
        %862 = vmatpush.msra.mxu0 %v837
        %863 = vmatpush.msra.mxu0 %v836
        %864 = vmatmul.f32.gmra.mxu0 %v846
        %v865 = vpop.f32.mrf.mxu0
        %v866 = vadd.f32 0.0, %v865
        %867 = vdwg.mxu0
        %v868 = vld [vmem:[#allocation8] sm:$0xff]
        %v869 = vld [vmem:[#allocation8 + $0x8] sm:$0xff]
        %v870 = vld [vmem:[#allocation8 + $0x10] sm:$0xff]
        %v871 = vld [vmem:[#allocation8 + $0x18] sm:$0xff]
        %v872 = vld [vmem:[#allocation8 + $0x20] sm:$0xff]
        %v873 = vld [vmem:[#allocation8 + $0x28] sm:$0xff]
        %v874 = vld [vmem:[#allocation8 + $0x30] sm:$0xff]
        %v875 = vld [vmem:[#allocation8 + $0x38] sm:$0xff]
        %v876 = vld [vmem:[#allocation8 + $0x40] sm:$0xff]
        %v877 = vld [vmem:[#allocation8 + $0x48] sm:$0xff]
        %v878 = vld [vmem:[#allocation8 + $0x50] sm:$0xff]
        %v879 = vld [vmem:[#allocation8 + $0x58] sm:$0xff]
        %v880 = vld [vmem:[#allocation8 + $0x60] sm:$0xff]
        %v881 = vld [vmem:[#allocation8 + $0x68] sm:$0xff]
        %v882 = vld [vmem:[#allocation8 + $0x70] sm:$0xff]
        %v883 = vld [vmem:[#allocation8 + $0x78] sm:$0xff]
        %v884 = vld [vmem:[#allocation8 + $0x80] sm:$0xff]
        %v885 = vld [vmem:[#allocation8 + $0x88] sm:$0x7]
        %894 = vrot.lane.b32.xlu0 %v820, 124
        %v895 = vpop.permute.xlu0 %894
        %896 = vrot.lane.b32.xlu0 %v821, 124
        %v897 = vpop.permute.xlu0 %896
        %898 = vrot.lane.b32.xlu0 %v822, 124
        %v899 = vpop.permute.xlu0 %898
        %900 = vrot.lane.b32.xlu0 %v823, 124
        %v901 = vpop.permute.xlu0 %900
        %902 = vrot.lane.b32.xlu0 %v824, 124
        %v903 = vpop.permute.xlu0 %902
        %904 = vrot.lane.b32.xlu0 %v825, 124
        %v905 = vpop.permute.xlu0 %904
        %906 = vrot.lane.b32.xlu0 %v826, 124
        %v907 = vpop.permute.xlu0 %906
        %908 = vrot.lane.b32.xlu0 %v827, 124
        %v909 = vpop.permute.xlu0 %908
        %v919 = vsel %vm844, %v868, 0
        %v922 = vsel %vm844, %v869, 0
        %v925 = vsel %vm844, %v870, 0
        %v928 = vsel %vm844, %v871, 0
        %v931 = vsel %vm844, %v872, 0
        %v934 = vsel %vm844, %v873, 0
        %v937 = vsel %vm844, %v874, 0
        %v940 = vsel %vm844, %v875, 0
        %v943 = vsel %vm844, %v876, 0
        %v946 = vsel %vm844, %v877, 0
        %v949 = vsel %vm844, %v878, 0
        %v952 = vsel %vm844, %v879, 0
        %v955 = vsel %vm844, %v880, 0
        %v958 = vsel %vm844, %v881, 0
        %v961 = vsel %vm844, %v882, 0
        %v964 = vsel %vm844, %v883, 0
        %v967 = vsel %vm844, %v884, 0
        %v970 = vsel %vm844, %v885, 0
        %972 = vmatpush.msra.mxu0 0.0
        %973 = vmatpush.msra.mxu0 0.0
        %974 = vmatpush.msra.mxu0 0.0
        %975 = vmatpush.msra.mxu0 0.0
        %976 = vmatpush.msra.mxu0 0.0
        %977 = vmatpush.msra.mxu0 0.0
        %978 = vmatpush.msra.mxu0 0.0
        %979 = vmatpush.msra.mxu0 0.0
        %980 = vmatpush.msra.mxu0 %v909
        %981 = vmatpush.msra.mxu0 %v907
        %982 = vmatpush.msra.mxu0 %v905
        %983 = vmatpush.msra.mxu0 %v903
        %984 = vmatpush.msra.mxu0 %v901
        %985 = vmatpush.msra.mxu0 %v899
        %986 = vmatpush.msra.mxu0 %v897
        %987 = vmatpush.msra.mxu0 %v895
        %988 = vmatmul.f32.gmra.mxu0 %v919
        %v989 = vpop.f32.mrf.mxu0
        %v990 = vadd.f32 0.0, %v989
        %991 = vmatmul.f32.gmra.mxu0 %v922
        %v992 = vpop.f32.mrf.mxu0
        %v993 = vadd.f32 0.0, %v992
        %994 = vmatmul.f32.gmra.mxu0 %v925
        %v995 = vpop.f32.mrf.mxu0
        %v996 = vadd.f32 0.0, %v995
        %997 = vmatmul.f32.gmra.mxu0 %v928
        %v998 = vpop.f32.mrf.mxu0
        %v999 = vadd.f32 0.0, %v998
        %1000 = vmatmul.f32.gmra.mxu0 %v931
        %v1001 = vpop.f32.mrf.mxu0
        %v1002 = vadd.f32 0.0, %v1001
        %1003 = vmatmul.f32.gmra.mxu0 %v934
        %v1004 = vpop.f32.mrf.mxu0
        %v1005 = vadd.f32 0.0, %v1004
        %1006 = vmatmul.f32.gmra.mxu0 %v937
        %v1007 = vpop.f32.mrf.mxu0
        %v1008 = vadd.f32 0.0, %v1007
        %1009 = vmatmul.f32.gmra.mxu0 %v940
        %v1010 = vpop.f32.mrf.mxu0
        %v1011 = vadd.f32 0.0, %v1010
        %1012 = vmatmul.f32.gmra.mxu0 %v943
        %v1013 = vpop.f32.mrf.mxu0
        %v1014 = vadd.f32 0.0, %v1013
        %1015 = vmatmul.f32.gmra.mxu0 %v946
        %v1016 = vpop.f32.mrf.mxu0
        %v1017 = vadd.f32 0.0, %v1016
        %1018 = vmatmul.f32.gmra.mxu0 %v949
        %v1019 = vpop.f32.mrf.mxu0
        %v1020 = vadd.f32 0.0, %v1019
        %1021 = vmatmul.f32.gmra.mxu0 %v952
        %v1022 = vpop.f32.mrf.mxu0
        %v1023 = vadd.f32 0.0, %v1022
        %1024 = vmatmul.f32.gmra.mxu0 %v955
        %v1025 = vpop.f32.mrf.mxu0
        %v1026 = vadd.f32 0.0, %v1025
        %1027 = vmatmul.f32.gmra.mxu0 %v958
        %v1028 = vpop.f32.mrf.mxu0
        %v1029 = vadd.f32 0.0, %v1028
        %1030 = vmatmul.f32.gmra.mxu0 %v961
        %v1031 = vpop.f32.mrf.mxu0
        %v1032 = vadd.f32 0.0, %v1031
        %1033 = vmatmul.f32.gmra.mxu0 %v964
        %v1034 = vpop.f32.mrf.mxu0
        %v1035 = vadd.f32 0.0, %v1034
        %1036 = vmatmul.f32.gmra.mxu0 %v967
        %v1037 = vpop.f32.mrf.mxu0
        %v1038 = vadd.f32 0.0, %v1037
        %1039 = vmatmul.f32.gmra.mxu0 %v970
        %v1040 = vpop.f32.mrf.mxu0
        %v1041 = vadd.f32 0.0, %v1040
        %1042 = vdwg.mxu0
        %v1043 = vmax.f32 %v990, 0.0
        %v1044 = vmax.f32 %v993, 0.0
        %v1045 = vmax.f32 %v996, 0.0
        %v1046 = vmax.f32 %v999, 0.0
        %v1047 = vmax.f32 %v1002, 0.0
        %v1048 = vmax.f32 %v1005, 0.0
        %v1049 = vmax.f32 %v1008, 0.0
        %v1050 = vmax.f32 %v1011, 0.0
        %v1051 = vmax.f32 %v1014, 0.0
        %v1052 = vmax.f32 %v1017, 0.0
        %v1053 = vmax.f32 %v1020, 0.0
        %v1054 = vmax.f32 %v1023, 0.0
        %v1055 = vmax.f32 %v1026, 0.0
        %v1056 = vmax.f32 %v1029, 0.0
        %v1057 = vmax.f32 %v1032, 0.0
        %v1058 = vmax.f32 %v1035, 0.0
        %v1059 = vmax.f32 %v1038, 0.0
        %v1060 = vmax.f32 %v1041, 0.0
        %v1061 = vmin.f32 %v1043, 6.0
        %v1062 = vmin.f32 %v1044, 6.0
        %v1063 = vmin.f32 %v1045, 6.0
        %v1064 = vmin.f32 %v1046, 6.0
        %v1065 = vmin.f32 %v1047, 6.0
        %v1066 = vmin.f32 %v1048, 6.0
        %v1067 = vmin.f32 %v1049, 6.0
        %v1068 = vmin.f32 %v1050, 6.0
        %v1069 = vmin.f32 %v1051, 6.0
        %v1070 = vmin.f32 %v1052, 6.0
        %v1071 = vmin.f32 %v1053, 6.0
        %v1072 = vmin.f32 %v1054, 6.0
        %v1073 = vmin.f32 %v1055, 6.0
        %v1074 = vmin.f32 %v1056, 6.0
        %v1075 = vmin.f32 %v1057, 6.0
        %v1076 = vmin.f32 %v1058, 6.0
        %v1077 = vmin.f32 %v1059, 6.0
        %v1078 = vmin.f32 %v1060, 6.0
        %v1079 = vld [vmem:[#allocation10] sm:$0xff]
        %v1080 = vld [vmem:[#allocation10 + $0x8] sm:$0xff]
        %v1081 = vld [vmem:[#allocation10 + $0x10] sm:$0xff]
        %v1082 = vld [vmem:[#allocation10 + $0x18] sm:$0xff]
        %v1083 = vld [vmem:[#allocation10 + $0x20] sm:$0xff]
        %v1084 = vld [vmem:[#allocation10 + $0x28] sm:$0xff]
        %v1085 = vld [vmem:[#allocation10 + $0x30] sm:$0xff]
        %v1086 = vld [vmem:[#allocation10 + $0x38] sm:$0xff]
        %v1087 = vld [vmem:[#allocation10 + $0x40] sm:$0xff]
        %v1088 = vld [vmem:[#allocation10 + $0x48] sm:$0xff]
        %v1089 = vld [vmem:[#allocation10 + $0x50] sm:$0xff]
        %v1090 = vld [vmem:[#allocation10 + $0x58] sm:$0xff]
        %v1091 = vld [vmem:[#allocation10 + $0x60] sm:$0xff]
        %v1092 = vld [vmem:[#allocation10 + $0x68] sm:$0xff]
        %v1093 = vld [vmem:[#allocation10 + $0x70] sm:$0xff]
        %v1094 = vld [vmem:[#allocation10 + $0x78] sm:$0xff]
        %v1095 = vld [vmem:[#allocation10 + $0x80] sm:$0xff]
        %v1096 = vld [vmem:[#allocation10 + $0x88] sm:$0x7]
        %v1097 = vmul.f32 %v1061, %v1079
        %v1098 = vmul.f32 %v1062, %v1080
        %v1099 = vmul.f32 %v1063, %v1081
        %v1100 = vmul.f32 %v1064, %v1082
        %v1101 = vmul.f32 %v1065, %v1083
        %v1102 = vmul.f32 %v1066, %v1084
        %v1103 = vmul.f32 %v1067, %v1085
        %v1104 = vmul.f32 %v1068, %v1086
        %v1105 = vmul.f32 %v1069, %v1087
        %v1106 = vmul.f32 %v1070, %v1088
        %v1107 = vmul.f32 %v1071, %v1089
        %v1108 = vmul.f32 %v1072, %v1090
        %v1109 = vmul.f32 %v1073, %v1091
        %v1110 = vmul.f32 %v1074, %v1092
        %v1111 = vmul.f32 %v1075, %v1093
        %v1112 = vmul.f32 %v1076, %v1094
        %v1113 = vmul.f32 %v1077, %v1095
        %v1114 = vmul.f32 %v1078, %v1096
        %v1115 = vld [vmem:[#allocation11] sm:$0xff]
        %v1116 = vld [vmem:[#allocation11 + $0x8] sm:$0xff]
        %v1117 = vld [vmem:[#allocation11 + $0x10] sm:$0xff]
        %v1118 = vld [vmem:[#allocation11 + $0x18] sm:$0xff]
        %v1119 = vld [vmem:[#allocation11 + $0x20] sm:$0xff]
        %v1120 = vld [vmem:[#allocation11 + $0x28] sm:$0xff]
        %v1121 = vld [vmem:[#allocation11 + $0x30] sm:$0xff]
        %v1122 = vld [vmem:[#allocation11 + $0x38] sm:$0xff]
        %v1123 = vld [vmem:[#allocation11 + $0x40] sm:$0xff]
        %v1124 = vld [vmem:[#allocation11 + $0x48] sm:$0xff]
        %v1125 = vld [vmem:[#allocation11 + $0x50] sm:$0xff]
        %v1126 = vld [vmem:[#allocation11 + $0x58] sm:$0xff]
        %v1127 = vld [vmem:[#allocation11 + $0x60] sm:$0xff]
        %v1128 = vld [vmem:[#allocation11 + $0x68] sm:$0xff]
        %v1129 = vld [vmem:[#allocation11 + $0x70] sm:$0xff]
        %v1130 = vld [vmem:[#allocation11 + $0x78] sm:$0xff]
        %vm1131 = vcmask 89088
        %v1133 = vsel %vm1131, %v1116, 0
        %v1136 = vsel %vm1131, %v1118, 0
        %v1139 = vsel %vm1131, %v1120, 0
        %v1142 = vsel %vm1131, %v1122, 0
        %v1145 = vsel %vm1131, %v1124, 0
        %v1148 = vsel %vm1131, %v1126, 0
        %v1151 = vsel %vm1131, %v1128, 0
        %v1154 = vsel %vm1131, %v1130, 0
        %vm1156 = vcmask 1042432
        %v1158 = vsel %vm1156, %v1114, 0
        %1160 = vmatpush.msra.mxu0 %v1112
        %1161 = vmatpush.msra.mxu0 %v1111
        %1162 = vmatpush.msra.mxu0 %v1110
        %1163 = vmatpush.msra.mxu0 %v1109
        %1164 = vmatpush.msra.mxu0 %v1108
        %1165 = vmatpush.msra.mxu0 %v1107
        %1166 = vmatpush.msra.mxu0 %v1106
        %1167 = vmatpush.msra.mxu0 %v1105
        %1168 = vmatpush.msra.mxu0 %v1104
        %1169 = vmatpush.msra.mxu0 %v1103
        %1170 = vmatpush.msra.mxu0 %v1102
        %1171 = vmatpush.msra.mxu0 %v1101
        %1172 = vmatpush.msra.mxu0 %v1100
        %1173 = vmatpush.msra.mxu0 %v1099
        %1174 = vmatpush.msra.mxu0 %v1098
        %1175 = vmatpush.msra.mxu0 %v1097
        %1176 = vmatmul.f32.gmra.mxu0 %v1115
        %v1177 = vpop.f32.mrf.mxu0
        %v1178 = vadd.f32 0.0, %v1177
        %1179 = vmatmul.f32.gmra.mxu0 %v1117
        %v1180 = vpop.f32.mrf.mxu0
        %v1181 = vadd.f32 0.0, %v1180
        %1182 = vmatmul.f32.gmra.mxu0 %v1119
        %v1183 = vpop.f32.mrf.mxu0
        %v1184 = vadd.f32 0.0, %v1183
        %1185 = vmatmul.f32.gmra.mxu0 %v1121
        %v1186 = vpop.f32.mrf.mxu0
        %v1187 = vadd.f32 0.0, %v1186
        %1188 = vmatmul.f32.gmra.mxu0 %v1123
        %v1189 = vpop.f32.mrf.mxu0
        %v1190 = vadd.f32 0.0, %v1189
        %1191 = vmatmul.f32.gmra.mxu0 %v1125
        %v1192 = vpop.f32.mrf.mxu0
        %v1193 = vadd.f32 0.0, %v1192
        %1194 = vmatmul.f32.gmra.mxu0 %v1127
        %v1195 = vpop.f32.mrf.mxu0
        %v1196 = vadd.f32 0.0, %v1195
        %1197 = vmatmul.f32.gmra.mxu0 %v1129
        %v1198 = vpop.f32.mrf.mxu0
        %v1199 = vadd.f32 0.0, %v1198
        %1200 = vdwg.mxu0
        %1201 = vmatpush.msra.mxu0 0.0
        %1202 = vmatpush.msra.mxu0 0.0
        %1203 = vmatpush.msra.mxu0 0.0
        %1204 = vmatpush.msra.mxu0 0.0
        %1205 = vmatpush.msra.mxu0 0.0
        %1206 = vmatpush.msra.mxu0 0.0
        %1207 = vmatpush.msra.mxu0 0.0
        %1208 = vmatpush.msra.mxu0 0.0
        %1209 = vmatpush.msra.mxu0 0.0
        %1210 = vmatpush.msra.mxu0 0.0
        %1211 = vmatpush.msra.mxu0 0.0
        %1212 = vmatpush.msra.mxu0 0.0
        %1213 = vmatpush.msra.mxu0 0.0
        %1214 = vmatpush.msra.mxu0 0.0
        %1215 = vmatpush.msra.mxu0 %v1158
        %1216 = vmatpush.msra.mxu0 %v1113
        %1217 = vmatmul.f32.gmra.mxu0 %v1133
        %v1218 = vpop.f32.mrf.mxu0
        %v1219 = vadd.f32 %v1178, %v1218
        %1220 = vmatmul.f32.gmra.mxu0 %v1136
        %v1221 = vpop.f32.mrf.mxu0
        %v1222 = vadd.f32 %v1181, %v1221
        %1223 = vmatmul.f32.gmra.mxu0 %v1139
        %v1224 = vpop.f32.mrf.mxu0
        %v1225 = vadd.f32 %v1184, %v1224
        %1226 = vmatmul.f32.gmra.mxu0 %v1142
        %v1227 = vpop.f32.mrf.mxu0
        %v1228 = vadd.f32 %v1187, %v1227
        %1229 = vmatmul.f32.gmra.mxu0 %v1145
        %v1230 = vpop.f32.mrf.mxu0
        %v1231 = vadd.f32 %v1190, %v1230
        %1232 = vmatmul.f32.gmra.mxu0 %v1148
        %v1233 = vpop.f32.mrf.mxu0
        %v1234 = vadd.f32 %v1193, %v1233
        %1235 = vmatmul.f32.gmra.mxu0 %v1151
        %v1236 = vpop.f32.mrf.mxu0
        %v1237 = vadd.f32 %v1196, %v1236
        %1238 = vmatmul.f32.gmra.mxu0 %v1154
        %v1239 = vpop.f32.mrf.mxu0
        %v1240 = vadd.f32 %v1199, %v1239
        %1241 = vdwg.mxu0
        %v1242 = vpack.c.bf16 %v744, %v743
        %v1243 = vpack.c.bf16 %v746, %v745
        %v1244 = vpack.c.bf16 %v748, %v747
        %v1245 = vpack.c.bf16 %v750, %v749
        %v1246 = vpack.c.bf16 %v1222, %v1219
        %v1247 = vpack.c.bf16 %v1228, %v1225
        %v1248 = vpack.c.bf16 %v1234, %v1231
        %v1249 = vpack.c.bf16 %v1240, %v1237
        %v1250 = vpack.c.bf16 %v866, %v866
        %v1251 = vld [vmem:[#allocation13] sm:$0xf]
        %v1252 = vld [vmem:[#allocation13 + $0x4] sm:$0xf]
        %v1253 = vld [vmem:[#allocation13 + $0x8] sm:$0xf]
        %v1254 = vld [vmem:[#allocation13 + $0xc] sm:$0xf]
        %v1258 = vunpack.c.l.b16 %v1252
        %v1259 = vunpack.c.l.b16 %v1253
        %v1260 = vunpack.c.l.b16 %v1254
        %v1261 = vpack.c.b16 %v1259, %v1258
        %v1262 = vpack.c.b16 %v1260, %v1260
        %vm1264 = vcmask 195584
        %v1266 = vsel %vm1264, %v1246, 0
        %v1269 = vsel %vm1264, %v1247, 0
        %v1272 = vsel %vm1264, %v1248, 0
        %v1275 = vsel %vm1264, %v1249, 0
        %vm1277 = vcmask 1043456
        %v1279 = vsel %vm1277, %v1262, 0
        %1281 = vmatpush.bf16.msra.mxu0 0
        %1282 = vmatpush.bf16.msra.mxu0 0
        %1283 = vmatpush.bf16.msra.mxu0 0
        %1284 = vmatpush.bf16.msra.mxu0 0
        %1285 = vmatpush.bf16.msra.mxu0 0
        %1286 = vmatpush.bf16.msra.mxu0 0
        %1287 = vmatpush.bf16.msra.mxu0 %v1279
        %1288 = vmatpush.bf16.msra.mxu0 %v1261
        %1289 = vmatmul.bf16.gmra.mxu0 %v1266
        %v1290 = vpop.f32.mrf.mxu0
        %v1291 = vadd.f32 0.0, %v1290
        %v1292 = vpop.f32.mrf.mxu0
        %v1293 = vadd.f32 0.0, %v1292
        %1294 = vmatmul.bf16.gmra.mxu0 %v1269
        %v1295 = vpop.f32.mrf.mxu0
        %v1296 = vadd.f32 0.0, %v1295
        %v1297 = vpop.f32.mrf.mxu0
        %v1298 = vadd.f32 0.0, %v1297
        %1299 = vmatmul.bf16.gmra.mxu0 %v1272
        %v1300 = vpop.f32.mrf.mxu0
        %v1301 = vadd.f32 0.0, %v1300
        %v1302 = vpop.f32.mrf.mxu0
        %v1303 = vadd.f32 0.0, %v1302
        %1304 = vmatmul.bf16.gmra.mxu0 %v1275
        %v1305 = vpop.f32.mrf.mxu0
        %v1306 = vadd.f32 0.0, %v1305
        %v1307 = vpop.f32.mrf.mxu0
        %v1308 = vadd.f32 0.0, %v1307
        %1309 = vdwg.mxu0
        %v1311 = vsel %vm752, %v1242, 0
        %v1314 = vsel %vm752, %v1243, 0
        %v1317 = vsel %vm752, %v1244, 0
        %v1320 = vsel %vm752, %v1245, 0
        %v1323 = vsel %vm1277, %v1251, 0
        %1325 = vmatpush.bf16.msra.mxu0 0
        %1326 = vmatpush.bf16.msra.mxu0 0
        %1327 = vmatpush.bf16.msra.mxu0 0
        %1328 = vmatpush.bf16.msra.mxu0 0
        %1329 = vmatpush.bf16.msra.mxu0 0
        %1330 = vmatpush.bf16.msra.mxu0 0
        %1331 = vmatpush.bf16.msra.mxu0 0
        %1332 = vmatpush.bf16.msra.mxu0 %v1323
        %1333 = vmatmul.bf16.gmra.mxu0 %v1311
        %v1334 = vpop.f32.mrf.mxu0
        %v1335 = vadd.f32 %v1291, %v1334
        %v1336 = vpop.f32.mrf.mxu0
        %v1337 = vadd.f32 %v1293, %v1336
        %1338 = vmatmul.bf16.gmra.mxu0 %v1314
        %v1339 = vpop.f32.mrf.mxu0
        %v1340 = vadd.f32 %v1296, %v1339
        %v1341 = vpop.f32.mrf.mxu0
        %v1342 = vadd.f32 %v1298, %v1341
        %1343 = vmatmul.bf16.gmra.mxu0 %v1317
        %v1344 = vpop.f32.mrf.mxu0
        %v1345 = vadd.f32 %v1301, %v1344
        %v1346 = vpop.f32.mrf.mxu0
        %v1347 = vadd.f32 %v1303, %v1346
        %1348 = vmatmul.bf16.gmra.mxu0 %v1320
        %v1349 = vpop.f32.mrf.mxu0
        %v1350 = vadd.f32 %v1306, %v1349
        %v1351 = vpop.f32.mrf.mxu0
        %v1352 = vadd.f32 %v1308, %v1351
        %1353 = vdwg.mxu0
        %v1354 = vld [vmem:[#allocation13 + $0x10] sm:$0x3]
        %vm1355 = vcmask 31744
        %v1357 = vsel %vm1355, %v1250, 0
        %vm1359 = vcmask 1041408
        %v1361 = vsel %vm1359, %v1354, 0
        %1363 = vmatpush.bf16.msra.mxu0 0
        %1364 = vmatpush.bf16.msra.mxu0 0
        %1365 = vmatpush.bf16.msra.mxu0 0
        %1366 = vmatpush.bf16.msra.mxu0 0
        %1367 = vmatpush.bf16.msra.mxu0 0
        %1368 = vmatpush.bf16.msra.mxu0 0
        %1369 = vmatpush.bf16.msra.mxu0 0
        %1370 = vmatpush.bf16.msra.mxu0 %v1361
        %1371 = vmatmul.bf16.gmra.mxu0 %v1357
        %v1372 = vpop.f32.mrf.mxu0
        %v1373 = vadd.f32 0.0, %v1372
        %v1374 = vpop.f32.mrf.mxu0
        %1375 = vdwg.mxu0
        %v1376 = vperm.slane %v1373, 0
        %v1377 = vadd.f32 %v1335, %v1376
        %v1378 = vadd.f32 %v1337, %v1376
        %v1379 = vadd.f32 %v1340, %v1376
        %v1380 = vadd.f32 %v1342, %v1376
        %v1381 = vadd.f32 %v1345, %v1376
        %v1382 = vadd.f32 %v1347, %v1376
        %v1383 = vadd.f32 %v1350, %v1376
        %v1384 = vadd.f32 %v1352, %v1376
        %v1385 = vld [vmem:[#allocation14] sm:$0xf]
        %v1386 = vld [vmem:[#allocation14 + $0x4] sm:$0xf]
        %v1387 = vld [vmem:[#allocation14 + $0x8] sm:$0xf]
        %v1388 = vld [vmem:[#allocation14 + $0xc] sm:$0xf]
        %v1392 = vunpack.c.l.b16 %v1386
        %v1393 = vunpack.c.l.b16 %v1387
        %v1394 = vunpack.c.l.b16 %v1388
        %v1395 = vpack.c.b16 %v1393, %v1392
        %v1396 = vpack.c.b16 %v1394, %v1394
        %v1399 = vsel %vm1277, %v1396, 0
        %1401 = vmatpush.bf16.msra.mxu0 0
        %1402 = vmatpush.bf16.msra.mxu0 0
        %1403 = vmatpush.bf16.msra.mxu0 0
        %1404 = vmatpush.bf16.msra.mxu0 0
        %1405 = vmatpush.bf16.msra.mxu0 0
        %1406 = vmatpush.bf16.msra.mxu0 0
        %1407 = vmatpush.bf16.msra.mxu0 %v1399
        %1408 = vmatpush.bf16.msra.mxu0 %v1395
        %1409 = vmatmul.bf16.gmra.mxu0 %v1266
        %v1410 = vpop.f32.mrf.mxu0
        %v1411 = vadd.f32 0.0, %v1410
        %v1412 = vpop.f32.mrf.mxu0
        %v1413 = vadd.f32 0.0, %v1412
        %1414 = vmatmul.bf16.gmra.mxu0 %v1269
        %v1415 = vpop.f32.mrf.mxu0
        %v1416 = vadd.f32 0.0, %v1415
        %v1417 = vpop.f32.mrf.mxu0
        %v1418 = vadd.f32 0.0, %v1417
        %1419 = vmatmul.bf16.gmra.mxu0 %v1272
        %v1420 = vpop.f32.mrf.mxu0
        %v1421 = vadd.f32 0.0, %v1420
        %v1422 = vpop.f32.mrf.mxu0
        %v1423 = vadd.f32 0.0, %v1422
        %1424 = vmatmul.bf16.gmra.mxu0 %v1275
        %v1425 = vpop.f32.mrf.mxu0
        %v1426 = vadd.f32 0.0, %v1425
        %v1427 = vpop.f32.mrf.mxu0
        %v1428 = vadd.f32 0.0, %v1427
        %1429 = vdwg.mxu0
        %v1431 = vsel %vm1277, %v1385, 0
        %1433 = vmatpush.bf16.msra.mxu0 0
        %1434 = vmatpush.bf16.msra.mxu0 0
        %1435 = vmatpush.bf16.msra.mxu0 0
        %1436 = vmatpush.bf16.msra.mxu0 0
        %1437 = vmatpush.bf16.msra.mxu0 0
        %1438 = vmatpush.bf16.msra.mxu0 0
        %1439 = vmatpush.bf16.msra.mxu0 0
        %1440 = vmatpush.bf16.msra.mxu0 %v1431
        %1441 = vmatmul.bf16.gmra.mxu0 %v1311
        %v1442 = vpop.f32.mrf.mxu0
        %v1443 = vadd.f32 %v1411, %v1442
        %v1444 = vpop.f32.mrf.mxu0
        %v1445 = vadd.f32 %v1413, %v1444
        %1446 = vmatmul.bf16.gmra.mxu0 %v1314
        %v1447 = vpop.f32.mrf.mxu0
        %v1448 = vadd.f32 %v1416, %v1447
        %v1449 = vpop.f32.mrf.mxu0
        %v1450 = vadd.f32 %v1418, %v1449
        %1451 = vmatmul.bf16.gmra.mxu0 %v1317
        %v1452 = vpop.f32.mrf.mxu0
        %v1453 = vadd.f32 %v1421, %v1452
        %v1454 = vpop.f32.mrf.mxu0
        %v1455 = vadd.f32 %v1423, %v1454
        %1456 = vmatmul.bf16.gmra.mxu0 %v1320
        %v1457 = vpop.f32.mrf.mxu0
        %v1458 = vadd.f32 %v1426, %v1457
        %v1459 = vpop.f32.mrf.mxu0
        %v1460 = vadd.f32 %v1428, %v1459
        %1461 = vdwg.mxu0
        %v1462 = vld [vmem:[#allocation14 + $0x10] sm:$0x3]
        %v1464 = vsel %vm1359, %v1462, 0
        %1466 = vmatpush.bf16.msra.mxu0 0
        %1467 = vmatpush.bf16.msra.mxu0 0
        %1468 = vmatpush.bf16.msra.mxu0 0
        %1469 = vmatpush.bf16.msra.mxu0 0
        %1470 = vmatpush.bf16.msra.mxu0 0
        %1471 = vmatpush.bf16.msra.mxu0 0
        %1472 = vmatpush.bf16.msra.mxu0 0
        %1473 = vmatpush.bf16.msra.mxu0 %v1464
        %1474 = vmatmul.bf16.gmra.mxu0 %v1357
        %v1475 = vpop.f32.mrf.mxu0
        %v1476 = vadd.f32 0.0, %v1475
        %v1477 = vpop.f32.mrf.mxu0
        %1478 = vdwg.mxu0
        %v1479 = vperm.slane %v1476, 0
        %v1480 = vadd.f32 %v1443, %v1479
        %v1481 = vadd.f32 %v1445, %v1479
        %v1482 = vadd.f32 %v1448, %v1479
        %v1483 = vadd.f32 %v1450, %v1479
        %v1484 = vadd.f32 %v1453, %v1479
        %v1485 = vadd.f32 %v1455, %v1479
        %v1486 = vadd.f32 %v1458, %v1479
        %v1487 = vadd.f32 %v1460, %v1479
        %v1488 = vlaneseq
        %v1489 = vshrl.u32 %v1488, 7
        %v1490 = vadd.s32 %v1489, 8
        %v1491 = vadd.s32 %v1489, 16
        %v1492 = vadd.s32 %v1489, 24
        %v1493 = vadd.s32 %v1489, 32
        %v1494 = vadd.s32 %v1489, 40
        %v1495 = vadd.s32 %v1489, 48
        %v1496 = vadd.s32 %v1489, 56
        %v1497 = vld [vmem:[#allocation19 + $0x1] sm:$0x1]
        %v1498 = vld [vmem:[%s8 + $0x6] sm:$0x1]
        %v1499 = vperm.slane %v1498, 0
        %v1500 = vmul.f32 %v1499, %v1377
        %v1501 = vmul.f32 %v1499, %v1378
        %v1502 = vmul.f32 %v1499, %v1379
        %v1503 = vmul.f32 %v1499, %v1380
        %v1504 = vmul.f32 %v1499, %v1381
        %v1505 = vmul.f32 %v1499, %v1382
        %v1506 = vmul.f32 %v1499, %v1383
        %v1507 = vmul.f32 %v1499, %v1384
        %v1508 = vperm.slane %v1497, 0
        %v1509 = vadd.f32 %v1508, %v1500
        %v1510 = vadd.f32 %v1508, %v1501
        %v1511 = vadd.f32 %v1508, %v1502
        %v1512 = vadd.f32 %v1508, %v1503
        %v1513 = vadd.f32 %v1508, %v1504
        %v1514 = vadd.f32 %v1508, %v1505
        %v1515 = vadd.f32 %v1508, %v1506
        %v1516 = vadd.f32 %v1508, %v1507
        %v1517 = vrot.slane %v1377, 7
        %v1518 = vrot.slane %v1378, 7
        %v1519 = vrot.slane %v1379, 7
        %v1520 = vrot.slane %v1380, 7
        %v1521 = vrot.slane %v1381, 7
        %v1522 = vrot.slane %v1382, 7
        %v1523 = vrot.slane %v1383, 7
        %v1524 = vrot.slane %v1384, 7
        %vm1525 = vcmp.lt.s32.totalorder %v1489, 1
        %v1526 = vsel %vm1525, %v1523, %v1524
        %v1527 = vsel %vm1525, %v1522, %v1523
        %v1528 = vsel %vm1525, %v1521, %v1522
        %v1529 = vsel %vm1525, %v1520, %v1521
        %v1530 = vsel %vm1525, %v1519, %v1520
        %v1531 = vsel %vm1525, %v1518, %v1519
        %v1532 = vsel %vm1525, %v1517, %v1518
        %v1533 = vsel %vm1525, %v1524, %v1517
        %vm1534 = vcmp.ge.s32.totalorder %v1489, 1
        %vm1535 = vcmp.ge.s32.totalorder %v1490, 1
        %vm1536 = vcmp.ge.s32.totalorder %v1491, 1
        %vm1537 = vcmp.ge.s32.totalorder %v1492, 1
        %vm1538 = vcmp.ge.s32.totalorder %v1493, 1
        %vm1539 = vcmp.ge.s32.totalorder %v1494, 1
        %vm1540 = vcmp.ge.s32.totalorder %v1495, 1
        %vm1541 = vcmp.ge.s32.totalorder %v1496, 1
        %v1542 = vsel %vm1534, %v1533, 0.0
        %v1543 = vsel %vm1535, %v1532, 0.0
        %v1544 = vsel %vm1536, %v1531, 0.0
        %v1545 = vsel %vm1537, %v1530, 0.0
        %v1546 = vsel %vm1538, %v1529, 0.0
        %v1547 = vsel %vm1539, %v1528, 0.0
        %v1548 = vsel %vm1540, %v1527, 0.0
        %v1549 = vsel %vm1541, %v1526, 0.0
        %v1550 = vld [vmem:[%s8 + $0x5] sm:$0x1]
        %v1551 = vperm.slane %v1550, 0
        %v1552 = vmul.f32 %v1551, %v1542
        %v1553 = vmul.f32 %v1551, %v1543
        %v1554 = vmul.f32 %v1551, %v1544
        %v1555 = vmul.f32 %v1551, %v1545
        %v1556 = vmul.f32 %v1551, %v1546
        %v1557 = vmul.f32 %v1551, %v1547
        %v1558 = vmul.f32 %v1551, %v1548
        %v1559 = vmul.f32 %v1551, %v1549
        %v1560 = vadd.f32 %v1509, %v1552
        %v1561 = vadd.f32 %v1510, %v1553
        %v1562 = vadd.f32 %v1511, %v1554
        %v1563 = vadd.f32 %v1512, %v1555
        %v1564 = vadd.f32 %v1513, %v1556
        %v1565 = vadd.f32 %v1514, %v1557
        %v1566 = vadd.f32 %v1515, %v1558
        %v1567 = vadd.f32 %v1516, %v1559
        %v1568 = vrot.slane %v1377, 6
        %v1569 = vrot.slane %v1378, 6
        %v1570 = vrot.slane %v1379, 6
        %v1571 = vrot.slane %v1380, 6
        %v1572 = vrot.slane %v1381, 6
        %v1573 = vrot.slane %v1382, 6
        %v1574 = vrot.slane %v1383, 6
        %v1575 = vrot.slane %v1384, 6
        %vm1576 = vcmp.lt.s32.totalorder %v1489, 2
        %v1577 = vsel %vm1576, %v1574, %v1575
        %v1578 = vsel %vm1576, %v1573, %v1574
        %v1579 = vsel %vm1576, %v1572, %v1573
        %v1580 = vsel %vm1576, %v1571, %v1572
        %v1581 = vsel %vm1576, %v1570, %v1571
        %v1582 = vsel %vm1576, %v1569, %v1570
        %v1583 = vsel %vm1576, %v1568, %v1569
        %v1584 = vsel %vm1576, %v1575, %v1568
        %vm1585 = vcmp.ge.s32.totalorder %v1489, 2
        %vm1586 = vcmp.ge.s32.totalorder %v1490, 2
        %vm1587 = vcmp.ge.s32.totalorder %v1491, 2
        %vm1588 = vcmp.ge.s32.totalorder %v1492, 2
        %vm1589 = vcmp.ge.s32.totalorder %v1493, 2
        %vm1590 = vcmp.ge.s32.totalorder %v1494, 2
        %vm1591 = vcmp.ge.s32.totalorder %v1495, 2
        %vm1592 = vcmp.ge.s32.totalorder %v1496, 2
        %v1593 = vsel %vm1585, %v1584, 0.0
        %v1594 = vsel %vm1586, %v1583, 0.0
        %v1595 = vsel %vm1587, %v1582, 0.0
        %v1596 = vsel %vm1588, %v1581, 0.0
        %v1597 = vsel %vm1589, %v1580, 0.0
        %v1598 = vsel %vm1590, %v1579, 0.0
        %v1599 = vsel %vm1591, %v1578, 0.0
        %v1600 = vsel %vm1592, %v1577, 0.0
        %v1601 = vld [vmem:[%s8 + $0x4] sm:$0x1]
        %v1602 = vperm.slane %v1601, 0
        %v1603 = vmul.f32 %v1602, %v1593
        %v1604 = vmul.f32 %v1602, %v1594
        %v1605 = vmul.f32 %v1602, %v1595
        %v1606 = vmul.f32 %v1602, %v1596
        %v1607 = vmul.f32 %v1602, %v1597
        %v1608 = vmul.f32 %v1602, %v1598
        %v1609 = vmul.f32 %v1602, %v1599
        %v1610 = vmul.f32 %v1602, %v1600
        %v1611 = vadd.f32 %v1560, %v1603
        %v1612 = vadd.f32 %v1561, %v1604
        %v1613 = vadd.f32 %v1562, %v1605
        %v1614 = vadd.f32 %v1563, %v1606
        %v1615 = vadd.f32 %v1564, %v1607
        %v1616 = vadd.f32 %v1565, %v1608
        %v1617 = vadd.f32 %v1566, %v1609
        %v1618 = vadd.f32 %v1567, %v1610
        %v1619 = vrot.slane %v1377, 5
        %v1620 = vrot.slane %v1378, 5
        %v1621 = vrot.slane %v1379, 5
        %v1622 = vrot.slane %v1380, 5
        %v1623 = vrot.slane %v1381, 5
        %v1624 = vrot.slane %v1382, 5
        %v1625 = vrot.slane %v1383, 5
        %v1626 = vrot.slane %v1384, 5
        %vm1627 = vcmp.lt.s32.totalorder %v1489, 3
        %v1628 = vsel %vm1627, %v1625, %v1626
        %v1629 = vsel %vm1627, %v1624, %v1625
        %v1630 = vsel %vm1627, %v1623, %v1624
        %v1631 = vsel %vm1627, %v1622, %v1623
        %v1632 = vsel %vm1627, %v1621, %v1622
        %v1633 = vsel %vm1627, %v1620, %v1621
        %v1634 = vsel %vm1627, %v1619, %v1620
        %v1635 = vsel %vm1627, %v1626, %v1619
        %vm1636 = vcmp.ge.s32.totalorder %v1489, 3
        %vm1637 = vcmp.ge.s32.totalorder %v1490, 3
        %vm1638 = vcmp.ge.s32.totalorder %v1491, 3
        %vm1639 = vcmp.ge.s32.totalorder %v1492, 3
        %vm1640 = vcmp.ge.s32.totalorder %v1493, 3
        %vm1641 = vcmp.ge.s32.totalorder %v1494, 3
        %vm1642 = vcmp.ge.s32.totalorder %v1495, 3
        %vm1643 = vcmp.ge.s32.totalorder %v1496, 3
        %v1644 = vsel %vm1636, %v1635, 0.0
        %v1645 = vsel %vm1637, %v1634, 0.0
        %v1646 = vsel %vm1638, %v1633, 0.0
        %v1647 = vsel %vm1639, %v1632, 0.0
        %v1648 = vsel %vm1640, %v1631, 0.0
        %v1649 = vsel %vm1641, %v1630, 0.0
        %v1650 = vsel %vm1642, %v1629, 0.0
        %v1651 = vsel %vm1643, %v1628, 0.0
        %v1652 = vld [vmem:[%s8 + $0x3] sm:$0x1]
        %v1653 = vperm.slane %v1652, 0
        %v1654 = vmul.f32 %v1653, %v1644
        %v1655 = vmul.f32 %v1653, %v1645
        %v1656 = vmul.f32 %v1653, %v1646
        %v1657 = vmul.f32 %v1653, %v1647
        %v1658 = vmul.f32 %v1653, %v1648
        %v1659 = vmul.f32 %v1653, %v1649
        %v1660 = vmul.f32 %v1653, %v1650
        %v1661 = vmul.f32 %v1653, %v1651
        %v1662 = vadd.f32 %v1611, %v1654
        %v1663 = vadd.f32 %v1612, %v1655
        %v1664 = vadd.f32 %v1613, %v1656
        %v1665 = vadd.f32 %v1614, %v1657
        %v1666 = vadd.f32 %v1615, %v1658
        %v1667 = vadd.f32 %v1616, %v1659
        %v1668 = vadd.f32 %v1617, %v1660
        %v1669 = vadd.f32 %v1618, %v1661
        %v1670 = vxor.u32 %v1662, 2147483648
        %v1671 = vxor.u32 %v1663, 2147483648
        %v1672 = vxor.u32 %v1664, 2147483648
        %v1673 = vxor.u32 %v1665, 2147483648
        %v1674 = vxor.u32 %v1666, 2147483648
        %v1675 = vxor.u32 %v1667, 2147483648
        %v1676 = vxor.u32 %v1668, 2147483648
        %v1677 = vxor.u32 %v1669, 2147483648
        %v1678 = vmul.f32 %v1670, 1.442695
        %v1679 = vpow.pop %v1678
        %v1680 = vmul.f32 %v1671, 1.442695
        %v1681 = vpow.pop %v1680
        %v1682 = vmul.f32 %v1672, 1.442695
        %v1683 = vpow.pop %v1682
        %v1684 = vmul.f32 %v1673, 1.442695
        %v1685 = vpow.pop %v1684
        %v1686 = vmul.f32 %v1674, 1.442695
        %v1687 = vpow.pop %v1686
        %v1688 = vmul.f32 %v1675, 1.442695
        %v1689 = vpow.pop %v1688
        %v1690 = vmul.f32 %v1676, 1.442695
        %v1691 = vpow.pop %v1690
        %v1692 = vmul.f32 %v1677, 1.442695
        %v1693 = vpow.pop %v1692
        %v1694 = vadd.f32 %v1679, 1.0
        %v1695 = vadd.f32 %v1681, 1.0
        %v1696 = vadd.f32 %v1683, 1.0
        %v1697 = vadd.f32 %v1685, 1.0
        %v1698 = vadd.f32 %v1687, 1.0
        %v1699 = vadd.f32 %v1689, 1.0
        %v1700 = vadd.f32 %v1691, 1.0
        %v1701 = vadd.f32 %v1693, 1.0
        %v1702 = vrcp.pop %v1694
        %v1703 = vmul.f32 %v1694, %v1702
        %v1704 = vsub.f32 1.0, %v1703
        %v1705 = vmul.f32 %v1702, %v1704
        %v1706 = vadd.f32 %v1702, %v1705
        %vm1707 = vweird.f32 %v1694
        %vm1708 = vweird.f32 %v1702
        %vm1709 = vmor %vm1707, %vm1708
        %v1710 = vsel %vm1709, %v1702, %v1706
        %v1711 = vand.u32 2147483647, %v1694
        %vm1712 = vcmp.eq.f32.partialorder %v1711, 8.507059e+37
        %v1713 = vand.u32 %v1694, 2147483648
        %v1714 = vor.u32 1.1754944e-38, %v1713
        %v1715 = vsel %vm1712, %v1714, %v1710
        %v1716 = vmul.f32 1.0, %v1715
        %v1717 = vrcp.pop %v1695
        %v1718 = vmul.f32 %v1695, %v1717
        %v1719 = vsub.f32 1.0, %v1718
        %v1720 = vmul.f32 %v1717, %v1719
        %v1721 = vadd.f32 %v1717, %v1720
        %vm1722 = vweird.f32 %v1695
        %vm1723 = vweird.f32 %v1717
        %vm1724 = vmor %vm1722, %vm1723
        %v1725 = vsel %vm1724, %v1717, %v1721
        %v1726 = vand.u32 2147483647, %v1695
        %vm1727 = vcmp.eq.f32.partialorder %v1726, 8.507059e+37
        %v1728 = vand.u32 %v1695, 2147483648
        %v1729 = vor.u32 1.1754944e-38, %v1728
        %v1730 = vsel %vm1727, %v1729, %v1725
        %v1731 = vmul.f32 1.0, %v1730
        %v1732 = vrcp.pop %v1696
        %v1733 = vmul.f32 %v1696, %v1732
        %v1734 = vsub.f32 1.0, %v1733
        %v1735 = vmul.f32 %v1732, %v1734
        %v1736 = vadd.f32 %v1732, %v1735
        %vm1737 = vweird.f32 %v1696
        %vm1738 = vweird.f32 %v1732
        %vm1739 = vmor %vm1737, %vm1738
        %v1740 = vsel %vm1739, %v1732, %v1736
        %v1741 = vand.u32 2147483647, %v1696
        %vm1742 = vcmp.eq.f32.partialorder %v1741, 8.507059e+37
        %v1743 = vand.u32 %v1696, 2147483648
        %v1744 = vor.u32 1.1754944e-38, %v1743
        %v1745 = vsel %vm1742, %v1744, %v1740
        %v1746 = vmul.f32 1.0, %v1745
        %v1747 = vrcp.pop %v1697
        %v1748 = vmul.f32 %v1697, %v1747
        %v1749 = vsub.f32 1.0, %v1748
        %v1750 = vmul.f32 %v1747, %v1749
        %v1751 = vadd.f32 %v1747, %v1750
        %vm1752 = vweird.f32 %v1697
        %vm1753 = vweird.f32 %v1747
        %vm1754 = vmor %vm1752, %vm1753
        %v1755 = vsel %vm1754, %v1747, %v1751
        %v1756 = vand.u32 2147483647, %v1697
        %vm1757 = vcmp.eq.f32.partialorder %v1756, 8.507059e+37
        %v1758 = vand.u32 %v1697, 2147483648
        %v1759 = vor.u32 1.1754944e-38, %v1758
        %v1760 = vsel %vm1757, %v1759, %v1755
        %v1761 = vmul.f32 1.0, %v1760
        %v1762 = vrcp.pop %v1698
        %v1763 = vmul.f32 %v1698, %v1762
        %v1764 = vsub.f32 1.0, %v1763
        %v1765 = vmul.f32 %v1762, %v1764
        %v1766 = vadd.f32 %v1762, %v1765
        %vm1767 = vweird.f32 %v1698
        %vm1768 = vweird.f32 %v1762
        %vm1769 = vmor %vm1767, %vm1768
        %v1770 = vsel %vm1769, %v1762, %v1766
        %v1771 = vand.u32 2147483647, %v1698
        %vm1772 = vcmp.eq.f32.partialorder %v1771, 8.507059e+37
        %v1773 = vand.u32 %v1698, 2147483648
        %v1774 = vor.u32 1.1754944e-38, %v1773
        %v1775 = vsel %vm1772, %v1774, %v1770
        %v1776 = vmul.f32 1.0, %v1775
        %v1777 = vrcp.pop %v1699
        %v1778 = vmul.f32 %v1699, %v1777
        %v1779 = vsub.f32 1.0, %v1778
        %v1780 = vmul.f32 %v1777, %v1779
        %v1781 = vadd.f32 %v1777, %v1780
        %vm1782 = vweird.f32 %v1699
        %vm1783 = vweird.f32 %v1777
        %vm1784 = vmor %vm1782, %vm1783
        %v1785 = vsel %vm1784, %v1777, %v1781
        %v1786 = vand.u32 2147483647, %v1699
        %vm1787 = vcmp.eq.f32.partialorder %v1786, 8.507059e+37
        %v1788 = vand.u32 %v1699, 2147483648
        %v1789 = vor.u32 1.1754944e-38, %v1788
        %v1790 = vsel %vm1787, %v1789, %v1785
        %v1791 = vmul.f32 1.0, %v1790
        %v1792 = vrcp.pop %v1700
        %v1793 = vmul.f32 %v1700, %v1792
        %v1794 = vsub.f32 1.0, %v1793
        %v1795 = vmul.f32 %v1792, %v1794
        %v1796 = vadd.f32 %v1792, %v1795
        %vm1797 = vweird.f32 %v1700
        %vm1798 = vweird.f32 %v1792
        %vm1799 = vmor %vm1797, %vm1798
        %v1800 = vsel %vm1799, %v1792, %v1796
        %v1801 = vand.u32 2147483647, %v1700
        %vm1802 = vcmp.eq.f32.partialorder %v1801, 8.507059e+37
        %v1803 = vand.u32 %v1700, 2147483648
        %v1804 = vor.u32 1.1754944e-38, %v1803
        %v1805 = vsel %vm1802, %v1804, %v1800
        %v1806 = vmul.f32 1.0, %v1805
        %v1807 = vrcp.pop %v1701
        %v1808 = vmul.f32 %v1701, %v1807
        %v1809 = vsub.f32 1.0, %v1808
        %v1810 = vmul.f32 %v1807, %v1809
        %v1811 = vadd.f32 %v1807, %v1810
        %vm1812 = vweird.f32 %v1701
        %vm1813 = vweird.f32 %v1807
        %vm1814 = vmor %vm1812, %vm1813
        %v1815 = vsel %vm1814, %v1807, %v1811
        %v1816 = vand.u32 2147483647, %v1701
        %vm1817 = vcmp.eq.f32.partialorder %v1816, 8.507059e+37
        %v1818 = vand.u32 %v1701, 2147483648
        %v1819 = vor.u32 1.1754944e-38, %v1818
        %v1820 = vsel %vm1817, %v1819, %v1815
        %v1821 = vmul.f32 1.0, %v1820
        %v1822 = vmul.f32 %v1662, %v1716
        %v1823 = vmul.f32 %v1663, %v1731
        %v1824 = vmul.f32 %v1664, %v1746
        %v1825 = vmul.f32 %v1665, %v1761
        %v1826 = vmul.f32 %v1666, %v1776
        %v1827 = vmul.f32 %v1667, %v1791
        %v1828 = vmul.f32 %v1668, %v1806
        %v1829 = vmul.f32 %v1669, %v1821
        %v1830 = vld [vmem:[%s7] sm:$0xff]
        %v1831 = vld [vmem:[%s7 + $0x8] sm:$0xff]
        %v1832 = vld [vmem:[%s7 + $0x10] sm:$0xff]
        %v1833 = vld [vmem:[%s7 + $0x18] sm:$0xff]
        %v1834 = vld [vmem:[%s7 + $0x20] sm:$0xff]
        %v1835 = vld [vmem:[%s7 + $0x28] sm:$0xff]
        %v1836 = vld [vmem:[%s7 + $0x30] sm:$0xff]
        %v1837 = vld [vmem:[%s7 + $0x38] sm:$0xff]
        %v1838 = vld [vmem:[%s7 + $0x40] sm:$0xff]
        %vm1839 = vcmask 588800
        %v1841 = vsel %vm1839, %v1822, 0
        %v1844 = vsel %vm1839, %v1823, 0
        %v1847 = vsel %vm1839, %v1824, 0
        %v1850 = vsel %vm1839, %v1825, 0
        %v1853 = vsel %vm1839, %v1826, 0
        %v1856 = vsel %vm1839, %v1827, 0
        %v1859 = vsel %vm1839, %v1828, 0
        %v1862 = vsel %vm1839, %v1829, 0
        %1864 = vmatpush.msra.mxu0 0.0
        %1865 = vmatpush.msra.mxu0 0.0
        %1866 = vmatpush.msra.mxu0 0.0
        %1867 = vmatpush.msra.mxu0 0.0
        %1868 = vmatpush.msra.mxu0 0.0
        %1869 = vmatpush.msra.mxu0 0.0
        %1870 = vmatpush.msra.mxu0 0.0
        %1871 = vmatpush.msra.mxu0 %v1838
        %1872 = vmatpush.msra.mxu0 %v1837
        %1873 = vmatpush.msra.mxu0 %v1836
        %1874 = vmatpush.msra.mxu0 %v1835
        %1875 = vmatpush.msra.mxu0 %v1834
        %1876 = vmatpush.msra.mxu0 %v1833
        %1877 = vmatpush.msra.mxu0 %v1832
        %1878 = vmatpush.msra.mxu0 %v1831
        %1879 = vmatpush.msra.mxu0 %v1830
        %1880 = vmatmul.f32.gmra.mxu0 %v1841
        %v1881 = vpop.f32.mrf.mxu0
        %v1882 = vadd.f32 0.0, %v1881
        %1883 = vmatmul.f32.gmra.mxu0 %v1844
        %v1884 = vpop.f32.mrf.mxu0
        %v1885 = vadd.f32 0.0, %v1884
        %1886 = vmatmul.f32.gmra.mxu0 %v1847
        %v1887 = vpop.f32.mrf.mxu0
        %v1888 = vadd.f32 0.0, %v1887
        %1889 = vmatmul.f32.gmra.mxu0 %v1850
        %v1890 = vpop.f32.mrf.mxu0
        %v1891 = vadd.f32 0.0, %v1890
        %1892 = vmatmul.f32.gmra.mxu0 %v1853
        %v1893 = vpop.f32.mrf.mxu0
        %v1894 = vadd.f32 0.0, %v1893
        %1895 = vmatmul.f32.gmra.mxu0 %v1856
        %v1896 = vpop.f32.mrf.mxu0
        %v1897 = vadd.f32 0.0, %v1896
        %1898 = vmatmul.f32.gmra.mxu0 %v1859
        %v1899 = vpop.f32.mrf.mxu0
        %v1900 = vadd.f32 0.0, %v1899
        %1901 = vmatmul.f32.gmra.mxu0 %v1862
        %v1902 = vpop.f32.mrf.mxu0
        %v1903 = vadd.f32 0.0, %v1902
        %1904 = vdwg.mxu0
        %v1905 = vld [vmem:[%s8] sm:$0x7]
        %v1906 = vld [vmem:[#allocation19 + $0x2] sm:$0x1]
        %v1907 = vperm.slane %v1906, 0
        %vm1908 = vcmask 23552
        %v1910 = vsel %vm1908, %v1882, 0
        %v1913 = vsel %vm1908, %v1885, 0
        %v1916 = vsel %vm1908, %v1888, 0
        %v1919 = vsel %vm1908, %v1891, 0
        %v1922 = vsel %vm1908, %v1894, 0
        %v1925 = vsel %vm1908, %v1897, 0
        %v1928 = vsel %vm1908, %v1900, 0
        %v1931 = vsel %vm1908, %v1903, 0
        %v1934 = vsel %vm1156, %v1905, 0
        %1936 = vmatpush.msra.mxu0 0.0
        %1937 = vmatpush.msra.mxu0 0.0
        %1938 = vmatpush.msra.mxu0 0.0
        %1939 = vmatpush.msra.mxu0 0.0
        %1940 = vmatpush.msra.mxu0 0.0
        %1941 = vmatpush.msra.mxu0 0.0
        %1942 = vmatpush.msra.mxu0 0.0
        %1943 = vmatpush.msra.mxu0 0.0
        %1944 = vmatpush.msra.mxu0 0.0
        %1945 = vmatpush.msra.mxu0 0.0
        %1946 = vmatpush.msra.mxu0 0.0
        %1947 = vmatpush.msra.mxu0 0.0
        %1948 = vmatpush.msra.mxu0 0.0
        %1949 = vmatpush.msra.mxu0 0.0
        %1950 = vmatpush.msra.mxu0 0.0
        %1951 = vmatpush.msra.mxu0 %v1934
        %1952 = vmatmul.f32.gmra.mxu0 %v1910
        %v1953 = vpop.f32.mrf.mxu0
        %v1954 = vadd.f32 %v1907, %v1953
        %1955 = vmatmul.f32.gmra.mxu0 %v1913
        %v1956 = vpop.f32.mrf.mxu0
        %v1957 = vadd.f32 %v1907, %v1956
        %1958 = vmatmul.f32.gmra.mxu0 %v1916
        %v1959 = vpop.f32.mrf.mxu0
        %v1960 = vadd.f32 %v1907, %v1959
        %1961 = vmatmul.f32.gmra.mxu0 %v1919
        %v1962 = vpop.f32.mrf.mxu0
        %v1963 = vadd.f32 %v1907, %v1962
        %1964 = vmatmul.f32.gmra.mxu0 %v1922
        %v1965 = vpop.f32.mrf.mxu0
        %v1966 = vadd.f32 %v1907, %v1965
        %1967 = vmatmul.f32.gmra.mxu0 %v1925
        %v1968 = vpop.f32.mrf.mxu0
        %v1969 = vadd.f32 %v1907, %v1968
        %1970 = vmatmul.f32.gmra.mxu0 %v1928
        %v1971 = vpop.f32.mrf.mxu0
        %v1972 = vadd.f32 %v1907, %v1971
        %1973 = vmatmul.f32.gmra.mxu0 %v1931
        %v1974 = vpop.f32.mrf.mxu0
        %v1975 = vadd.f32 %v1907, %v1974
        %1976 = vdwg.mxu0
        %v1977 = vmax.f32 %v1954, 0.0
        %v1978 = vmax.f32 %v1957, 0.0
        %v1979 = vmax.f32 %v1960, 0.0
        %v1980 = vmax.f32 %v1963, 0.0
        %v1981 = vmax.f32 %v1966, 0.0
        %v1982 = vmax.f32 %v1969, 0.0
        %v1983 = vmax.f32 %v1972, 0.0
        %v1984 = vmax.f32 %v1975, 0.0
        %vm1985 = vcmp.ne.f32.partialorder %v1954, %v1954
        %vm1986 = vcmp.ne.f32.partialorder %v1957, %v1957
        %vm1987 = vcmp.ne.f32.partialorder %v1960, %v1960
        %vm1988 = vcmp.ne.f32.partialorder %v1963, %v1963
        %vm1989 = vcmp.ne.f32.partialorder %v1966, %v1966
        %vm1990 = vcmp.ne.f32.partialorder %v1969, %v1969
        %vm1991 = vcmp.ne.f32.partialorder %v1972, %v1972
        %vm1992 = vcmp.ne.f32.partialorder %v1975, %v1975
        %v1993 = vadd.f32 %v1954, 0.0
        %v1994 = vadd.f32 %v1957, 0.0
        %v1995 = vadd.f32 %v1960, 0.0
        %v1996 = vadd.f32 %v1963, 0.0
        %v1997 = vadd.f32 %v1966, 0.0
        %v1998 = vadd.f32 %v1969, 0.0
        %v1999 = vadd.f32 %v1972, 0.0
        %v2000 = vadd.f32 %v1975, 0.0
        %v2001 = vand.u32 2147483647, %v1954
        %v2002 = vand.u32 2147483647, %v1957
        %v2003 = vand.u32 2147483647, %v1960
        %v2004 = vand.u32 2147483647, %v1963
        %v2005 = vand.u32 2147483647, %v1966
        %v2006 = vand.u32 2147483647, %v1969
        %v2007 = vand.u32 2147483647, %v1972
        %v2008 = vand.u32 2147483647, %v1975
        %v2009 = vsub.f32 0.0, %v2001
        %v2010 = vsub.f32 0.0, %v2002
        %v2011 = vsub.f32 0.0, %v2003
        %v2012 = vsub.f32 0.0, %v2004
        %v2013 = vsub.f32 0.0, %v2005
        %v2014 = vsub.f32 0.0, %v2006
        %v2015 = vsub.f32 0.0, %v2007
        %v2016 = vsub.f32 0.0, %v2008
        %v2017 = vmul.f32 %v2009, 1.442695
        %v2018 = vpow.pop %v2017
        %v2019 = vmul.f32 %v2010, 1.442695
        %v2020 = vpow.pop %v2019
        %v2021 = vmul.f32 %v2011, 1.442695
        %v2022 = vpow.pop %v2021
        %v2023 = vmul.f32 %v2012, 1.442695
        %v2024 = vpow.pop %v2023
        %v2025 = vmul.f32 %v2013, 1.442695
        %v2026 = vpow.pop %v2025
        %v2027 = vmul.f32 %v2014, 1.442695
        %v2028 = vpow.pop %v2027
        %v2029 = vmul.f32 %v2015, 1.442695
        %v2030 = vpow.pop %v2029
        %v2031 = vmul.f32 %v2016, 1.442695
        %v2032 = vpow.pop %v2031
        %v2033 = vadd.f32 %v2018, 1.0
        %v2034 = vlog2.pop %v2033
        %v2035 = vmul.f32 %v2034, 0.6931472
        %v2036 = vmul.f32 -0.5, %v2018
        %v2037 = vadd.f32 %v2036, 1.0
        %v2038 = vmul.f32 %v2037, %v2018
        %v2039 = vand.u32 2147483647, %v2018
        %vm2040 = vcmp.lt.f32.partialorder %v2039, 0.0004427343
        %v2041 = vsel %vm2040, %v2038, %v2035
        %v2042 = vadd.f32 %v2020, 1.0
        %v2043 = vlog2.pop %v2042
        %v2044 = vmul.f32 %v2043, 0.6931472
        %v2045 = vmul.f32 -0.5, %v2020
        %v2046 = vadd.f32 %v2045, 1.0
        %v2047 = vmul.f32 %v2046, %v2020
        %v2048 = vand.u32 2147483647, %v2020
        %vm2049 = vcmp.lt.f32.partialorder %v2048, 0.0004427343
        %v2050 = vsel %vm2049, %v2047, %v2044
        %v2051 = vadd.f32 %v2022, 1.0
        %v2052 = vlog2.pop %v2051
        %v2053 = vmul.f32 %v2052, 0.6931472
        %v2054 = vmul.f32 -0.5, %v2022
        %v2055 = vadd.f32 %v2054, 1.0
        %v2056 = vmul.f32 %v2055, %v2022
        %v2057 = vand.u32 2147483647, %v2022
        %vm2058 = vcmp.lt.f32.partialorder %v2057, 0.0004427343
        %v2059 = vsel %vm2058, %v2056, %v2053
        %v2060 = vadd.f32 %v2024, 1.0
        %v2061 = vlog2.pop %v2060
        %v2062 = vmul.f32 %v2061, 0.6931472
        %v2063 = vmul.f32 -0.5, %v2024
        %v2064 = vadd.f32 %v2063, 1.0
        %v2065 = vmul.f32 %v2064, %v2024
        %v2066 = vand.u32 2147483647, %v2024
        %vm2067 = vcmp.lt.f32.partialorder %v2066, 0.0004427343
        %v2068 = vsel %vm2067, %v2065, %v2062
        %v2069 = vadd.f32 %v2026, 1.0
        %v2070 = vlog2.pop %v2069
        %v2071 = vmul.f32 %v2070, 0.6931472
        %v2072 = vmul.f32 -0.5, %v2026
        %v2073 = vadd.f32 %v2072, 1.0
        %v2074 = vmul.f32 %v2073, %v2026
        %v2075 = vand.u32 2147483647, %v2026
        %vm2076 = vcmp.lt.f32.partialorder %v2075, 0.0004427343
        %v2077 = vsel %vm2076, %v2074, %v2071
        %v2078 = vadd.f32 %v2028, 1.0
        %v2079 = vlog2.pop %v2078
        %v2080 = vmul.f32 %v2079, 0.6931472
        %v2081 = vmul.f32 -0.5, %v2028
        %v2082 = vadd.f32 %v2081, 1.0
        %v2083 = vmul.f32 %v2082, %v2028
        %v2084 = vand.u32 2147483647, %v2028
        %vm2085 = vcmp.lt.f32.partialorder %v2084, 0.0004427343
        %v2086 = vsel %vm2085, %v2083, %v2080
        %v2087 = vadd.f32 %v2030, 1.0
        %v2088 = vlog2.pop %v2087
        %v2089 = vmul.f32 %v2088, 0.6931472
        %v2090 = vmul.f32 -0.5, %v2030
        %v2091 = vadd.f32 %v2090, 1.0
        %v2092 = vmul.f32 %v2091, %v2030
        %v2093 = vand.u32 2147483647, %v2030
        %vm2094 = vcmp.lt.f32.partialorder %v2093, 0.0004427343
        %v2095 = vsel %vm2094, %v2092, %v2089
        %v2096 = vadd.f32 %v2032, 1.0
        %v2097 = vlog2.pop %v2096
        %v2098 = vmul.f32 %v2097, 0.6931472
        %v2099 = vmul.f32 -0.5, %v2032
        %v2100 = vadd.f32 %v2099, 1.0
        %v2101 = vmul.f32 %v2100, %v2032
        %v2102 = vand.u32 2147483647, %v2032
        %vm2103 = vcmp.lt.f32.partialorder %v2102, 0.0004427343
        %v2104 = vsel %vm2103, %v2101, %v2098
        %v2105 = vadd.f32 %v1977, %v2041
        %v2106 = vadd.f32 %v1978, %v2050
        %v2107 = vadd.f32 %v1979, %v2059
        %v2108 = vadd.f32 %v1980, %v2068
        %v2109 = vadd.f32 %v1981, %v2077
        %v2110 = vadd.f32 %v1982, %v2086
        %v2111 = vadd.f32 %v1983, %v2095
        %v2112 = vadd.f32 %v1984, %v2104
        %v2113 = vsel %vm1985, %v1993, %v2105
        %v2114 = vsel %vm1986, %v1994, %v2106
        %v2115 = vsel %vm1987, %v1995, %v2107
        %v2116 = vsel %vm1988, %v1996, %v2108
        %v2117 = vsel %vm1989, %v1997, %v2109
        %v2118 = vsel %vm1990, %v1998, %v2110
        %v2119 = vsel %vm1991, %v1999, %v2111
        %v2120 = vsel %vm1992, %v2000, %v2112
        %v2121 = vmul.f32 %v2113, %v1822
        %v2122 = vmul.f32 %v2114, %v1823
        %v2123 = vmul.f32 %v2115, %v1824
        %v2124 = vmul.f32 %v2116, %v1825
        %v2125 = vmul.f32 %v2117, %v1826
        %v2126 = vmul.f32 %v2118, %v1827
        %v2127 = vmul.f32 %v2119, %v1828
        %v2128 = vmul.f32 %v2120, %v1829
        %v2129 = vld [vmem:[#allocation16] sm:$0xf]
        %v2130 = vld [vmem:[#allocation16 + $0x8] sm:$0xf]
        %v2131 = vld [vmem:[#allocation16 + $0x10] sm:$0xf]
        %s2132 = scalar_lea.vmem [#allocation16], 4
        %v2133 = vld [vmem:[%s2132] ss:$8 sm:$0x7]
        %2142 = vrot.lane.b32.xlu0 %v2113, 72
        %v2143 = vpop.permute.xlu0 %2142
        %2144 = vrot.lane.b32.xlu0 %v2114, 72
        %v2145 = vpop.permute.xlu0 %2144
        %2146 = vrot.lane.b32.xlu0 %v2115, 72
        %v2147 = vpop.permute.xlu0 %2146
        %2148 = vrot.lane.b32.xlu0 %v2116, 72
        %v2149 = vpop.permute.xlu0 %2148
        %2150 = vrot.lane.b32.xlu0 %v2117, 72
        %v2151 = vpop.permute.xlu0 %2150
        %2152 = vrot.lane.b32.xlu0 %v2118, 72
        %v2153 = vpop.permute.xlu0 %2152
        %2154 = vrot.lane.b32.xlu0 %v2119, 72
        %v2155 = vpop.permute.xlu0 %2154
        %2156 = vrot.lane.b32.xlu0 %v2120, 72
        %v2157 = vpop.permute.xlu0 %2156
        %2166 = vrot.lane.b32.xlu0 %v2113, 16
        %v2167 = vpop.permute.xlu0 %2166
        %2168 = vrot.lane.b32.xlu0 %v2114, 16
        %v2169 = vpop.permute.xlu0 %2168
        %2170 = vrot.lane.b32.xlu0 %v2115, 16
        %v2171 = vpop.permute.xlu0 %2170
        %2172 = vrot.lane.b32.xlu0 %v2116, 16
        %v2173 = vpop.permute.xlu0 %2172
        %2174 = vrot.lane.b32.xlu0 %v2117, 16
        %v2175 = vpop.permute.xlu0 %2174
        %2176 = vrot.lane.b32.xlu0 %v2118, 16
        %v2177 = vpop.permute.xlu0 %2176
        %2178 = vrot.lane.b32.xlu0 %v2119, 16
        %v2179 = vpop.permute.xlu0 %2178
        %2180 = vrot.lane.b32.xlu0 %v2120, 16
        %v2181 = vpop.permute.xlu0 %2180
        %2190 = vrot.lane.b32.xlu0 %v2113, 88
        %v2191 = vpop.permute.xlu0 %2190
        %2192 = vrot.lane.b32.xlu0 %v2114, 88
        %v2193 = vpop.permute.xlu0 %2192
        %2194 = vrot.lane.b32.xlu0 %v2115, 88
        %v2195 = vpop.permute.xlu0 %2194
        %2196 = vrot.lane.b32.xlu0 %v2116, 88
        %v2197 = vpop.permute.xlu0 %2196
        %2198 = vrot.lane.b32.xlu0 %v2117, 88
        %v2199 = vpop.permute.xlu0 %2198
        %2200 = vrot.lane.b32.xlu0 %v2118, 88
        %v2201 = vpop.permute.xlu0 %2200
        %2202 = vrot.lane.b32.xlu0 %v2119, 88
        %v2203 = vpop.permute.xlu0 %2202
        %2204 = vrot.lane.b32.xlu0 %v2120, 88
        %v2205 = vpop.permute.xlu0 %2204
        %v2214 = vsel %vm1839, %v2113, %v2143
        %v2215 = vsel %vm1839, %v2114, %v2145
        %v2216 = vsel %vm1839, %v2115, %v2147
        %v2217 = vsel %vm1839, %v2116, %v2149
        %v2218 = vsel %vm1839, %v2117, %v2151
        %v2219 = vsel %vm1839, %v2118, %v2153
        %v2220 = vsel %vm1839, %v2119, %v2155
        %v2221 = vsel %vm1839, %v2120, %v2157
        %vm2222 = vcmask 130048
        %v2223 = vsel %vm2222, %v2143, %v2167
        %v2224 = vsel %vm2222, %v2145, %v2169
        %v2225 = vsel %vm2222, %v2147, %v2171
        %v2226 = vsel %vm2222, %v2149, %v2173
        %v2227 = vsel %vm2222, %v2151, %v2175
        %v2228 = vsel %vm2222, %v2153, %v2177
        %v2229 = vsel %vm2222, %v2155, %v2179
        %v2230 = vsel %vm2222, %v2157, %v2181
        %vm2231 = vcmask 719872
        %v2232 = vsel %vm2231, %v2223, %v2191
        %v2233 = vsel %vm2231, %v2224, %v2193
        %v2234 = vsel %vm2231, %v2225, %v2195
        %v2235 = vsel %vm2231, %v2226, %v2197
        %v2236 = vsel %vm2231, %v2227, %v2199
        %v2237 = vsel %vm2231, %v2228, %v2201
        %v2238 = vsel %vm2231, %v2229, %v2203
        %v2239 = vsel %vm2231, %v2230, %v2205
        %2248 = vrot.lane.b32.xlu0 %v2121, 72
        %v2249 = vpop.permute.xlu0 %2248
        %2250 = vrot.lane.b32.xlu0 %v2122, 72
        %v2251 = vpop.permute.xlu0 %2250
        %2252 = vrot.lane.b32.xlu0 %v2123, 72
        %v2253 = vpop.permute.xlu0 %2252
        %2254 = vrot.lane.b32.xlu0 %v2124, 72
        %v2255 = vpop.permute.xlu0 %2254
        %2256 = vrot.lane.b32.xlu0 %v2125, 72
        %v2257 = vpop.permute.xlu0 %2256
        %2258 = vrot.lane.b32.xlu0 %v2126, 72
        %v2259 = vpop.permute.xlu0 %2258
        %2260 = vrot.lane.b32.xlu0 %v2127, 72
        %v2261 = vpop.permute.xlu0 %2260
        %2262 = vrot.lane.b32.xlu0 %v2128, 72
        %v2263 = vpop.permute.xlu0 %2262
        %2272 = vrot.lane.b32.xlu0 %v2121, 16
        %v2273 = vpop.permute.xlu0 %2272
        %2274 = vrot.lane.b32.xlu0 %v2122, 16
        %v2275 = vpop.permute.xlu0 %2274
        %2276 = vrot.lane.b32.xlu0 %v2123, 16
        %v2277 = vpop.permute.xlu0 %2276
        %2278 = vrot.lane.b32.xlu0 %v2124, 16
        %v2279 = vpop.permute.xlu0 %2278
        %2280 = vrot.lane.b32.xlu0 %v2125, 16
        %v2281 = vpop.permute.xlu0 %2280
        %2282 = vrot.lane.b32.xlu0 %v2126, 16
        %v2283 = vpop.permute.xlu0 %2282
        %2284 = vrot.lane.b32.xlu0 %v2127, 16
        %v2285 = vpop.permute.xlu0 %2284
        %2286 = vrot.lane.b32.xlu0 %v2128, 16
        %v2287 = vpop.permute.xlu0 %2286
        %2296 = vrot.lane.b32.xlu0 %v2121, 88
        %v2297 = vpop.permute.xlu0 %2296
        %2298 = vrot.lane.b32.xlu0 %v2122, 88
        %v2299 = vpop.permute.xlu0 %2298
        %2300 = vrot.lane.b32.xlu0 %v2123, 88
        %v2301 = vpop.permute.xlu0 %2300
        %2302 = vrot.lane.b32.xlu0 %v2124, 88
        %v2303 = vpop.permute.xlu0 %2302
        %2304 = vrot.lane.b32.xlu0 %v2125, 88
        %v2305 = vpop.permute.xlu0 %2304
        %2306 = vrot.lane.b32.xlu0 %v2126, 88
        %v2307 = vpop.permute.xlu0 %2306
        %2308 = vrot.lane.b32.xlu0 %v2127, 88
        %v2309 = vpop.permute.xlu0 %2308
        %2310 = vrot.lane.b32.xlu0 %v2128, 88
        %v2311 = vpop.permute.xlu0 %2310
        %v2320 = vsel %vm1839, %v2121, %v2249
        %v2321 = vsel %vm1839, %v2122, %v2251
        %v2322 = vsel %vm1839, %v2123, %v2253
        %v2323 = vsel %vm1839, %v2124, %v2255
        %v2324 = vsel %vm1839, %v2125, %v2257
        %v2325 = vsel %vm1839, %v2126, %v2259
        %v2326 = vsel %vm1839, %v2127, %v2261
        %v2327 = vsel %vm1839, %v2128, %v2263
        %v2328 = vsel %vm2222, %v2249, %v2273
        %v2329 = vsel %vm2222, %v2251, %v2275
        %v2330 = vsel %vm2222, %v2253, %v2277
        %v2331 = vsel %vm2222, %v2255, %v2279
        %v2332 = vsel %vm2222, %v2257, %v2281
        %v2333 = vsel %vm2222, %v2259, %v2283
        %v2334 = vsel %vm2222, %v2261, %v2285
        %v2335 = vsel %vm2222, %v2263, %v2287
        %v2336 = vsel %vm2231, %v2328, %v2297
        %v2337 = vsel %vm2231, %v2329, %v2299
        %v2338 = vsel %vm2231, %v2330, %v2301
        %v2339 = vsel %vm2231, %v2331, %v2303
        %v2340 = vsel %vm2231, %v2332, %v2305
        %v2341 = vsel %vm2231, %v2333, %v2307
        %v2342 = vsel %vm2231, %v2334, %v2309
        %v2343 = vsel %vm2231, %v2335, %v2311
        %v2345 = vperm.slane %v2133, 0
        %v2346 = vperm.slane %v2133, 1
        %v2347 = vperm.slane %v2133, 2
        %v2351 = vmul.f32 %v2214, %v2345
        %v2352 = vmul.f32 %v2232, %v2346
        %v2353 = vmul.f32 %v2191, %v2347
        %v2354 = vmul.f32 %v2215, %v2345
        %v2355 = vmul.f32 %v2233, %v2346
        %v2356 = vmul.f32 %v2193, %v2347
        %v2357 = vmul.f32 %v2216, %v2345
        %v2358 = vmul.f32 %v2234, %v2346
        %v2359 = vmul.f32 %v2195, %v2347
        %v2360 = vmul.f32 %v2217, %v2345
        %v2361 = vmul.f32 %v2235, %v2346
        %v2362 = vmul.f32 %v2197, %v2347
        %v2363 = vmul.f32 %v2218, %v2345
        %v2364 = vmul.f32 %v2236, %v2346
        %v2365 = vmul.f32 %v2199, %v2347
        %v2366 = vmul.f32 %v2219, %v2345
        %v2367 = vmul.f32 %v2237, %v2346
        %v2368 = vmul.f32 %v2201, %v2347
        %v2369 = vmul.f32 %v2220, %v2345
        %v2370 = vmul.f32 %v2238, %v2346
        %v2371 = vmul.f32 %v2203, %v2347
        %v2372 = vmul.f32 %v2221, %v2345
        %v2373 = vmul.f32 %v2239, %v2346
        %v2374 = vmul.f32 %v2205, %v2347
        %v2375 = vmul.f32 %v2351, 1.442695
        %v2376 = vpow.pop %v2375
        %v2377 = vmul.f32 %v2352, 1.442695
        %v2378 = vpow.pop %v2377
        %v2379 = vmul.f32 %v2353, 1.442695
        %v2380 = vpow.pop %v2379
        %v2381 = vmul.f32 %v2354, 1.442695
        %v2382 = vpow.pop %v2381
        %v2383 = vmul.f32 %v2355, 1.442695
        %v2384 = vpow.pop %v2383
        %v2385 = vmul.f32 %v2356, 1.442695
        %v2386 = vpow.pop %v2385
        %v2387 = vmul.f32 %v2357, 1.442695
        %v2388 = vpow.pop %v2387
        %v2389 = vmul.f32 %v2358, 1.442695
        %v2390 = vpow.pop %v2389
        %v2391 = vmul.f32 %v2359, 1.442695
        %v2392 = vpow.pop %v2391
        %v2393 = vmul.f32 %v2360, 1.442695
        %v2394 = vpow.pop %v2393
        %v2395 = vmul.f32 %v2361, 1.442695
        %v2396 = vpow.pop %v2395
        %v2397 = vmul.f32 %v2362, 1.442695
        %v2398 = vpow.pop %v2397
        %v2399 = vmul.f32 %v2363, 1.442695
        %v2400 = vpow.pop %v2399
        %v2401 = vmul.f32 %v2364, 1.442695
        %v2402 = vpow.pop %v2401
        %v2403 = vmul.f32 %v2365, 1.442695
        %v2404 = vpow.pop %v2403
        %v2405 = vmul.f32 %v2366, 1.442695
        %v2406 = vpow.pop %v2405
        %v2407 = vmul.f32 %v2367, 1.442695
        %v2408 = vpow.pop %v2407
        %v2409 = vmul.f32 %v2368, 1.442695
        %v2410 = vpow.pop %v2409
        %v2411 = vmul.f32 %v2369, 1.442695
        %v2412 = vpow.pop %v2411
        %v2413 = vmul.f32 %v2370, 1.442695
        %v2414 = vpow.pop %v2413
        %v2415 = vmul.f32 %v2371, 1.442695
        %v2416 = vpow.pop %v2415
        %v2417 = vmul.f32 %v2372, 1.442695
        %v2418 = vpow.pop %v2417
        %v2419 = vmul.f32 %v2373, 1.442695
        %v2420 = vpow.pop %v2419
        %v2421 = vmul.f32 %v2374, 1.442695
        %v2422 = vpow.pop %v2421
        %2423 = vst [vmem:[#allocation2] sm:$0xff] %v2376
        %2424 = vst [vmem:[#allocation2 + $0x8] sm:$0xff] %v2378
        %vm2425 = vcmask 261120
        %2426 = vst.msk [vmem:[#allocation2 + $0x10] sm:$0xff] %vm2425, %v2380
        %2427 = vst [vmem:[#allocation2 + $0x18] sm:$0xff] %v2382
        %2428 = vst [vmem:[#allocation2 + $0x20] sm:$0xff] %v2384
        %2429 = vst.msk [vmem:[#allocation2 + $0x28] sm:$0xff] %vm2425, %v2386
        %2430 = vst [vmem:[#allocation2 + $0x30] sm:$0xff] %v2388
        %2431 = vst [vmem:[#allocation2 + $0x38] sm:$0xff] %v2390
        %2432 = vst.msk [vmem:[#allocation2 + $0x40] sm:$0xff] %vm2425, %v2392
        %2433 = vst [vmem:[#allocation2 + $0x48] sm:$0xff] %v2394
        %2434 = vst [vmem:[#allocation2 + $0x50] sm:$0xff] %v2396
        %2435 = vst.msk [vmem:[#allocation2 + $0x58] sm:$0xff] %vm2425, %v2398
        %2436 = vst [vmem:[#allocation2 + $0x60] sm:$0xff] %v2400
        %2437 = vst [vmem:[#allocation2 + $0x68] sm:$0xff] %v2402
        %2438 = vst.msk [vmem:[#allocation2 + $0x70] sm:$0xff] %vm2425, %v2404
        %2439 = vst [vmem:[#allocation2 + $0x78] sm:$0xff] %v2406
        %2440 = vst [vmem:[#allocation2 + $0x80] sm:$0xff] %v2408
        %2441 = vst.msk [vmem:[#allocation2 + $0x88] sm:$0xff] %vm2425, %v2410
        %2442 = vst [vmem:[#allocation2 + $0x90] sm:$0xff] %v2412
        %2443 = vst [vmem:[#allocation2 + $0x98] sm:$0xff] %v2414
        %2444 = vst.msk [vmem:[#allocation2 + $0xa0] sm:$0xff] %vm2425, %v2416
        %2445 = vst [vmem:[#allocation2 + $0xa8] sm:$0xff] %v2418
        %2446 = vst [vmem:[#allocation2 + $0xb0] sm:$0xff] %v2420
        %2447 = vst.msk [vmem:[#allocation2 + $0xb8] sm:$0xff] %vm2425, %v2422
        %2448 = vrot.lane.b32.xlu0 %v1882, 125
        %v2449 = vpop.permute.xlu0 %2448
        %2450 = vrot.lane.b32.xlu0 %v1885, 125
        %v2451 = vpop.permute.xlu0 %2450
        %2452 = vrot.lane.b32.xlu0 %v1888, 125
        %v2453 = vpop.permute.xlu0 %2452
        %2454 = vrot.lane.b32.xlu0 %v1891, 125
        %v2455 = vpop.permute.xlu0 %2454
        %2456 = vrot.lane.b32.xlu0 %v1894, 125
        %v2457 = vpop.permute.xlu0 %2456
        %2458 = vrot.lane.b32.xlu0 %v1897, 125
        %v2459 = vpop.permute.xlu0 %2458
        %2460 = vrot.lane.b32.xlu0 %v1900, 125
        %v2461 = vpop.permute.xlu0 %2460
        %2462 = vrot.lane.b32.xlu0 %v1903, 125
        %v2463 = vpop.permute.xlu0 %2462
        %v2464 = vsel %vm1355, %v2449, 0
        %v2466 = vsel %vm1355, %v2451, 0
        %v2468 = vsel %vm1355, %v2453, 0
        %v2470 = vsel %vm1355, %v2455, 0
        %v2472 = vsel %vm1355, %v2457, 0
        %v2474 = vsel %vm1355, %v2459, 0
        %v2476 = vsel %vm1355, %v2461, 0
        %v2478 = vsel %vm1355, %v2463, 0
        %v2481 = vsel %vm1277, %v2129, 0
        %v2484 = vsel %vm1277, %v2130, 0
        %v2487 = vsel %vm1277, %v2131, 0
        %2489 = vmatpush.msra.mxu0 0.0
        %2490 = vmatpush.msra.mxu0 0.0
        %2491 = vmatpush.msra.mxu0 0.0
        %2492 = vmatpush.msra.mxu0 0.0
        %2493 = vmatpush.msra.mxu0 0.0
        %2494 = vmatpush.msra.mxu0 0.0
        %2495 = vmatpush.msra.mxu0 0.0
        %2496 = vmatpush.msra.mxu0 0.0
        %2497 = vmatpush.msra.mxu0 0.0
        %2498 = vmatpush.msra.mxu0 0.0
        %2499 = vmatpush.msra.mxu0 0.0
        %2500 = vmatpush.msra.mxu0 0.0
        %2501 = vmatpush.msra.mxu0 0.0
        %2502 = vmatpush.msra.mxu0 0.0
        %2503 = vmatpush.msra.mxu0 0.0
        %2504 = vmatpush.msra.mxu0 %v2481
        %2505 = vmatmul.f32.gmra.mxu0 %v2464
        %v2506 = vpop.f32.mrf.mxu0
        %v2507 = vadd.f32 0.0, %v2506
        %2508 = vmatmul.f32.gmra.mxu0 %v2466
        %v2509 = vpop.f32.mrf.mxu0
        %v2510 = vadd.f32 0.0, %v2509
        %2511 = vmatmul.f32.gmra.mxu0 %v2468
        %v2512 = vpop.f32.mrf.mxu0
        %v2513 = vadd.f32 0.0, %v2512
        %2514 = vmatmul.f32.gmra.mxu0 %v2470
        %v2515 = vpop.f32.mrf.mxu0
        %v2516 = vadd.f32 0.0, %v2515
        %2517 = vmatmul.f32.gmra.mxu0 %v2472
        %v2518 = vpop.f32.mrf.mxu0
        %v2519 = vadd.f32 0.0, %v2518
        %2520 = vmatmul.f32.gmra.mxu0 %v2474
        %v2521 = vpop.f32.mrf.mxu0
        %v2522 = vadd.f32 0.0, %v2521
        %2523 = vmatmul.f32.gmra.mxu0 %v2476
        %v2524 = vpop.f32.mrf.mxu0
        %v2525 = vadd.f32 0.0, %v2524
        %2526 = vmatmul.f32.gmra.mxu0 %v2478
        %v2527 = vpop.f32.mrf.mxu0
        %v2528 = vadd.f32 0.0, %v2527
        %2529 = vdwg.mxu0
        %2530 = vmatpush.msra.mxu0 0.0
        %2531 = vmatpush.msra.mxu0 0.0
        %2532 = vmatpush.msra.mxu0 0.0
        %2533 = vmatpush.msra.mxu0 0.0
        %2534 = vmatpush.msra.mxu0 0.0
        %2535 = vmatpush.msra.mxu0 0.0
        %2536 = vmatpush.msra.mxu0 0.0
        %2537 = vmatpush.msra.mxu0 0.0
        %2538 = vmatpush.msra.mxu0 0.0
        %2539 = vmatpush.msra.mxu0 0.0
        %2540 = vmatpush.msra.mxu0 0.0
        %2541 = vmatpush.msra.mxu0 0.0
        %2542 = vmatpush.msra.mxu0 0.0
        %2543 = vmatpush.msra.mxu0 0.0
        %2544 = vmatpush.msra.mxu0 0.0
        %2545 = vmatpush.msra.mxu0 %v2484
        %2546 = vmatmul.f32.gmra.mxu0 %v2464
        %v2547 = vpop.f32.mrf.mxu0
        %v2548 = vadd.f32 0.0, %v2547
        %2549 = vmatmul.f32.gmra.mxu0 %v2466
        %v2550 = vpop.f32.mrf.mxu0
        %v2551 = vadd.f32 0.0, %v2550
        %2552 = vmatmul.f32.gmra.mxu0 %v2468
        %v2553 = vpop.f32.mrf.mxu0
        %v2554 = vadd.f32 0.0, %v2553
        %2555 = vmatmul.f32.gmra.mxu0 %v2470
        %v2556 = vpop.f32.mrf.mxu0
        %v2557 = vadd.f32 0.0, %v2556
        %2558 = vmatmul.f32.gmra.mxu0 %v2472
        %v2559 = vpop.f32.mrf.mxu0
        %v2560 = vadd.f32 0.0, %v2559
        %2561 = vmatmul.f32.gmra.mxu0 %v2474
        %v2562 = vpop.f32.mrf.mxu0
        %v2563 = vadd.f32 0.0, %v2562
        %2564 = vmatmul.f32.gmra.mxu0 %v2476
        %v2565 = vpop.f32.mrf.mxu0
        %v2566 = vadd.f32 0.0, %v2565
        %2567 = vmatmul.f32.gmra.mxu0 %v2478
        %v2568 = vpop.f32.mrf.mxu0
        %v2569 = vadd.f32 0.0, %v2568
        %2570 = vdwg.mxu0
        %2571 = vmatpush.msra.mxu0 0.0
        %2572 = vmatpush.msra.mxu0 0.0
        %2573 = vmatpush.msra.mxu0 0.0
        %2574 = vmatpush.msra.mxu0 0.0
        %2575 = vmatpush.msra.mxu0 0.0
        %2576 = vmatpush.msra.mxu0 0.0
        %2577 = vmatpush.msra.mxu0 0.0
        %2578 = vmatpush.msra.mxu0 0.0
        %2579 = vmatpush.msra.mxu0 0.0
        %2580 = vmatpush.msra.mxu0 0.0
        %2581 = vmatpush.msra.mxu0 0.0
        %2582 = vmatpush.msra.mxu0 0.0
        %2583 = vmatpush.msra.mxu0 0.0
        %2584 = vmatpush.msra.mxu0 0.0
        %2585 = vmatpush.msra.mxu0 0.0
        %2586 = vmatpush.msra.mxu0 %v2487
        %2587 = vmatmul.f32.gmra.mxu0 %v2464
        %v2588 = vpop.f32.mrf.mxu0
        %v2589 = vadd.f32 0.0, %v2588
        %2590 = vmatmul.f32.gmra.mxu0 %v2466
        %v2591 = vpop.f32.mrf.mxu0
        %v2592 = vadd.f32 0.0, %v2591
        %2593 = vmatmul.f32.gmra.mxu0 %v2468
        %v2594 = vpop.f32.mrf.mxu0
        %v2595 = vadd.f32 0.0, %v2594
        %2596 = vmatmul.f32.gmra.mxu0 %v2470
        %v2597 = vpop.f32.mrf.mxu0
        %v2598 = vadd.f32 0.0, %v2597
        %2599 = vmatmul.f32.gmra.mxu0 %v2472
        %v2600 = vpop.f32.mrf.mxu0
        %v2601 = vadd.f32 0.0, %v2600
        %2602 = vmatmul.f32.gmra.mxu0 %v2474
        %v2603 = vpop.f32.mrf.mxu0
        %v2604 = vadd.f32 0.0, %v2603
        %2605 = vmatmul.f32.gmra.mxu0 %v2476
        %v2606 = vpop.f32.mrf.mxu0
        %v2607 = vadd.f32 0.0, %v2606
        %2608 = vmatmul.f32.gmra.mxu0 %v2478
        %v2609 = vpop.f32.mrf.mxu0
        %v2610 = vadd.f32 0.0, %v2609
        %2611 = vdwg.mxu0
        %v2612 = vmul.f32 %v2320, %v2507
        %v2613 = vmul.f32 %v2336, %v2548
        %v2614 = vmul.f32 %v2297, %v2589
        %v2615 = vmul.f32 %v2321, %v2510
        %v2616 = vmul.f32 %v2337, %v2551
        %v2617 = vmul.f32 %v2299, %v2592
        %v2618 = vmul.f32 %v2322, %v2513
        %v2619 = vmul.f32 %v2338, %v2554
        %v2620 = vmul.f32 %v2301, %v2595
        %v2621 = vmul.f32 %v2323, %v2516
        %v2622 = vmul.f32 %v2339, %v2557
        %v2623 = vmul.f32 %v2303, %v2598
        %v2624 = vmul.f32 %v2324, %v2519
        %v2625 = vmul.f32 %v2340, %v2560
        %v2626 = vmul.f32 %v2305, %v2601
        %v2627 = vmul.f32 %v2325, %v2522
        %v2628 = vmul.f32 %v2341, %v2563
        %v2629 = vmul.f32 %v2307, %v2604
        %v2630 = vmul.f32 %v2326, %v2525
        %v2631 = vmul.f32 %v2342, %v2566
        %v2632 = vmul.f32 %v2309, %v2607
        %v2633 = vmul.f32 %v2327, %v2528
        %v2634 = vmul.f32 %v2343, %v2569
        %v2635 = vmul.f32 %v2311, %v2610
        %2636 = vst [vmem:[#allocation3] sm:$0xff] %v2612
        %2637 = vst [vmem:[#allocation3 + $0x8] sm:$0xff] %v2613
        %2638 = vst.msk [vmem:[#allocation3 + $0x10] sm:$0xff] %vm2425, %v2614
        %2639 = vst [vmem:[#allocation3 + $0x18] sm:$0xff] %v2615
        %2640 = vst [vmem:[#allocation3 + $0x20] sm:$0xff] %v2616
        %2641 = vst.msk [vmem:[#allocation3 + $0x28] sm:$0xff] %vm2425, %v2617
        %2642 = vst [vmem:[#allocation3 + $0x30] sm:$0xff] %v2618
        %2643 = vst [vmem:[#allocation3 + $0x38] sm:$0xff] %v2619
        %2644 = vst.msk [vmem:[#allocation3 + $0x40] sm:$0xff] %vm2425, %v2620
        %2645 = vst [vmem:[#allocation3 + $0x48] sm:$0xff] %v2621
        %2646 = vst [vmem:[#allocation3 + $0x50] sm:$0xff] %v2622
        %2647 = vst.msk [vmem:[#allocation3 + $0x58] sm:$0xff] %vm2425, %v2623
        %2648 = vst [vmem:[#allocation3 + $0x60] sm:$0xff] %v2624
        %2649 = vst [vmem:[#allocation3 + $0x68] sm:$0xff] %v2625
        %2650 = vst.msk [vmem:[#allocation3 + $0x70] sm:$0xff] %vm2425, %v2626
        %2651 = vst [vmem:[#allocation3 + $0x78] sm:$0xff] %v2627
        %2652 = vst [vmem:[#allocation3 + $0x80] sm:$0xff] %v2628
        %2653 = vst.msk [vmem:[#allocation3 + $0x88] sm:$0xff] %vm2425, %v2629
        %2654 = vst [vmem:[#allocation3 + $0x90] sm:$0xff] %v2630
        %2655 = vst [vmem:[#allocation3 + $0x98] sm:$0xff] %v2631
        %2656 = vst.msk [vmem:[#allocation3 + $0xa0] sm:$0xff] %vm2425, %v2632
        %2657 = vst [vmem:[#allocation3 + $0xa8] sm:$0xff] %v2633
        %2658 = vst [vmem:[#allocation3 + $0xb0] sm:$0xff] %v2634
        %2659 = vst.msk [vmem:[#allocation3 + $0xb8] sm:$0xff] %vm2425, %v2635
        %2660 = vrot.lane.b32.xlu0 %v1882, 121
        %v2661 = vpop.permute.xlu0 %2660
        %2662 = vrot.lane.b32.xlu0 %v1885, 121
        %v2663 = vpop.permute.xlu0 %2662
        %2664 = vrot.lane.b32.xlu0 %v1888, 121
        %v2665 = vpop.permute.xlu0 %2664
        %2666 = vrot.lane.b32.xlu0 %v1891, 121
        %v2667 = vpop.permute.xlu0 %2666
        %2668 = vrot.lane.b32.xlu0 %v1894, 121
        %v2669 = vpop.permute.xlu0 %2668
        %2670 = vrot.lane.b32.xlu0 %v1897, 121
        %v2671 = vpop.permute.xlu0 %2670
        %2672 = vrot.lane.b32.xlu0 %v1900, 121
        %v2673 = vpop.permute.xlu0 %2672
        %2674 = vrot.lane.b32.xlu0 %v1903, 121
        %v2675 = vpop.permute.xlu0 %2674
        %v2676 = vsel %vm1355, %v2661, 0
        %v2678 = vsel %vm1355, %v2663, 0
        %v2680 = vsel %vm1355, %v2665, 0
        %v2682 = vsel %vm1355, %v2667, 0
        %v2684 = vsel %vm1355, %v2669, 0
        %v2686 = vsel %vm1355, %v2671, 0
        %v2688 = vsel %vm1355, %v2673, 0
        %v2690 = vsel %vm1355, %v2675, 0
        %2692 = vmatpush.msra.mxu0 0.0
        %2693 = vmatpush.msra.mxu0 0.0
        %2694 = vmatpush.msra.mxu0 0.0
        %2695 = vmatpush.msra.mxu0 0.0
        %2696 = vmatpush.msra.mxu0 0.0
        %2697 = vmatpush.msra.mxu0 0.0
        %2698 = vmatpush.msra.mxu0 0.0
        %2699 = vmatpush.msra.mxu0 0.0
        %2700 = vmatpush.msra.mxu0 0.0
        %2701 = vmatpush.msra.mxu0 0.0
        %2702 = vmatpush.msra.mxu0 0.0
        %2703 = vmatpush.msra.mxu0 0.0
        %2704 = vmatpush.msra.mxu0 0.0
        %2705 = vmatpush.msra.mxu0 0.0
        %2706 = vmatpush.msra.mxu0 0.0
        %2707 = vmatpush.msra.mxu0 %v2481
        %2708 = vmatmul.f32.gmra.mxu0 %v2676
        %v2709 = vpop.f32.mrf.mxu0
        %v2710 = vadd.f32 0.0, %v2709
        %2711 = vmatmul.f32.gmra.mxu0 %v2678
        %v2712 = vpop.f32.mrf.mxu0
        %v2713 = vadd.f32 0.0, %v2712
        %2714 = vmatmul.f32.gmra.mxu0 %v2680
        %v2715 = vpop.f32.mrf.mxu0
        %v2716 = vadd.f32 0.0, %v2715
        %2717 = vmatmul.f32.gmra.mxu0 %v2682
        %v2718 = vpop.f32.mrf.mxu0
        %v2719 = vadd.f32 0.0, %v2718
        %2720 = vmatmul.f32.gmra.mxu0 %v2684
        %v2721 = vpop.f32.mrf.mxu0
        %v2722 = vadd.f32 0.0, %v2721
        %2723 = vmatmul.f32.gmra.mxu0 %v2686
        %v2724 = vpop.f32.mrf.mxu0
        %v2725 = vadd.f32 0.0, %v2724
        %2726 = vmatmul.f32.gmra.mxu0 %v2688
        %v2727 = vpop.f32.mrf.mxu0
        %v2728 = vadd.f32 0.0, %v2727
        %2729 = vmatmul.f32.gmra.mxu0 %v2690
        %v2730 = vpop.f32.mrf.mxu0
        %v2731 = vadd.f32 0.0, %v2730
        %2732 = vdwg.mxu0
        %2733 = vmatpush.msra.mxu0 0.0
        %2734 = vmatpush.msra.mxu0 0.0
        %2735 = vmatpush.msra.mxu0 0.0
        %2736 = vmatpush.msra.mxu0 0.0
        %2737 = vmatpush.msra.mxu0 0.0
        %2738 = vmatpush.msra.mxu0 0.0
        %2739 = vmatpush.msra.mxu0 0.0
        %2740 = vmatpush.msra.mxu0 0.0
        %2741 = vmatpush.msra.mxu0 0.0
        %2742 = vmatpush.msra.mxu0 0.0
        %2743 = vmatpush.msra.mxu0 0.0
        %2744 = vmatpush.msra.mxu0 0.0
        %2745 = vmatpush.msra.mxu0 0.0
        %2746 = vmatpush.msra.mxu0 0.0
        %2747 = vmatpush.msra.mxu0 0.0
        %2748 = vmatpush.msra.mxu0 %v2484
        %2749 = vmatmul.f32.gmra.mxu0 %v2676
        %v2750 = vpop.f32.mrf.mxu0
        %v2751 = vadd.f32 0.0, %v2750
        %2752 = vmatmul.f32.gmra.mxu0 %v2678
        %v2753 = vpop.f32.mrf.mxu0
        %v2754 = vadd.f32 0.0, %v2753
        %2755 = vmatmul.f32.gmra.mxu0 %v2680
        %v2756 = vpop.f32.mrf.mxu0
        %v2757 = vadd.f32 0.0, %v2756
        %2758 = vmatmul.f32.gmra.mxu0 %v2682
        %v2759 = vpop.f32.mrf.mxu0
        %v2760 = vadd.f32 0.0, %v2759
        %2761 = vmatmul.f32.gmra.mxu0 %v2684
        %v2762 = vpop.f32.mrf.mxu0
        %v2763 = vadd.f32 0.0, %v2762
        %2764 = vmatmul.f32.gmra.mxu0 %v2686
        %v2765 = vpop.f32.mrf.mxu0
        %v2766 = vadd.f32 0.0, %v2765
        %2767 = vmatmul.f32.gmra.mxu0 %v2688
        %v2768 = vpop.f32.mrf.mxu0
        %v2769 = vadd.f32 0.0, %v2768
        %2770 = vmatmul.f32.gmra.mxu0 %v2690
        %v2771 = vpop.f32.mrf.mxu0
        %v2772 = vadd.f32 0.0, %v2771
        %2773 = vdwg.mxu0
        %2774 = vmatpush.msra.mxu0 0.0
        %2775 = vmatpush.msra.mxu0 0.0
        %2776 = vmatpush.msra.mxu0 0.0
        %2777 = vmatpush.msra.mxu0 0.0
        %2778 = vmatpush.msra.mxu0 0.0
        %2779 = vmatpush.msra.mxu0 0.0
        %2780 = vmatpush.msra.mxu0 0.0
        %2781 = vmatpush.msra.mxu0 0.0
        %2782 = vmatpush.msra.mxu0 0.0
        %2783 = vmatpush.msra.mxu0 0.0
        %2784 = vmatpush.msra.mxu0 0.0
        %2785 = vmatpush.msra.mxu0 0.0
        %2786 = vmatpush.msra.mxu0 0.0
        %2787 = vmatpush.msra.mxu0 0.0
        %2788 = vmatpush.msra.mxu0 0.0
        %2789 = vmatpush.msra.mxu0 %v2487
        %2790 = vmatmul.f32.gmra.mxu0 %v2676
        %v2791 = vpop.f32.mrf.mxu0
        %v2792 = vadd.f32 0.0, %v2791
        %2793 = vmatmul.f32.gmra.mxu0 %v2678
        %v2794 = vpop.f32.mrf.mxu0
        %v2795 = vadd.f32 0.0, %v2794
        %2796 = vmatmul.f32.gmra.mxu0 %v2680
        %v2797 = vpop.f32.mrf.mxu0
        %v2798 = vadd.f32 0.0, %v2797
        %2799 = vmatmul.f32.gmra.mxu0 %v2682
        %v2800 = vpop.f32.mrf.mxu0
        %v2801 = vadd.f32 0.0, %v2800
        %2802 = vmatmul.f32.gmra.mxu0 %v2684
        %v2803 = vpop.f32.mrf.mxu0
        %v2804 = vadd.f32 0.0, %v2803
        %2805 = vmatmul.f32.gmra.mxu0 %v2686
        %v2806 = vpop.f32.mrf.mxu0
        %v2807 = vadd.f32 0.0, %v2806
        %2808 = vmatmul.f32.gmra.mxu0 %v2688
        %v2809 = vpop.f32.mrf.mxu0
        %v2810 = vadd.f32 0.0, %v2809
        %2811 = vmatmul.f32.gmra.mxu0 %v2690
        %v2812 = vpop.f32.mrf.mxu0
        %v2813 = vadd.f32 0.0, %v2812
        %2814 = vdwg.mxu0
        %2815 = vst [vmem:[#allocation4] sm:$0xff] %v2710
        %2816 = vst [vmem:[#allocation4 + $0x8] sm:$0xff] %v2751
        %2817 = vst.msk [vmem:[#allocation4 + $0x10] sm:$0xff] %vm2425, %v2792
        %2818 = vst [vmem:[#allocation4 + $0x18] sm:$0xff] %v2713
        %2819 = vst [vmem:[#allocation4 + $0x20] sm:$0xff] %v2754
        %2820 = vst.msk [vmem:[#allocation4 + $0x28] sm:$0xff] %vm2425, %v2795
        %2821 = vst [vmem:[#allocation4 + $0x30] sm:$0xff] %v2716
        %2822 = vst [vmem:[#allocation4 + $0x38] sm:$0xff] %v2757
        %2823 = vst.msk [vmem:[#allocation4 + $0x40] sm:$0xff] %vm2425, %v2798
        %2824 = vst [vmem:[#allocation4 + $0x48] sm:$0xff] %v2719
        %2825 = vst [vmem:[#allocation4 + $0x50] sm:$0xff] %v2760
        %2826 = vst.msk [vmem:[#allocation4 + $0x58] sm:$0xff] %vm2425, %v2801
        %2827 = vst [vmem:[#allocation4 + $0x60] sm:$0xff] %v2722
        %2828 = vst [vmem:[#allocation4 + $0x68] sm:$0xff] %v2763
        %2829 = vst.msk [vmem:[#allocation4 + $0x70] sm:$0xff] %vm2425, %v2804
        %2830 = vst [vmem:[#allocation4 + $0x78] sm:$0xff] %v2725
        %2831 = vst [vmem:[#allocation4 + $0x80] sm:$0xff] %v2766
        %2832 = vst.msk [vmem:[#allocation4 + $0x88] sm:$0xff] %vm2425, %v2807
        %2833 = vst [vmem:[#allocation4 + $0x90] sm:$0xff] %v2728
        %2834 = vst [vmem:[#allocation4 + $0x98] sm:$0xff] %v2769
        %2835 = vst.msk [vmem:[#allocation4 + $0xa0] sm:$0xff] %vm2425, %v2810
        %2836 = vst [vmem:[#allocation4 + $0xa8] sm:$0xff] %v2731
        %2837 = vst [vmem:[#allocation4 + $0xb0] sm:$0xff] %v2772
        %2838 = vst.msk [vmem:[#allocation4 + $0xb8] sm:$0xff] %vm2425, %v2813
        %v2839 = vld [vmem:[#allocation2] sm:$0xff]
        %v2840 = vld [vmem:[#allocation2 + $0x8] sm:$0xff]
        %v2841 = vld [vmem:[#allocation2 + $0x10] sm:$0xff]
        %v2842 = vld [vmem:[#allocation3] sm:$0xff]
        %v2843 = vld [vmem:[#allocation3 + $0x8] sm:$0xff]
        %v2844 = vld [vmem:[#allocation3 + $0x10] sm:$0xff]
        %v2845 = vld [vmem:[#allocation4] sm:$0xff]
        %v2846 = vld [vmem:[#allocation4 + $0x8] sm:$0xff]
        %v2847 = vld [vmem:[#allocation4 + $0x10] sm:$0xff]
        %v2848 = vmul.f32 %v2839, 0.0
        %v2849 = vmul.f32 %v2840, 0.0
        %v2850 = vmul.f32 %v2841, 0.0
        %v2851 = vadd.f32 %v2848, %v2842
        %v2852 = vadd.f32 %v2849, %v2843
        %v2853 = vadd.f32 %v2850, %v2844
        %v2857 = vrot.slane %v2851, 7
        %v2858 = vrot.slane %v2852, 7
        %v2859 = vrot.slane %v2853, 7
        %v2863 = vmul.f32 %v2839, %v2857
        %v2864 = vmul.f32 %v2840, %v2858
        %v2865 = vmul.f32 %v2841, %v2859
        %v2866 = vadd.f32 %v2863, %v2842
        %v2867 = vadd.f32 %v2864, %v2843
        %v2868 = vadd.f32 %v2865, %v2844
        %v2872 = vrot.slane %v2866, 7
        %v2873 = vrot.slane %v2867, 7
        %v2874 = vrot.slane %v2868, 7
        %v2878 = vmul.f32 %v2839, %v2872
        %v2879 = vmul.f32 %v2840, %v2873
        %v2880 = vmul.f32 %v2841, %v2874
        %v2881 = vadd.f32 %v2878, %v2842
        %v2882 = vadd.f32 %v2879, %v2843
        %v2883 = vadd.f32 %v2880, %v2844
        %v2887 = vrot.slane %v2881, 7
        %v2888 = vrot.slane %v2882, 7
        %v2889 = vrot.slane %v2883, 7
        %v2893 = vmul.f32 %v2839, %v2887
        %v2894 = vmul.f32 %v2840, %v2888
        %v2895 = vmul.f32 %v2841, %v2889
        %v2896 = vadd.f32 %v2893, %v2842
        %v2897 = vadd.f32 %v2894, %v2843
        %v2898 = vadd.f32 %v2895, %v2844
        %v2902 = vrot.slane %v2896, 7
        %v2903 = vrot.slane %v2897, 7
        %v2904 = vrot.slane %v2898, 7
        %v2908 = vmul.f32 %v2839, %v2902
        %v2909 = vmul.f32 %v2840, %v2903
        %v2910 = vmul.f32 %v2841, %v2904
        %v2911 = vadd.f32 %v2908, %v2842
        %v2912 = vadd.f32 %v2909, %v2843
        %v2913 = vadd.f32 %v2910, %v2844
        %v2917 = vrot.slane %v2911, 7
        %v2918 = vrot.slane %v2912, 7
        %v2919 = vrot.slane %v2913, 7
        %v2923 = vmul.f32 %v2839, %v2917
        %v2924 = vmul.f32 %v2840, %v2918
        %v2925 = vmul.f32 %v2841, %v2919
        %v2926 = vadd.f32 %v2923, %v2842
        %v2927 = vadd.f32 %v2924, %v2843
        %v2928 = vadd.f32 %v2925, %v2844
        %v2932 = vrot.slane %v2926, 7
        %v2933 = vrot.slane %v2927, 7
        %v2934 = vrot.slane %v2928, 7
        %v2938 = vmul.f32 %v2839, %v2932
        %v2939 = vmul.f32 %v2840, %v2933
        %v2940 = vmul.f32 %v2841, %v2934
        %v2941 = vadd.f32 %v2938, %v2842
        %v2942 = vadd.f32 %v2939, %v2843
        %v2943 = vadd.f32 %v2940, %v2844
        %v2947 = vrot.slane %v2941, 7
        %v2948 = vrot.slane %v2942, 7
        %v2949 = vrot.slane %v2943, 7
        %v2953 = vmul.f32 %v2839, %v2947
        %v2954 = vmul.f32 %v2840, %v2948
        %v2955 = vmul.f32 %v2841, %v2949
        %v2956 = vadd.f32 %v2953, %v2842
        %v2957 = vadd.f32 %v2954, %v2843
        %v2958 = vadd.f32 %v2955, %v2844
        %vm2959 = vcmask 1040384
        %v2960 = vsel %vm2959, %v2851, %v2866
        %v2961 = vsel %vm2959, %v2852, %v2867
        %v2962 = vsel %vm2959, %v2853, %v2868
        %v2963 = vsel %vm1359, %v2960, %v2881
        %v2964 = vsel %vm1359, %v2961, %v2882
        %v2965 = vsel %vm1359, %v2962, %v2883
        %v2966 = vsel %vm1156, %v2963, %v2896
        %v2967 = vsel %vm1156, %v2964, %v2897
        %v2968 = vsel %vm1156, %v2965, %v2898
        %v2969 = vsel %vm1277, %v2966, %v2911
        %v2970 = vsel %vm1277, %v2967, %v2912
        %v2971 = vsel %vm1277, %v2968, %v2913
        %vm2972 = vcmask 1044480
        %v2973 = vsel %vm2972, %v2969, %v2926
        %v2974 = vsel %vm2972, %v2970, %v2927
        %v2975 = vsel %vm2972, %v2971, %v2928
        %vm2976 = vcmask 1045504
        %v2977 = vsel %vm2976, %v2973, %v2941
        %v2978 = vsel %vm2976, %v2974, %v2942
        %v2979 = vsel %vm2976, %v2975, %v2943
        %vm2980 = vcmask 1046528
        %v2981 = vsel %vm2980, %v2977, %v2956
        %v2982 = vsel %vm2980, %v2978, %v2957
        %v2983 = vsel %vm2980, %v2979, %v2958
        %v2984 = vmul.f32 %v2981, %v2845
        %v2985 = vmul.f32 %v2982, %v2846
        %v2986 = vmul.f32 %v2983, %v2847
        %v2987 = vld [vmem:[#allocation17] sm:$0xff]
        %v2988 = vld [vmem:[#allocation17 + $0x8] sm:$0xff]
        %v2989 = vld [vmem:[#allocation17 + $0x10] sm:$0xff]
        %v2990 = vld [vmem:[#allocation17 + $0x18] sm:$0xff]
        %v2991 = vld [vmem:[#allocation17 + $0x20] sm:$0xff]
        %v2992 = vld [vmem:[#allocation17 + $0x28] sm:$0xff]
        %v2993 = vld [vmem:[#allocation17 + $0x30] sm:$0xff]
        %v2994 = vld [vmem:[#allocation17 + $0x38] sm:$0xff]
        %v2995 = vld [vmem:[#allocation17 + $0x40] sm:$0xff]
        %v2996 = vld [vmem:[#allocation17 + $0x48] sm:$0xff]
        %v2997 = vld [vmem:[#allocation17 + $0x50] sm:$0xff]
        %v2998 = vld [vmem:[#allocation17 + $0x58] sm:$0xff]
        %v2999 = vld [vmem:[#allocation17 + $0x60] sm:$0xff]
        %v3000 = vld [vmem:[#allocation17 + $0x68] sm:$0xff]
        %v3001 = vld [vmem:[#allocation17 + $0x70] sm:$0xff]
        %v3002 = vld [vmem:[#allocation17 + $0x78] sm:$0xff]
        %v3003 = vld [vmem:[#allocation17 + $0x80] sm:$0xff]
        %v3004 = vld [vmem:[#allocation17 + $0x88] sm:$0xff]
        %v3005 = vld [vmem:[#allocation17 + $0x90] sm:$0xff]
        %v3006 = vld [vmem:[#allocation17 + $0x98] sm:$0xff]
        %v3007 = vld [vmem:[#allocation17 + $0xa0] sm:$0xff]
        %v3008 = vld [vmem:[#allocation17 + $0xa8] sm:$0xff]
        %v3009 = vld [vmem:[#allocation17 + $0xb0] sm:$0xff]
        %v3010 = vld [vmem:[#allocation17 + $0xb8] sm:$0xff]
        %v3011 = vld [vmem:[#allocation17 + $0xc0] sm:$0xff]
        %v3012 = vld [vmem:[#allocation17 + $0xc8] sm:$0xff]
        %v3013 = vld [vmem:[#allocation17 + $0xd0] sm:$0xff]
        %v3014 = vld [vmem:[#allocation17 + $0xd8] sm:$0xff]
        %v3015 = vld [vmem:[#allocation17 + $0xe0] sm:$0xff]
        %v3016 = vld [vmem:[#allocation17 + $0xe8] sm:$0xff]
        %v3017 = vld [vmem:[#allocation17 + $0xf0] sm:$0xff]
        %v3018 = vld [vmem:[#allocation17 + $0xf8] sm:$0xff]
        %v3019 = vld [vmem:[#allocation17 + $0x100] sm:$0xff]
        %v3020 = vld [vmem:[#allocation17 + $0x108] sm:$0xff]
        %v3021 = vld [vmem:[#allocation17 + $0x110] sm:$0xff]
        %v3022 = vld [vmem:[#allocation17 + $0x118] sm:$0xff]
        %v3024 = vsel %vm2425, %v2986, 0
        %3026 = vmatpush.msra.mxu0 %v3002
        %3027 = vmatpush.msra.mxu0 %v3001
        %3028 = vmatpush.msra.mxu0 %v3000
        %3029 = vmatpush.msra.mxu0 %v2999
        %3030 = vmatpush.msra.mxu0 %v2998
        %3031 = vmatpush.msra.mxu0 %v2997
        %3032 = vmatpush.msra.mxu0 %v2996
        %3033 = vmatpush.msra.mxu0 %v2995
        %3034 = vmatpush.msra.mxu0 %v2994
        %3035 = vmatpush.msra.mxu0 %v2993
        %3036 = vmatpush.msra.mxu0 %v2992
        %3037 = vmatpush.msra.mxu0 %v2991
        %3038 = vmatpush.msra.mxu0 %v2990
        %3039 = vmatpush.msra.mxu0 %v2989
        %3040 = vmatpush.msra.mxu0 %v2988
        %3041 = vmatpush.msra.mxu0 %v2987
        %3042 = vmatmul.f32.gmra.mxu0 %v2984
        %v3043 = vpop.f32.mrf.mxu0
        %v3044 = vadd.f32 0.0, %v3043
        %3045 = vdwg.mxu0
        %3046 = vmatpush.msra.mxu0 %v3018
        %3047 = vmatpush.msra.mxu0 %v3017
        %3048 = vmatpush.msra.mxu0 %v3016
        %3049 = vmatpush.msra.mxu0 %v3015
        %3050 = vmatpush.msra.mxu0 %v3014
        %3051 = vmatpush.msra.mxu0 %v3013
        %3052 = vmatpush.msra.mxu0 %v3012
        %3053 = vmatpush.msra.mxu0 %v3011
        %3054 = vmatpush.msra.mxu0 %v3010
        %3055 = vmatpush.msra.mxu0 %v3009
        %3056 = vmatpush.msra.mxu0 %v3008
        %3057 = vmatpush.msra.mxu0 %v3007
        %3058 = vmatpush.msra.mxu0 %v3006
        %3059 = vmatpush.msra.mxu0 %v3005
        %3060 = vmatpush.msra.mxu0 %v3004
        %3061 = vmatpush.msra.mxu0 %v3003
        %3062 = vmatmul.f32.gmra.mxu0 %v2985
        %v3063 = vpop.f32.mrf.mxu0
        %v3064 = vadd.f32 %v3044, %v3063
        %3065 = vdwg.mxu0
        %3066 = vmatpush.msra.mxu0 0.0
        %3067 = vmatpush.msra.mxu0 0.0
        %3068 = vmatpush.msra.mxu0 0.0
        %3069 = vmatpush.msra.mxu0 0.0
        %3070 = vmatpush.msra.mxu0 0.0
        %3071 = vmatpush.msra.mxu0 0.0
        %3072 = vmatpush.msra.mxu0 0.0
        %3073 = vmatpush.msra.mxu0 0.0
        %3074 = vmatpush.msra.mxu0 0.0
        %3075 = vmatpush.msra.mxu0 0.0
        %3076 = vmatpush.msra.mxu0 0.0
        %3077 = vmatpush.msra.mxu0 0.0
        %3078 = vmatpush.msra.mxu0 %v3022
        %3079 = vmatpush.msra.mxu0 %v3021
        %3080 = vmatpush.msra.mxu0 %v3020
        %3081 = vmatpush.msra.mxu0 %v3019
        %3082 = vmatmul.f32.gmra.mxu0 %v3024
        %v3083 = vpop.f32.mrf.mxu0
        %v3084 = vadd.f32 %v3064, %v3083
        %3085 = vdwg.mxu0
        %3086 = vst.msk [vmem:[#allocation5] sm:$0xff] %vm1839, %v3084
        %v3087 = vld [vmem:[#allocation2 + $0x18] sm:$0xff]
        %v3088 = vld [vmem:[#allocation2 + $0x20] sm:$0xff]
        %v3089 = vld [vmem:[#allocation2 + $0x28] sm:$0xff]
        %v3090 = vld [vmem:[#allocation3 + $0x18] sm:$0xff]
        %v3091 = vld [vmem:[#allocation3 + $0x20] sm:$0xff]
        %v3092 = vld [vmem:[#allocation3 + $0x28] sm:$0xff]
        %v3093 = vld [vmem:[#allocation4 + $0x18] sm:$0xff]
        %v3094 = vld [vmem:[#allocation4 + $0x20] sm:$0xff]
        %v3095 = vld [vmem:[#allocation4 + $0x28] sm:$0xff]
        %v3099 = vrot.slane %v2956, 7
        %v3100 = vrot.slane %v2957, 7
        %v3101 = vrot.slane %v2958, 7
        %v3105 = vmul.f32 %v3087, %v3099
        %v3106 = vmul.f32 %v3088, %v3100
        %v3107 = vmul.f32 %v3089, %v3101
        %v3108 = vadd.f32 %v3105, %v3090
        %v3109 = vadd.f32 %v3106, %v3091
        %v3110 = vadd.f32 %v3107, %v3092
        %v3114 = vrot.slane %v3108, 7
        %v3115 = vrot.slane %v3109, 7
        %v3116 = vrot.slane %v3110, 7
        %v3120 = vmul.f32 %v3087, %v3114
        %v3121 = vmul.f32 %v3088, %v3115
        %v3122 = vmul.f32 %v3089, %v3116
        %v3123 = vadd.f32 %v3120, %v3090
        %v3124 = vadd.f32 %v3121, %v3091
        %v3125 = vadd.f32 %v3122, %v3092
        %v3129 = vrot.slane %v3123, 7
        %v3130 = vrot.slane %v3124, 7
        %v3131 = vrot.slane %v3125, 7
        %v3135 = vmul.f32 %v3087, %v3129
        %v3136 = vmul.f32 %v3088, %v3130
        %v3137 = vmul.f32 %v3089, %v3131
        %v3138 = vadd.f32 %v3135, %v3090
        %v3139 = vadd.f32 %v3136, %v3091
        %v3140 = vadd.f32 %v3137, %v3092
        %v3144 = vrot.slane %v3138, 7
        %v3145 = vrot.slane %v3139, 7
        %v3146 = vrot.slane %v3140, 7
        %v3150 = vmul.f32 %v3087, %v3144
        %v3151 = vmul.f32 %v3088, %v3145
        %v3152 = vmul.f32 %v3089, %v3146
        %v3153 = vadd.f32 %v3150, %v3090
        %v3154 = vadd.f32 %v3151, %v3091
        %v3155 = vadd.f32 %v3152, %v3092
        %v3159 = vrot.slane %v3153, 7
        %v3160 = vrot.slane %v3154, 7
        %v3161 = vrot.slane %v3155, 7
        %v3165 = vmul.f32 %v3087, %v3159
        %v3166 = vmul.f32 %v3088, %v3160
        %v3167 = vmul.f32 %v3089, %v3161
        %v3168 = vadd.f32 %v3165, %v3090
        %v3169 = vadd.f32 %v3166, %v3091
        %v3170 = vadd.f32 %v3167, %v3092
        %v3174 = vrot.slane %v3168, 7
        %v3175 = vrot.slane %v3169, 7
        %v3176 = vrot.slane %v3170, 7
        %v3180 = vmul.f32 %v3087, %v3174
        %v3181 = vmul.f32 %v3088, %v3175
        %v3182 = vmul.f32 %v3089, %v3176
        %v3183 = vadd.f32 %v3180, %v3090
        %v3184 = vadd.f32 %v3181, %v3091
        %v3185 = vadd.f32 %v3182, %v3092
        %v3189 = vrot.slane %v3183, 7
        %v3190 = vrot.slane %v3184, 7
        %v3191 = vrot.slane %v3185, 7
        %v3195 = vmul.f32 %v3087, %v3189
        %v3196 = vmul.f32 %v3088, %v3190
        %v3197 = vmul.f32 %v3089, %v3191
        %v3198 = vadd.f32 %v3195, %v3090
        %v3199 = vadd.f32 %v3196, %v3091
        %v3200 = vadd.f32 %v3197, %v3092
        %v3204 = vrot.slane %v3198, 7
        %v3205 = vrot.slane %v3199, 7
        %v3206 = vrot.slane %v3200, 7
        %v3210 = vmul.f32 %v3087, %v3204
        %v3211 = vmul.f32 %v3088, %v3205
        %v3212 = vmul.f32 %v3089, %v3206
        %v3213 = vadd.f32 %v3210, %v3090
        %v3214 = vadd.f32 %v3211, %v3091
        %v3215 = vadd.f32 %v3212, %v3092
        %v3216 = vsel %vm2959, %v3108, %v3123
        %v3217 = vsel %vm2959, %v3109, %v3124
        %v3218 = vsel %vm2959, %v3110, %v3125
        %v3219 = vsel %vm1359, %v3216, %v3138
        %v3220 = vsel %vm1359, %v3217, %v3139
        %v3221 = vsel %vm1359, %v3218, %v3140
        %v3222 = vsel %vm1156, %v3219, %v3153
        %v3223 = vsel %vm1156, %v3220, %v3154
        %v3224 = vsel %vm1156, %v3221, %v3155
        %v3225 = vsel %vm1277, %v3222, %v3168
        %v3226 = vsel %vm1277, %v3223, %v3169
        %v3227 = vsel %vm1277, %v3224, %v3170
        %v3228 = vsel %vm2972, %v3225, %v3183
        %v3229 = vsel %vm2972, %v3226, %v3184
        %v3230 = vsel %vm2972, %v3227, %v3185
        %v3231 = vsel %vm2976, %v3228, %v3198
        %v3232 = vsel %vm2976, %v3229, %v3199
        %v3233 = vsel %vm2976, %v3230, %v3200
        %v3234 = vsel %vm2980, %v3231, %v3213
        %v3235 = vsel %vm2980, %v3232, %v3214
        %v3236 = vsel %vm2980, %v3233, %v3215
        %v3237 = vmul.f32 %v3234, %v3093
        %v3238 = vmul.f32 %v3235, %v3094
        %v3239 = vmul.f32 %v3236, %v3095
        %v3240 = vld [vmem:[#allocation17] sm:$0xff]
        %v3241 = vld [vmem:[#allocation17 + $0x8] sm:$0xff]
        %v3242 = vld [vmem:[#allocation17 + $0x10] sm:$0xff]
        %v3243 = vld [vmem:[#allocation17 + $0x18] sm:$0xff]
        %v3244 = vld [vmem:[#allocation17 + $0x20] sm:$0xff]
        %v3245 = vld [vmem:[#allocation17 + $0x28] sm:$0xff]
        %v3246 = vld [vmem:[#allocation17 + $0x30] sm:$0xff]
        %v3247 = vld [vmem:[#allocation17 + $0x38] sm:$0xff]
        %v3248 = vld [vmem:[#allocation17 + $0x40] sm:$0xff]
        %v3249 = vld [vmem:[#allocation17 + $0x48] sm:$0xff]
        %v3250 = vld [vmem:[#allocation17 + $0x50] sm:$0xff]
        %v3251 = vld [vmem:[#allocation17 + $0x58] sm:$0xff]
        %v3252 = vld [vmem:[#allocation17 + $0x60] sm:$0xff]
        %v3253 = vld [vmem:[#allocation17 + $0x68] sm:$0xff]
        %v3254 = vld [vmem:[#allocation17 + $0x70] sm:$0xff]
        %v3255 = vld [vmem:[#allocation17 + $0x78] sm:$0xff]
        %v3256 = vld [vmem:[#allocation17 + $0x80] sm:$0xff]
        %v3257 = vld [vmem:[#allocation17 + $0x88] sm:$0xff]
        %v3258 = vld [vmem:[#allocation17 + $0x90] sm:$0xff]
        %v3259 = vld [vmem:[#allocation17 + $0x98] sm:$0xff]
        %v3260 = vld [vmem:[#allocation17 + $0xa0] sm:$0xff]
        %v3261 = vld [vmem:[#allocation17 + $0xa8] sm:$0xff]
        %v3262 = vld [vmem:[#allocation17 + $0xb0] sm:$0xff]
        %v3263 = vld [vmem:[#allocation17 + $0xb8] sm:$0xff]
        %v3264 = vld [vmem:[#allocation17 + $0xc0] sm:$0xff]
        %v3265 = vld [vmem:[#allocation17 + $0xc8] sm:$0xff]
        %v3266 = vld [vmem:[#allocation17 + $0xd0] sm:$0xff]
        %v3267 = vld [vmem:[#allocation17 + $0xd8] sm:$0xff]
        %v3268 = vld [vmem:[#allocation17 + $0xe0] sm:$0xff]
        %v3269 = vld [vmem:[#allocation17 + $0xe8] sm:$0xff]
        %v3270 = vld [vmem:[#allocation17 + $0xf0] sm:$0xff]
        %v3271 = vld [vmem:[#allocation17 + $0xf8] sm:$0xff]
        %v3272 = vld [vmem:[#allocation17 + $0x100] sm:$0xff]
        %v3273 = vld [vmem:[#allocation17 + $0x108] sm:$0xff]
        %v3274 = vld [vmem:[#allocation17 + $0x110] sm:$0xff]
        %v3275 = vld [vmem:[#allocation17 + $0x118] sm:$0xff]
        %v3277 = vsel %vm2425, %v3239, 0
        %3279 = vmatpush.msra.mxu0 %v3255
        %3280 = vmatpush.msra.mxu0 %v3254
        %3281 = vmatpush.msra.mxu0 %v3253
        %3282 = vmatpush.msra.mxu0 %v3252
        %3283 = vmatpush.msra.mxu0 %v3251
        %3284 = vmatpush.msra.mxu0 %v3250
        %3285 = vmatpush.msra.mxu0 %v3249
        %3286 = vmatpush.msra.mxu0 %v3248
        %3287 = vmatpush.msra.mxu0 %v3247
        %3288 = vmatpush.msra.mxu0 %v3246
        %3289 = vmatpush.msra.mxu0 %v3245
        %3290 = vmatpush.msra.mxu0 %v3244
        %3291 = vmatpush.msra.mxu0 %v3243
        %3292 = vmatpush.msra.mxu0 %v3242
        %3293 = vmatpush.msra.mxu0 %v3241
        %3294 = vmatpush.msra.mxu0 %v3240
        %3295 = vmatmul.f32.gmra.mxu0 %v3237
        %v3296 = vpop.f32.mrf.mxu0
        %v3297 = vadd.f32 0.0, %v3296
        %3298 = vdwg.mxu0
        %3299 = vmatpush.msra.mxu0 %v3271
        %3300 = vmatpush.msra.mxu0 %v3270
        %3301 = vmatpush.msra.mxu0 %v3269
        %3302 = vmatpush.msra.mxu0 %v3268
        %3303 = vmatpush.msra.mxu0 %v3267
        %3304 = vmatpush.msra.mxu0 %v3266
        %3305 = vmatpush.msra.mxu0 %v3265
        %3306 = vmatpush.msra.mxu0 %v3264
        %3307 = vmatpush.msra.mxu0 %v3263
        %3308 = vmatpush.msra.mxu0 %v3262
        %3309 = vmatpush.msra.mxu0 %v3261
        %3310 = vmatpush.msra.mxu0 %v3260
        %3311 = vmatpush.msra.mxu0 %v3259
        %3312 = vmatpush.msra.mxu0 %v3258
        %3313 = vmatpush.msra.mxu0 %v3257
        %3314 = vmatpush.msra.mxu0 %v3256
        %3315 = vmatmul.f32.gmra.mxu0 %v3238
        %v3316 = vpop.f32.mrf.mxu0
        %v3317 = vadd.f32 %v3297, %v3316
        %3318 = vdwg.mxu0
        %3319 = vmatpush.msra.mxu0 0.0
        %3320 = vmatpush.msra.mxu0 0.0
        %3321 = vmatpush.msra.mxu0 0.0
        %3322 = vmatpush.msra.mxu0 0.0
        %3323 = vmatpush.msra.mxu0 0.0
        %3324 = vmatpush.msra.mxu0 0.0
        %3325 = vmatpush.msra.mxu0 0.0
        %3326 = vmatpush.msra.mxu0 0.0
        %3327 = vmatpush.msra.mxu0 0.0
        %3328 = vmatpush.msra.mxu0 0.0
        %3329 = vmatpush.msra.mxu0 0.0
        %3330 = vmatpush.msra.mxu0 0.0
        %3331 = vmatpush.msra.mxu0 %v3275
        %3332 = vmatpush.msra.mxu0 %v3274
        %3333 = vmatpush.msra.mxu0 %v3273
        %3334 = vmatpush.msra.mxu0 %v3272
        %3335 = vmatmul.f32.gmra.mxu0 %v3277
        %v3336 = vpop.f32.mrf.mxu0
        %v3337 = vadd.f32 %v3317, %v3336
        %3338 = vdwg.mxu0
        %3339 = vst.msk [vmem:[#allocation5 + $0x8] sm:$0xff] %vm1839, %v3337
        %v3340 = vld [vmem:[#allocation2 + $0x30] sm:$0xff]
        %v3341 = vld [vmem:[#allocation2 + $0x38] sm:$0xff]
        %v3342 = vld [vmem:[#allocation2 + $0x40] sm:$0xff]
        %v3343 = vld [vmem:[#allocation3 + $0x30] sm:$0xff]
        %v3344 = vld [vmem:[#allocation3 + $0x38] sm:$0xff]
        %v3345 = vld [vmem:[#allocation3 + $0x40] sm:$0xff]
        %v3346 = vld [vmem:[#allocation4 + $0x30] sm:$0xff]
        %v3347 = vld [vmem:[#allocation4 + $0x38] sm:$0xff]
        %v3348 = vld [vmem:[#allocation4 + $0x40] sm:$0xff]
        %v3352 = vrot.slane %v3213, 7
        %v3353 = vrot.slane %v3214, 7
        %v3354 = vrot.slane %v3215, 7
        %v3358 = vmul.f32 %v3340, %v3352
        %v3359 = vmul.f32 %v3341, %v3353
        %v3360 = vmul.f32 %v3342, %v3354
        %v3361 = vadd.f32 %v3358, %v3343
        %v3362 = vadd.f32 %v3359, %v3344
        %v3363 = vadd.f32 %v3360, %v3345
        %v3367 = vrot.slane %v3361, 7
        %v3368 = vrot.slane %v3362, 7
        %v3369 = vrot.slane %v3363, 7
        %v3373 = vmul.f32 %v3340, %v3367
        %v3374 = vmul.f32 %v3341, %v3368
        %v3375 = vmul.f32 %v3342, %v3369
        %v3376 = vadd.f32 %v3373, %v3343
        %v3377 = vadd.f32 %v3374, %v3344
        %v3378 = vadd.f32 %v3375, %v3345
        %v3382 = vrot.slane %v3376, 7
        %v3383 = vrot.slane %v3377, 7
        %v3384 = vrot.slane %v3378, 7
        %v3388 = vmul.f32 %v3340, %v3382
        %v3389 = vmul.f32 %v3341, %v3383
        %v3390 = vmul.f32 %v3342, %v3384
        %v3391 = vadd.f32 %v3388, %v3343
        %v3392 = vadd.f32 %v3389, %v3344
        %v3393 = vadd.f32 %v3390, %v3345
        %v3397 = vrot.slane %v3391, 7
        %v3398 = vrot.slane %v3392, 7
        %v3399 = vrot.slane %v3393, 7
        %v3403 = vmul.f32 %v3340, %v3397
        %v3404 = vmul.f32 %v3341, %v3398
        %v3405 = vmul.f32 %v3342, %v3399
        %v3406 = vadd.f32 %v3403, %v3343
        %v3407 = vadd.f32 %v3404, %v3344
        %v3408 = vadd.f32 %v3405, %v3345
        %v3412 = vrot.slane %v3406, 7
        %v3413 = vrot.slane %v3407, 7
        %v3414 = vrot.slane %v3408, 7
        %v3418 = vmul.f32 %v3340, %v3412
        %v3419 = vmul.f32 %v3341, %v3413
        %v3420 = vmul.f32 %v3342, %v3414
        %v3421 = vadd.f32 %v3418, %v3343
        %v3422 = vadd.f32 %v3419, %v3344
        %v3423 = vadd.f32 %v3420, %v3345
        %v3427 = vrot.slane %v3421, 7
        %v3428 = vrot.slane %v3422, 7
        %v3429 = vrot.slane %v3423, 7
        %v3433 = vmul.f32 %v3340, %v3427
        %v3434 = vmul.f32 %v3341, %v3428
        %v3435 = vmul.f32 %v3342, %v3429
        %v3436 = vadd.f32 %v3433, %v3343
        %v3437 = vadd.f32 %v3434, %v3344
        %v3438 = vadd.f32 %v3435, %v3345
        %v3442 = vrot.slane %v3436, 7
        %v3443 = vrot.slane %v3437, 7
        %v3444 = vrot.slane %v3438, 7
        %v3448 = vmul.f32 %v3340, %v3442
        %v3449 = vmul.f32 %v3341, %v3443
        %v3450 = vmul.f32 %v3342, %v3444
        %v3451 = vadd.f32 %v3448, %v3343
        %v3452 = vadd.f32 %v3449, %v3344
        %v3453 = vadd.f32 %v3450, %v3345
        %v3457 = vrot.slane %v3451, 7
        %v3458 = vrot.slane %v3452, 7
        %v3459 = vrot.slane %v3453, 7
        %v3463 = vmul.f32 %v3340, %v3457
        %v3464 = vmul.f32 %v3341, %v3458
        %v3465 = vmul.f32 %v3342, %v3459
        %v3466 = vadd.f32 %v3463, %v3343
        %v3467 = vadd.f32 %v3464, %v3344
        %v3468 = vadd.f32 %v3465, %v3345
        %v3469 = vsel %vm2959, %v3361, %v3376
        %v3470 = vsel %vm2959, %v3362, %v3377
        %v3471 = vsel %vm2959, %v3363, %v3378
        %v3472 = vsel %vm1359, %v3469, %v3391
        %v3473 = vsel %vm1359, %v3470, %v3392
        %v3474 = vsel %vm1359, %v3471, %v3393
        %v3475 = vsel %vm1156, %v3472, %v3406
        %v3476 = vsel %vm1156, %v3473, %v3407
        %v3477 = vsel %vm1156, %v3474, %v3408
        %v3478 = vsel %vm1277, %v3475, %v3421
        %v3479 = vsel %vm1277, %v3476, %v3422
        %v3480 = vsel %vm1277, %v3477, %v3423
        %v3481 = vsel %vm2972, %v3478, %v3436
        %v3482 = vsel %vm2972, %v3479, %v3437
        %v3483 = vsel %vm2972, %v3480, %v3438
        %v3484 = vsel %vm2976, %v3481, %v3451
        %v3485 = vsel %vm2976, %v3482, %v3452
        %v3486 = vsel %vm2976, %v3483, %v3453
        %v3487 = vsel %vm2980, %v3484, %v3466
        %v3488 = vsel %vm2980, %v3485, %v3467
        %v3489 = vsel %vm2980, %v3486, %v3468
        %v3490 = vmul.f32 %v3487, %v3346
        %v3491 = vmul.f32 %v3488, %v3347
        %v3492 = vmul.f32 %v3489, %v3348
        %v3493 = vld [vmem:[#allocation17] sm:$0xff]
        %v3494 = vld [vmem:[#allocation17 + $0x8] sm:$0xff]
        %v3495 = vld [vmem:[#allocation17 + $0x10] sm:$0xff]
        %v3496 = vld [vmem:[#allocation17 + $0x18] sm:$0xff]
        %v3497 = vld [vmem:[#allocation17 + $0x20] sm:$0xff]
        %v3498 = vld [vmem:[#allocation17 + $0x28] sm:$0xff]
        %v3499 = vld [vmem:[#allocation17 + $0x30] sm:$0xff]
        %v3500 = vld [vmem:[#allocation17 + $0x38] sm:$0xff]
        %v3501 = vld [vmem:[#allocation17 + $0x40] sm:$0xff]
        %v3502 = vld [vmem:[#allocation17 + $0x48] sm:$0xff]
        %v3503 = vld [vmem:[#allocation17 + $0x50] sm:$0xff]
        %v3504 = vld [vmem:[#allocation17 + $0x58] sm:$0xff]
        %v3505 = vld [vmem:[#allocation17 + $0x60] sm:$0xff]
        %v3506 = vld [vmem:[#allocation17 + $0x68] sm:$0xff]
        %v3507 = vld [vmem:[#allocation17 + $0x70] sm:$0xff]
        %v3508 = vld [vmem:[#allocation17 + $0x78] sm:$0xff]
        %v3509 = vld [vmem:[#allocation17 + $0x80] sm:$0xff]
        %v3510 = vld [vmem:[#allocation17 + $0x88] sm:$0xff]
        %v3511 = vld [vmem:[#allocation17 + $0x90] sm:$0xff]
        %v3512 = vld [vmem:[#allocation17 + $0x98] sm:$0xff]
        %v3513 = vld [vmem:[#allocation17 + $0xa0] sm:$0xff]
        %v3514 = vld [vmem:[#allocation17 + $0xa8] sm:$0xff]
        %v3515 = vld [vmem:[#allocation17 + $0xb0] sm:$0xff]
        %v3516 = vld [vmem:[#allocation17 + $0xb8] sm:$0xff]
        %v3517 = vld [vmem:[#allocation17 + $0xc0] sm:$0xff]
        %v3518 = vld [vmem:[#allocation17 + $0xc8] sm:$0xff]
        %v3519 = vld [vmem:[#allocation17 + $0xd0] sm:$0xff]
        %v3520 = vld [vmem:[#allocation17 + $0xd8] sm:$0xff]
        %v3521 = vld [vmem:[#allocation17 + $0xe0] sm:$0xff]
        %v3522 = vld [vmem:[#allocation17 + $0xe8] sm:$0xff]
        %v3523 = vld [vmem:[#allocation17 + $0xf0] sm:$0xff]
        %v3524 = vld [vmem:[#allocation17 + $0xf8] sm:$0xff]
        %v3525 = vld [vmem:[#allocation17 + $0x100] sm:$0xff]
        %v3526 = vld [vmem:[#allocation17 + $0x108] sm:$0xff]
        %v3527 = vld [vmem:[#allocation17 + $0x110] sm:$0xff]
        %v3528 = vld [vmem:[#allocation17 + $0x118] sm:$0xff]
        %v3530 = vsel %vm2425, %v3492, 0
        %3532 = vmatpush.msra.mxu0 %v3508
        %3533 = vmatpush.msra.mxu0 %v3507
        %3534 = vmatpush.msra.mxu0 %v3506
        %3535 = vmatpush.msra.mxu0 %v3505
        %3536 = vmatpush.msra.mxu0 %v3504
        %3537 = vmatpush.msra.mxu0 %v3503
        %3538 = vmatpush.msra.mxu0 %v3502
        %3539 = vmatpush.msra.mxu0 %v3501
        %3540 = vmatpush.msra.mxu0 %v3500
        %3541 = vmatpush.msra.mxu0 %v3499
        %3542 = vmatpush.msra.mxu0 %v3498
        %3543 = vmatpush.msra.mxu0 %v3497
        %3544 = vmatpush.msra.mxu0 %v3496
        %3545 = vmatpush.msra.mxu0 %v3495
        %3546 = vmatpush.msra.mxu0 %v3494
        %3547 = vmatpush.msra.mxu0 %v3493
        %3548 = vmatmul.f32.gmra.mxu0 %v3490
        %v3549 = vpop.f32.mrf.mxu0
        %v3550 = vadd.f32 0.0, %v3549
        %3551 = vdwg.mxu0
        %3552 = vmatpush.msra.mxu0 %v3524
        %3553 = vmatpush.msra.mxu0 %v3523
        %3554 = vmatpush.msra.mxu0 %v3522
        %3555 = vmatpush.msra.mxu0 %v3521
        %3556 = vmatpush.msra.mxu0 %v3520
        %3557 = vmatpush.msra.mxu0 %v3519
        %3558 = vmatpush.msra.mxu0 %v3518
        %3559 = vmatpush.msra.mxu0 %v3517
        %3560 = vmatpush.msra.mxu0 %v3516
        %3561 = vmatpush.msra.mxu0 %v3515
        %3562 = vmatpush.msra.mxu0 %v3514
        %3563 = vmatpush.msra.mxu0 %v3513
        %3564 = vmatpush.msra.mxu0 %v3512
        %3565 = vmatpush.msra.mxu0 %v3511
        %3566 = vmatpush.msra.mxu0 %v3510
        %3567 = vmatpush.msra.mxu0 %v3509
        %3568 = vmatmul.f32.gmra.mxu0 %v3491
        %v3569 = vpop.f32.mrf.mxu0
        %v3570 = vadd.f32 %v3550, %v3569
        %3571 = vdwg.mxu0
        %3572 = vmatpush.msra.mxu0 0.0
        %3573 = vmatpush.msra.mxu0 0.0
        %3574 = vmatpush.msra.mxu0 0.0
        %3575 = vmatpush.msra.mxu0 0.0
        %3576 = vmatpush.msra.mxu0 0.0
        %3577 = vmatpush.msra.mxu0 0.0
        %3578 = vmatpush.msra.mxu0 0.0
        %3579 = vmatpush.msra.mxu0 0.0
        %3580 = vmatpush.msra.mxu0 0.0
        %3581 = vmatpush.msra.mxu0 0.0
        %3582 = vmatpush.msra.mxu0 0.0
        %3583 = vmatpush.msra.mxu0 0.0
        %3584 = vmatpush.msra.mxu0 %v3528
        %3585 = vmatpush.msra.mxu0 %v3527
        %3586 = vmatpush.msra.mxu0 %v3526
        %3587 = vmatpush.msra.mxu0 %v3525
        %3588 = vmatmul.f32.gmra.mxu0 %v3530
        %v3589 = vpop.f32.mrf.mxu0
        %v3590 = vadd.f32 %v3570, %v3589
        %3591 = vdwg.mxu0
        %3592 = vst.msk [vmem:[#allocation5 + $0x10] sm:$0xff] %vm1839, %v3590
        %v3593 = vld [vmem:[#allocation2 + $0x48] sm:$0xff]
        %v3594 = vld [vmem:[#allocation2 + $0x50] sm:$0xff]
        %v3595 = vld [vmem:[#allocation2 + $0x58] sm:$0xff]
        %v3596 = vld [vmem:[#allocation3 + $0x48] sm:$0xff]
        %v3597 = vld [vmem:[#allocation3 + $0x50] sm:$0xff]
        %v3598 = vld [vmem:[#allocation3 + $0x58] sm:$0xff]
        %v3599 = vld [vmem:[#allocation4 + $0x48] sm:$0xff]
        %v3600 = vld [vmem:[#allocation4 + $0x50] sm:$0xff]
        %v3601 = vld [vmem:[#allocation4 + $0x58] sm:$0xff]
        %v3605 = vrot.slane %v3466, 7
        %v3606 = vrot.slane %v3467, 7
        %v3607 = vrot.slane %v3468, 7
        %v3611 = vmul.f32 %v3593, %v3605
        %v3612 = vmul.f32 %v3594, %v3606
        %v3613 = vmul.f32 %v3595, %v3607
        %v3614 = vadd.f32 %v3611, %v3596
        %v3615 = vadd.f32 %v3612, %v3597
        %v3616 = vadd.f32 %v3613, %v3598
        %v3620 = vrot.slane %v3614, 7
        %v3621 = vrot.slane %v3615, 7
        %v3622 = vrot.slane %v3616, 7
        %v3626 = vmul.f32 %v3593, %v3620
        %v3627 = vmul.f32 %v3594, %v3621
        %v3628 = vmul.f32 %v3595, %v3622
        %v3629 = vadd.f32 %v3626, %v3596
        %v3630 = vadd.f32 %v3627, %v3597
        %v3631 = vadd.f32 %v3628, %v3598
        %v3635 = vrot.slane %v3629, 7
        %v3636 = vrot.slane %v3630, 7
        %v3637 = vrot.slane %v3631, 7
        %v3641 = vmul.f32 %v3593, %v3635
        %v3642 = vmul.f32 %v3594, %v3636
        %v3643 = vmul.f32 %v3595, %v3637
        %v3644 = vadd.f32 %v3641, %v3596
        %v3645 = vadd.f32 %v3642, %v3597
        %v3646 = vadd.f32 %v3643, %v3598
        %v3650 = vrot.slane %v3644, 7
        %v3651 = vrot.slane %v3645, 7
        %v3652 = vrot.slane %v3646, 7
        %v3656 = vmul.f32 %v3593, %v3650
        %v3657 = vmul.f32 %v3594, %v3651
        %v3658 = vmul.f32 %v3595, %v3652
        %v3659 = vadd.f32 %v3656, %v3596
        %v3660 = vadd.f32 %v3657, %v3597
        %v3661 = vadd.f32 %v3658, %v3598
        %v3665 = vrot.slane %v3659, 7
        %v3666 = vrot.slane %v3660, 7
        %v3667 = vrot.slane %v3661, 7
        %v3671 = vmul.f32 %v3593, %v3665
        %v3672 = vmul.f32 %v3594, %v3666
        %v3673 = vmul.f32 %v3595, %v3667
        %v3674 = vadd.f32 %v3671, %v3596
        %v3675 = vadd.f32 %v3672, %v3597
        %v3676 = vadd.f32 %v3673, %v3598
        %v3680 = vrot.slane %v3674, 7
        %v3681 = vrot.slane %v3675, 7
        %v3682 = vrot.slane %v3676, 7
        %v3686 = vmul.f32 %v3593, %v3680
        %v3687 = vmul.f32 %v3594, %v3681
        %v3688 = vmul.f32 %v3595, %v3682
        %v3689 = vadd.f32 %v3686, %v3596
        %v3690 = vadd.f32 %v3687, %v3597
        %v3691 = vadd.f32 %v3688, %v3598
        %v3695 = vrot.slane %v3689, 7
        %v3696 = vrot.slane %v3690, 7
        %v3697 = vrot.slane %v3691, 7
        %v3701 = vmul.f32 %v3593, %v3695
        %v3702 = vmul.f32 %v3594, %v3696
        %v3703 = vmul.f32 %v3595, %v3697
        %v3704 = vadd.f32 %v3701, %v3596
        %v3705 = vadd.f32 %v3702, %v3597
        %v3706 = vadd.f32 %v3703, %v3598
        %v3710 = vrot.slane %v3704, 7
        %v3711 = vrot.slane %v3705, 7
        %v3712 = vrot.slane %v3706, 7
        %v3716 = vmul.f32 %v3593, %v3710
        %v3717 = vmul.f32 %v3594, %v3711
        %v3718 = vmul.f32 %v3595, %v3712
        %v3719 = vadd.f32 %v3716, %v3596
        %v3720 = vadd.f32 %v3717, %v3597
        %v3721 = vadd.f32 %v3718, %v3598
        %v3722 = vsel %vm2959, %v3614, %v3629
        %v3723 = vsel %vm2959, %v3615, %v3630
        %v3724 = vsel %vm2959, %v3616, %v3631
        %v3725 = vsel %vm1359, %v3722, %v3644
        %v3726 = vsel %vm1359, %v3723, %v3645
        %v3727 = vsel %vm1359, %v3724, %v3646
        %v3728 = vsel %vm1156, %v3725, %v3659
        %v3729 = vsel %vm1156, %v3726, %v3660
        %v3730 = vsel %vm1156, %v3727, %v3661
        %v3731 = vsel %vm1277, %v3728, %v3674
        %v3732 = vsel %vm1277, %v3729, %v3675
        %v3733 = vsel %vm1277, %v3730, %v3676
        %v3734 = vsel %vm2972, %v3731, %v3689
        %v3735 = vsel %vm2972, %v3732, %v3690
        %v3736 = vsel %vm2972, %v3733, %v3691
        %v3737 = vsel %vm2976, %v3734, %v3704
        %v3738 = vsel %vm2976, %v3735, %v3705
        %v3739 = vsel %vm2976, %v3736, %v3706
        %v3740 = vsel %vm2980, %v3737, %v3719
        %v3741 = vsel %vm2980, %v3738, %v3720
        %v3742 = vsel %vm2980, %v3739, %v3721
        %v3743 = vmul.f32 %v3740, %v3599
        %v3744 = vmul.f32 %v3741, %v3600
        %v3745 = vmul.f32 %v3742, %v3601
        %v3746 = vld [vmem:[#allocation17] sm:$0xff]
        %v3747 = vld [vmem:[#allocation17 + $0x8] sm:$0xff]
        %v3748 = vld [vmem:[#allocation17 + $0x10] sm:$0xff]
        %v3749 = vld [vmem:[#allocation17 + $0x18] sm:$0xff]
        %v3750 = vld [vmem:[#allocation17 + $0x20] sm:$0xff]
        %v3751 = vld [vmem:[#allocation17 + $0x28] sm:$0xff]
        %v3752 = vld [vmem:[#allocation17 + $0x30] sm:$0xff]
        %v3753 = vld [vmem:[#allocation17 + $0x38] sm:$0xff]
        %v3754 = vld [vmem:[#allocation17 + $0x40] sm:$0xff]
        %v3755 = vld [vmem:[#allocation17 + $0x48] sm:$0xff]
        %v3756 = vld [vmem:[#allocation17 + $0x50] sm:$0xff]
        %v3757 = vld [vmem:[#allocation17 + $0x58] sm:$0xff]
        %v3758 = vld [vmem:[#allocation17 + $0x60] sm:$0xff]
        %v3759 = vld [vmem:[#allocation17 + $0x68] sm:$0xff]
        %v3760 = vld [vmem:[#allocation17 + $0x70] sm:$0xff]
        %v3761 = vld [vmem:[#allocation17 + $0x78] sm:$0xff]
        %v3762 = vld [vmem:[#allocation17 + $0x80] sm:$0xff]
        %v3763 = vld [vmem:[#allocation17 + $0x88] sm:$0xff]
        %v3764 = vld [vmem:[#allocation17 + $0x90] sm:$0xff]
        %v3765 = vld [vmem:[#allocation17 + $0x98] sm:$0xff]
        %v3766 = vld [vmem:[#allocation17 + $0xa0] sm:$0xff]
        %v3767 = vld [vmem:[#allocation17 + $0xa8] sm:$0xff]
        %v3768 = vld [vmem:[#allocation17 + $0xb0] sm:$0xff]
        %v3769 = vld [vmem:[#allocation17 + $0xb8] sm:$0xff]
        %v3770 = vld [vmem:[#allocation17 + $0xc0] sm:$0xff]
        %v3771 = vld [vmem:[#allocation17 + $0xc8] sm:$0xff]
        %v3772 = vld [vmem:[#allocation17 + $0xd0] sm:$0xff]
        %v3773 = vld [vmem:[#allocation17 + $0xd8] sm:$0xff]
        %v3774 = vld [vmem:[#allocation17 + $0xe0] sm:$0xff]
        %v3775 = vld [vmem:[#allocation17 + $0xe8] sm:$0xff]
        %v3776 = vld [vmem:[#allocation17 + $0xf0] sm:$0xff]
        %v3777 = vld [vmem:[#allocation17 + $0xf8] sm:$0xff]
        %v3778 = vld [vmem:[#allocation17 + $0x100] sm:$0xff]
        %v3779 = vld [vmem:[#allocation17 + $0x108] sm:$0xff]
        %v3780 = vld [vmem:[#allocation17 + $0x110] sm:$0xff]
        %v3781 = vld [vmem:[#allocation17 + $0x118] sm:$0xff]
        %v3783 = vsel %vm2425, %v3745, 0
        %3785 = vmatpush.msra.mxu0 %v3761
        %3786 = vmatpush.msra.mxu0 %v3760
        %3787 = vmatpush.msra.mxu0 %v3759
        %3788 = vmatpush.msra.mxu0 %v3758
        %3789 = vmatpush.msra.mxu0 %v3757
        %3790 = vmatpush.msra.mxu0 %v3756
        %3791 = vmatpush.msra.mxu0 %v3755
        %3792 = vmatpush.msra.mxu0 %v3754
        %3793 = vmatpush.msra.mxu0 %v3753
        %3794 = vmatpush.msra.mxu0 %v3752
        %3795 = vmatpush.msra.mxu0 %v3751
        %3796 = vmatpush.msra.mxu0 %v3750
        %3797 = vmatpush.msra.mxu0 %v3749
        %3798 = vmatpush.msra.mxu0 %v3748
        %3799 = vmatpush.msra.mxu0 %v3747
        %3800 = vmatpush.msra.mxu0 %v3746
        %3801 = vmatmul.f32.gmra.mxu0 %v3743
        %v3802 = vpop.f32.mrf.mxu0
        %v3803 = vadd.f32 0.0, %v3802
        %3804 = vdwg.mxu0
        %3805 = vmatpush.msra.mxu0 %v3777
        %3806 = vmatpush.msra.mxu0 %v3776
        %3807 = vmatpush.msra.mxu0 %v3775
        %3808 = vmatpush.msra.mxu0 %v3774
        %3809 = vmatpush.msra.mxu0 %v3773
        %3810 = vmatpush.msra.mxu0 %v3772
        %3811 = vmatpush.msra.mxu0 %v3771
        %3812 = vmatpush.msra.mxu0 %v3770
        %3813 = vmatpush.msra.mxu0 %v3769
        %3814 = vmatpush.msra.mxu0 %v3768
        %3815 = vmatpush.msra.mxu0 %v3767
        %3816 = vmatpush.msra.mxu0 %v3766
        %3817 = vmatpush.msra.mxu0 %v3765
        %3818 = vmatpush.msra.mxu0 %v3764
        %3819 = vmatpush.msra.mxu0 %v3763
        %3820 = vmatpush.msra.mxu0 %v3762
        %3821 = vmatmul.f32.gmra.mxu0 %v3744
        %v3822 = vpop.f32.mrf.mxu0
        %v3823 = vadd.f32 %v3803, %v3822
        %3824 = vdwg.mxu0
        %3825 = vmatpush.msra.mxu0 0.0
        %3826 = vmatpush.msra.mxu0 0.0
        %3827 = vmatpush.msra.mxu0 0.0
        %3828 = vmatpush.msra.mxu0 0.0
        %3829 = vmatpush.msra.mxu0 0.0
        %3830 = vmatpush.msra.mxu0 0.0
        %3831 = vmatpush.msra.mxu0 0.0
        %3832 = vmatpush.msra.mxu0 0.0
        %3833 = vmatpush.msra.mxu0 0.0
        %3834 = vmatpush.msra.mxu0 0.0
        %3835 = vmatpush.msra.mxu0 0.0
        %3836 = vmatpush.msra.mxu0 0.0
        %3837 = vmatpush.msra.mxu0 %v3781
        %3838 = vmatpush.msra.mxu0 %v3780
        %3839 = vmatpush.msra.mxu0 %v3779
        %3840 = vmatpush.msra.mxu0 %v3778
        %3841 = vmatmul.f32.gmra.mxu0 %v3783
        %v3842 = vpop.f32.mrf.mxu0
        %v3843 = vadd.f32 %v3823, %v3842
        %3844 = vdwg.mxu0
        %3845 = vst.msk [vmem:[#allocation5 + $0x18] sm:$0xff] %vm1839, %v3843
        %v3846 = vld [vmem:[#allocation2 + $0x60] sm:$0xff]
        %v3847 = vld [vmem:[#allocation2 + $0x68] sm:$0xff]
        %v3848 = vld [vmem:[#allocation2 + $0x70] sm:$0xff]
        %v3849 = vld [vmem:[#allocation3 + $0x60] sm:$0xff]
        %v3850 = vld [vmem:[#allocation3 + $0x68] sm:$0xff]
        %v3851 = vld [vmem:[#allocation3 + $0x70] sm:$0xff]
        %v3852 = vld [vmem:[#allocation4 + $0x60] sm:$0xff]
        %v3853 = vld [vmem:[#allocation4 + $0x68] sm:$0xff]
        %v3854 = vld [vmem:[#allocation4 + $0x70] sm:$0xff]
        %v3858 = vrot.slane %v3719, 7
        %v3859 = vrot.slane %v3720, 7
        %v3860 = vrot.slane %v3721, 7
        %v3864 = vmul.f32 %v3846, %v3858
        %v3865 = vmul.f32 %v3847, %v3859
        %v3866 = vmul.f32 %v3848, %v3860
        %v3867 = vadd.f32 %v3864, %v3849
        %v3868 = vadd.f32 %v3865, %v3850
        %v3869 = vadd.f32 %v3866, %v3851
        %v3873 = vrot.slane %v3867, 7
        %v3874 = vrot.slane %v3868, 7
        %v3875 = vrot.slane %v3869, 7
        %v3879 = vmul.f32 %v3846, %v3873
        %v3880 = vmul.f32 %v3847, %v3874
        %v3881 = vmul.f32 %v3848, %v3875
        %v3882 = vadd.f32 %v3879, %v3849
        %v3883 = vadd.f32 %v3880, %v3850
        %v3884 = vadd.f32 %v3881, %v3851
        %v3888 = vrot.slane %v3882, 7
        %v3889 = vrot.slane %v3883, 7
        %v3890 = vrot.slane %v3884, 7
        %v3894 = vmul.f32 %v3846, %v3888
        %v3895 = vmul.f32 %v3847, %v3889
        %v3896 = vmul.f32 %v3848, %v3890
        %v3897 = vadd.f32 %v3894, %v3849
        %v3898 = vadd.f32 %v3895, %v3850
        %v3899 = vadd.f32 %v3896, %v3851
        %v3903 = vrot.slane %v3897, 7
        %v3904 = vrot.slane %v3898, 7
        %v3905 = vrot.slane %v3899, 7
        %v3909 = vmul.f32 %v3846, %v3903
        %v3910 = vmul.f32 %v3847, %v3904
        %v3911 = vmul.f32 %v3848, %v3905
        %v3912 = vadd.f32 %v3909, %v3849
        %v3913 = vadd.f32 %v3910, %v3850
        %v3914 = vadd.f32 %v3911, %v3851
        %v3918 = vrot.slane %v3912, 7
        %v3919 = vrot.slane %v3913, 7
        %v3920 = vrot.slane %v3914, 7
        %v3924 = vmul.f32 %v3846, %v3918
        %v3925 = vmul.f32 %v3847, %v3919
        %v3926 = vmul.f32 %v3848, %v3920
        %v3927 = vadd.f32 %v3924, %v3849
        %v3928 = vadd.f32 %v3925, %v3850
        %v3929 = vadd.f32 %v3926, %v3851
        %v3933 = vrot.slane %v3927, 7
        %v3934 = vrot.slane %v3928, 7
        %v3935 = vrot.slane %v3929, 7
        %v3939 = vmul.f32 %v3846, %v3933
        %v3940 = vmul.f32 %v3847, %v3934
        %v3941 = vmul.f32 %v3848, %v3935
        %v3942 = vadd.f32 %v3939, %v3849
        %v3943 = vadd.f32 %v3940, %v3850
        %v3944 = vadd.f32 %v3941, %v3851
        %v3948 = vrot.slane %v3942, 7
        %v3949 = vrot.slane %v3943, 7
        %v3950 = vrot.slane %v3944, 7
        %v3954 = vmul.f32 %v3846, %v3948
        %v3955 = vmul.f32 %v3847, %v3949
        %v3956 = vmul.f32 %v3848, %v3950
        %v3957 = vadd.f32 %v3954, %v3849
        %v3958 = vadd.f32 %v3955, %v3850
        %v3959 = vadd.f32 %v3956, %v3851
        %v3963 = vrot.slane %v3957, 7
        %v3964 = vrot.slane %v3958, 7
        %v3965 = vrot.slane %v3959, 7
        %v3969 = vmul.f32 %v3846, %v3963
        %v3970 = vmul.f32 %v3847, %v3964
        %v3971 = vmul.f32 %v3848, %v3965
        %v3972 = vadd.f32 %v3969, %v3849
        %v3973 = vadd.f32 %v3970, %v3850
        %v3974 = vadd.f32 %v3971, %v3851
        %v3975 = vsel %vm2959, %v3867, %v3882
        %v3976 = vsel %vm2959, %v3868, %v3883
        %v3977 = vsel %vm2959, %v3869, %v3884
        %v3978 = vsel %vm1359, %v3975, %v3897
        %v3979 = vsel %vm1359, %v3976, %v3898
        %v3980 = vsel %vm1359, %v3977, %v3899
        %v3981 = vsel %vm1156, %v3978, %v3912
        %v3982 = vsel %vm1156, %v3979, %v3913
        %v3983 = vsel %vm1156, %v3980, %v3914
        %v3984 = vsel %vm1277, %v3981, %v3927
        %v3985 = vsel %vm1277, %v3982, %v3928
        %v3986 = vsel %vm1277, %v3983, %v3929
        %v3987 = vsel %vm2972, %v3984, %v3942
        %v3988 = vsel %vm2972, %v3985, %v3943
        %v3989 = vsel %vm2972, %v3986, %v3944
        %v3990 = vsel %vm2976, %v3987, %v3957
        %v3991 = vsel %vm2976, %v3988, %v3958
        %v3992 = vsel %vm2976, %v3989, %v3959
        %v3993 = vsel %vm2980, %v3990, %v3972
        %v3994 = vsel %vm2980, %v3991, %v3973
        %v3995 = vsel %vm2980, %v3992, %v3974
        %v3996 = vmul.f32 %v3993, %v3852
        %v3997 = vmul.f32 %v3994, %v3853
        %v3998 = vmul.f32 %v3995, %v3854
        %v3999 = vld [vmem:[#allocation17] sm:$0xff]
        %v4000 = vld [vmem:[#allocation17 + $0x8] sm:$0xff]
        %v4001 = vld [vmem:[#allocation17 + $0x10] sm:$0xff]
        %v4002 = vld [vmem:[#allocation17 + $0x18] sm:$0xff]
        %v4003 = vld [vmem:[#allocation17 + $0x20] sm:$0xff]
        %v4004 = vld [vmem:[#allocation17 + $0x28] sm:$0xff]
        %v4005 = vld [vmem:[#allocation17 + $0x30] sm:$0xff]
        %v4006 = vld [vmem:[#allocation17 + $0x38] sm:$0xff]
        %v4007 = vld [vmem:[#allocation17 + $0x40] sm:$0xff]
        %v4008 = vld [vmem:[#allocation17 + $0x48] sm:$0xff]
        %v4009 = vld [vmem:[#allocation17 + $0x50] sm:$0xff]
        %v4010 = vld [vmem:[#allocation17 + $0x58] sm:$0xff]
        %v4011 = vld [vmem:[#allocation17 + $0x60] sm:$0xff]
        %v4012 = vld [vmem:[#allocation17 + $0x68] sm:$0xff]
        %v4013 = vld [vmem:[#allocation17 + $0x70] sm:$0xff]
        %v4014 = vld [vmem:[#allocation17 + $0x78] sm:$0xff]
        %v4015 = vld [vmem:[#allocation17 + $0x80] sm:$0xff]
        %v4016 = vld [vmem:[#allocation17 + $0x88] sm:$0xff]
        %v4017 = vld [vmem:[#allocation17 + $0x90] sm:$0xff]
        %v4018 = vld [vmem:[#allocation17 + $0x98] sm:$0xff]
        %v4019 = vld [vmem:[#allocation17 + $0xa0] sm:$0xff]
        %v4020 = vld [vmem:[#allocation17 + $0xa8] sm:$0xff]
        %v4021 = vld [vmem:[#allocation17 + $0xb0] sm:$0xff]
        %v4022 = vld [vmem:[#allocation17 + $0xb8] sm:$0xff]
        %v4023 = vld [vmem:[#allocation17 + $0xc0] sm:$0xff]
        %v4024 = vld [vmem:[#allocation17 + $0xc8] sm:$0xff]
        %v4025 = vld [vmem:[#allocation17 + $0xd0] sm:$0xff]
        %v4026 = vld [vmem:[#allocation17 + $0xd8] sm:$0xff]
        %v4027 = vld [vmem:[#allocation17 + $0xe0] sm:$0xff]
        %v4028 = vld [vmem:[#allocation17 + $0xe8] sm:$0xff]
        %v4029 = vld [vmem:[#allocation17 + $0xf0] sm:$0xff]
        %v4030 = vld [vmem:[#allocation17 + $0xf8] sm:$0xff]
        %v4031 = vld [vmem:[#allocation17 + $0x100] sm:$0xff]
        %v4032 = vld [vmem:[#allocation17 + $0x108] sm:$0xff]
        %v4033 = vld [vmem:[#allocation17 + $0x110] sm:$0xff]
        %v4034 = vld [vmem:[#allocation17 + $0x118] sm:$0xff]
        %v4036 = vsel %vm2425, %v3998, 0
        %4038 = vmatpush.msra.mxu0 %v4014
        %4039 = vmatpush.msra.mxu0 %v4013
        %4040 = vmatpush.msra.mxu0 %v4012
        %4041 = vmatpush.msra.mxu0 %v4011
        %4042 = vmatpush.msra.mxu0 %v4010
        %4043 = vmatpush.msra.mxu0 %v4009
        %4044 = vmatpush.msra.mxu0 %v4008
        %4045 = vmatpush.msra.mxu0 %v4007
        %4046 = vmatpush.msra.mxu0 %v4006
        %4047 = vmatpush.msra.mxu0 %v4005
        %4048 = vmatpush.msra.mxu0 %v4004
        %4049 = vmatpush.msra.mxu0 %v4003
        %4050 = vmatpush.msra.mxu0 %v4002
        %4051 = vmatpush.msra.mxu0 %v4001
        %4052 = vmatpush.msra.mxu0 %v4000
        %4053 = vmatpush.msra.mxu0 %v3999
        %4054 = vmatmul.f32.gmra.mxu0 %v3996
        %v4055 = vpop.f32.mrf.mxu0
        %v4056 = vadd.f32 0.0, %v4055
        %4057 = vdwg.mxu0
        %4058 = vmatpush.msra.mxu0 %v4030
        %4059 = vmatpush.msra.mxu0 %v4029
        %4060 = vmatpush.msra.mxu0 %v4028
        %4061 = vmatpush.msra.mxu0 %v4027
        %4062 = vmatpush.msra.mxu0 %v4026
        %4063 = vmatpush.msra.mxu0 %v4025
        %4064 = vmatpush.msra.mxu0 %v4024
        %4065 = vmatpush.msra.mxu0 %v4023
        %4066 = vmatpush.msra.mxu0 %v4022
        %4067 = vmatpush.msra.mxu0 %v4021
        %4068 = vmatpush.msra.mxu0 %v4020
        %4069 = vmatpush.msra.mxu0 %v4019
        %4070 = vmatpush.msra.mxu0 %v4018
        %4071 = vmatpush.msra.mxu0 %v4017
        %4072 = vmatpush.msra.mxu0 %v4016
        %4073 = vmatpush.msra.mxu0 %v4015
        %4074 = vmatmul.f32.gmra.mxu0 %v3997
        %v4075 = vpop.f32.mrf.mxu0
        %v4076 = vadd.f32 %v4056, %v4075
        %4077 = vdwg.mxu0
        %4078 = vmatpush.msra.mxu0 0.0
        %4079 = vmatpush.msra.mxu0 0.0
        %4080 = vmatpush.msra.mxu0 0.0
        %4081 = vmatpush.msra.mxu0 0.0
        %4082 = vmatpush.msra.mxu0 0.0
        %4083 = vmatpush.msra.mxu0 0.0
        %4084 = vmatpush.msra.mxu0 0.0
        %4085 = vmatpush.msra.mxu0 0.0
        %4086 = vmatpush.msra.mxu0 0.0
        %4087 = vmatpush.msra.mxu0 0.0
        %4088 = vmatpush.msra.mxu0 0.0
        %4089 = vmatpush.msra.mxu0 0.0
        %4090 = vmatpush.msra.mxu0 %v4034
        %4091 = vmatpush.msra.mxu0 %v4033
        %4092 = vmatpush.msra.mxu0 %v4032
        %4093 = vmatpush.msra.mxu0 %v4031
        %4094 = vmatmul.f32.gmra.mxu0 %v4036
        %v4095 = vpop.f32.mrf.mxu0
        %v4096 = vadd.f32 %v4076, %v4095
        %4097 = vdwg.mxu0
        %4098 = vst.msk [vmem:[#allocation5 + $0x20] sm:$0xff] %vm1839, %v4096
        %v4099 = vld [vmem:[#allocation2 + $0x78] sm:$0xff]
        %v4100 = vld [vmem:[#allocation2 + $0x80] sm:$0xff]
        %v4101 = vld [vmem:[#allocation2 + $0x88] sm:$0xff]
        %v4102 = vld [vmem:[#allocation3 + $0x78] sm:$0xff]
        %v4103 = vld [vmem:[#allocation3 + $0x80] sm:$0xff]
        %v4104 = vld [vmem:[#allocation3 + $0x88] sm:$0xff]
        %v4105 = vld [vmem:[#allocation4 + $0x78] sm:$0xff]
        %v4106 = vld [vmem:[#allocation4 + $0x80] sm:$0xff]
        %v4107 = vld [vmem:[#allocation4 + $0x88] sm:$0xff]
        %v4111 = vrot.slane %v3972, 7
        %v4112 = vrot.slane %v3973, 7
        %v4113 = vrot.slane %v3974, 7
        %v4117 = vmul.f32 %v4099, %v4111
        %v4118 = vmul.f32 %v4100, %v4112
        %v4119 = vmul.f32 %v4101, %v4113
        %v4120 = vadd.f32 %v4117, %v4102
        %v4121 = vadd.f32 %v4118, %v4103
        %v4122 = vadd.f32 %v4119, %v4104
        %v4126 = vrot.slane %v4120, 7
        %v4127 = vrot.slane %v4121, 7
        %v4128 = vrot.slane %v4122, 7
        %v4132 = vmul.f32 %v4099, %v4126
        %v4133 = vmul.f32 %v4100, %v4127
        %v4134 = vmul.f32 %v4101, %v4128
        %v4135 = vadd.f32 %v4132, %v4102
        %v4136 = vadd.f32 %v4133, %v4103
        %v4137 = vadd.f32 %v4134, %v4104
        %v4141 = vrot.slane %v4135, 7
        %v4142 = vrot.slane %v4136, 7
        %v4143 = vrot.slane %v4137, 7
        %v4147 = vmul.f32 %v4099, %v4141
        %v4148 = vmul.f32 %v4100, %v4142
        %v4149 = vmul.f32 %v4101, %v4143
        %v4150 = vadd.f32 %v4147, %v4102
        %v4151 = vadd.f32 %v4148, %v4103
        %v4152 = vadd.f32 %v4149, %v4104
        %v4156 = vrot.slane %v4150, 7
        %v4157 = vrot.slane %v4151, 7
        %v4158 = vrot.slane %v4152, 7
        %v4162 = vmul.f32 %v4099, %v4156
        %v4163 = vmul.f32 %v4100, %v4157
        %v4164 = vmul.f32 %v4101, %v4158
        %v4165 = vadd.f32 %v4162, %v4102
        %v4166 = vadd.f32 %v4163, %v4103
        %v4167 = vadd.f32 %v4164, %v4104
        %v4171 = vrot.slane %v4165, 7
        %v4172 = vrot.slane %v4166, 7
        %v4173 = vrot.slane %v4167, 7
        %v4177 = vmul.f32 %v4099, %v4171
        %v4178 = vmul.f32 %v4100, %v4172
        %v4179 = vmul.f32 %v4101, %v4173
        %v4180 = vadd.f32 %v4177, %v4102
        %v4181 = vadd.f32 %v4178, %v4103
        %v4182 = vadd.f32 %v4179, %v4104
        %v4186 = vrot.slane %v4180, 7
        %v4187 = vrot.slane %v4181, 7
        %v4188 = vrot.slane %v4182, 7
        %v4192 = vmul.f32 %v4099, %v4186
        %v4193 = vmul.f32 %v4100, %v4187
        %v4194 = vmul.f32 %v4101, %v4188
        %v4195 = vadd.f32 %v4192, %v4102
        %v4196 = vadd.f32 %v4193, %v4103
        %v4197 = vadd.f32 %v4194, %v4104
        %v4201 = vrot.slane %v4195, 7
        %v4202 = vrot.slane %v4196, 7
        %v4203 = vrot.slane %v4197, 7
        %v4207 = vmul.f32 %v4099, %v4201
        %v4208 = vmul.f32 %v4100, %v4202
        %v4209 = vmul.f32 %v4101, %v4203
        %v4210 = vadd.f32 %v4207, %v4102
        %v4211 = vadd.f32 %v4208, %v4103
        %v4212 = vadd.f32 %v4209, %v4104
        %v4216 = vrot.slane %v4210, 7
        %v4217 = vrot.slane %v4211, 7
        %v4218 = vrot.slane %v4212, 7
        %v4222 = vmul.f32 %v4099, %v4216
        %v4223 = vmul.f32 %v4100, %v4217
        %v4224 = vmul.f32 %v4101, %v4218
        %v4225 = vadd.f32 %v4222, %v4102
        %v4226 = vadd.f32 %v4223, %v4103
        %v4227 = vadd.f32 %v4224, %v4104
        %v4228 = vsel %vm2959, %v4120, %v4135
        %v4229 = vsel %vm2959, %v4121, %v4136
        %v4230 = vsel %vm2959, %v4122, %v4137
        %v4231 = vsel %vm1359, %v4228, %v4150
        %v4232 = vsel %vm1359, %v4229, %v4151
        %v4233 = vsel %vm1359, %v4230, %v4152
        %v4234 = vsel %vm1156, %v4231, %v4165
        %v4235 = vsel %vm1156, %v4232, %v4166
        %v4236 = vsel %vm1156, %v4233, %v4167
        %v4237 = vsel %vm1277, %v4234, %v4180
        %v4238 = vsel %vm1277, %v4235, %v4181
        %v4239 = vsel %vm1277, %v4236, %v4182
        %v4240 = vsel %vm2972, %v4237, %v4195
        %v4241 = vsel %vm2972, %v4238, %v4196
        %v4242 = vsel %vm2972, %v4239, %v4197
        %v4243 = vsel %vm2976, %v4240, %v4210
        %v4244 = vsel %vm2976, %v4241, %v4211
        %v4245 = vsel %vm2976, %v4242, %v4212
        %v4246 = vsel %vm2980, %v4243, %v4225
        %v4247 = vsel %vm2980, %v4244, %v4226
        %v4248 = vsel %vm2980, %v4245, %v4227
        %v4249 = vmul.f32 %v4246, %v4105
        %v4250 = vmul.f32 %v4247, %v4106
        %v4251 = vmul.f32 %v4248, %v4107
        %v4252 = vld [vmem:[#allocation17] sm:$0xff]
        %v4253 = vld [vmem:[#allocation17 + $0x8] sm:$0xff]
        %v4254 = vld [vmem:[#allocation17 + $0x10] sm:$0xff]
        %v4255 = vld [vmem:[#allocation17 + $0x18] sm:$0xff]
        %v4256 = vld [vmem:[#allocation17 + $0x20] sm:$0xff]
        %v4257 = vld [vmem:[#allocation17 + $0x28] sm:$0xff]
        %v4258 = vld [vmem:[#allocation17 + $0x30] sm:$0xff]
        %v4259 = vld [vmem:[#allocation17 + $0x38] sm:$0xff]
        %v4260 = vld [vmem:[#allocation17 + $0x40] sm:$0xff]
        %v4261 = vld [vmem:[#allocation17 + $0x48] sm:$0xff]
        %v4262 = vld [vmem:[#allocation17 + $0x50] sm:$0xff]
        %v4263 = vld [vmem:[#allocation17 + $0x58] sm:$0xff]
        %v4264 = vld [vmem:[#allocation17 + $0x60] sm:$0xff]
        %v4265 = vld [vmem:[#allocation17 + $0x68] sm:$0xff]
        %v4266 = vld [vmem:[#allocation17 + $0x70] sm:$0xff]
        %v4267 = vld [vmem:[#allocation17 + $0x78] sm:$0xff]
        %v4268 = vld [vmem:[#allocation17 + $0x80] sm:$0xff]
        %v4269 = vld [vmem:[#allocation17 + $0x88] sm:$0xff]
        %v4270 = vld [vmem:[#allocation17 + $0x90] sm:$0xff]
        %v4271 = vld [vmem:[#allocation17 + $0x98] sm:$0xff]
        %v4272 = vld [vmem:[#allocation17 + $0xa0] sm:$0xff]
        %v4273 = vld [vmem:[#allocation17 + $0xa8] sm:$0xff]
        %v4274 = vld [vmem:[#allocation17 + $0xb0] sm:$0xff]
        %v4275 = vld [vmem:[#allocation17 + $0xb8] sm:$0xff]
        %v4276 = vld [vmem:[#allocation17 + $0xc0] sm:$0xff]
        %v4277 = vld [vmem:[#allocation17 + $0xc8] sm:$0xff]
        %v4278 = vld [vmem:[#allocation17 + $0xd0] sm:$0xff]
        %v4279 = vld [vmem:[#allocation17 + $0xd8] sm:$0xff]
        %v4280 = vld [vmem:[#allocation17 + $0xe0] sm:$0xff]
        %v4281 = vld [vmem:[#allocation17 + $0xe8] sm:$0xff]
        %v4282 = vld [vmem:[#allocation17 + $0xf0] sm:$0xff]
        %v4283 = vld [vmem:[#allocation17 + $0xf8] sm:$0xff]
        %v4284 = vld [vmem:[#allocation17 + $0x100] sm:$0xff]
        %v4285 = vld [vmem:[#allocation17 + $0x108] sm:$0xff]
        %v4286 = vld [vmem:[#allocation17 + $0x110] sm:$0xff]
        %v4287 = vld [vmem:[#allocation17 + $0x118] sm:$0xff]
        %v4289 = vsel %vm2425, %v4251, 0
        %4291 = vmatpush.msra.mxu0 %v4267
        %4292 = vmatpush.msra.mxu0 %v4266
        %4293 = vmatpush.msra.mxu0 %v4265
        %4294 = vmatpush.msra.mxu0 %v4264
        %4295 = vmatpush.msra.mxu0 %v4263
        %4296 = vmatpush.msra.mxu0 %v4262
        %4297 = vmatpush.msra.mxu0 %v4261
        %4298 = vmatpush.msra.mxu0 %v4260
        %4299 = vmatpush.msra.mxu0 %v4259
        %4300 = vmatpush.msra.mxu0 %v4258
        %4301 = vmatpush.msra.mxu0 %v4257
        %4302 = vmatpush.msra.mxu0 %v4256
        %4303 = vmatpush.msra.mxu0 %v4255
        %4304 = vmatpush.msra.mxu0 %v4254
        %4305 = vmatpush.msra.mxu0 %v4253
        %4306 = vmatpush.msra.mxu0 %v4252
        %4307 = vmatmul.f32.gmra.mxu0 %v4249
        %v4308 = vpop.f32.mrf.mxu0
        %v4309 = vadd.f32 0.0, %v4308
        %4310 = vdwg.mxu0
        %4311 = vmatpush.msra.mxu0 %v4283
        %4312 = vmatpush.msra.mxu0 %v4282
        %4313 = vmatpush.msra.mxu0 %v4281
        %4314 = vmatpush.msra.mxu0 %v4280
        %4315 = vmatpush.msra.mxu0 %v4279
        %4316 = vmatpush.msra.mxu0 %v4278
        %4317 = vmatpush.msra.mxu0 %v4277
        %4318 = vmatpush.msra.mxu0 %v4276
        %4319 = vmatpush.msra.mxu0 %v4275
        %4320 = vmatpush.msra.mxu0 %v4274
        %4321 = vmatpush.msra.mxu0 %v4273
        %4322 = vmatpush.msra.mxu0 %v4272
        %4323 = vmatpush.msra.mxu0 %v4271
        %4324 = vmatpush.msra.mxu0 %v4270
        %4325 = vmatpush.msra.mxu0 %v4269
        %4326 = vmatpush.msra.mxu0 %v4268
        %4327 = vmatmul.f32.gmra.mxu0 %v4250
        %v4328 = vpop.f32.mrf.mxu0
        %v4329 = vadd.f32 %v4309, %v4328
        %4330 = vdwg.mxu0
        %4331 = vmatpush.msra.mxu0 0.0
        %4332 = vmatpush.msra.mxu0 0.0
        %4333 = vmatpush.msra.mxu0 0.0
        %4334 = vmatpush.msra.mxu0 0.0
        %4335 = vmatpush.msra.mxu0 0.0
        %4336 = vmatpush.msra.mxu0 0.0
        %4337 = vmatpush.msra.mxu0 0.0
        %4338 = vmatpush.msra.mxu0 0.0
        %4339 = vmatpush.msra.mxu0 0.0
        %4340 = vmatpush.msra.mxu0 0.0
        %4341 = vmatpush.msra.mxu0 0.0
        %4342 = vmatpush.msra.mxu0 0.0
        %4343 = vmatpush.msra.mxu0 %v4287
        %4344 = vmatpush.msra.mxu0 %v4286
        %4345 = vmatpush.msra.mxu0 %v4285
        %4346 = vmatpush.msra.mxu0 %v4284
        %4347 = vmatmul.f32.gmra.mxu0 %v4289
        %v4348 = vpop.f32.mrf.mxu0
        %v4349 = vadd.f32 %v4329, %v4348
        %4350 = vdwg.mxu0
        %4351 = vst.msk [vmem:[#allocation5 + $0x28] sm:$0xff] %vm1839, %v4349
        %v4352 = vld [vmem:[#allocation2 + $0x90] sm:$0xff]
        %v4353 = vld [vmem:[#allocation2 + $0x98] sm:$0xff]
        %v4354 = vld [vmem:[#allocation2 + $0xa0] sm:$0xff]
        %v4355 = vld [vmem:[#allocation3 + $0x90] sm:$0xff]
        %v4356 = vld [vmem:[#allocation3 + $0x98] sm:$0xff]
        %v4357 = vld [vmem:[#allocation3 + $0xa0] sm:$0xff]
        %v4358 = vld [vmem:[#allocation4 + $0x90] sm:$0xff]
        %v4359 = vld [vmem:[#allocation4 + $0x98] sm:$0xff]
        %v4360 = vld [vmem:[#allocation4 + $0xa0] sm:$0xff]
        %v4364 = vrot.slane %v4225, 7
        %v4365 = vrot.slane %v4226, 7
        %v4366 = vrot.slane %v4227, 7
        %v4370 = vmul.f32 %v4352, %v4364
        %v4371 = vmul.f32 %v4353, %v4365
        %v4372 = vmul.f32 %v4354, %v4366
        %v4373 = vadd.f32 %v4370, %v4355
        %v4374 = vadd.f32 %v4371, %v4356
        %v4375 = vadd.f32 %v4372, %v4357
        %v4379 = vrot.slane %v4373, 7
        %v4380 = vrot.slane %v4374, 7
        %v4381 = vrot.slane %v4375, 7
        %v4385 = vmul.f32 %v4352, %v4379
        %v4386 = vmul.f32 %v4353, %v4380
        %v4387 = vmul.f32 %v4354, %v4381
        %v4388 = vadd.f32 %v4385, %v4355
        %v4389 = vadd.f32 %v4386, %v4356
        %v4390 = vadd.f32 %v4387, %v4357
        %v4394 = vrot.slane %v4388, 7
        %v4395 = vrot.slane %v4389, 7
        %v4396 = vrot.slane %v4390, 7
        %v4400 = vmul.f32 %v4352, %v4394
        %v4401 = vmul.f32 %v4353, %v4395
        %v4402 = vmul.f32 %v4354, %v4396
        %v4403 = vadd.f32 %v4400, %v4355
        %v4404 = vadd.f32 %v4401, %v4356
        %v4405 = vadd.f32 %v4402, %v4357
        %v4409 = vrot.slane %v4403, 7
        %v4410 = vrot.slane %v4404, 7
        %v4411 = vrot.slane %v4405, 7
        %v4415 = vmul.f32 %v4352, %v4409
        %v4416 = vmul.f32 %v4353, %v4410
        %v4417 = vmul.f32 %v4354, %v4411
        %v4418 = vadd.f32 %v4415, %v4355
        %v4419 = vadd.f32 %v4416, %v4356
        %v4420 = vadd.f32 %v4417, %v4357
        %v4424 = vrot.slane %v4418, 7
        %v4425 = vrot.slane %v4419, 7
        %v4426 = vrot.slane %v4420, 7
        %v4430 = vmul.f32 %v4352, %v4424
        %v4431 = vmul.f32 %v4353, %v4425
        %v4432 = vmul.f32 %v4354, %v4426
        %v4433 = vadd.f32 %v4430, %v4355
        %v4434 = vadd.f32 %v4431, %v4356
        %v4435 = vadd.f32 %v4432, %v4357
        %v4439 = vrot.slane %v4433, 7
        %v4440 = vrot.slane %v4434, 7
        %v4441 = vrot.slane %v4435, 7
        %v4445 = vmul.f32 %v4352, %v4439
        %v4446 = vmul.f32 %v4353, %v4440
        %v4447 = vmul.f32 %v4354, %v4441
        %v4448 = vadd.f32 %v4445, %v4355
        %v4449 = vadd.f32 %v4446, %v4356
        %v4450 = vadd.f32 %v4447, %v4357
        %v4454 = vrot.slane %v4448, 7
        %v4455 = vrot.slane %v4449, 7
        %v4456 = vrot.slane %v4450, 7
        %v4460 = vmul.f32 %v4352, %v4454
        %v4461 = vmul.f32 %v4353, %v4455
        %v4462 = vmul.f32 %v4354, %v4456
        %v4463 = vadd.f32 %v4460, %v4355
        %v4464 = vadd.f32 %v4461, %v4356
        %v4465 = vadd.f32 %v4462, %v4357
        %v4469 = vrot.slane %v4463, 7
        %v4470 = vrot.slane %v4464, 7
        %v4471 = vrot.slane %v4465, 7
        %v4475 = vmul.f32 %v4352, %v4469
        %v4476 = vmul.f32 %v4353, %v4470
        %v4477 = vmul.f32 %v4354, %v4471
        %v4478 = vadd.f32 %v4475, %v4355
        %v4479 = vadd.f32 %v4476, %v4356
        %v4480 = vadd.f32 %v4477, %v4357
        %v4481 = vsel %vm2959, %v4373, %v4388
        %v4482 = vsel %vm2959, %v4374, %v4389
        %v4483 = vsel %vm2959, %v4375, %v4390
        %v4484 = vsel %vm1359, %v4481, %v4403
        %v4485 = vsel %vm1359, %v4482, %v4404
        %v4486 = vsel %vm1359, %v4483, %v4405
        %v4487 = vsel %vm1156, %v4484, %v4418
        %v4488 = vsel %vm1156, %v4485, %v4419
        %v4489 = vsel %vm1156, %v4486, %v4420
        %v4490 = vsel %vm1277, %v4487, %v4433
        %v4491 = vsel %vm1277, %v4488, %v4434
        %v4492 = vsel %vm1277, %v4489, %v4435
        %v4493 = vsel %vm2972, %v4490, %v4448
        %v4494 = vsel %vm2972, %v4491, %v4449
        %v4495 = vsel %vm2972, %v4492, %v4450
        %v4496 = vsel %vm2976, %v4493, %v4463
        %v4497 = vsel %vm2976, %v4494, %v4464
        %v4498 = vsel %vm2976, %v4495, %v4465
        %v4499 = vsel %vm2980, %v4496, %v4478
        %v4500 = vsel %vm2980, %v4497, %v4479
        %v4501 = vsel %vm2980, %v4498, %v4480
        %v4502 = vmul.f32 %v4499, %v4358
        %v4503 = vmul.f32 %v4500, %v4359
        %v4504 = vmul.f32 %v4501, %v4360
        %v4505 = vld [vmem:[#allocation17] sm:$0xff]
        %v4506 = vld [vmem:[#allocation17 + $0x8] sm:$0xff]
        %v4507 = vld [vmem:[#allocation17 + $0x10] sm:$0xff]
        %v4508 = vld [vmem:[#allocation17 + $0x18] sm:$0xff]
        %v4509 = vld [vmem:[#allocation17 + $0x20] sm:$0xff]
        %v4510 = vld [vmem:[#allocation17 + $0x28] sm:$0xff]
        %v4511 = vld [vmem:[#allocation17 + $0x30] sm:$0xff]
        %v4512 = vld [vmem:[#allocation17 + $0x38] sm:$0xff]
        %v4513 = vld [vmem:[#allocation17 + $0x40] sm:$0xff]
        %v4514 = vld [vmem:[#allocation17 + $0x48] sm:$0xff]
        %v4515 = vld [vmem:[#allocation17 + $0x50] sm:$0xff]
        %v4516 = vld [vmem:[#allocation17 + $0x58] sm:$0xff]
        %v4517 = vld [vmem:[#allocation17 + $0x60] sm:$0xff]
        %v4518 = vld [vmem:[#allocation17 + $0x68] sm:$0xff]
        %v4519 = vld [vmem:[#allocation17 + $0x70] sm:$0xff]
        %v4520 = vld [vmem:[#allocation17 + $0x78] sm:$0xff]
        %v4521 = vld [vmem:[#allocation17 + $0x80] sm:$0xff]
        %v4522 = vld [vmem:[#allocation17 + $0x88] sm:$0xff]
        %v4523 = vld [vmem:[#allocation17 + $0x90] sm:$0xff]
        %v4524 = vld [vmem:[#allocation17 + $0x98] sm:$0xff]
        %v4525 = vld [vmem:[#allocation17 + $0xa0] sm:$0xff]
        %v4526 = vld [vmem:[#allocation17 + $0xa8] sm:$0xff]
        %v4527 = vld [vmem:[#allocation17 + $0xb0] sm:$0xff]
        %v4528 = vld [vmem:[#allocation17 + $0xb8] sm:$0xff]
        %v4529 = vld [vmem:[#allocation17 + $0xc0] sm:$0xff]
        %v4530 = vld [vmem:[#allocation17 + $0xc8] sm:$0xff]
        %v4531 = vld [vmem:[#allocation17 + $0xd0] sm:$0xff]
        %v4532 = vld [vmem:[#allocation17 + $0xd8] sm:$0xff]
        %v4533 = vld [vmem:[#allocation17 + $0xe0] sm:$0xff]
        %v4534 = vld [vmem:[#allocation17 + $0xe8] sm:$0xff]
        %v4535 = vld [vmem:[#allocation17 + $0xf0] sm:$0xff]
        %v4536 = vld [vmem:[#allocation17 + $0xf8] sm:$0xff]
        %v4537 = vld [vmem:[#allocation17 + $0x100] sm:$0xff]
        %v4538 = vld [vmem:[#allocation17 + $0x108] sm:$0xff]
        %v4539 = vld [vmem:[#allocation17 + $0x110] sm:$0xff]
        %v4540 = vld [vmem:[#allocation17 + $0x118] sm:$0xff]
        %v4542 = vsel %vm2425, %v4504, 0
        %4544 = vmatpush.msra.mxu0 %v4520
        %4545 = vmatpush.msra.mxu0 %v4519
        %4546 = vmatpush.msra.mxu0 %v4518
        %4547 = vmatpush.msra.mxu0 %v4517
        %4548 = vmatpush.msra.mxu0 %v4516
        %4549 = vmatpush.msra.mxu0 %v4515
        %4550 = vmatpush.msra.mxu0 %v4514
        %4551 = vmatpush.msra.mxu0 %v4513
        %4552 = vmatpush.msra.mxu0 %v4512
        %4553 = vmatpush.msra.mxu0 %v4511
        %4554 = vmatpush.msra.mxu0 %v4510
        %4555 = vmatpush.msra.mxu0 %v4509
        %4556 = vmatpush.msra.mxu0 %v4508
        %4557 = vmatpush.msra.mxu0 %v4507
        %4558 = vmatpush.msra.mxu0 %v4506
        %4559 = vmatpush.msra.mxu0 %v4505
        %4560 = vmatmul.f32.gmra.mxu0 %v4502
        %v4561 = vpop.f32.mrf.mxu0
        %v4562 = vadd.f32 0.0, %v4561
        %4563 = vdwg.mxu0
        %4564 = vmatpush.msra.mxu0 %v4536
        %4565 = vmatpush.msra.mxu0 %v4535
        %4566 = vmatpush.msra.mxu0 %v4534
        %4567 = vmatpush.msra.mxu0 %v4533
        %4568 = vmatpush.msra.mxu0 %v4532
        %4569 = vmatpush.msra.mxu0 %v4531
        %4570 = vmatpush.msra.mxu0 %v4530
        %4571 = vmatpush.msra.mxu0 %v4529
        %4572 = vmatpush.msra.mxu0 %v4528
        %4573 = vmatpush.msra.mxu0 %v4527
        %4574 = vmatpush.msra.mxu0 %v4526
        %4575 = vmatpush.msra.mxu0 %v4525
        %4576 = vmatpush.msra.mxu0 %v4524
        %4577 = vmatpush.msra.mxu0 %v4523
        %4578 = vmatpush.msra.mxu0 %v4522
        %4579 = vmatpush.msra.mxu0 %v4521
        %4580 = vmatmul.f32.gmra.mxu0 %v4503
        %v4581 = vpop.f32.mrf.mxu0
        %v4582 = vadd.f32 %v4562, %v4581
        %4583 = vdwg.mxu0
        %4584 = vmatpush.msra.mxu0 0.0
        %4585 = vmatpush.msra.mxu0 0.0
        %4586 = vmatpush.msra.mxu0 0.0
        %4587 = vmatpush.msra.mxu0 0.0
        %4588 = vmatpush.msra.mxu0 0.0
        %4589 = vmatpush.msra.mxu0 0.0
        %4590 = vmatpush.msra.mxu0 0.0
        %4591 = vmatpush.msra.mxu0 0.0
        %4592 = vmatpush.msra.mxu0 0.0
        %4593 = vmatpush.msra.mxu0 0.0
        %4594 = vmatpush.msra.mxu0 0.0
        %4595 = vmatpush.msra.mxu0 0.0
        %4596 = vmatpush.msra.mxu0 %v4540
        %4597 = vmatpush.msra.mxu0 %v4539
        %4598 = vmatpush.msra.mxu0 %v4538
        %4599 = vmatpush.msra.mxu0 %v4537
        %4600 = vmatmul.f32.gmra.mxu0 %v4542
        %v4601 = vpop.f32.mrf.mxu0
        %v4602 = vadd.f32 %v4582, %v4601
        %4603 = vdwg.mxu0
        %4604 = vst.msk [vmem:[#allocation5 + $0x30] sm:$0xff] %vm1839, %v4602
        %v4605 = vld [vmem:[#allocation2 + $0xa8] sm:$0xff]
        %v4606 = vld [vmem:[#allocation2 + $0xb0] sm:$0xff]
        %v4607 = vld [vmem:[#allocation2 + $0xb8] sm:$0xff]
        %v4608 = vld [vmem:[#allocation3 + $0xa8] sm:$0xff]
        %v4609 = vld [vmem:[#allocation3 + $0xb0] sm:$0xff]
        %v4610 = vld [vmem:[#allocation3 + $0xb8] sm:$0xff]
        %v4611 = vld [vmem:[#allocation4 + $0xa8] sm:$0xff]
        %v4612 = vld [vmem:[#allocation4 + $0xb0] sm:$0xff]
        %v4613 = vld [vmem:[#allocation4 + $0xb8] sm:$0xff]
        %v4617 = vrot.slane %v4478, 7
        %v4618 = vrot.slane %v4479, 7
        %v4619 = vrot.slane %v4480, 7
        %v4623 = vmul.f32 %v4605, %v4617
        %v4624 = vmul.f32 %v4606, %v4618
        %v4625 = vmul.f32 %v4607, %v4619
        %v4626 = vadd.f32 %v4623, %v4608
        %v4627 = vadd.f32 %v4624, %v4609
        %v4628 = vadd.f32 %v4625, %v4610
        %v4632 = vrot.slane %v4626, 7
        %v4633 = vrot.slane %v4627, 7
        %v4634 = vrot.slane %v4628, 7
        %v4638 = vmul.f32 %v4605, %v4632
        %v4639 = vmul.f32 %v4606, %v4633
        %v4640 = vmul.f32 %v4607, %v4634
        %v4641 = vadd.f32 %v4638, %v4608
        %v4642 = vadd.f32 %v4639, %v4609
        %v4643 = vadd.f32 %v4640, %v4610
        %v4647 = vrot.slane %v4641, 7
        %v4648 = vrot.slane %v4642, 7
        %v4649 = vrot.slane %v4643, 7
        %v4653 = vmul.f32 %v4605, %v4647
        %v4654 = vmul.f32 %v4606, %v4648
        %v4655 = vmul.f32 %v4607, %v4649
        %v4656 = vadd.f32 %v4653, %v4608
        %v4657 = vadd.f32 %v4654, %v4609
        %v4658 = vadd.f32 %v4655, %v4610
        %v4662 = vrot.slane %v4656, 7
        %v4663 = vrot.slane %v4657, 7
        %v4664 = vrot.slane %v4658, 7
        %v4668 = vmul.f32 %v4605, %v4662
        %v4669 = vmul.f32 %v4606, %v4663
        %v4670 = vmul.f32 %v4607, %v4664
        %v4671 = vadd.f32 %v4668, %v4608
        %v4672 = vadd.f32 %v4669, %v4609
        %v4673 = vadd.f32 %v4670, %v4610
        %v4677 = vrot.slane %v4671, 7
        %v4678 = vrot.slane %v4672, 7
        %v4679 = vrot.slane %v4673, 7
        %v4683 = vmul.f32 %v4605, %v4677
        %v4684 = vmul.f32 %v4606, %v4678
        %v4685 = vmul.f32 %v4607, %v4679
        %v4686 = vadd.f32 %v4683, %v4608
        %v4687 = vadd.f32 %v4684, %v4609
        %v4688 = vadd.f32 %v4685, %v4610
        %v4692 = vrot.slane %v4686, 7
        %v4693 = vrot.slane %v4687, 7
        %v4694 = vrot.slane %v4688, 7
        %v4698 = vmul.f32 %v4605, %v4692
        %v4699 = vmul.f32 %v4606, %v4693
        %v4700 = vmul.f32 %v4607, %v4694
        %v4701 = vadd.f32 %v4698, %v4608
        %v4702 = vadd.f32 %v4699, %v4609
        %v4703 = vadd.f32 %v4700, %v4610
        %v4707 = vrot.slane %v4701, 7
        %v4708 = vrot.slane %v4702, 7
        %v4709 = vrot.slane %v4703, 7
        %v4713 = vmul.f32 %v4605, %v4707
        %v4714 = vmul.f32 %v4606, %v4708
        %v4715 = vmul.f32 %v4607, %v4709
        %v4716 = vadd.f32 %v4713, %v4608
        %v4717 = vadd.f32 %v4714, %v4609
        %v4718 = vadd.f32 %v4715, %v4610
        %v4722 = vrot.slane %v4716, 7
        %v4723 = vrot.slane %v4717, 7
        %v4724 = vrot.slane %v4718, 7
        %v4728 = vmul.f32 %v4605, %v4722
        %v4729 = vmul.f32 %v4606, %v4723
        %v4730 = vmul.f32 %v4607, %v4724
        %v4731 = vadd.f32 %v4728, %v4608
        %v4732 = vadd.f32 %v4729, %v4609
        %v4733 = vadd.f32 %v4730, %v4610
        %v4734 = vsel %vm2959, %v4626, %v4641
        %v4735 = vsel %vm2959, %v4627, %v4642
        %v4736 = vsel %vm2959, %v4628, %v4643
        %v4737 = vsel %vm1359, %v4734, %v4656
        %v4738 = vsel %vm1359, %v4735, %v4657
        %v4739 = vsel %vm1359, %v4736, %v4658
        %v4740 = vsel %vm1156, %v4737, %v4671
        %v4741 = vsel %vm1156, %v4738, %v4672
        %v4742 = vsel %vm1156, %v4739, %v4673
        %v4743 = vsel %vm1277, %v4740, %v4686
        %v4744 = vsel %vm1277, %v4741, %v4687
        %v4745 = vsel %vm1277, %v4742, %v4688
        %v4746 = vsel %vm2972, %v4743, %v4701
        %v4747 = vsel %vm2972, %v4744, %v4702
        %v4748 = vsel %vm2972, %v4745, %v4703
        %v4749 = vsel %vm2976, %v4746, %v4716
        %v4750 = vsel %vm2976, %v4747, %v4717
        %v4751 = vsel %vm2976, %v4748, %v4718
        %v4752 = vsel %vm2980, %v4749, %v4731
        %v4753 = vsel %vm2980, %v4750, %v4732
        %v4754 = vsel %vm2980, %v4751, %v4733
        %v4755 = vmul.f32 %v4752, %v4611
        %v4756 = vmul.f32 %v4753, %v4612
        %v4757 = vmul.f32 %v4754, %v4613
        %v4758 = vld [vmem:[#allocation17] sm:$0xff]
        %v4759 = vld [vmem:[#allocation17 + $0x8] sm:$0xff]
        %v4760 = vld [vmem:[#allocation17 + $0x10] sm:$0xff]
        %v4761 = vld [vmem:[#allocation17 + $0x18] sm:$0xff]
        %v4762 = vld [vmem:[#allocation17 + $0x20] sm:$0xff]
        %v4763 = vld [vmem:[#allocation17 + $0x28] sm:$0xff]
        %v4764 = vld [vmem:[#allocation17 + $0x30] sm:$0xff]
        %v4765 = vld [vmem:[#allocation17 + $0x38] sm:$0xff]
        %v4766 = vld [vmem:[#allocation17 + $0x40] sm:$0xff]
        %v4767 = vld [vmem:[#allocation17 + $0x48] sm:$0xff]
        %v4768 = vld [vmem:[#allocation17 + $0x50] sm:$0xff]
        %v4769 = vld [vmem:[#allocation17 + $0x58] sm:$0xff]
        %v4770 = vld [vmem:[#allocation17 + $0x60] sm:$0xff]
        %v4771 = vld [vmem:[#allocation17 + $0x68] sm:$0xff]
        %v4772 = vld [vmem:[#allocation17 + $0x70] sm:$0xff]
        %v4773 = vld [vmem:[#allocation17 + $0x78] sm:$0xff]
        %v4774 = vld [vmem:[#allocation17 + $0x80] sm:$0xff]
        %v4775 = vld [vmem:[#allocation17 + $0x88] sm:$0xff]
        %v4776 = vld [vmem:[#allocation17 + $0x90] sm:$0xff]
        %v4777 = vld [vmem:[#allocation17 + $0x98] sm:$0xff]
        %v4778 = vld [vmem:[#allocation17 + $0xa0] sm:$0xff]
        %v4779 = vld [vmem:[#allocation17 + $0xa8] sm:$0xff]
        %v4780 = vld [vmem:[#allocation17 + $0xb0] sm:$0xff]
        %v4781 = vld [vmem:[#allocation17 + $0xb8] sm:$0xff]
        %v4782 = vld [vmem:[#allocation17 + $0xc0] sm:$0xff]
        %v4783 = vld [vmem:[#allocation17 + $0xc8] sm:$0xff]
        %v4784 = vld [vmem:[#allocation17 + $0xd0] sm:$0xff]
        %v4785 = vld [vmem:[#allocation17 + $0xd8] sm:$0xff]
        %v4786 = vld [vmem:[#allocation17 + $0xe0] sm:$0xff]
        %v4787 = vld [vmem:[#allocation17 + $0xe8] sm:$0xff]
        %v4788 = vld [vmem:[#allocation17 + $0xf0] sm:$0xff]
        %v4789 = vld [vmem:[#allocation17 + $0xf8] sm:$0xff]
        %v4790 = vld [vmem:[#allocation17 + $0x100] sm:$0xff]
        %v4791 = vld [vmem:[#allocation17 + $0x108] sm:$0xff]
        %v4792 = vld [vmem:[#allocation17 + $0x110] sm:$0xff]
        %v4793 = vld [vmem:[#allocation17 + $0x118] sm:$0xff]
        %v4795 = vsel %vm2425, %v4757, 0
        %4797 = vmatpush.msra.mxu0 %v4773
        %4798 = vmatpush.msra.mxu0 %v4772
        %4799 = vmatpush.msra.mxu0 %v4771
        %4800 = vmatpush.msra.mxu0 %v4770
        %4801 = vmatpush.msra.mxu0 %v4769
        %4802 = vmatpush.msra.mxu0 %v4768
        %4803 = vmatpush.msra.mxu0 %v4767
        %4804 = vmatpush.msra.mxu0 %v4766
        %4805 = vmatpush.msra.mxu0 %v4765
        %4806 = vmatpush.msra.mxu0 %v4764
        %4807 = vmatpush.msra.mxu0 %v4763
        %4808 = vmatpush.msra.mxu0 %v4762
        %4809 = vmatpush.msra.mxu0 %v4761
        %4810 = vmatpush.msra.mxu0 %v4760
        %4811 = vmatpush.msra.mxu0 %v4759
        %4812 = vmatpush.msra.mxu0 %v4758
        %4813 = vmatmul.f32.gmra.mxu0 %v4755
        %v4814 = vpop.f32.mrf.mxu0
        %v4815 = vadd.f32 0.0, %v4814
        %4816 = vdwg.mxu0
        %4817 = vmatpush.msra.mxu0 %v4789
        %4818 = vmatpush.msra.mxu0 %v4788
        %4819 = vmatpush.msra.mxu0 %v4787
        %4820 = vmatpush.msra.mxu0 %v4786
        %4821 = vmatpush.msra.mxu0 %v4785
        %4822 = vmatpush.msra.mxu0 %v4784
        %4823 = vmatpush.msra.mxu0 %v4783
        %4824 = vmatpush.msra.mxu0 %v4782
        %4825 = vmatpush.msra.mxu0 %v4781
        %4826 = vmatpush.msra.mxu0 %v4780
        %4827 = vmatpush.msra.mxu0 %v4779
        %4828 = vmatpush.msra.mxu0 %v4778
        %4829 = vmatpush.msra.mxu0 %v4777
        %4830 = vmatpush.msra.mxu0 %v4776
        %4831 = vmatpush.msra.mxu0 %v4775
        %4832 = vmatpush.msra.mxu0 %v4774
        %4833 = vmatmul.f32.gmra.mxu0 %v4756
        %v4834 = vpop.f32.mrf.mxu0
        %v4835 = vadd.f32 %v4815, %v4834
        %4836 = vdwg.mxu0
        %4837 = vmatpush.msra.mxu0 0.0
        %4838 = vmatpush.msra.mxu0 0.0
        %4839 = vmatpush.msra.mxu0 0.0
        %4840 = vmatpush.msra.mxu0 0.0
        %4841 = vmatpush.msra.mxu0 0.0
        %4842 = vmatpush.msra.mxu0 0.0
        %4843 = vmatpush.msra.mxu0 0.0
        %4844 = vmatpush.msra.mxu0 0.0
        %4845 = vmatpush.msra.mxu0 0.0
        %4846 = vmatpush.msra.mxu0 0.0
        %4847 = vmatpush.msra.mxu0 0.0
        %4848 = vmatpush.msra.mxu0 0.0
        %4849 = vmatpush.msra.mxu0 %v4793
        %4850 = vmatpush.msra.mxu0 %v4792
        %4851 = vmatpush.msra.mxu0 %v4791
        %4852 = vmatpush.msra.mxu0 %v4790
        %4853 = vmatmul.f32.gmra.mxu0 %v4795
        %v4854 = vpop.f32.mrf.mxu0
        %v4855 = vadd.f32 %v4835, %v4854
        %4856 = vdwg.mxu0
        %4857 = vst.msk [vmem:[#allocation5 + $0x38] sm:$0xff] %vm1839, %v4855
        %v4858 = vld [vmem:[#allocation5] sm:$0xff]
        %v4859 = vld [vmem:[#allocation5 + $0x8] sm:$0xff]
        %v4860 = vld [vmem:[#allocation5 + $0x10] sm:$0xff]
        %v4861 = vld [vmem:[#allocation5 + $0x18] sm:$0xff]
        %v4862 = vld [vmem:[#allocation5 + $0x20] sm:$0xff]
        %v4863 = vld [vmem:[#allocation5 + $0x28] sm:$0xff]
        %v4864 = vld [vmem:[#allocation5 + $0x30] sm:$0xff]
        %v4865 = vld [vmem:[#allocation5 + $0x38] sm:$0xff]
        %v4866 = vld [vmem:[%s8 + $0x7] sm:$0x1]
        %v4867 = vperm.slane %v4866, 0
        %v4868 = vmul.f32 %v4867, %v1822
        %v4869 = vmul.f32 %v4867, %v1823
        %v4870 = vmul.f32 %v4867, %v1824
        %v4871 = vmul.f32 %v4867, %v1825
        %v4872 = vmul.f32 %v4867, %v1826
        %v4873 = vmul.f32 %v4867, %v1827
        %v4874 = vmul.f32 %v4867, %v1828
        %v4875 = vmul.f32 %v4867, %v1829
        %v4876 = vadd.f32 %v4858, %v4868
        %v4877 = vadd.f32 %v4859, %v4869
        %v4878 = vadd.f32 %v4860, %v4870
        %v4879 = vadd.f32 %v4861, %v4871
        %v4880 = vadd.f32 %v4862, %v4872
        %v4881 = vadd.f32 %v4863, %v4873
        %v4882 = vadd.f32 %v4864, %v4874
        %v4883 = vadd.f32 %v4865, %v4875
        %v4884 = vxor.u32 %v1480, 2147483648
        %v4885 = vxor.u32 %v1481, 2147483648
        %v4886 = vxor.u32 %v1482, 2147483648
        %v4887 = vxor.u32 %v1483, 2147483648
        %v4888 = vxor.u32 %v1484, 2147483648
        %v4889 = vxor.u32 %v1485, 2147483648
        %v4890 = vxor.u32 %v1486, 2147483648
        %v4891 = vxor.u32 %v1487, 2147483648
        %v4892 = vmul.f32 %v4884, 1.442695
        %v4893 = vpow.pop %v4892
        %v4894 = vmul.f32 %v4885, 1.442695
        %v4895 = vpow.pop %v4894
        %v4896 = vmul.f32 %v4886, 1.442695
        %v4897 = vpow.pop %v4896
        %v4898 = vmul.f32 %v4887, 1.442695
        %v4899 = vpow.pop %v4898
        %v4900 = vmul.f32 %v4888, 1.442695
        %v4901 = vpow.pop %v4900
        %v4902 = vmul.f32 %v4889, 1.442695
        %v4903 = vpow.pop %v4902
        %v4904 = vmul.f32 %v4890, 1.442695
        %v4905 = vpow.pop %v4904
        %v4906 = vmul.f32 %v4891, 1.442695
        %v4907 = vpow.pop %v4906
        %v4908 = vadd.f32 %v4893, 1.0
        %v4909 = vadd.f32 %v4895, 1.0
        %v4910 = vadd.f32 %v4897, 1.0
        %v4911 = vadd.f32 %v4899, 1.0
        %v4912 = vadd.f32 %v4901, 1.0
        %v4913 = vadd.f32 %v4903, 1.0
        %v4914 = vadd.f32 %v4905, 1.0
        %v4915 = vadd.f32 %v4907, 1.0
        %v4916 = vrcp.pop %v4908
        %v4917 = vmul.f32 %v4908, %v4916
        %v4918 = vsub.f32 1.0, %v4917
        %v4919 = vmul.f32 %v4916, %v4918
        %v4920 = vadd.f32 %v4916, %v4919
        %vm4921 = vweird.f32 %v4908
        %vm4922 = vweird.f32 %v4916
        %vm4923 = vmor %vm4921, %vm4922
        %v4924 = vsel %vm4923, %v4916, %v4920
        %v4925 = vand.u32 2147483647, %v4908
        %vm4926 = vcmp.eq.f32.partialorder %v4925, 8.507059e+37
        %v4927 = vand.u32 %v4908, 2147483648
        %v4928 = vor.u32 1.1754944e-38, %v4927
        %v4929 = vsel %vm4926, %v4928, %v4924
        %v4930 = vmul.f32 1.0, %v4929
        %v4931 = vrcp.pop %v4909
        %v4932 = vmul.f32 %v4909, %v4931
        %v4933 = vsub.f32 1.0, %v4932
        %v4934 = vmul.f32 %v4931, %v4933
        %v4935 = vadd.f32 %v4931, %v4934
        %vm4936 = vweird.f32 %v4909
        %vm4937 = vweird.f32 %v4931
        %vm4938 = vmor %vm4936, %vm4937
        %v4939 = vsel %vm4938, %v4931, %v4935
        %v4940 = vand.u32 2147483647, %v4909
        %vm4941 = vcmp.eq.f32.partialorder %v4940, 8.507059e+37
        %v4942 = vand.u32 %v4909, 2147483648
        %v4943 = vor.u32 1.1754944e-38, %v4942
        %v4944 = vsel %vm4941, %v4943, %v4939
        %v4945 = vmul.f32 1.0, %v4944
        %v4946 = vrcp.pop %v4910
        %v4947 = vmul.f32 %v4910, %v4946
        %v4948 = vsub.f32 1.0, %v4947
        %v4949 = vmul.f32 %v4946, %v4948
        %v4950 = vadd.f32 %v4946, %v4949
        %vm4951 = vweird.f32 %v4910
        %vm4952 = vweird.f32 %v4946
        %vm4953 = vmor %vm4951, %vm4952
        %v4954 = vsel %vm4953, %v4946, %v4950
        %v4955 = vand.u32 2147483647, %v4910
        %vm4956 = vcmp.eq.f32.partialorder %v4955, 8.507059e+37
        %v4957 = vand.u32 %v4910, 2147483648
        %v4958 = vor.u32 1.1754944e-38, %v4957
        %v4959 = vsel %vm4956, %v4958, %v4954
        %v4960 = vmul.f32 1.0, %v4959
        %v4961 = vrcp.pop %v4911
        %v4962 = vmul.f32 %v4911, %v4961
        %v4963 = vsub.f32 1.0, %v4962
        %v4964 = vmul.f32 %v4961, %v4963
        %v4965 = vadd.f32 %v4961, %v4964
        %vm4966 = vweird.f32 %v4911
        %vm4967 = vweird.f32 %v4961
        %vm4968 = vmor %vm4966, %vm4967
        %v4969 = vsel %vm4968, %v4961, %v4965
        %v4970 = vand.u32 2147483647, %v4911
        %vm4971 = vcmp.eq.f32.partialorder %v4970, 8.507059e+37
        %v4972 = vand.u32 %v4911, 2147483648
        %v4973 = vor.u32 1.1754944e-38, %v4972
        %v4974 = vsel %vm4971, %v4973, %v4969
        %v4975 = vmul.f32 1.0, %v4974
        %v4976 = vrcp.pop %v4912
        %v4977 = vmul.f32 %v4912, %v4976
        %v4978 = vsub.f32 1.0, %v4977
        %v4979 = vmul.f32 %v4976, %v4978
        %v4980 = vadd.f32 %v4976, %v4979
        %vm4981 = vweird.f32 %v4912
        %vm4982 = vweird.f32 %v4976
        %vm4983 = vmor %vm4981, %vm4982
        %v4984 = vsel %vm4983, %v4976, %v4980
        %v4985 = vand.u32 2147483647, %v4912
        %vm4986 = vcmp.eq.f32.partialorder %v4985, 8.507059e+37
        %v4987 = vand.u32 %v4912, 2147483648
        %v4988 = vor.u32 1.1754944e-38, %v4987
        %v4989 = vsel %vm4986, %v4988, %v4984
        %v4990 = vmul.f32 1.0, %v4989
        %v4991 = vrcp.pop %v4913
        %v4992 = vmul.f32 %v4913, %v4991
        %v4993 = vsub.f32 1.0, %v4992
        %v4994 = vmul.f32 %v4991, %v4993
        %v4995 = vadd.f32 %v4991, %v4994
        %vm4996 = vweird.f32 %v4913
        %vm4997 = vweird.f32 %v4991
        %vm4998 = vmor %vm4996, %vm4997
        %v4999 = vsel %vm4998, %v4991, %v4995
        %v5000 = vand.u32 2147483647, %v4913
        %vm5001 = vcmp.eq.f32.partialorder %v5000, 8.507059e+37
        %v5002 = vand.u32 %v4913, 2147483648
        %v5003 = vor.u32 1.1754944e-38, %v5002
        %v5004 = vsel %vm5001, %v5003, %v4999
        %v5005 = vmul.f32 1.0, %v5004
        %v5006 = vrcp.pop %v4914
        %v5007 = vmul.f32 %v4914, %v5006
        %v5008 = vsub.f32 1.0, %v5007
        %v5009 = vmul.f32 %v5006, %v5008
        %v5010 = vadd.f32 %v5006, %v5009
        %vm5011 = vweird.f32 %v4914
        %vm5012 = vweird.f32 %v5006
        %vm5013 = vmor %vm5011, %vm5012
        %v5014 = vsel %vm5013, %v5006, %v5010
        %v5015 = vand.u32 2147483647, %v4914
        %vm5016 = vcmp.eq.f32.partialorder %v5015, 8.507059e+37
        %v5017 = vand.u32 %v4914, 2147483648
        %v5018 = vor.u32 1.1754944e-38, %v5017
        %v5019 = vsel %vm5016, %v5018, %v5014
        %v5020 = vmul.f32 1.0, %v5019
        %v5021 = vrcp.pop %v4915
        %v5022 = vmul.f32 %v4915, %v5021
        %v5023 = vsub.f32 1.0, %v5022
        %v5024 = vmul.f32 %v5021, %v5023
        %v5025 = vadd.f32 %v5021, %v5024
        %vm5026 = vweird.f32 %v4915
        %vm5027 = vweird.f32 %v5021
        %vm5028 = vmor %vm5026, %vm5027
        %v5029 = vsel %vm5028, %v5021, %v5025
        %v5030 = vand.u32 2147483647, %v4915
        %vm5031 = vcmp.eq.f32.partialorder %v5030, 8.507059e+37
        %v5032 = vand.u32 %v4915, 2147483648
        %v5033 = vor.u32 1.1754944e-38, %v5032
        %v5034 = vsel %vm5031, %v5033, %v5029
        %v5035 = vmul.f32 1.0, %v5034
        %v5036 = vmul.f32 %v1480, %v4930
        %v5037 = vmul.f32 %v1481, %v4945
        %v5038 = vmul.f32 %v1482, %v4960
        %v5039 = vmul.f32 %v1483, %v4975
        %v5040 = vmul.f32 %v1484, %v4990
        %v5041 = vmul.f32 %v1485, %v5005
        %v5042 = vmul.f32 %v1486, %v5020
        %v5043 = vmul.f32 %v1487, %v5035
        %v5044 = vmul.f32 %v4876, %v5036
        %v5045 = vmul.f32 %v4877, %v5037
        %v5046 = vmul.f32 %v4878, %v5038
        %v5047 = vmul.f32 %v4879, %v5039
        %v5048 = vmul.f32 %v4880, %v5040
        %v5049 = vmul.f32 %v4881, %v5041
        %v5050 = vmul.f32 %v4882, %v5042
        %v5051 = vmul.f32 %v4883, %v5043
        %v5052 = vpack.c.bf16 %v5045, %v5044
        %v5053 = vpack.c.bf16 %v5047, %v5046
        %v5054 = vpack.c.bf16 %v5049, %v5048
        %v5055 = vpack.c.bf16 %v5051, %v5050
        %v5056 = vld [vmem:[#allocation20] sm:$0xf]
        %v5057 = vld [vmem:[#allocation20 + $0x4] sm:$0xf]
        %v5058 = vld [vmem:[#allocation20 + $0x8] sm:$0xf]
        %v5059 = vld [vmem:[#allocation20 + $0xc] sm:$0xf]
        %v5060 = vld [vmem:[#allocation20 + $0x10] sm:$0xf]
        %v5061 = vld [vmem:[#allocation20 + $0x14] sm:$0xf]
        %v5062 = vld [vmem:[#allocation20 + $0x18] sm:$0xf]
        %v5063 = vld [vmem:[#allocation20 + $0x1c] sm:$0xf]
        %v5064 = vld [vmem:[#allocation20 + $0x20] sm:$0xf]
        %v5074 = vunpack.c.l.b16 %v5056
        %v5075 = vunpack.c.l.b16 %v5057
        %v5076 = vunpack.c.l.b16 %v5058
        %v5077 = vunpack.c.l.b16 %v5059
        %v5078 = vunpack.c.l.b16 %v5060
        %v5079 = vunpack.c.l.b16 %v5061
        %v5080 = vunpack.c.l.b16 %v5062
        %v5081 = vunpack.c.l.b16 %v5063
        %v5082 = vunpack.c.l.b16 %v5064
        %v5083 = vpack.c.b16 %v5075, %v5074
        %v5084 = vpack.c.b16 %v5077, %v5076
        %v5085 = vpack.c.b16 %v5079, %v5078
        %v5086 = vpack.c.b16 %v5081, %v5080
        %v5087 = vpack.c.b16 %v5082, %v5082
        %v5093 = vsel %vm1839, %v5052, 0
        %v5096 = vsel %vm1839, %v5053, 0
        %v5099 = vsel %vm1839, %v5054, 0
        %v5102 = vsel %vm1839, %v5055, 0
        %v5105 = vsel %vm1277, %v5087, 0
        %5107 = vmatpush.bf16.msra.mxu0 0
        %5108 = vmatpush.bf16.msra.mxu0 0
        %5109 = vmatpush.bf16.msra.mxu0 0
        %5110 = vmatpush.bf16.msra.mxu0 %v5105
        %5111 = vmatpush.bf16.msra.mxu0 %v5086
        %5112 = vmatpush.bf16.msra.mxu0 %v5085
        %5113 = vmatpush.bf16.msra.mxu0 %v5084
        %5114 = vmatpush.bf16.msra.mxu0 %v5083
        %5115 = vmatmul.bf16.gmra.mxu0 %v5093
        %v5116 = vpop.f32.mrf.mxu0
        %v5117 = vadd.f32 0.0, %v5116
        %v5118 = vpop.f32.mrf.mxu0
        %v5119 = vadd.f32 0.0, %v5118
        %5120 = vmatmul.bf16.gmra.mxu0 %v5096
        %v5121 = vpop.f32.mrf.mxu0
        %v5122 = vadd.f32 0.0, %v5121
        %v5123 = vpop.f32.mrf.mxu0
        %v5124 = vadd.f32 0.0, %v5123
        %5125 = vmatmul.bf16.gmra.mxu0 %v5099
        %v5126 = vpop.f32.mrf.mxu0
        %v5127 = vadd.f32 0.0, %v5126
        %v5128 = vpop.f32.mrf.mxu0
        %v5129 = vadd.f32 0.0, %v5128
        %5130 = vmatmul.bf16.gmra.mxu0 %v5102
        %v5131 = vpop.f32.mrf.mxu0
        %v5132 = vadd.f32 0.0, %v5131
        %v5133 = vpop.f32.mrf.mxu0
        %v5134 = vadd.f32 0.0, %v5133
        %5135 = vdwg.mxu0
        %v5136 = vld [vmem:[#allocation22] sm:$0xf]
        %v5137 = vld [vmem:[#allocation22 + $0x4] sm:$0xf]
        %v5138 = vld [vmem:[#allocation22 + $0x8] sm:$0xf]
        %v5139 = vld [vmem:[#allocation22 + $0xc] sm:$0xf]
        %v5140 = vld [vmem:[#allocation22 + $0x10] sm:$0xf]
        %v5141 = vld [vmem:[#allocation22 + $0x14] sm:$0xf]
        %v5142 = vld [vmem:[#allocation22 + $0x18] sm:$0xf]
        %v5143 = vld [vmem:[#allocation22 + $0x1c] sm:$0xf]
        %v5144 = vld [vmem:[#allocation22 + $0x20] sm:$0xf]
        %v5145 = vld [vmem:[#allocation22 + $0x24] sm:$0xf]
        %v5146 = vld [vmem:[#allocation22 + $0x28] sm:$0xf]
        %v5147 = vld [vmem:[#allocation22 + $0x2c] sm:$0xf]
        %v5148 = vld [vmem:[#allocation22 + $0x30] sm:$0xf]
        %v5149 = vld [vmem:[#allocation22 + $0x34] sm:$0xf]
        %v5150 = vld [vmem:[#allocation22 + $0x38] sm:$0xf]
        %v5151 = vld [vmem:[#allocation22 + $0x3c] sm:$0xf]
        %v5152 = vld [vmem:[#allocation22 + $0x40] sm:$0xf]
        %v5153 = vld [vmem:[#allocation22 + $0x44] sm:$0xf]
        %v5154 = vld [vmem:[#allocation22 + $0x48] sm:$0xf]
        %v5155 = vld [vmem:[#allocation22 + $0x4c] sm:$0xf]
        %v5156 = vld [vmem:[#allocation22 + $0x50] sm:$0xf]
        %v5157 = vld [vmem:[#allocation22 + $0x54] sm:$0xf]
        %v5158 = vld [vmem:[#allocation22 + $0x58] sm:$0xf]
        %v5159 = vld [vmem:[#allocation22 + $0x5c] sm:$0xf]
        %v5160 = vld [vmem:[#allocation22 + $0x60] sm:$0xf]
        %v5161 = vld [vmem:[#allocation22 + $0x64] sm:$0xf]
        %v5162 = vld [vmem:[#allocation22 + $0x68] sm:$0xf]
        %v5163 = vld [vmem:[#allocation22 + $0x6c] sm:$0xf]
        %v5164 = vld [vmem:[#allocation22 + $0x70] sm:$0xf]
        %v5165 = vld [vmem:[#allocation22 + $0x74] sm:$0xf]
        %v5166 = vld [vmem:[#allocation22 + $0x78] sm:$0xf]
        %v5167 = vld [vmem:[#allocation22 + $0x7c] sm:$0xf]
        %v5168 = vld [vmem:[#allocation22 + $0x80] sm:$0xf]
        %v5169 = vld [vmem:[#allocation22 + $0x84] sm:$0xf]
        %v5170 = vld [vmem:[#allocation22 + $0x88] sm:$0xf]
        %v5171 = vld [vmem:[#allocation22 + $0x8c] sm:$0xf]
        %v5172 = vld [vmem:[#allocation22 + $0x90] sm:$0xf]
        %v5173 = vld [vmem:[#allocation22 + $0x94] sm:$0xf]
        %v5174 = vld [vmem:[#allocation22 + $0x98] sm:$0xf]
        %v5175 = vld [vmem:[#allocation22 + $0x9c] sm:$0xf]
        %v5176 = vld [vmem:[#allocation22 + $0xa0] sm:$0xf]
        %v5177 = vld [vmem:[#allocation22 + $0xa4] sm:$0xf]
        %v5178 = vld [vmem:[#allocation22 + $0xa8] sm:$0xf]
        %v5179 = vld [vmem:[#allocation22 + $0xac] sm:$0xf]
        %v5180 = vld [vmem:[#allocation22 + $0xb0] sm:$0xf]
        %v5181 = vld [vmem:[#allocation22 + $0xb4] sm:$0xf]
        %v5182 = vld [vmem:[#allocation22 + $0xb8] sm:$0xf]
        %v5183 = vld [vmem:[#allocation22 + $0xbc] sm:$0xf]
        %v5184 = vld [vmem:[#allocation22 + $0xc0] sm:$0xf]
        %v5185 = vld [vmem:[#allocation22 + $0xc4] sm:$0xf]
        %v5186 = vld [vmem:[#allocation22 + $0xc8] sm:$0xf]
        %v5187 = vld [vmem:[#allocation22 + $0xcc] sm:$0xf]
        %v5188 = vld [vmem:[#allocation22 + $0xd0] sm:$0xf]
        %v5189 = vld [vmem:[#allocation22 + $0xd4] sm:$0xf]
        %v5190 = vld [vmem:[#allocation22 + $0xd8] sm:$0xf]
        %v5191 = vld [vmem:[#allocation22 + $0xdc] sm:$0xf]
        %v5192 = vld [vmem:[#allocation22 + $0xe0] sm:$0xf]
        %v5193 = vld [vmem:[#allocation22 + $0xe4] sm:$0xf]
        %v5194 = vld [vmem:[#allocation22 + $0xe8] sm:$0xf]
        %v5195 = vld [vmem:[#allocation22 + $0xec] sm:$0xf]
        %v5196 = vld [vmem:[#allocation22 + $0xf0] sm:$0xf]
        %v5197 = vld [vmem:[#allocation22 + $0xf4] sm:$0xf]
        %v5198 = vld [vmem:[#allocation22 + $0xf8] sm:$0xf]
        %v5199 = vld [vmem:[#allocation22 + $0xfc] sm:$0xf]
        %v5200 = vld [vmem:[#allocation22 + $0x100] sm:$0xf]
        %v5201 = vld [vmem:[#allocation22 + $0x104] sm:$0xf]
        %v5202 = vld [vmem:[#allocation22 + $0x108] sm:$0xf]
        %v5203 = vld [vmem:[#allocation22 + $0x10c] sm:$0xf]
        %v5204 = vld [vmem:[#allocation22 + $0x110] sm:$0xf]
        %v5205 = vld [vmem:[#allocation22 + $0x114] sm:$0xf]
        %v5206 = vld [vmem:[#allocation22 + $0x118] sm:$0xf]
        %v5207 = vld [vmem:[#allocation22 + $0x11c] sm:$0xf]
        %v5208 = vpack.c.bf16 %v5119, %v5117
        %v5209 = vpack.c.bf16 %v5124, %v5122
        %v5210 = vpack.c.bf16 %v5129, %v5127
        %v5211 = vpack.c.bf16 %v5134, %v5132
        %v5284 = vunpack.c.l.b16 %v5136
        %v5285 = vunpack.c.l.b16 %v5137
        %v5286 = vunpack.c.l.b16 %v5138
        %v5287 = vunpack.c.l.b16 %v5139
        %v5288 = vunpack.c.l.b16 %v5140
        %v5289 = vunpack.c.l.b16 %v5141
        %v5290 = vunpack.c.l.b16 %v5142
        %v5291 = vunpack.c.l.b16 %v5143
        %v5292 = vunpack.c.l.b16 %v5144
        %v5293 = vunpack.c.l.b16 %v5145
        %v5294 = vunpack.c.l.b16 %v5146
        %v5295 = vunpack.c.l.b16 %v5147
        %v5296 = vunpack.c.l.b16 %v5148
        %v5297 = vunpack.c.l.b16 %v5149
        %v5298 = vunpack.c.l.b16 %v5150
        %v5299 = vunpack.c.l.b16 %v5151
        %v5300 = vunpack.c.l.b16 %v5152
        %v5301 = vunpack.c.l.b16 %v5153
        %v5302 = vunpack.c.l.b16 %v5154
        %v5303 = vunpack.c.l.b16 %v5155
        %v5304 = vunpack.c.l.b16 %v5156
        %v5305 = vunpack.c.l.b16 %v5157
        %v5306 = vunpack.c.l.b16 %v5158
        %v5307 = vunpack.c.l.b16 %v5159
        %v5308 = vunpack.c.l.b16 %v5160
        %v5309 = vunpack.c.l.b16 %v5161
        %v5310 = vunpack.c.l.b16 %v5162
        %v5311 = vunpack.c.l.b16 %v5163
        %v5312 = vunpack.c.l.b16 %v5164
        %v5313 = vunpack.c.l.b16 %v5165
        %v5314 = vunpack.c.l.b16 %v5166
        %v5315 = vunpack.c.l.b16 %v5167
        %v5316 = vunpack.c.l.b16 %v5168
        %v5317 = vunpack.c.l.b16 %v5169
        %v5318 = vunpack.c.l.b16 %v5170
        %v5319 = vunpack.c.l.b16 %v5171
        %v5320 = vunpack.c.l.b16 %v5172
        %v5321 = vunpack.c.l.b16 %v5173
        %v5322 = vunpack.c.l.b16 %v5174
        %v5323 = vunpack.c.l.b16 %v5175
        %v5324 = vunpack.c.l.b16 %v5176
        %v5325 = vunpack.c.l.b16 %v5177
        %v5326 = vunpack.c.l.b16 %v5178
        %v5327 = vunpack.c.l.b16 %v5179
        %v5328 = vunpack.c.l.b16 %v5180
        %v5329 = vunpack.c.l.b16 %v5181
        %v5330 = vunpack.c.l.b16 %v5182
        %v5331 = vunpack.c.l.b16 %v5183
        %v5332 = vunpack.c.l.b16 %v5184
        %v5333 = vunpack.c.l.b16 %v5185
        %v5334 = vunpack.c.l.b16 %v5186
        %v5335 = vunpack.c.l.b16 %v5187
        %v5336 = vunpack.c.l.b16 %v5188
        %v5337 = vunpack.c.l.b16 %v5189
        %v5338 = vunpack.c.l.b16 %v5190
        %v5339 = vunpack.c.l.b16 %v5191
        %v5340 = vunpack.c.l.b16 %v5192
        %v5341 = vunpack.c.l.b16 %v5193
        %v5342 = vunpack.c.l.b16 %v5194
        %v5343 = vunpack.c.l.b16 %v5195
        %v5344 = vunpack.c.l.b16 %v5196
        %v5345 = vunpack.c.l.b16 %v5197
        %v5346 = vunpack.c.l.b16 %v5198
        %v5347 = vunpack.c.l.b16 %v5199
        %v5348 = vunpack.c.l.b16 %v5200
        %v5349 = vunpack.c.l.b16 %v5201
        %v5350 = vunpack.c.l.b16 %v5202
        %v5351 = vunpack.c.l.b16 %v5203
        %v5352 = vunpack.c.l.b16 %v5204
        %v5353 = vunpack.c.l.b16 %v5205
        %v5354 = vunpack.c.l.b16 %v5206
        %v5355 = vunpack.c.l.b16 %v5207
        %v5356 = vpack.c.b16 %v5285, %v5284
        %v5357 = vpack.c.b16 %v5287, %v5286
        %v5358 = vpack.c.b16 %v5289, %v5288
        %v5359 = vpack.c.b16 %v5291, %v5290
        %v5360 = vpack.c.b16 %v5293, %v5292
        %v5361 = vpack.c.b16 %v5295, %v5294
        %v5362 = vpack.c.b16 %v5297, %v5296
        %v5363 = vpack.c.b16 %v5299, %v5298
        %v5364 = vpack.c.b16 %v5301, %v5300
        %v5365 = vpack.c.b16 %v5303, %v5302
        %v5366 = vpack.c.b16 %v5305, %v5304
        %v5367 = vpack.c.b16 %v5307, %v5306
        %v5368 = vpack.c.b16 %v5309, %v5308
        %v5369 = vpack.c.b16 %v5311, %v5310
        %v5370 = vpack.c.b16 %v5313, %v5312
        %v5371 = vpack.c.b16 %v5315, %v5314
        %v5372 = vpack.c.b16 %v5317, %v5316
        %v5373 = vpack.c.b16 %v5319, %v5318
        %v5374 = vpack.c.b16 %v5321, %v5320
        %v5375 = vpack.c.b16 %v5323, %v5322
        %v5376 = vpack.c.b16 %v5325, %v5324
        %v5377 = vpack.c.b16 %v5327, %v5326
        %v5378 = vpack.c.b16 %v5329, %v5328
        %v5379 = vpack.c.b16 %v5331, %v5330
        %v5380 = vpack.c.b16 %v5333, %v5332
        %v5381 = vpack.c.b16 %v5335, %v5334
        %v5382 = vpack.c.b16 %v5337, %v5336
        %v5383 = vpack.c.b16 %v5339, %v5338
        %v5384 = vpack.c.b16 %v5341, %v5340
        %v5385 = vpack.c.b16 %v5343, %v5342
        %v5386 = vpack.c.b16 %v5345, %v5344
        %v5387 = vpack.c.b16 %v5347, %v5346
        %v5388 = vpack.c.b16 %v5349, %v5348
        %v5389 = vpack.c.b16 %v5351, %v5350
        %v5390 = vpack.c.b16 %v5353, %v5352
        %v5391 = vpack.c.b16 %v5355, %v5354
        %v5393 = vsel %vm844, %v5356, 0
        %v5396 = vsel %vm844, %v5357, 0
        %v5399 = vsel %vm844, %v5358, 0
        %v5402 = vsel %vm844, %v5359, 0
        %v5405 = vsel %vm844, %v5360, 0
        %v5408 = vsel %vm844, %v5361, 0
        %v5411 = vsel %vm844, %v5362, 0
        %v5414 = vsel %vm844, %v5363, 0
        %v5417 = vsel %vm844, %v5364, 0
        %v5420 = vsel %vm844, %v5365, 0
        %v5423 = vsel %vm844, %v5366, 0
        %v5426 = vsel %vm844, %v5367, 0
        %v5429 = vsel %vm844, %v5368, 0
        %v5432 = vsel %vm844, %v5369, 0
        %v5435 = vsel %vm844, %v5370, 0
        %v5438 = vsel %vm844, %v5371, 0
        %v5441 = vsel %vm844, %v5372, 0
        %v5444 = vsel %vm844, %v5373, 0
        %v5447 = vsel %vm844, %v5374, 0
        %v5450 = vsel %vm844, %v5375, 0
        %v5453 = vsel %vm844, %v5376, 0
        %v5456 = vsel %vm844, %v5377, 0
        %v5459 = vsel %vm844, %v5378, 0
        %v5462 = vsel %vm844, %v5379, 0
        %v5465 = vsel %vm844, %v5380, 0
        %v5468 = vsel %vm844, %v5381, 0
        %v5471 = vsel %vm844, %v5382, 0
        %v5474 = vsel %vm844, %v5383, 0
        %v5477 = vsel %vm844, %v5384, 0
        %v5480 = vsel %vm844, %v5385, 0
        %v5483 = vsel %vm844, %v5386, 0
        %v5486 = vsel %vm844, %v5387, 0
        %v5489 = vsel %vm844, %v5388, 0
        %v5492 = vsel %vm844, %v5389, 0
        %v5495 = vsel %vm844, %v5390, 0
        %v5498 = vsel %vm844, %v5391, 0
        %5500 = vmatpush.bf16.msra.mxu0 0
        %5501 = vmatpush.bf16.msra.mxu0 0
        %5502 = vmatpush.bf16.msra.mxu0 0
        %5503 = vmatpush.bf16.msra.mxu0 0
        %5504 = vmatpush.bf16.msra.mxu0 %v5211
        %5505 = vmatpush.bf16.msra.mxu0 %v5210
        %5506 = vmatpush.bf16.msra.mxu0 %v5209
        %5507 = vmatpush.bf16.msra.mxu0 %v5208
        %5508 = vmatmul.bf16.gmra.mxu0 %v5393
        %v5509 = vpop.f32.mrf.mxu0
        %v5510 = vadd.f32 0.0, %v5509
        %v5511 = vpop.f32.mrf.mxu0
        %v5512 = vadd.f32 0.0, %v5511
        %5513 = vmatmul.bf16.gmra.mxu0 %v5396
        %v5514 = vpop.f32.mrf.mxu0
        %v5515 = vadd.f32 0.0, %v5514
        %v5516 = vpop.f32.mrf.mxu0
        %v5517 = vadd.f32 0.0, %v5516
        %5518 = vmatmul.bf16.gmra.mxu0 %v5399
        %v5519 = vpop.f32.mrf.mxu0
        %v5520 = vadd.f32 0.0, %v5519
        %v5521 = vpop.f32.mrf.mxu0
        %v5522 = vadd.f32 0.0, %v5521
        %5523 = vmatmul.bf16.gmra.mxu0 %v5402
        %v5524 = vpop.f32.mrf.mxu0
        %v5525 = vadd.f32 0.0, %v5524
        %v5526 = vpop.f32.mrf.mxu0
        %v5527 = vadd.f32 0.0, %v5526
        %5528 = vmatmul.bf16.gmra.mxu0 %v5405
        %v5529 = vpop.f32.mrf.mxu0
        %v5530 = vadd.f32 0.0, %v5529
        %v5531 = vpop.f32.mrf.mxu0
        %v5532 = vadd.f32 0.0, %v5531
        %5533 = vmatmul.bf16.gmra.mxu0 %v5408
        %v5534 = vpop.f32.mrf.mxu0
        %v5535 = vadd.f32 0.0, %v5534
        %v5536 = vpop.f32.mrf.mxu0
        %v5537 = vadd.f32 0.0, %v5536
        %5538 = vmatmul.bf16.gmra.mxu0 %v5411
        %v5539 = vpop.f32.mrf.mxu0
        %v5540 = vadd.f32 0.0, %v5539
        %v5541 = vpop.f32.mrf.mxu0
        %v5542 = vadd.f32 0.0, %v5541
        %5543 = vmatmul.bf16.gmra.mxu0 %v5414
        %v5544 = vpop.f32.mrf.mxu0
        %v5545 = vadd.f32 0.0, %v5544
        %v5546 = vpop.f32.mrf.mxu0
        %v5547 = vadd.f32 0.0, %v5546
        %5548 = vmatmul.bf16.gmra.mxu0 %v5417
        %v5549 = vpop.f32.mrf.mxu0
        %v5550 = vadd.f32 0.0, %v5549
        %v5551 = vpop.f32.mrf.mxu0
        %v5552 = vadd.f32 0.0, %v5551
        %5553 = vmatmul.bf16.gmra.mxu0 %v5420
        %v5554 = vpop.f32.mrf.mxu0
        %v5555 = vadd.f32 0.0, %v5554
        %v5556 = vpop.f32.mrf.mxu0
        %v5557 = vadd.f32 0.0, %v5556
        %5558 = vmatmul.bf16.gmra.mxu0 %v5423
        %v5559 = vpop.f32.mrf.mxu0
        %v5560 = vadd.f32 0.0, %v5559
        %v5561 = vpop.f32.mrf.mxu0
        %v5562 = vadd.f32 0.0, %v5561
        %5563 = vmatmul.bf16.gmra.mxu0 %v5426
        %v5564 = vpop.f32.mrf.mxu0
        %v5565 = vadd.f32 0.0, %v5564
        %v5566 = vpop.f32.mrf.mxu0
        %v5567 = vadd.f32 0.0, %v5566
        %5568 = vmatmul.bf16.gmra.mxu0 %v5429
        %v5569 = vpop.f32.mrf.mxu0
        %v5570 = vadd.f32 0.0, %v5569
        %v5571 = vpop.f32.mrf.mxu0
        %v5572 = vadd.f32 0.0, %v5571
        %5573 = vmatmul.bf16.gmra.mxu0 %v5432
        %v5574 = vpop.f32.mrf.mxu0
        %v5575 = vadd.f32 0.0, %v5574
        %v5576 = vpop.f32.mrf.mxu0
        %v5577 = vadd.f32 0.0, %v5576
        %5578 = vmatmul.bf16.gmra.mxu0 %v5435
        %v5579 = vpop.f32.mrf.mxu0
        %v5580 = vadd.f32 0.0, %v5579
        %v5581 = vpop.f32.mrf.mxu0
        %v5582 = vadd.f32 0.0, %v5581
        %5583 = vmatmul.bf16.gmra.mxu0 %v5438
        %v5584 = vpop.f32.mrf.mxu0
        %v5585 = vadd.f32 0.0, %v5584
        %v5586 = vpop.f32.mrf.mxu0
        %v5587 = vadd.f32 0.0, %v5586
        %5588 = vmatmul.bf16.gmra.mxu0 %v5441
        %v5589 = vpop.f32.mrf.mxu0
        %v5590 = vadd.f32 0.0, %v5589
        %v5591 = vpop.f32.mrf.mxu0
        %v5592 = vadd.f32 0.0, %v5591
        %5593 = vmatmul.bf16.gmra.mxu0 %v5444
        %v5594 = vpop.f32.mrf.mxu0
        %v5595 = vadd.f32 0.0, %v5594
        %v5596 = vpop.f32.mrf.mxu0
        %v5597 = vadd.f32 0.0, %v5596
        %5598 = vmatmul.bf16.gmra.mxu0 %v5447
        %v5599 = vpop.f32.mrf.mxu0
        %v5600 = vadd.f32 0.0, %v5599
        %v5601 = vpop.f32.mrf.mxu0
        %v5602 = vadd.f32 0.0, %v5601
        %5603 = vmatmul.bf16.gmra.mxu0 %v5450
        %v5604 = vpop.f32.mrf.mxu0
        %v5605 = vadd.f32 0.0, %v5604
        %v5606 = vpop.f32.mrf.mxu0
        %v5607 = vadd.f32 0.0, %v5606
        %5608 = vmatmul.bf16.gmra.mxu0 %v5453
        %v5609 = vpop.f32.mrf.mxu0
        %v5610 = vadd.f32 0.0, %v5609
        %v5611 = vpop.f32.mrf.mxu0
        %v5612 = vadd.f32 0.0, %v5611
        %5613 = vmatmul.bf16.gmra.mxu0 %v5456
        %v5614 = vpop.f32.mrf.mxu0
        %v5615 = vadd.f32 0.0, %v5614
        %v5616 = vpop.f32.mrf.mxu0
        %v5617 = vadd.f32 0.0, %v5616
        %5618 = vmatmul.bf16.gmra.mxu0 %v5459
        %v5619 = vpop.f32.mrf.mxu0
        %v5620 = vadd.f32 0.0, %v5619
        %v5621 = vpop.f32.mrf.mxu0
        %v5622 = vadd.f32 0.0, %v5621
        %5623 = vmatmul.bf16.gmra.mxu0 %v5462
        %v5624 = vpop.f32.mrf.mxu0
        %v5625 = vadd.f32 0.0, %v5624
        %v5626 = vpop.f32.mrf.mxu0
        %v5627 = vadd.f32 0.0, %v5626
        %5628 = vmatmul.bf16.gmra.mxu0 %v5465
        %v5629 = vpop.f32.mrf.mxu0
        %v5630 = vadd.f32 0.0, %v5629
        %v5631 = vpop.f32.mrf.mxu0
        %v5632 = vadd.f32 0.0, %v5631
        %5633 = vmatmul.bf16.gmra.mxu0 %v5468
        %v5634 = vpop.f32.mrf.mxu0
        %v5635 = vadd.f32 0.0, %v5634
        %v5636 = vpop.f32.mrf.mxu0
        %v5637 = vadd.f32 0.0, %v5636
        %5638 = vmatmul.bf16.gmra.mxu0 %v5471
        %v5639 = vpop.f32.mrf.mxu0
        %v5640 = vadd.f32 0.0, %v5639
        %v5641 = vpop.f32.mrf.mxu0
        %v5642 = vadd.f32 0.0, %v5641
        %5643 = vmatmul.bf16.gmra.mxu0 %v5474
        %v5644 = vpop.f32.mrf.mxu0
        %v5645 = vadd.f32 0.0, %v5644
        %v5646 = vpop.f32.mrf.mxu0
        %v5647 = vadd.f32 0.0, %v5646
        %5648 = vmatmul.bf16.gmra.mxu0 %v5477
        %v5649 = vpop.f32.mrf.mxu0
        %v5650 = vadd.f32 0.0, %v5649
        %v5651 = vpop.f32.mrf.mxu0
        %v5652 = vadd.f32 0.0, %v5651
        %5653 = vmatmul.bf16.gmra.mxu0 %v5480
        %v5654 = vpop.f32.mrf.mxu0
        %v5655 = vadd.f32 0.0, %v5654
        %v5656 = vpop.f32.mrf.mxu0
        %v5657 = vadd.f32 0.0, %v5656
        %5658 = vmatmul.bf16.gmra.mxu0 %v5483
        %v5659 = vpop.f32.mrf.mxu0
        %v5660 = vadd.f32 0.0, %v5659
        %v5661 = vpop.f32.mrf.mxu0
        %v5662 = vadd.f32 0.0, %v5661
        %5663 = vmatmul.bf16.gmra.mxu0 %v5486
        %v5664 = vpop.f32.mrf.mxu0
        %v5665 = vadd.f32 0.0, %v5664
        %v5666 = vpop.f32.mrf.mxu0
        %v5667 = vadd.f32 0.0, %v5666
        %5668 = vmatmul.bf16.gmra.mxu0 %v5489
        %v5669 = vpop.f32.mrf.mxu0
        %v5670 = vadd.f32 0.0, %v5669
        %v5671 = vpop.f32.mrf.mxu0
        %v5672 = vadd.f32 0.0, %v5671
        %5673 = vmatmul.bf16.gmra.mxu0 %v5492
        %v5674 = vpop.f32.mrf.mxu0
        %v5675 = vadd.f32 0.0, %v5674
        %v5676 = vpop.f32.mrf.mxu0
        %v5677 = vadd.f32 0.0, %v5676
        %5678 = vmatmul.bf16.gmra.mxu0 %v5495
        %v5679 = vpop.f32.mrf.mxu0
        %v5680 = vadd.f32 0.0, %v5679
        %v5681 = vpop.f32.mrf.mxu0
        %v5682 = vadd.f32 0.0, %v5681
        %5683 = vmatmul.bf16.gmra.mxu0 %v5498
        %v5684 = vpop.f32.mrf.mxu0
        %v5685 = vadd.f32 0.0, %v5684
        %v5686 = vpop.f32.mrf.mxu0
        %v5687 = vadd.f32 0.0, %v5686
        %5688 = vdwg.mxu0
        %v5689 = vpack.c.bf16 %v5510, %v5510
        %v5690 = vpack.c.bf16 %v5512, %v5512
        %v5691 = vpack.c.bf16 %v5515, %v5515
        %v5692 = vpack.c.bf16 %v5517, %v5517
        %v5693 = vpack.c.bf16 %v5520, %v5520
        %v5694 = vpack.c.bf16 %v5522, %v5522
        %v5695 = vpack.c.bf16 %v5525, %v5525
        %v5696 = vpack.c.bf16 %v5527, %v5527
        %v5697 = vpack.c.bf16 %v5530, %v5530
        %v5698 = vpack.c.bf16 %v5532, %v5532
        %v5699 = vpack.c.bf16 %v5535, %v5535
        %v5700 = vpack.c.bf16 %v5537, %v5537
        %v5701 = vpack.c.bf16 %v5540, %v5540
        %v5702 = vpack.c.bf16 %v5542, %v5542
        %v5703 = vpack.c.bf16 %v5545, %v5545
        %v5704 = vpack.c.bf16 %v5547, %v5547
        %v5705 = vpack.c.bf16 %v5550, %v5550
        %v5706 = vpack.c.bf16 %v5552, %v5552
        %v5707 = vpack.c.bf16 %v5555, %v5555
        %v5708 = vpack.c.bf16 %v5557, %v5557
        %v5709 = vpack.c.bf16 %v5560, %v5560
        %v5710 = vpack.c.bf16 %v5562, %v5562
        %v5711 = vpack.c.bf16 %v5565, %v5565
        %v5712 = vpack.c.bf16 %v5567, %v5567
        %v5713 = vpack.c.bf16 %v5570, %v5570
        %v5714 = vpack.c.bf16 %v5572, %v5572
        %v5715 = vpack.c.bf16 %v5575, %v5575
        %v5716 = vpack.c.bf16 %v5577, %v5577
        %v5717 = vpack.c.bf16 %v5580, %v5580
        %v5718 = vpack.c.bf16 %v5582, %v5582
        %v5719 = vpack.c.bf16 %v5585, %v5585
        %v5720 = vpack.c.bf16 %v5587, %v5587
        %v5721 = vpack.c.bf16 %v5590, %v5590
        %v5722 = vpack.c.bf16 %v5592, %v5592
        %v5723 = vpack.c.bf16 %v5595, %v5595
        %v5724 = vpack.c.bf16 %v5597, %v5597
        %v5725 = vpack.c.bf16 %v5600, %v5600
        %v5726 = vpack.c.bf16 %v5602, %v5602
        %v5727 = vpack.c.bf16 %v5605, %v5605
        %v5728 = vpack.c.bf16 %v5607, %v5607
        %v5729 = vpack.c.bf16 %v5610, %v5610
        %v5730 = vpack.c.bf16 %v5612, %v5612
        %v5731 = vpack.c.bf16 %v5615, %v5615
        %v5732 = vpack.c.bf16 %v5617, %v5617
        %v5733 = vpack.c.bf16 %v5620, %v5620
        %v5734 = vpack.c.bf16 %v5622, %v5622
        %v5735 = vpack.c.bf16 %v5625, %v5625
        %v5736 = vpack.c.bf16 %v5627, %v5627
        %v5737 = vpack.c.bf16 %v5630, %v5630
        %v5738 = vpack.c.bf16 %v5632, %v5632
        %v5739 = vpack.c.bf16 %v5635, %v5635
        %v5740 = vpack.c.bf16 %v5637, %v5637
        %v5741 = vpack.c.bf16 %v5640, %v5640
        %v5742 = vpack.c.bf16 %v5642, %v5642
        %v5743 = vpack.c.bf16 %v5645, %v5645
        %v5744 = vpack.c.bf16 %v5647, %v5647
        %v5745 = vpack.c.bf16 %v5650, %v5650
        %v5746 = vpack.c.bf16 %v5652, %v5652
        %v5747 = vpack.c.bf16 %v5655, %v5655
        %v5748 = vpack.c.bf16 %v5657, %v5657
        %v5749 = vpack.c.bf16 %v5660, %v5660
        %v5750 = vpack.c.bf16 %v5662, %v5662
        %v5751 = vpack.c.bf16 %v5665, %v5665
        %v5752 = vpack.c.bf16 %v5667, %v5667
        %v5753 = vpack.c.bf16 %v5670, %v5670
        %v5754 = vpack.c.bf16 %v5672, %v5672
        %v5755 = vpack.c.bf16 %v5675, %v5675
        %v5756 = vpack.c.bf16 %v5677, %v5677
        %v5757 = vpack.c.bf16 %v5680, %v5680
        %v5758 = vpack.c.bf16 %v5682, %v5682
        %v5759 = vpack.c.bf16 %v5685, %v5685
        %v5760 = vpack.c.bf16 %v5687, %v5687
        %v5761 = vld [vmem:[%s14] sm:$0xf]
        %v5762 = vld [vmem:[%s14 + $0x4] sm:$0xf]
        %v5763 = vld [vmem:[%s14 + $0x8] sm:$0xf]
        %v5764 = vld [vmem:[%s14 + $0xc] sm:$0xf]
        %v5765 = vld [vmem:[%s14 + $0x10] sm:$0x3]
        %s5766 = scalar_lea.vmem %s14, 20
        %v5767 = vld [vmem:[%s5766] sm:$0xf]
        %v5768 = vld [vmem:[%s5766 + $0x4] sm:$0xf]
        %v5769 = vld [vmem:[%s5766 + $0x8] sm:$0xf]
        %v5770 = vld [vmem:[%s5766 + $0xc] sm:$0xf]
        %v5771 = vld [vmem:[%s5766 + $0x10] sm:$0x3]
        %v5780 = vunpack.c.l.b16 %v5697
        %v5781 = vunpack.c.l.b16 %v5698
        %v5782 = vunpack.c.l.b16 %v5699
        %v5783 = vunpack.c.l.b16 %v5700
        %v5784 = vunpack.c.l.b16 %v5701
        %v5785 = vunpack.c.l.b16 %v5702
        %v5786 = vunpack.c.l.b16 %v5703
        %v5787 = vunpack.c.l.b16 %v5704
        %v5788 = vpack.c.b16 %v5781, %v5780
        %v5789 = vpack.c.b16 %v5783, %v5782
        %v5790 = vpack.c.b16 %v5785, %v5784
        %v5791 = vpack.c.b16 %v5787, %v5786
        %v5797 = vunpack.c.l.b16 %v5767
        %v5798 = vunpack.c.l.b16 %v5768
        %v5799 = vunpack.c.l.b16 %v5769
        %v5800 = vunpack.c.l.b16 %v5770
        %v5801 = vunpack.c.l.b16 %v5771
        %v5802 = vpack.c.b16 %v5798, %v5797
        %v5803 = vpack.c.b16 %v5800, %v5799
        %v5804 = vpack.c.b16 %v5801, %v5801
        %vm5807 = vcmask 293888
        %v5809 = vsel %vm5807, %v5788, 0
        %v5812 = vsel %vm5807, %v5789, 0
        %v5815 = vsel %vm5807, %v5790, 0
        %v5818 = vsel %vm5807, %v5791, 0
        %v5821 = vsel %vm1359, %v5804, 0
        %5823 = vmatpush.bf16.msra.mxu0 0
        %5824 = vmatpush.bf16.msra.mxu0 0
        %5825 = vmatpush.bf16.msra.mxu0 0
        %5826 = vmatpush.bf16.msra.mxu0 0
        %5827 = vmatpush.bf16.msra.mxu0 0
        %5828 = vmatpush.bf16.msra.mxu0 %v5821
        %5829 = vmatpush.bf16.msra.mxu0 %v5803
        %5830 = vmatpush.bf16.msra.mxu0 %v5802
        %5831 = vmatmul.bf16.gmra.mxu0 %v5809
        %v5832 = vpop.f32.mrf.mxu0
        %v5833 = vadd.f32 0.0, %v5832
        %v5834 = vpop.f32.mrf.mxu0
        %v5835 = vadd.f32 0.0, %v5834
        %5836 = vmatmul.bf16.gmra.mxu0 %v5812
        %v5837 = vpop.f32.mrf.mxu0
        %v5838 = vadd.f32 0.0, %v5837
        %v5839 = vpop.f32.mrf.mxu0
        %v5840 = vadd.f32 0.0, %v5839
        %5841 = vmatmul.bf16.gmra.mxu0 %v5815
        %v5842 = vpop.f32.mrf.mxu0
        %v5843 = vadd.f32 0.0, %v5842
        %v5844 = vpop.f32.mrf.mxu0
        %v5845 = vadd.f32 0.0, %v5844
        %5846 = vmatmul.bf16.gmra.mxu0 %v5818
        %v5847 = vpop.f32.mrf.mxu0
        %v5848 = vadd.f32 0.0, %v5847
        %v5849 = vpop.f32.mrf.mxu0
        %v5850 = vadd.f32 0.0, %v5849
        %5851 = vdwg.mxu0
        %v5860 = vunpack.c.l.b16 %v5689
        %v5861 = vunpack.c.l.b16 %v5690
        %v5862 = vunpack.c.l.b16 %v5691
        %v5863 = vunpack.c.l.b16 %v5692
        %v5864 = vunpack.c.l.b16 %v5693
        %v5865 = vunpack.c.l.b16 %v5694
        %v5866 = vunpack.c.l.b16 %v5695
        %v5867 = vunpack.c.l.b16 %v5696
        %v5868 = vpack.c.b16 %v5861, %v5860
        %v5869 = vpack.c.b16 %v5863, %v5862
        %v5870 = vpack.c.b16 %v5865, %v5864
        %v5871 = vpack.c.b16 %v5867, %v5866
        %v5877 = vunpack.c.l.b16 %v5761
        %v5878 = vunpack.c.l.b16 %v5762
        %v5879 = vunpack.c.l.b16 %v5763
        %v5880 = vunpack.c.l.b16 %v5764
        %v5881 = vunpack.c.l.b16 %v5765
        %v5882 = vpack.c.b16 %v5878, %v5877
        %v5883 = vpack.c.b16 %v5880, %v5879
        %v5884 = vpack.c.b16 %v5881, %v5881
        %v5888 = vsel %vm5807, %v5868, 0
        %v5891 = vsel %vm5807, %v5869, 0
        %v5894 = vsel %vm5807, %v5870, 0
        %v5897 = vsel %vm5807, %v5871, 0
        %v5900 = vsel %vm1359, %v5884, 0
        %5902 = vmatpush.bf16.msra.mxu0 0
        %5903 = vmatpush.bf16.msra.mxu0 0
        %5904 = vmatpush.bf16.msra.mxu0 0
        %5905 = vmatpush.bf16.msra.mxu0 0
        %5906 = vmatpush.bf16.msra.mxu0 0
        %5907 = vmatpush.bf16.msra.mxu0 %v5900
        %5908 = vmatpush.bf16.msra.mxu0 %v5883
        %5909 = vmatpush.bf16.msra.mxu0 %v5882
        %5910 = vmatmul.bf16.gmra.mxu0 %v5888
        %v5911 = vpop.f32.mrf.mxu0
        %v5912 = vadd.f32 %v5833, %v5911
        %v5913 = vpop.f32.mrf.mxu0
        %v5914 = vadd.f32 %v5835, %v5913
        %5915 = vmatmul.bf16.gmra.mxu0 %v5891
        %v5916 = vpop.f32.mrf.mxu0
        %v5917 = vadd.f32 %v5838, %v5916
        %v5918 = vpop.f32.mrf.mxu0
        %v5919 = vadd.f32 %v5840, %v5918
        %5920 = vmatmul.bf16.gmra.mxu0 %v5894
        %v5921 = vpop.f32.mrf.mxu0
        %v5922 = vadd.f32 %v5843, %v5921
        %v5923 = vpop.f32.mrf.mxu0
        %v5924 = vadd.f32 %v5845, %v5923
        %5925 = vmatmul.bf16.gmra.mxu0 %v5897
        %v5926 = vpop.f32.mrf.mxu0
        %v5927 = vadd.f32 %v5848, %v5926
        %v5928 = vpop.f32.mrf.mxu0
        %v5929 = vadd.f32 %v5850, %v5928
        %5930 = vdwg.mxu0
        %s5931 = scalar_lea.vmem %s14, 40
        %v5932 = vld [vmem:[%s5931] sm:$0xf]
        %v5933 = vld [vmem:[%s5931 + $0x4] sm:$0xf]
        %v5934 = vld [vmem:[%s5931 + $0x8] sm:$0xf]
        %v5935 = vld [vmem:[%s5931 + $0xc] sm:$0xf]
        %v5936 = vld [vmem:[%s5931 + $0x10] sm:$0x3]
        %v5945 = vunpack.c.l.b16 %v5705
        %v5946 = vunpack.c.l.b16 %v5706
        %v5947 = vunpack.c.l.b16 %v5707
        %v5948 = vunpack.c.l.b16 %v5708
        %v5949 = vunpack.c.l.b16 %v5709
        %v5950 = vunpack.c.l.b16 %v5710
        %v5951 = vunpack.c.l.b16 %v5711
        %v5952 = vunpack.c.l.b16 %v5712
        %v5953 = vpack.c.b16 %v5946, %v5945
        %v5954 = vpack.c.b16 %v5948, %v5947
        %v5955 = vpack.c.b16 %v5950, %v5949
        %v5956 = vpack.c.b16 %v5952, %v5951
        %v5962 = vunpack.c.l.b16 %v5932
        %v5963 = vunpack.c.l.b16 %v5933
        %v5964 = vunpack.c.l.b16 %v5934
        %v5965 = vunpack.c.l.b16 %v5935
        %v5966 = vunpack.c.l.b16 %v5936
        %v5967 = vpack.c.b16 %v5963, %v5962
        %v5968 = vpack.c.b16 %v5965, %v5964
        %v5969 = vpack.c.b16 %v5966, %v5966
        %v5973 = vsel %vm5807, %v5953, 0
        %v5976 = vsel %vm5807, %v5954, 0
        %v5979 = vsel %vm5807, %v5955, 0
        %v5982 = vsel %vm5807, %v5956, 0
        %v5985 = vsel %vm1359, %v5969, 0
        %5987 = vmatpush.bf16.msra.mxu0 0
        %5988 = vmatpush.bf16.msra.mxu0 0
        %5989 = vmatpush.bf16.msra.mxu0 0
        %5990 = vmatpush.bf16.msra.mxu0 0
        %5991 = vmatpush.bf16.msra.mxu0 0
        %5992 = vmatpush.bf16.msra.mxu0 %v5985
        %5993 = vmatpush.bf16.msra.mxu0 %v5968
        %5994 = vmatpush.bf16.msra.mxu0 %v5967
        %5995 = vmatmul.bf16.gmra.mxu0 %v5973
        %v5996 = vpop.f32.mrf.mxu0
        %v5997 = vadd.f32 0.0, %v5996
        %v5998 = vpop.f32.mrf.mxu0
        %v5999 = vadd.f32 0.0, %v5998
        %6000 = vmatmul.bf16.gmra.mxu0 %v5976
        %v6001 = vpop.f32.mrf.mxu0
        %v6002 = vadd.f32 0.0, %v6001
        %v6003 = vpop.f32.mrf.mxu0
        %v6004 = vadd.f32 0.0, %v6003
        %6005 = vmatmul.bf16.gmra.mxu0 %v5979
        %v6006 = vpop.f32.mrf.mxu0
        %v6007 = vadd.f32 0.0, %v6006
        %v6008 = vpop.f32.mrf.mxu0
        %v6009 = vadd.f32 0.0, %v6008
        %6010 = vmatmul.bf16.gmra.mxu0 %v5982
        %v6011 = vpop.f32.mrf.mxu0
        %v6012 = vadd.f32 0.0, %v6011
        %v6013 = vpop.f32.mrf.mxu0
        %v6014 = vadd.f32 0.0, %v6013
        %6015 = vdwg.mxu0
        %v6016 = vadd.f32 %v5912, %v5997
        %v6017 = vadd.f32 %v5914, %v5999
        %v6018 = vadd.f32 %v5917, %v6002
        %v6019 = vadd.f32 %v5919, %v6004
        %v6020 = vadd.f32 %v5922, %v6007
        %v6021 = vadd.f32 %v5924, %v6009
        %v6022 = vadd.f32 %v5927, %v6012
        %v6023 = vadd.f32 %v5929, %v6014
        %s6024 = scalar_lea.vmem %s14, 60
        %v6025 = vld [vmem:[%s6024] sm:$0xf]
        %v6026 = vld [vmem:[%s6024 + $0x4] sm:$0xf]
        %v6027 = vld [vmem:[%s6024 + $0x8] sm:$0xf]
        %v6028 = vld [vmem:[%s6024 + $0xc] sm:$0xf]
        %v6029 = vld [vmem:[%s6024 + $0x10] sm:$0x3]
        %v6038 = vunpack.c.l.b16 %v5713
        %v6039 = vunpack.c.l.b16 %v5714
        %v6040 = vunpack.c.l.b16 %v5715
        %v6041 = vunpack.c.l.b16 %v5716
        %v6042 = vunpack.c.l.b16 %v5717
        %v6043 = vunpack.c.l.b16 %v5718
        %v6044 = vunpack.c.l.b16 %v5719
        %v6045 = vunpack.c.l.b16 %v5720
        %v6046 = vpack.c.b16 %v6039, %v6038
        %v6047 = vpack.c.b16 %v6041, %v6040
        %v6048 = vpack.c.b16 %v6043, %v6042
        %v6049 = vpack.c.b16 %v6045, %v6044
        %v6055 = vunpack.c.l.b16 %v6025
        %v6056 = vunpack.c.l.b16 %v6026
        %v6057 = vunpack.c.l.b16 %v6027
        %v6058 = vunpack.c.l.b16 %v6028
        %v6059 = vunpack.c.l.b16 %v6029
        %v6060 = vpack.c.b16 %v6056, %v6055
        %v6061 = vpack.c.b16 %v6058, %v6057
        %v6062 = vpack.c.b16 %v6059, %v6059
        %v6066 = vsel %vm5807, %v6046, 0
        %v6069 = vsel %vm5807, %v6047, 0
        %v6072 = vsel %vm5807, %v6048, 0
        %v6075 = vsel %vm5807, %v6049, 0
        %v6078 = vsel %vm1359, %v6062, 0
        %6080 = vmatpush.bf16.msra.mxu0 0
        %6081 = vmatpush.bf16.msra.mxu0 0
        %6082 = vmatpush.bf16.msra.mxu0 0
        %6083 = vmatpush.bf16.msra.mxu0 0
        %6084 = vmatpush.bf16.msra.mxu0 0
        %6085 = vmatpush.bf16.msra.mxu0 %v6078
        %6086 = vmatpush.bf16.msra.mxu0 %v6061
        %6087 = vmatpush.bf16.msra.mxu0 %v6060
        %6088 = vmatmul.bf16.gmra.mxu0 %v6066
        %v6089 = vpop.f32.mrf.mxu0
        %v6090 = vadd.f32 0.0, %v6089
        %v6091 = vpop.f32.mrf.mxu0
        %v6092 = vadd.f32 0.0, %v6091
        %6093 = vmatmul.bf16.gmra.mxu0 %v6069
        %v6094 = vpop.f32.mrf.mxu0
        %v6095 = vadd.f32 0.0, %v6094
        %v6096 = vpop.f32.mrf.mxu0
        %v6097 = vadd.f32 0.0, %v6096
        %6098 = vmatmul.bf16.gmra.mxu0 %v6072
        %v6099 = vpop.f32.mrf.mxu0
        %v6100 = vadd.f32 0.0, %v6099
        %v6101 = vpop.f32.mrf.mxu0
        %v6102 = vadd.f32 0.0, %v6101
        %6103 = vmatmul.bf16.gmra.mxu0 %v6075
        %v6104 = vpop.f32.mrf.mxu0
        %v6105 = vadd.f32 0.0, %v6104
        %v6106 = vpop.f32.mrf.mxu0
        %v6107 = vadd.f32 0.0, %v6106
        %6108 = vdwg.mxu0
        %v6109 = vadd.f32 %v6016, %v6090
        %v6110 = vadd.f32 %v6017, %v6092
        %v6111 = vadd.f32 %v6018, %v6095
        %v6112 = vadd.f32 %v6019, %v6097
        %v6113 = vadd.f32 %v6020, %v6100
        %v6114 = vadd.f32 %v6021, %v6102
        %v6115 = vadd.f32 %v6022, %v6105
        %v6116 = vadd.f32 %v6023, %v6107
        %s6117 = scalar_lea.vmem %s14, 80
        %v6118 = vld [vmem:[%s6117] sm:$0xf]
        %v6119 = vld [vmem:[%s6117 + $0x4] sm:$0xf]
        %v6120 = vld [vmem:[%s6117 + $0x8] sm:$0xf]
        %v6121 = vld [vmem:[%s6117 + $0xc] sm:$0xf]
        %v6122 = vld [vmem:[%s6117 + $0x10] sm:$0x3]
        %v6131 = vunpack.c.l.b16 %v5721
        %v6132 = vunpack.c.l.b16 %v5722
        %v6133 = vunpack.c.l.b16 %v5723
        %v6134 = vunpack.c.l.b16 %v5724
        %v6135 = vunpack.c.l.b16 %v5725
        %v6136 = vunpack.c.l.b16 %v5726
        %v6137 = vunpack.c.l.b16 %v5727
        %v6138 = vunpack.c.l.b16 %v5728
        %v6139 = vpack.c.b16 %v6132, %v6131
        %v6140 = vpack.c.b16 %v6134, %v6133
        %v6141 = vpack.c.b16 %v6136, %v6135
        %v6142 = vpack.c.b16 %v6138, %v6137
        %v6148 = vunpack.c.l.b16 %v6118
        %v6149 = vunpack.c.l.b16 %v6119
        %v6150 = vunpack.c.l.b16 %v6120
        %v6151 = vunpack.c.l.b16 %v6121
        %v6152 = vunpack.c.l.b16 %v6122
        %v6153 = vpack.c.b16 %v6149, %v6148
        %v6154 = vpack.c.b16 %v6151, %v6150
        %v6155 = vpack.c.b16 %v6152, %v6152
        %v6159 = vsel %vm5807, %v6139, 0
        %v6162 = vsel %vm5807, %v6140, 0
        %v6165 = vsel %vm5807, %v6141, 0
        %v6168 = vsel %vm5807, %v6142, 0
        %v6171 = vsel %vm1359, %v6155, 0
        %6173 = vmatpush.bf16.msra.mxu0 0
        %6174 = vmatpush.bf16.msra.mxu0 0
        %6175 = vmatpush.bf16.msra.mxu0 0
        %6176 = vmatpush.bf16.msra.mxu0 0
        %6177 = vmatpush.bf16.msra.mxu0 0
        %6178 = vmatpush.bf16.msra.mxu0 %v6171
        %6179 = vmatpush.bf16.msra.mxu0 %v6154
        %6180 = vmatpush.bf16.msra.mxu0 %v6153
        %6181 = vmatmul.bf16.gmra.mxu0 %v6159
        %v6182 = vpop.f32.mrf.mxu0
        %v6183 = vadd.f32 0.0, %v6182
        %v6184 = vpop.f32.mrf.mxu0
        %v6185 = vadd.f32 0.0, %v6184
        %6186 = vmatmul.bf16.gmra.mxu0 %v6162
        %v6187 = vpop.f32.mrf.mxu0
        %v6188 = vadd.f32 0.0, %v6187
        %v6189 = vpop.f32.mrf.mxu0
        %v6190 = vadd.f32 0.0, %v6189
        %6191 = vmatmul.bf16.gmra.mxu0 %v6165
        %v6192 = vpop.f32.mrf.mxu0
        %v6193 = vadd.f32 0.0, %v6192
        %v6194 = vpop.f32.mrf.mxu0
        %v6195 = vadd.f32 0.0, %v6194
        %6196 = vmatmul.bf16.gmra.mxu0 %v6168
        %v6197 = vpop.f32.mrf.mxu0
        %v6198 = vadd.f32 0.0, %v6197
        %v6199 = vpop.f32.mrf.mxu0
        %v6200 = vadd.f32 0.0, %v6199
        %6201 = vdwg.mxu0
        %v6202 = vadd.f32 %v6109, %v6183
        %v6203 = vadd.f32 %v6110, %v6185
        %v6204 = vadd.f32 %v6111, %v6188
        %v6205 = vadd.f32 %v6112, %v6190
        %v6206 = vadd.f32 %v6113, %v6193
        %v6207 = vadd.f32 %v6114, %v6195
        %v6208 = vadd.f32 %v6115, %v6198
        %v6209 = vadd.f32 %v6116, %v6200
        %s6210 = scalar_lea.vmem %s14, 100
        %v6211 = vld [vmem:[%s6210] sm:$0xf]
        %v6212 = vld [vmem:[%s6210 + $0x4] sm:$0xf]
        %v6213 = vld [vmem:[%s6210 + $0x8] sm:$0xf]
        %v6214 = vld [vmem:[%s6210 + $0xc] sm:$0xf]
        %v6215 = vld [vmem:[%s6210 + $0x10] sm:$0x3]
        %v6224 = vunpack.c.l.b16 %v5729
        %v6225 = vunpack.c.l.b16 %v5730
        %v6226 = vunpack.c.l.b16 %v5731
        %v6227 = vunpack.c.l.b16 %v5732
        %v6228 = vunpack.c.l.b16 %v5733
        %v6229 = vunpack.c.l.b16 %v5734
        %v6230 = vunpack.c.l.b16 %v5735
        %v6231 = vunpack.c.l.b16 %v5736
        %v6232 = vpack.c.b16 %v6225, %v6224
        %v6233 = vpack.c.b16 %v6227, %v6226
        %v6234 = vpack.c.b16 %v6229, %v6228
        %v6235 = vpack.c.b16 %v6231, %v6230
        %v6241 = vunpack.c.l.b16 %v6211
        %v6242 = vunpack.c.l.b16 %v6212
        %v6243 = vunpack.c.l.b16 %v6213
        %v6244 = vunpack.c.l.b16 %v6214
        %v6245 = vunpack.c.l.b16 %v6215
        %v6246 = vpack.c.b16 %v6242, %v6241
        %v6247 = vpack.c.b16 %v6244, %v6243
        %v6248 = vpack.c.b16 %v6245, %v6245
        %v6252 = vsel %vm5807, %v6232, 0
        %v6255 = vsel %vm5807, %v6233, 0
        %v6258 = vsel %vm5807, %v6234, 0
        %v6261 = vsel %vm5807, %v6235, 0
        %v6264 = vsel %vm1359, %v6248, 0
        %6266 = vmatpush.bf16.msra.mxu0 0
        %6267 = vmatpush.bf16.msra.mxu0 0
        %6268 = vmatpush.bf16.msra.mxu0 0
        %6269 = vmatpush.bf16.msra.mxu0 0
        %6270 = vmatpush.bf16.msra.mxu0 0
        %6271 = vmatpush.bf16.msra.mxu0 %v6264
        %6272 = vmatpush.bf16.msra.mxu0 %v6247
        %6273 = vmatpush.bf16.msra.mxu0 %v6246
        %6274 = vmatmul.bf16.gmra.mxu0 %v6252
        %v6275 = vpop.f32.mrf.mxu0
        %v6276 = vadd.f32 0.0, %v6275
        %v6277 = vpop.f32.mrf.mxu0
        %v6278 = vadd.f32 0.0, %v6277
        %6279 = vmatmul.bf16.gmra.mxu0 %v6255
        %v6280 = vpop.f32.mrf.mxu0
        %v6281 = vadd.f32 0.0, %v6280
        %v6282 = vpop.f32.mrf.mxu0
        %v6283 = vadd.f32 0.0, %v6282
        %6284 = vmatmul.bf16.gmra.mxu0 %v6258
        %v6285 = vpop.f32.mrf.mxu0
        %v6286 = vadd.f32 0.0, %v6285
        %v6287 = vpop.f32.mrf.mxu0
        %v6288 = vadd.f32 0.0, %v6287
        %6289 = vmatmul.bf16.gmra.mxu0 %v6261
        %v6290 = vpop.f32.mrf.mxu0
        %v6291 = vadd.f32 0.0, %v6290
        %v6292 = vpop.f32.mrf.mxu0
        %v6293 = vadd.f32 0.0, %v6292
        %6294 = vdwg.mxu0
        %v6295 = vadd.f32 %v6202, %v6276
        %v6296 = vadd.f32 %v6203, %v6278
        %v6297 = vadd.f32 %v6204, %v6281
        %v6298 = vadd.f32 %v6205, %v6283
        %v6299 = vadd.f32 %v6206, %v6286
        %v6300 = vadd.f32 %v6207, %v6288
        %v6301 = vadd.f32 %v6208, %v6291
        %v6302 = vadd.f32 %v6209, %v6293
        %s6303 = scalar_lea.vmem %s14, 120
        %v6304 = vld [vmem:[%s6303] sm:$0xf]
        %v6305 = vld [vmem:[%s6303 + $0x4] sm:$0xf]
        %v6306 = vld [vmem:[%s6303 + $0x8] sm:$0xf]
        %v6307 = vld [vmem:[%s6303 + $0xc] sm:$0xf]
        %v6308 = vld [vmem:[%s6303 + $0x10] sm:$0x3]
        %v6317 = vunpack.c.l.b16 %v5737
        %v6318 = vunpack.c.l.b16 %v5738
        %v6319 = vunpack.c.l.b16 %v5739
        %v6320 = vunpack.c.l.b16 %v5740
        %v6321 = vunpack.c.l.b16 %v5741
        %v6322 = vunpack.c.l.b16 %v5742
        %v6323 = vunpack.c.l.b16 %v5743
        %v6324 = vunpack.c.l.b16 %v5744
        %v6325 = vpack.c.b16 %v6318, %v6317
        %v6326 = vpack.c.b16 %v6320, %v6319
        %v6327 = vpack.c.b16 %v6322, %v6321
        %v6328 = vpack.c.b16 %v6324, %v6323
        %v6334 = vunpack.c.l.b16 %v6304
        %v6335 = vunpack.c.l.b16 %v6305
        %v6336 = vunpack.c.l.b16 %v6306
        %v6337 = vunpack.c.l.b16 %v6307
        %v6338 = vunpack.c.l.b16 %v6308
        %v6339 = vpack.c.b16 %v6335, %v6334
        %v6340 = vpack.c.b16 %v6337, %v6336
        %v6341 = vpack.c.b16 %v6338, %v6338
        %v6345 = vsel %vm5807, %v6325, 0
        %v6348 = vsel %vm5807, %v6326, 0
        %v6351 = vsel %vm5807, %v6327, 0
        %v6354 = vsel %vm5807, %v6328, 0
        %v6357 = vsel %vm1359, %v6341, 0
        %6359 = vmatpush.bf16.msra.mxu0 0
        %6360 = vmatpush.bf16.msra.mxu0 0
        %6361 = vmatpush.bf16.msra.mxu0 0
        %6362 = vmatpush.bf16.msra.mxu0 0
        %6363 = vmatpush.bf16.msra.mxu0 0
        %6364 = vmatpush.bf16.msra.mxu0 %v6357
        %6365 = vmatpush.bf16.msra.mxu0 %v6340
        %6366 = vmatpush.bf16.msra.mxu0 %v6339
        %6367 = vmatmul.bf16.gmra.mxu0 %v6345
        %v6368 = vpop.f32.mrf.mxu0
        %v6369 = vadd.f32 0.0, %v6368
        %v6370 = vpop.f32.mrf.mxu0
        %v6371 = vadd.f32 0.0, %v6370
        %6372 = vmatmul.bf16.gmra.mxu0 %v6348
        %v6373 = vpop.f32.mrf.mxu0
        %v6374 = vadd.f32 0.0, %v6373
        %v6375 = vpop.f32.mrf.mxu0
        %v6376 = vadd.f32 0.0, %v6375
        %6377 = vmatmul.bf16.gmra.mxu0 %v6351
        %v6378 = vpop.f32.mrf.mxu0
        %v6379 = vadd.f32 0.0, %v6378
        %v6380 = vpop.f32.mrf.mxu0
        %v6381 = vadd.f32 0.0, %v6380
        %6382 = vmatmul.bf16.gmra.mxu0 %v6354
        %v6383 = vpop.f32.mrf.mxu0
        %v6384 = vadd.f32 0.0, %v6383
        %v6385 = vpop.f32.mrf.mxu0
        %v6386 = vadd.f32 0.0, %v6385
        %6387 = vdwg.mxu0
        %v6388 = vadd.f32 %v6295, %v6369
        %v6389 = vadd.f32 %v6296, %v6371
        %v6390 = vadd.f32 %v6297, %v6374
        %v6391 = vadd.f32 %v6298, %v6376
        %v6392 = vadd.f32 %v6299, %v6379
        %v6393 = vadd.f32 %v6300, %v6381
        %v6394 = vadd.f32 %v6301, %v6384
        %v6395 = vadd.f32 %v6302, %v6386
        %s6396 = scalar_lea.vmem %s14, 140
        %v6397 = vld [vmem:[%s6396] sm:$0xf]
        %v6398 = vld [vmem:[%s6396 + $0x4] sm:$0xf]
        %v6399 = vld [vmem:[%s6396 + $0x8] sm:$0xf]
        %v6400 = vld [vmem:[%s6396 + $0xc] sm:$0xf]
        %v6401 = vld [vmem:[%s6396 + $0x10] sm:$0x3]
        %v6410 = vunpack.c.l.b16 %v5745
        %v6411 = vunpack.c.l.b16 %v5746
        %v6412 = vunpack.c.l.b16 %v5747
        %v6413 = vunpack.c.l.b16 %v5748
        %v6414 = vunpack.c.l.b16 %v5749
        %v6415 = vunpack.c.l.b16 %v5750
        %v6416 = vunpack.c.l.b16 %v5751
        %v6417 = vunpack.c.l.b16 %v5752
        %v6418 = vpack.c.b16 %v6411, %v6410
        %v6419 = vpack.c.b16 %v6413, %v6412
        %v6420 = vpack.c.b16 %v6415, %v6414
        %v6421 = vpack.c.b16 %v6417, %v6416
        %v6427 = vunpack.c.l.b16 %v6397
        %v6428 = vunpack.c.l.b16 %v6398
        %v6429 = vunpack.c.l.b16 %v6399
        %v6430 = vunpack.c.l.b16 %v6400
        %v6431 = vunpack.c.l.b16 %v6401
        %v6432 = vpack.c.b16 %v6428, %v6427
        %v6433 = vpack.c.b16 %v6430, %v6429
        %v6434 = vpack.c.b16 %v6431, %v6431
        %v6438 = vsel %vm5807, %v6418, 0
        %v6441 = vsel %vm5807, %v6419, 0
        %v6444 = vsel %vm5807, %v6420, 0
        %v6447 = vsel %vm5807, %v6421, 0
        %v6450 = vsel %vm1359, %v6434, 0
        %6452 = vmatpush.bf16.msra.mxu0 0
        %6453 = vmatpush.bf16.msra.mxu0 0
        %6454 = vmatpush.bf16.msra.mxu0 0
        %6455 = vmatpush.bf16.msra.mxu0 0
        %6456 = vmatpush.bf16.msra.mxu0 0
        %6457 = vmatpush.bf16.msra.mxu0 %v6450
        %6458 = vmatpush.bf16.msra.mxu0 %v6433
        %6459 = vmatpush.bf16.msra.mxu0 %v6432
        %6460 = vmatmul.bf16.gmra.mxu0 %v6438
        %v6461 = vpop.f32.mrf.mxu0
        %v6462 = vadd.f32 0.0, %v6461
        %v6463 = vpop.f32.mrf.mxu0
        %v6464 = vadd.f32 0.0, %v6463
        %6465 = vmatmul.bf16.gmra.mxu0 %v6441
        %v6466 = vpop.f32.mrf.mxu0
        %v6467 = vadd.f32 0.0, %v6466
        %v6468 = vpop.f32.mrf.mxu0
        %v6469 = vadd.f32 0.0, %v6468
        %6470 = vmatmul.bf16.gmra.mxu0 %v6444
        %v6471 = vpop.f32.mrf.mxu0
        %v6472 = vadd.f32 0.0, %v6471
        %v6473 = vpop.f32.mrf.mxu0
        %v6474 = vadd.f32 0.0, %v6473
        %6475 = vmatmul.bf16.gmra.mxu0 %v6447
        %v6476 = vpop.f32.mrf.mxu0
        %v6477 = vadd.f32 0.0, %v6476
        %v6478 = vpop.f32.mrf.mxu0
        %v6479 = vadd.f32 0.0, %v6478
        %6480 = vdwg.mxu0
        %v6481 = vadd.f32 %v6388, %v6462
        %v6482 = vadd.f32 %v6389, %v6464
        %v6483 = vadd.f32 %v6390, %v6467
        %v6484 = vadd.f32 %v6391, %v6469
        %v6485 = vadd.f32 %v6392, %v6472
        %v6486 = vadd.f32 %v6393, %v6474
        %v6487 = vadd.f32 %v6394, %v6477
        %v6488 = vadd.f32 %v6395, %v6479
        %s6489 = scalar_lea.vmem %s14, 160
        %v6490 = vld [vmem:[%s6489] sm:$0xf]
        %v6491 = vld [vmem:[%s6489 + $0x4] sm:$0xf]
        %v6492 = vld [vmem:[%s6489 + $0x8] sm:$0xf]
        %v6493 = vld [vmem:[%s6489 + $0xc] sm:$0xf]
        %v6494 = vld [vmem:[%s6489 + $0x10] sm:$0x3]
        %v6503 = vunpack.c.l.b16 %v5753
        %v6504 = vunpack.c.l.b16 %v5754
        %v6505 = vunpack.c.l.b16 %v5755
        %v6506 = vunpack.c.l.b16 %v5756
        %v6507 = vunpack.c.l.b16 %v5757
        %v6508 = vunpack.c.l.b16 %v5758
        %v6509 = vunpack.c.l.b16 %v5759
        %v6510 = vunpack.c.l.b16 %v5760
        %v6511 = vpack.c.b16 %v6504, %v6503
        %v6512 = vpack.c.b16 %v6506, %v6505
        %v6513 = vpack.c.b16 %v6508, %v6507
        %v6514 = vpack.c.b16 %v6510, %v6509
        %v6520 = vunpack.c.l.b16 %v6490
        %v6521 = vunpack.c.l.b16 %v6491
        %v6522 = vunpack.c.l.b16 %v6492
        %v6523 = vunpack.c.l.b16 %v6493
        %v6524 = vunpack.c.l.b16 %v6494
        %v6525 = vpack.c.b16 %v6521, %v6520
        %v6526 = vpack.c.b16 %v6523, %v6522
        %v6527 = vpack.c.b16 %v6524, %v6524
        %v6531 = vsel %vm5807, %v6511, 0
        %v6534 = vsel %vm5807, %v6512, 0
        %v6537 = vsel %vm5807, %v6513, 0
        %v6540 = vsel %vm5807, %v6514, 0
        %v6543 = vsel %vm1359, %v6527, 0
        %6545 = vmatpush.bf16.msra.mxu0 0
        %6546 = vmatpush.bf16.msra.mxu0 0
        %6547 = vmatpush.bf16.msra.mxu0 0
        %6548 = vmatpush.bf16.msra.mxu0 0
        %6549 = vmatpush.bf16.msra.mxu0 0
        %6550 = vmatpush.bf16.msra.mxu0 %v6543
        %6551 = vmatpush.bf16.msra.mxu0 %v6526
        %6552 = vmatpush.bf16.msra.mxu0 %v6525
        %6553 = vmatmul.bf16.gmra.mxu0 %v6531
        %v6554 = vpop.f32.mrf.mxu0
        %v6555 = vadd.f32 0.0, %v6554
        %v6556 = vpop.f32.mrf.mxu0
        %v6557 = vadd.f32 0.0, %v6556
        %6558 = vmatmul.bf16.gmra.mxu0 %v6534
        %v6559 = vpop.f32.mrf.mxu0
        %v6560 = vadd.f32 0.0, %v6559
        %v6561 = vpop.f32.mrf.mxu0
        %v6562 = vadd.f32 0.0, %v6561
        %6563 = vmatmul.bf16.gmra.mxu0 %v6537
        %v6564 = vpop.f32.mrf.mxu0
        %v6565 = vadd.f32 0.0, %v6564
        %v6566 = vpop.f32.mrf.mxu0
        %v6567 = vadd.f32 0.0, %v6566
        %6568 = vmatmul.bf16.gmra.mxu0 %v6540
        %v6569 = vpop.f32.mrf.mxu0
        %v6570 = vadd.f32 0.0, %v6569
        %v6571 = vpop.f32.mrf.mxu0
        %v6572 = vadd.f32 0.0, %v6571
        %6573 = vdwg.mxu0
        %v6574 = vadd.f32 %v6481, %v6555
        %v6575 = vadd.f32 %v6482, %v6557
        %v6576 = vadd.f32 %v6483, %v6560
        %v6577 = vadd.f32 %v6484, %v6562
        %v6578 = vadd.f32 %v6485, %v6565
        %v6579 = vadd.f32 %v6486, %v6567
        %v6580 = vadd.f32 %v6487, %v6570
        %v6581 = vadd.f32 %v6488, %v6572
        %v6582 = vld [vmem:[#allocation19 + $0x3] sm:$0x1]
        %v6583 = vperm.slane %v6582, 0
        %v6584 = vadd.f32 %v6574, %v6583
        %v6585 = vadd.f32 %v6575, %v6583
        %v6586 = vadd.f32 %v6576, %v6583
        %v6587 = vadd.f32 %v6577, %v6583
        %v6588 = vadd.f32 %v6578, %v6583
        %v6589 = vadd.f32 %v6579, %v6583
        %v6590 = vadd.f32 %v6580, %v6583
        %v6591 = vadd.f32 %v6581, %v6583
        %v6592 = vmax.f32 %v6584, 0.0
        %v6593 = vmax.f32 %v6585, 0.0
        %v6594 = vmax.f32 %v6586, 0.0
        %v6595 = vmax.f32 %v6587, 0.0
        %v6596 = vmax.f32 %v6588, 0.0
        %v6597 = vmax.f32 %v6589, 0.0
        %v6598 = vmax.f32 %v6590, 0.0
        %v6599 = vmax.f32 %v6591, 0.0
        %v6600 = vmin.f32 %v6592, 6.0
        %v6601 = vmin.f32 %v6593, 6.0
        %v6602 = vmin.f32 %v6594, 6.0
        %v6603 = vmin.f32 %v6595, 6.0
        %v6604 = vmin.f32 %v6596, 6.0
        %v6605 = vmin.f32 %v6597, 6.0
        %v6606 = vmin.f32 %v6598, 6.0
        %v6607 = vmin.f32 %v6599, 6.0
        %v6608 = vpack.c.bf16 %v6601, %v6600
        %v6609 = vpack.c.bf16 %v6603, %v6602
        %v6610 = vpack.c.bf16 %v6605, %v6604
        %v6611 = vpack.c.bf16 %v6607, %v6606
        %v6612 = vld [vmem:[#allocation23] sm:$0xf]
        %v6613 = vld [vmem:[#allocation23 + $0x4] sm:$0xf]
        %v6614 = vld [vmem:[#allocation23 + $0x8] sm:$0xf]
        %v6615 = vld [vmem:[#allocation23 + $0xc] sm:$0xf]
        %v6616 = vld [vmem:[#allocation23 + $0x10] sm:$0x3]
        %v6622 = vunpack.c.l.b16 %v6612
        %v6623 = vunpack.c.l.b16 %v6613
        %v6624 = vunpack.c.l.b16 %v6614
        %v6625 = vunpack.c.l.b16 %v6615
        %v6626 = vunpack.c.l.b16 %v6616
        %v6627 = vpack.c.b16 %v6623, %v6622
        %v6628 = vpack.c.b16 %v6625, %v6624
        %v6629 = vpack.c.b16 %v6626, %v6626
        %v6633 = vsel %vm5807, %v6608, 0
        %v6636 = vsel %vm5807, %v6609, 0
        %v6639 = vsel %vm5807, %v6610, 0
        %v6642 = vsel %vm5807, %v6611, 0
        %v6645 = vsel %vm1359, %v6629, 0
        %6647 = vmatpush.bf16.msra.mxu0 0
        %6648 = vmatpush.bf16.msra.mxu0 0
        %6649 = vmatpush.bf16.msra.mxu0 0
        %6650 = vmatpush.bf16.msra.mxu0 0
        %6651 = vmatpush.bf16.msra.mxu0 0
        %6652 = vmatpush.bf16.msra.mxu0 %v6645
        %6653 = vmatpush.bf16.msra.mxu0 %v6628
        %6654 = vmatpush.bf16.msra.mxu0 %v6627
        %6655 = vmatmul.bf16.gmra.mxu0 %v6633
        %v6656 = vpop.f32.mrf.mxu0
        %v6657 = vadd.f32 0.0, %v6656
        %v6658 = vpop.f32.mrf.mxu0
        %v6659 = vadd.f32 0.0, %v6658
        %6660 = vmatmul.bf16.gmra.mxu0 %v6636
        %v6661 = vpop.f32.mrf.mxu0
        %v6662 = vadd.f32 0.0, %v6661
        %v6663 = vpop.f32.mrf.mxu0
        %v6664 = vadd.f32 0.0, %v6663
        %6665 = vmatmul.bf16.gmra.mxu0 %v6639
        %v6666 = vpop.f32.mrf.mxu0
        %v6667 = vadd.f32 0.0, %v6666
        %v6668 = vpop.f32.mrf.mxu0
        %v6669 = vadd.f32 0.0, %v6668
        %6670 = vmatmul.bf16.gmra.mxu0 %v6642
        %v6671 = vpop.f32.mrf.mxu0
        %v6672 = vadd.f32 0.0, %v6671
        %v6673 = vpop.f32.mrf.mxu0
        %v6674 = vadd.f32 0.0, %v6673
        %6675 = vdwg.mxu0
        %v6676 = vmul.f32 %v6657, 0.5
        %v6677 = vmul.f32 %v6659, 0.5
        %v6678 = vmul.f32 %v6662, 0.5
        %v6679 = vmul.f32 %v6664, 0.5
        %v6680 = vmul.f32 %v6667, 0.5
        %v6681 = vmul.f32 %v6669, 0.5
        %v6682 = vmul.f32 %v6672, 0.5
        %v6683 = vmul.f32 %v6674, 0.5
        %v6684 = vmul.f32 %v6657, 0.70710677
        %v6685 = vmul.f32 %v6659, 0.70710677
        %v6686 = vmul.f32 %v6662, 0.70710677
        %v6687 = vmul.f32 %v6664, 0.70710677
        %v6688 = vmul.f32 %v6667, 0.70710677
        %v6689 = vmul.f32 %v6669, 0.70710677
        %v6690 = vmul.f32 %v6672, 0.70710677
        %v6691 = vmul.f32 %v6674, 0.70710677
        %v6692 = vmul.f32 %v6684, %v6684
        %v6693 = vmin.f32 16.0, %v6692
        %v6694 = vmul.f32 %v6693, 2.1237322e-06
        %v6695 = vadd.f32 %v6694, 0.00028619796
        %v6696 = vmul.f32 %v6693, %v6695
        %v6697 = vadd.f32 %v6696, 0.0036580483
        %v6698 = vmul.f32 %v6693, %v6697
        %v6699 = vadd.f32 %v6698, 0.05243302
        %v6700 = vmul.f32 %v6693, %v6699
        %v6701 = vadd.f32 %v6700, 0.18741608
        %v6702 = vmul.f32 %v6693, %v6701
        %v6703 = vadd.f32 %v6702, 1.1283791
        %v6704 = vmul.f32 %v6684, %v6703
        %v6705 = vmul.f32 %v6693, 3.8918573e-05
        %v6706 = vadd.f32 %v6705, 0.001143296
        %v6707 = vmul.f32 %v6693, %v6706
        %v6708 = vadd.f32 %v6707, 0.014752088
        %v6709 = vmul.f32 %v6693, %v6708
        %v6710 = vadd.f32 %v6709, 0.112945676
        %v6711 = vmul.f32 %v6693, %v6710
        %v6712 = vadd.f32 %v6711, 0.4994258
        %v6713 = vmul.f32 %v6693, %v6712
        %v6714 = vadd.f32 %v6713, 1.0
        %v6715 = vrcp.pop %v6714
        %v6716 = vmul.f32 %v6714, %v6715
        %v6717 = vsub.f32 1.0, %v6716
        %v6718 = vmul.f32 %v6715, %v6717
        %v6719 = vadd.f32 %v6715, %v6718
        %vm6720 = vweird.f32 %v6714
        %vm6721 = vweird.f32 %v6715
        %vm6722 = vmor %vm6720, %vm6721
        %v6723 = vsel %vm6722, %v6715, %v6719
        %v6724 = vand.u32 2147483647, %v6714
        %vm6725 = vcmp.eq.f32.partialorder %v6724, 8.507059e+37
        %v6726 = vand.u32 %v6714, 2147483648
        %v6727 = vor.u32 1.1754944e-38, %v6726
        %v6728 = vsel %vm6725, %v6727, %v6723
        %v6729 = vmul.f32 %v6704, %v6728
        %v6730 = vmin.f32 %v6729, 1.0
        %v6731 = vmax.f32 %v6730, -1.0
        %v6732 = vmul.f32 %v6685, %v6685
        %v6733 = vmin.f32 16.0, %v6732
        %v6734 = vmul.f32 %v6733, 2.1237322e-06
        %v6735 = vadd.f32 %v6734, 0.00028619796
        %v6736 = vmul.f32 %v6733, %v6735
        %v6737 = vadd.f32 %v6736, 0.0036580483
        %v6738 = vmul.f32 %v6733, %v6737
        %v6739 = vadd.f32 %v6738, 0.05243302
        %v6740 = vmul.f32 %v6733, %v6739
        %v6741 = vadd.f32 %v6740, 0.18741608
        %v6742 = vmul.f32 %v6733, %v6741
        %v6743 = vadd.f32 %v6742, 1.1283791
        %v6744 = vmul.f32 %v6685, %v6743
        %v6745 = vmul.f32 %v6733, 3.8918573e-05
        %v6746 = vadd.f32 %v6745, 0.001143296
        %v6747 = vmul.f32 %v6733, %v6746
        %v6748 = vadd.f32 %v6747, 0.014752088
        %v6749 = vmul.f32 %v6733, %v6748
        %v6750 = vadd.f32 %v6749, 0.112945676
        %v6751 = vmul.f32 %v6733, %v6750
        %v6752 = vadd.f32 %v6751, 0.4994258
        %v6753 = vmul.f32 %v6733, %v6752
        %v6754 = vadd.f32 %v6753, 1.0
        %v6755 = vrcp.pop %v6754
        %v6756 = vmul.f32 %v6754, %v6755
        %v6757 = vsub.f32 1.0, %v6756
        %v6758 = vmul.f32 %v6755, %v6757
        %v6759 = vadd.f32 %v6755, %v6758
        %vm6760 = vweird.f32 %v6754
        %vm6761 = vweird.f32 %v6755
        %vm6762 = vmor %vm6760, %vm6761
        %v6763 = vsel %vm6762, %v6755, %v6759
        %v6764 = vand.u32 2147483647, %v6754
        %vm6765 = vcmp.eq.f32.partialorder %v6764, 8.507059e+37
        %v6766 = vand.u32 %v6754, 2147483648
        %v6767 = vor.u32 1.1754944e-38, %v6766
        %v6768 = vsel %vm6765, %v6767, %v6763
        %v6769 = vmul.f32 %v6744, %v6768
        %v6770 = vmin.f32 %v6769, 1.0
        %v6771 = vmax.f32 %v6770, -1.0
        %v6772 = vmul.f32 %v6686, %v6686
        %v6773 = vmin.f32 16.0, %v6772
        %v6774 = vmul.f32 %v6773, 2.1237322e-06
        %v6775 = vadd.f32 %v6774, 0.00028619796
        %v6776 = vmul.f32 %v6773, %v6775
        %v6777 = vadd.f32 %v6776, 0.0036580483
        %v6778 = vmul.f32 %v6773, %v6777
        %v6779 = vadd.f32 %v6778, 0.05243302
        %v6780 = vmul.f32 %v6773, %v6779
        %v6781 = vadd.f32 %v6780, 0.18741608
        %v6782 = vmul.f32 %v6773, %v6781
        %v6783 = vadd.f32 %v6782, 1.1283791
        %v6784 = vmul.f32 %v6686, %v6783
        %v6785 = vmul.f32 %v6773, 3.8918573e-05
        %v6786 = vadd.f32 %v6785, 0.001143296
        %v6787 = vmul.f32 %v6773, %v6786
        %v6788 = vadd.f32 %v6787, 0.014752088
        %v6789 = vmul.f32 %v6773, %v6788
        %v6790 = vadd.f32 %v6789, 0.112945676
        %v6791 = vmul.f32 %v6773, %v6790
        %v6792 = vadd.f32 %v6791, 0.4994258
        %v6793 = vmul.f32 %v6773, %v6792
        %v6794 = vadd.f32 %v6793, 1.0
        %v6795 = vrcp.pop %v6794
        %v6796 = vmul.f32 %v6794, %v6795
        %v6797 = vsub.f32 1.0, %v6796
        %v6798 = vmul.f32 %v6795, %v6797
        %v6799 = vadd.f32 %v6795, %v6798
        %vm6800 = vweird.f32 %v6794
        %vm6801 = vweird.f32 %v6795
        %vm6802 = vmor %vm6800, %vm6801
        %v6803 = vsel %vm6802, %v6795, %v6799
        %v6804 = vand.u32 2147483647, %v6794
        %vm6805 = vcmp.eq.f32.partialorder %v6804, 8.507059e+37
        %v6806 = vand.u32 %v6794, 2147483648
        %v6807 = vor.u32 1.1754944e-38, %v6806
        %v6808 = vsel %vm6805, %v6807, %v6803
        %v6809 = vmul.f32 %v6784, %v6808
        %v6810 = vmin.f32 %v6809, 1.0
        %v6811 = vmax.f32 %v6810, -1.0
        %v6812 = vmul.f32 %v6687, %v6687
        %v6813 = vmin.f32 16.0, %v6812
        %v6814 = vmul.f32 %v6813, 2.1237322e-06
        %v6815 = vadd.f32 %v6814, 0.00028619796
        %v6816 = vmul.f32 %v6813, %v6815
        %v6817 = vadd.f32 %v6816, 0.0036580483
        %v6818 = vmul.f32 %v6813, %v6817
        %v6819 = vadd.f32 %v6818, 0.05243302
        %v6820 = vmul.f32 %v6813, %v6819
        %v6821 = vadd.f32 %v6820, 0.18741608
        %v6822 = vmul.f32 %v6813, %v6821
        %v6823 = vadd.f32 %v6822, 1.1283791
        %v6824 = vmul.f32 %v6687, %v6823
        %v6825 = vmul.f32 %v6813, 3.8918573e-05
        %v6826 = vadd.f32 %v6825, 0.001143296
        %v6827 = vmul.f32 %v6813, %v6826
        %v6828 = vadd.f32 %v6827, 0.014752088
        %v6829 = vmul.f32 %v6813, %v6828
        %v6830 = vadd.f32 %v6829, 0.112945676
        %v6831 = vmul.f32 %v6813, %v6830
        %v6832 = vadd.f32 %v6831, 0.4994258
        %v6833 = vmul.f32 %v6813, %v6832
        %v6834 = vadd.f32 %v6833, 1.0
        %v6835 = vrcp.pop %v6834
        %v6836 = vmul.f32 %v6834, %v6835
        %v6837 = vsub.f32 1.0, %v6836
        %v6838 = vmul.f32 %v6835, %v6837
        %v6839 = vadd.f32 %v6835, %v6838
        %vm6840 = vweird.f32 %v6834
        %vm6841 = vweird.f32 %v6835
        %vm6842 = vmor %vm6840, %vm6841
        %v6843 = vsel %vm6842, %v6835, %v6839
        %v6844 = vand.u32 2147483647, %v6834
        %vm6845 = vcmp.eq.f32.partialorder %v6844, 8.507059e+37
        %v6846 = vand.u32 %v6834, 2147483648
        %v6847 = vor.u32 1.1754944e-38, %v6846
        %v6848 = vsel %vm6845, %v6847, %v6843
        %v6849 = vmul.f32 %v6824, %v6848
        %v6850 = vmin.f32 %v6849, 1.0
        %v6851 = vmax.f32 %v6850, -1.0
        %v6852 = vmul.f32 %v6688, %v6688
        %v6853 = vmin.f32 16.0, %v6852
        %v6854 = vmul.f32 %v6853, 2.1237322e-06
        %v6855 = vadd.f32 %v6854, 0.00028619796
        %v6856 = vmul.f32 %v6853, %v6855
        %v6857 = vadd.f32 %v6856, 0.0036580483
        %v6858 = vmul.f32 %v6853, %v6857
        %v6859 = vadd.f32 %v6858, 0.05243302
        %v6860 = vmul.f32 %v6853, %v6859
        %v6861 = vadd.f32 %v6860, 0.18741608
        %v6862 = vmul.f32 %v6853, %v6861
        %v6863 = vadd.f32 %v6862, 1.1283791
        %v6864 = vmul.f32 %v6688, %v6863
        %v6865 = vmul.f32 %v6853, 3.8918573e-05
        %v6866 = vadd.f32 %v6865, 0.001143296
        %v6867 = vmul.f32 %v6853, %v6866
        %v6868 = vadd.f32 %v6867, 0.014752088
        %v6869 = vmul.f32 %v6853, %v6868
        %v6870 = vadd.f32 %v6869, 0.112945676
        %v6871 = vmul.f32 %v6853, %v6870
        %v6872 = vadd.f32 %v6871, 0.4994258
        %v6873 = vmul.f32 %v6853, %v6872
        %v6874 = vadd.f32 %v6873, 1.0
        %v6875 = vrcp.pop %v6874
        %v6876 = vmul.f32 %v6874, %v6875
        %v6877 = vsub.f32 1.0, %v6876
        %v6878 = vmul.f32 %v6875, %v6877
        %v6879 = vadd.f32 %v6875, %v6878
        %vm6880 = vweird.f32 %v6874
        %vm6881 = vweird.f32 %v6875
        %vm6882 = vmor %vm6880, %vm6881
        %v6883 = vsel %vm6882, %v6875, %v6879
        %v6884 = vand.u32 2147483647, %v6874
        %vm6885 = vcmp.eq.f32.partialorder %v6884, 8.507059e+37
        %v6886 = vand.u32 %v6874, 2147483648
        %v6887 = vor.u32 1.1754944e-38, %v6886
        %v6888 = vsel %vm6885, %v6887, %v6883
        %v6889 = vmul.f32 %v6864, %v6888
        %v6890 = vmin.f32 %v6889, 1.0
        %v6891 = vmax.f32 %v6890, -1.0
        %v6892 = vmul.f32 %v6689, %v6689
        %v6893 = vmin.f32 16.0, %v6892
        %v6894 = vmul.f32 %v6893, 2.1237322e-06
        %v6895 = vadd.f32 %v6894, 0.00028619796
        %v6896 = vmul.f32 %v6893, %v6895
        %v6897 = vadd.f32 %v6896, 0.0036580483
        %v6898 = vmul.f32 %v6893, %v6897
        %v6899 = vadd.f32 %v6898, 0.05243302
        %v6900 = vmul.f32 %v6893, %v6899
        %v6901 = vadd.f32 %v6900, 0.18741608
        %v6902 = vmul.f32 %v6893, %v6901
        %v6903 = vadd.f32 %v6902, 1.1283791
        %v6904 = vmul.f32 %v6689, %v6903
        %v6905 = vmul.f32 %v6893, 3.8918573e-05
        %v6906 = vadd.f32 %v6905, 0.001143296
        %v6907 = vmul.f32 %v6893, %v6906
        %v6908 = vadd.f32 %v6907, 0.014752088
        %v6909 = vmul.f32 %v6893, %v6908
        %v6910 = vadd.f32 %v6909, 0.112945676
        %v6911 = vmul.f32 %v6893, %v6910
        %v6912 = vadd.f32 %v6911, 0.4994258
        %v6913 = vmul.f32 %v6893, %v6912
        %v6914 = vadd.f32 %v6913, 1.0
        %v6915 = vrcp.pop %v6914
        %v6916 = vmul.f32 %v6914, %v6915
        %v6917 = vsub.f32 1.0, %v6916
        %v6918 = vmul.f32 %v6915, %v6917
        %v6919 = vadd.f32 %v6915, %v6918
        %vm6920 = vweird.f32 %v6914
        %vm6921 = vweird.f32 %v6915
        %vm6922 = vmor %vm6920, %vm6921
        %v6923 = vsel %vm6922, %v6915, %v6919
        %v6924 = vand.u32 2147483647, %v6914
        %vm6925 = vcmp.eq.f32.partialorder %v6924, 8.507059e+37
        %v6926 = vand.u32 %v6914, 2147483648
        %v6927 = vor.u32 1.1754944e-38, %v6926
        %v6928 = vsel %vm6925, %v6927, %v6923
        %v6929 = vmul.f32 %v6904, %v6928
        %v6930 = vmin.f32 %v6929, 1.0
        %v6931 = vmax.f32 %v6930, -1.0
        %v6932 = vmul.f32 %v6690, %v6690
        %v6933 = vmin.f32 16.0, %v6932
        %v6934 = vmul.f32 %v6933, 2.1237322e-06
        %v6935 = vadd.f32 %v6934, 0.00028619796
        %v6936 = vmul.f32 %v6933, %v6935
        %v6937 = vadd.f32 %v6936, 0.0036580483
        %v6938 = vmul.f32 %v6933, %v6937
        %v6939 = vadd.f32 %v6938, 0.05243302
        %v6940 = vmul.f32 %v6933, %v6939
        %v6941 = vadd.f32 %v6940, 0.18741608
        %v6942 = vmul.f32 %v6933, %v6941
        %v6943 = vadd.f32 %v6942, 1.1283791
        %v6944 = vmul.f32 %v6690, %v6943
        %v6945 = vmul.f32 %v6933, 3.8918573e-05
        %v6946 = vadd.f32 %v6945, 0.001143296
        %v6947 = vmul.f32 %v6933, %v6946
        %v6948 = vadd.f32 %v6947, 0.014752088
        %v6949 = vmul.f32 %v6933, %v6948
        %v6950 = vadd.f32 %v6949, 0.112945676
        %v6951 = vmul.f32 %v6933, %v6950
        %v6952 = vadd.f32 %v6951, 0.4994258
        %v6953 = vmul.f32 %v6933, %v6952
        %v6954 = vadd.f32 %v6953, 1.0
        %v6955 = vrcp.pop %v6954
        %v6956 = vmul.f32 %v6954, %v6955
        %v6957 = vsub.f32 1.0, %v6956
        %v6958 = vmul.f32 %v6955, %v6957
        %v6959 = vadd.f32 %v6955, %v6958
        %vm6960 = vweird.f32 %v6954
        %vm6961 = vweird.f32 %v6955
        %vm6962 = vmor %vm6960, %vm6961
        %v6963 = vsel %vm6962, %v6955, %v6959
        %v6964 = vand.u32 2147483647, %v6954
        %vm6965 = vcmp.eq.f32.partialorder %v6964, 8.507059e+37
        %v6966 = vand.u32 %v6954, 2147483648
        %v6967 = vor.u32 1.1754944e-38, %v6966
        %v6968 = vsel %vm6965, %v6967, %v6963
        %v6969 = vmul.f32 %v6944, %v6968
        %v6970 = vmin.f32 %v6969, 1.0
        %v6971 = vmax.f32 %v6970, -1.0
        %v6972 = vmul.f32 %v6691, %v6691
        %v6973 = vmin.f32 16.0, %v6972
        %v6974 = vmul.f32 %v6973, 2.1237322e-06
        %v6975 = vadd.f32 %v6974, 0.00028619796
        %v6976 = vmul.f32 %v6973, %v6975
        %v6977 = vadd.f32 %v6976, 0.0036580483
        %v6978 = vmul.f32 %v6973, %v6977
        %v6979 = vadd.f32 %v6978, 0.05243302
        %v6980 = vmul.f32 %v6973, %v6979
        %v6981 = vadd.f32 %v6980, 0.18741608
        %v6982 = vmul.f32 %v6973, %v6981
        %v6983 = vadd.f32 %v6982, 1.1283791
        %v6984 = vmul.f32 %v6691, %v6983
        %v6985 = vmul.f32 %v6973, 3.8918573e-05
        %v6986 = vadd.f32 %v6985, 0.001143296
        %v6987 = vmul.f32 %v6973, %v6986
        %v6988 = vadd.f32 %v6987, 0.014752088
        %v6989 = vmul.f32 %v6973, %v6988
        %v6990 = vadd.f32 %v6989, 0.112945676
        %v6991 = vmul.f32 %v6973, %v6990
        %v6992 = vadd.f32 %v6991, 0.4994258
        %v6993 = vmul.f32 %v6973, %v6992
        %v6994 = vadd.f32 %v6993, 1.0
        %v6995 = vrcp.pop %v6994
        %v6996 = vmul.f32 %v6994, %v6995
        %v6997 = vsub.f32 1.0, %v6996
        %v6998 = vmul.f32 %v6995, %v6997
        %v6999 = vadd.f32 %v6995, %v6998
        %vm7000 = vweird.f32 %v6994
        %vm7001 = vweird.f32 %v6995
        %vm7002 = vmor %vm7000, %vm7001
        %v7003 = vsel %vm7002, %v6995, %v6999
        %v7004 = vand.u32 2147483647, %v6994
        %vm7005 = vcmp.eq.f32.partialorder %v7004, 8.507059e+37
        %v7006 = vand.u32 %v6994, 2147483648
        %v7007 = vor.u32 1.1754944e-38, %v7006
        %v7008 = vsel %vm7005, %v7007, %v7003
        %v7009 = vmul.f32 %v6984, %v7008
        %v7010 = vmin.f32 %v7009, 1.0
        %v7011 = vmax.f32 %v7010, -1.0
        %v7012 = vadd.f32 %v6731, 1.0
        %v7013 = vadd.f32 %v6771, 1.0
        %v7014 = vadd.f32 %v6811, 1.0
        %v7015 = vadd.f32 %v6851, 1.0
        %v7016 = vadd.f32 %v6891, 1.0
        %v7017 = vadd.f32 %v6931, 1.0
        %v7018 = vadd.f32 %v6971, 1.0
        %v7019 = vadd.f32 %v7011, 1.0
        %v7020 = vmul.f32 %v6676, %v7012
        %v7021 = vmul.f32 %v6677, %v7013
        %v7022 = vmul.f32 %v6678, %v7014
        %v7023 = vmul.f32 %v6679, %v7015
        %v7024 = vmul.f32 %v6680, %v7016
        %v7025 = vmul.f32 %v6681, %v7017
        %v7026 = vmul.f32 %v6682, %v7018
        %v7027 = vmul.f32 %v6683, %v7019
        %v7028 = vpack.c.bf16 %v7021, %v7020
        %v7029 = vpack.c.bf16 %v7023, %v7022
        %v7030 = vpack.c.bf16 %v7025, %v7024
        %v7031 = vpack.c.bf16 %v7027, %v7026
        %v7032 = vld [vmem:[%s16] sm:$0xf]
        %v7033 = vld [vmem:[%s16 + $0x4] sm:$0xf]
        %v7036 = vunpack.c.l.b16 %v7032
        %v7037 = vunpack.c.l.b16 %v7033
        %v7038 = vpack.c.b16 %v7037, %v7036
        %v7041 = vsel %vm2222, %v7028, 0
        %v7044 = vsel %vm2222, %v7029, 0
        %v7047 = vsel %vm2222, %v7030, 0
        %v7050 = vsel %vm2222, %v7031, 0
        %7052 = vmatpush.bf16.msra.mxu0 0
        %7053 = vmatpush.bf16.msra.mxu0 0
        %7054 = vmatpush.bf16.msra.mxu0 0
        %7055 = vmatpush.bf16.msra.mxu0 0
        %7056 = vmatpush.bf16.msra.mxu0 0
        %7057 = vmatpush.bf16.msra.mxu0 0
        %7058 = vmatpush.bf16.msra.mxu0 0
        %7059 = vmatpush.bf16.msra.mxu0 %v7038
        %7060 = vmatmul.bf16.gmra.mxu0 %v7041
        %v7061 = vpop.f32.mrf.mxu0
        %v7062 = vadd.f32 0.0, %v7061
        %v7063 = vpop.f32.mrf.mxu0
        %v7064 = vadd.f32 0.0, %v7063
        %7065 = vmatmul.bf16.gmra.mxu0 %v7044
        %v7066 = vpop.f32.mrf.mxu0
        %v7067 = vadd.f32 0.0, %v7066
        %v7068 = vpop.f32.mrf.mxu0
        %v7069 = vadd.f32 0.0, %v7068
        %7070 = vmatmul.bf16.gmra.mxu0 %v7047
        %v7071 = vpop.f32.mrf.mxu0
        %v7072 = vadd.f32 0.0, %v7071
        %v7073 = vpop.f32.mrf.mxu0
        %v7074 = vadd.f32 0.0, %v7073
        %7075 = vmatmul.bf16.gmra.mxu0 %v7050
        %v7076 = vpop.f32.mrf.mxu0
        %v7077 = vadd.f32 0.0, %v7076
        %v7078 = vpop.f32.mrf.mxu0
        %v7079 = vadd.f32 0.0, %v7078
        %7080 = vdwg.mxu0
        %7081 = vst.msk [vmem:[%s741] sm:$0xff] %vm1355, %v7062
        %7082 = vst.msk [vmem:[%s741 + $0x8] sm:$0xff] %vm1355, %v7064
        %7083 = vst.msk [vmem:[%s741 + $0x10] sm:$0xff] %vm1355, %v7067
        %7084 = vst.msk [vmem:[%s741 + $0x18] sm:$0xff] %vm1355, %v7069
        %7085 = vst.msk [vmem:[%s741 + $0x20] sm:$0xff] %vm1355, %v7072
        %7086 = vst.msk [vmem:[%s741 + $0x28] sm:$0xff] %vm1355, %v7074
        %7087 = vst.msk [vmem:[%s741 + $0x30] sm:$0xff] %vm1355, %v7077
        %7088 = vst.msk [vmem:[%s741 + $0x38] sm:$0xff] %vm1355, %v7079
        %p7089 = scmp.lt.s32.totalorder %s35, 1
        %s7090 = scalar_select %p7089, %s35, 1
        %s7091 = smul.addr %s7090, 8
        %s7092 = smul.addr %s7091, 8
        %s7093 = scalar_lea.vmem %s17, %s7092
        // Predicated region
        $region137: #{_lambda_.1} parent=87 // pred_check
          %p7094 = pneg %p415
        $region138: #{_lambda_.1} parent=87 // pred_check_branch
          %7096 = sbr.rel (%p7094) target = $region140
        $region139: #{_lambda_.1} parent=87 // pred_region
          _
        $region140: #{_lambda_.1} parent=87 // pred_fallthru
          _
      $region88: #{_lambda_.1} parent=5 // pred_fallthru
        _
      %p7097 = scmp.le.s32.totalorder 2, %s30
      // Predicated region
      $region141: #{_lambda_.1} parent=5 // pred_check
        %p7098 = pneg %p7097
      $region142: #{_lambda_.1} parent=5 // pred_check_branch
        %7100 = sbr.rel (%p7098) target = $region144
      $region143: #{_lambda_.1} parent=5 // pred_region
        %s7101 = ssub.s32 %s30, 2
        // Predicated region
        $region145: #{_lambda_.1} parent=143 // pred_check
          %p7102 = pneg %p421
        $region146: #{_lambda_.1} parent=143 // pred_check_branch
          %7104 = sbr.rel (%p7102) target = $region148
        $region147: #{_lambda_.1} parent=143 // pred_region
          %p7105 = scmp.lt.s32.totalorder %s36, 1
          %s7106 = scalar_select %p7105, %s36, 1
          %s7107 = smul.addr %s7106, 8
          %s7108 = smul.addr %s7107, 8
          %s7109 = scalar_lea.vmem %s17, %s7108
        $region148: #{_lambda_.1} parent=143 // pred_fallthru
          _
      $region144: #{_lambda_.1} parent=5 // pred_fallthru
        _
    $region6: #{_lambda_.1} parent=1 // loop_footer
      %s34 = sadd.s32 1, %s30
    $region7: #{_lambda_.1} parent=1 // loop_footer_branch
      %29 = sbr.rel target = $region3
    $region8: #{_lambda_.1} parent=1 // loop_exit
      _
    %7110 = vsyncpa [#allocation7], 1
    %s7111 = scalar_lea.sflag [#allocation7], 1
    %7112 = vsyncpa %s7111, 1
    %7113 = vsyncpa [#allocation9], 1
    %7114 = vsyncpa [#allocation12], 1
    %7115 = vsyncpa [#allocation15], 1
    %7116 = vsyncpa [#allocation18], 1
    %7117 = vsyncpa [#allocation21], 1
    %7118 = vsyncpa [#allocation24], 1

</llo_original>
